<compile_context>
chip_gen: v7x
topology: tpu7x:2x2x1
jax: 0.10.0
libtpu: 0.0.40
codegen_flags: <defaults>
</compile_context>

<pallas_src>
import functools

import jax
import jax.numpy as jnp
from jax import lax
from jax.experimental import pallas as pl
from jax.experimental.pallas import tpu as pltpu


# ------------------------------ fused kernel -------------------------------- #
def _make_joint_kernel(*, B, T, H, L, F_pad, n_classes):
    """Fused: encoder LSTM stack -> relu/fc head -> decoder loop + projection."""

    def kernel(*refs):
        it = iter(refs)
        x_ref = next(it)                                            # (T, B, F)
        enc = [(next(it), next(it), next(it)) for _ in range(L)]    # (wih, whh, b)
        dec = [(next(it), next(it), next(it)) for _ in range(L)]    # dec_in + dec_out
        proj_w_ref, proj_b_ref = next(it), next(it)                 # (H,F_pad),(1,F_pad)
        fc_w_ref, fc_b_ref = next(it), next(it)                     # (H,C),(1,C)
        out_ref, logits_ref, emb_ref = next(it), next(it), next(it)

        f32 = jnp.float32

        # ------- prologue: everything time-invariant hoisted out of the loops ------
        # g-gate lane mask built ONCE (JAX does not CSE broadcast_in_dim in loops).
        lane = lax.broadcasted_iota(jnp.int32, (B, 4 * H), 1)
        g_mask = (lane >= 2 * H) & (lane < 3 * H)

        def cell(gates, c):
            # The wrapper pre-scaled the g-gate columns of W_ih/W_hh/b by 2, so one
            # sigmoid pass over (B, 4H) gives every gate: tanh(x) = 2*sigmoid(2x) - 1.
            s = jax.nn.sigmoid(gates)                       # single EUP pass / step
            act = jnp.where(g_mask, 2.0 * s - 1.0, s)
            i_g = act[:, 0 * H:1 * H]
            f_g = act[:, 1 * H:2 * H]
            g_g = act[:, 2 * H:3 * H]
            o_g = act[:, 3 * H:4 * H]
            c_new = f_g * c + i_g * g_g
            h_new = o_g * jnp.tanh(c_new)
            return h_new, c_new

        # -------------------- encoder: layer-major, fully unrolled -----------------
        # Per layer, all T input projections are issued before the recurrence (they do
        # not depend on it), so the serial chain per step is one MXU dot + elementwise.
        xs = [x_ref[t] for t in range(T)]                   # T static (B, F) loads
        h_fin, c_fin = [], []
        seq = xs
        for l in range(L):
            wih_ref, whh_ref, b_ref = enc[l]
            wih = wih_ref[...]
            whh = whh_ref[...]
            b_b = jnp.broadcast_to(b_ref[...], (B, 4 * H))  # hoisted (once per layer)
            xw = [jnp.dot(s, wih, preferred_element_type=f32) + b_b for s in seq]
            h = jnp.zeros((B, H), f32)
            c = jnp.zeros((B, H), f32)
            hs = []
            for t in range(T):                              # unrolled: static T
                gates = xw[t] + jnp.dot(h, whh, preferred_element_type=f32)
                h, c = cell(gates, c)
                hs.append(h)
            h_fin.append(h)
            c_fin.append(c)
            seq = hs                                        # input to next layer

        # ------------------- head: relu + fc, fused with encoder -------------------
        # encoder output[:, -1, :] == last-layer final hidden state.
        # TODO(synk): dropout / dropout2 treated as identity (inference mode, no RNG).
        emb = jnp.maximum(h_fin[L - 1], 0.0)
        emb_ref[...] = emb
        logits_ref[...] = (jnp.dot(emb, fc_w_ref[...], preferred_element_type=f32)
                           + fc_b_ref[...])

        # --------------------------------- decoder ---------------------------------
        # Reference semantics: every step restarts from the encoder's final (h, c) and
        # only the projected output is fed back, so h @ W_hh + b is constant per
        # decoder layer -> hoisted out of the T loop (one MXU dot per layer remains).
        dec_consts = []
        for l in range(L):
            wih_ref, whh_ref, b_ref = dec[l]
            hterm = (jnp.dot(h_fin[l], whh_ref[...], preferred_element_type=f32)
                     + b_ref[...])                          # (B, 4H), time-invariant
            dec_consts.append((wih_ref[...], hterm, c_fin[l]))

        proj_w = proj_w_ref[...]                            # (H, F_pad), zero-padded
        proj_b = jnp.broadcast_to(proj_b_ref[...], (B, F_pad))

        current = jnp.zeros((B, F_pad), f32)                # decoder_initial == zeros
        for t in range(T):                                  # unrolled: static T
            y = current
            for wih, hterm, c0 in dec_consts:
                gates = jnp.dot(y, wih, preferred_element_type=f32) + hterm
                y, _ = cell(gates, c0)
            projected = jnp.dot(y, proj_w, preferred_element_type=f32) + proj_b
            # F_pad is a multiple of 128 -> unmasked, lane-dense, fire-and-forget
            # store that is off the serial feedback chain.
            out_ref[pl.ds(t, 1), :, :] = projected[jnp.newaxis]
            current = projected

    return kernel


# ------------------------------ wrapper / prep ------------------------------ #
def _scale_g_gate(wih, whh, b, H):
    """Fold the 2x of tanh(x) = 2*sigmoid(2x) - 1 into the g-gate columns."""
    scale = jnp.concatenate([jnp.ones((2 * H,), jnp.float32),
                             jnp.full((H,), 2.0, jnp.float32),
                             jnp.ones((H,), jnp.float32)])
    return wih * scale, whh * scale, b * scale


def joint_forward(x_tbf, params, *, B, T, H, L, F, out_feat, n_classes):
    # Lane-dense decoder output/feedback path: pad projection outputs (and the
    # matching decoder_in weight rows) from out_feat to a multiple of 128 with zeros.
    F_pad = ((out_feat + 127) // 128) * 128
    pad = F_pad - out_feat

    enc = [_scale_g_gate(*layer, H) for layer in params["encoder"]]
    wih_di, whh_di, b_di = _scale_g_gate(*params["decoder_in"], H)
    dec_out = [_scale_g_gate(*layer, H) for layer in params["decoder_out"]]

    wih_di = jnp.pad(wih_di, ((0, pad), (0, 0)))            # (F_pad, 4H), zero rows
    proj_w = jnp.pad(params["proj"][0], ((0, 0), (0, pad)))  # (H, F_pad), zero cols
    proj_b = jnp.pad(params["proj"][1], ((0, 0), (0, pad)))  # (1, F_pad)

    # TODO(synk): for large B, cast LSTM weights to bf16 (v6e/v7x MXU native) and add
    # a batch-parallel grid axis so v7x's two TensorCores each take a batch shard.
    flat = [x_tbf]
    for wih, whh, b in enc:
        flat += [wih, whh, b]
    flat += [wih_di, whh_di, b_di]
    for wih, whh, b in dec_out:
        flat += [wih, whh, b]
    flat += [proj_w, proj_b, params["fc"][0], params["fc"][1]]

    out_shape = (jax.ShapeDtypeStruct((T, B, F_pad), jnp.float32),
                 jax.ShapeDtypeStruct((B, n_classes), jnp.float32),
                 jax.ShapeDtypeStruct((B, H), jnp.float32))

    # VMEM-residency guard: the whole working set must fit the scoped VMEM limit
    # (v7x only has 64 MiB physical VMEM).
    # TODO(synk): if T*B ever grows past this budget, stream x / outputs over a
    # T-blocked "arbitrary" grid axis instead of raising the limit.
    vmem_limit = 16 * 1024 * 1024
    resident_bytes = 4 * (sum(int(a.size) for a in flat)
                          + T * B * F_pad + B * n_classes + B * H)
    assert resident_bytes * 4 < vmem_limit, resident_bytes

    # Advisory cost estimate so XLA schedules around the single fused call sensibly.
    lstm_flops = lambda in_dim: 2 * B * (in_dim + H) * 4 * H
    flops = (T * (lstm_flops(F) + (L - 1) * lstm_flops(H))            # encoder
             + T * (lstm_flops(F_pad) + (L - 1) * lstm_flops(H)
                    + 2 * B * H * F_pad)                              # decoder + proj
             + 2 * B * H * n_classes)                                 # head
    transcendentals = 2 * T * L * B * 5 * H
    bytes_accessed = int(resident_bytes)

    kernel = _make_joint_kernel(B=B, T=T, H=H, L=L, F_pad=F_pad, n_classes=n_classes)
    outs_pad, logits, emb = pl.pallas_call(
        kernel,
        out_shape=out_shape,
        compiler_params=pltpu.CompilerParams(vmem_limit_bytes=vmem_limit),
        cost_estimate=pl.CostEstimate(flops=int(flops),
                                      transcendentals=int(transcendentals),
                                      bytes_accessed=bytes_accessed),
    )(*flat)
    return outs_pad[..., :out_feat], logits, emb


# ------------------------------- parameters -------------------------------- #
def init_lstm_layer(key, in_dim, hidden):
    k1, k2, k3, k4 = jax.random.split(key, 4)
    s = 1.0 / float(hidden) ** 0.5
    # PyTorch layout is (4H, in)/(4H, H); store transposed for x @ W. Gate order [i|f|g|o].
    wih = jax.random.uniform(k1, (in_dim, 4 * hidden), jnp.float32, -s, s)
    whh = jax.random.uniform(k2, (hidden, 4 * hidden), jnp.float32, -s, s)
    b_ih = jax.random.uniform(k3, (1, 4 * hidden), jnp.float32, -s, s)
    b_hh = jax.random.uniform(k4, (1, 4 * hidden), jnp.float32, -s, s)
    return wih, whh, b_ih + b_hh


def init_linear(key, in_dim, out_dim):
    k1, k2 = jax.random.split(key)
    s = 1.0 / float(in_dim) ** 0.5
    w = jax.random.uniform(k1, (in_dim, out_dim), jnp.float32, -s, s)
    b = jax.random.uniform(k2, (1, out_dim), jnp.float32, -s, s)
    return w, b


def init_params(key, input_dim, output_dim, num_nodes, hidden, num_layers, n_classes):
    keys = jax.random.split(key, num_layers + (num_layers - 1) + 3)
    kidx = 0
    in_feat = input_dim * num_nodes
    out_feat = output_dim * num_nodes

    encoder = []
    for l in range(num_layers):
        encoder.append(init_lstm_layer(keys[kidx], in_feat if l == 0 else hidden, hidden))
        kidx += 1
    decoder_in = init_lstm_layer(keys[kidx], in_feat, hidden); kidx += 1
    decoder_out = []
    for _ in range(num_layers - 1):
        decoder_out.append(init_lstm_layer(keys[kidx], hidden, hidden))
        kidx += 1
    fc_w, fc_b = init_linear(keys[kidx], hidden, n_classes); kidx += 1
    proj_w, proj_b = init_linear(keys[kidx], hidden, out_feat); kidx += 1
    return dict(encoder=encoder, decoder_in=decoder_in, decoder_out=decoder_out,
                fc=(fc_w, fc_b), proj=(proj_w, proj_b))


# --------------------------------- forward ---------------------------------- #
def forward(params, inputs, *, input_dim, output_dim, num_nodes, hidden,
            num_rnn_layers, n_classes):
    """Mirrors Model.forward. inputs: (B, T, num_nodes, input_dim)."""
    B, T, N, D = inputs.shape
    # permute(0,1,3,2) then flatten -> feature index = d * num_nodes + n
    x = jnp.transpose(inputs, (0, 1, 3, 2)).reshape(B, T, D * N)
    x_tbf = jnp.transpose(x, (1, 0, 2))                  # time-major (T, B, F)
    out_feat = output_dim * num_nodes
    assert out_feat == D * N, "decoder feedback requires output_dim == input_dim"

    outs_tbf, logits, embedding = joint_forward(
        x_tbf, params, B=B, T=T, H=hidden, L=num_rnn_layers,
        F=D * N, out_feat=out_feat, n_classes=n_classes)

    outputs = jnp.transpose(outs_tbf, (1, 0, 2)).reshape(B, T, output_dim, num_nodes)
    return outputs, logits, embedding


# ------------------------- pure-JAX reference check ------------------------- #
def _reference_forward(params, inputs, *, hidden, num_rnn_layers, output_dim, num_nodes):
    B, T, N, D = inputs.shape
    H, L = hidden, num_rnn_layers
    hi = lax.Precision.HIGHEST
    x = jnp.transpose(inputs, (0, 1, 3, 2)).reshape(B, T, D * N)
    x = jnp.transpose(x, (1, 0, 2))                      # (T, B, F)

    def cell(xv, h, c, wih, whh, b):
        g = jnp.dot(xv, wih, precision=hi) + jnp.dot(h, whh, precision=hi) + b
        i = jax.nn.sigmoid(g[:, :H]); f = jax.nn.sigmoid(g[:, H:2 * H])
        gg = jnp.tanh(g[:, 2 * H:3 * H]); o = jax.nn.sigmoid(g[:, 3 * H:])
        c = f * c + i * gg
        return o * jnp.tanh(c), c

    hs = [jnp.zeros((B, H))] * L
    cs = [jnp.zeros((B, H))] * L
    for t in range(T):
        inp = x[t]
        for l in range(L):
            hs[l], cs[l] = cell(inp, hs[l], cs[l], *params["encoder"][l])
            inp = hs[l]
    emb = jnp.maximum(hs[-1], 0.0)
    logits = jnp.dot(emb, params["fc"][0], precision=hi) + params["fc"][1]

    out_feat = output_dim * num_nodes
    cur = jnp.zeros((B, out_feat))
    outs = []
    for t in range(T):
        y, _ = cell(cur, hs[0], cs[0], *params["decoder_in"])
        for l in range(L - 1):
            y, _ = cell(y, hs[1 + l], cs[1 + l], *params["decoder_out"][l])
        proj = jnp.dot(y, params["proj"][0], precision=hi) + params["proj"][1]
        outs.append(proj)
        cur = proj
    outs = jnp.stack(outs, 0)                            # (T, B, out_feat)
    outs = jnp.transpose(outs, (1, 0, 2)).reshape(B, T, output_dim, num_nodes)
    return outs, logits, emb


# ---------------------------------- driver ---------------------------------- #
if __name__ == "__main__":
    # Small config consistent with the module. output_dim must equal input_dim for the
    # decoder feedback loop to be shape-consistent (as in the original).
    B, T = 2, 8
    num_nodes, input_dim, output_dim = 4, 2, 2
    hidden, num_rnn_layers, n_classes = 32, 2, 3

    key = jax.random.PRNGKey(0)
    k_param, k_in = jax.random.split(key)
    params = init_params(k_param, input_dim, output_dim, num_nodes,
                         hidden, num_rnn_layers, n_classes)
    inputs = jax.random.normal(k_in, (B, T, num_nodes, input_dim), jnp.float32)

    fwd = jax.jit(functools.partial(
        forward, input_dim=input_dim, output_dim=output_dim, num_nodes=num_nodes,
        hidden=hidden, num_rnn_layers=num_rnn_layers, n_classes=n_classes))

    outputs, logits, embedding = fwd(params, inputs)
    jax.block_until_ready((outputs, logits, embedding))

    assert outputs.shape == (B, T, output_dim, num_nodes)
    assert logits.shape == (B, n_classes)
    assert embedding.shape == (B, hidden)

    ref_out, ref_logits, ref_emb = _reference_forward(
        params, inputs, hidden=hidden, num_rnn_layers=num_rnn_layers,
        output_dim=output_dim, num_nodes=num_nodes)
    assert jnp.allclose(outputs, ref_out, atol=1e-3, rtol=1e-3)
    assert jnp.allclose(logits, ref_logits, atol=1e-3, rtol=1e-3)
    assert jnp.allclose(embedding, ref_emb, atol=1e-3, rtol=1e-3)
    print("KERNEL_OK")
</pallas_src>

<mosaic_0001>
module attributes {stable_mosaic.version = 11 : i64} {
  func.func @kernel(%arg0: memref<8x2x8xf32, #tpu.memory_space<vmem>>, %arg1: memref<8x128xf32, #tpu.memory_space<vmem>>, %arg2: memref<32x128xf32, #tpu.memory_space<vmem>>, %arg3: memref<1x128xf32, #tpu.memory_space<vmem>>, %arg4: memref<32x128xf32, #tpu.memory_space<vmem>>, %arg5: memref<32x128xf32, #tpu.memory_space<vmem>>, %arg6: memref<1x128xf32, #tpu.memory_space<vmem>>, %arg7: memref<128x128xf32, #tpu.memory_space<vmem>>, %arg8: memref<32x128xf32, #tpu.memory_space<vmem>>, %arg9: memref<1x128xf32, #tpu.memory_space<vmem>>, %arg10: memref<32x128xf32, #tpu.memory_space<vmem>>, %arg11: memref<32x128xf32, #tpu.memory_space<vmem>>, %arg12: memref<1x128xf32, #tpu.memory_space<vmem>>, %arg13: memref<32x128xf32, #tpu.memory_space<vmem>>, %arg14: memref<1x128xf32, #tpu.memory_space<vmem>>, %arg15: memref<32x3xf32, #tpu.memory_space<vmem>>, %arg16: memref<1x3xf32, #tpu.memory_space<vmem>>, %arg17: memref<8x2x128xf32, #tpu.memory_space<vmem>>, %arg18: memref<2x3xf32, #tpu.memory_space<vmem>>, %arg19: memref<2x32xf32, #tpu.memory_space<vmem>>) attributes {dimension_semantics = [], scalar_prefetch = 0 : i64, scratch_operands = 0 : i64, tpu.core_type = #tpu.core_type<tc>} {
    %0 = tpu.iota {dimensions = array<i32: 1>} : vector<2x128xi32>
    %c64_i32 = arith.constant 64 : i32
    %1 = vector.broadcast %c64_i32 : i32 to vector<2x128xi32>
    %2 = arith.cmpi sge, %0, %1 : vector<2x128xi32>
    %c96_i32 = arith.constant 96 : i32
    %3 = vector.broadcast %c96_i32 : i32 to vector<2x128xi32>
    %4 = arith.cmpi slt, %0, %3 : vector<2x128xi32>
    %5 = arith.andi %2, %4 : vector<2x128xi1>
    %c0 = arith.constant 0 : index
    %c0_0 = arith.constant 0 : index
    %c0_1 = arith.constant 0 : index
    %6 = vector.load %arg0[%c0, %c0_0, %c0_1] : memref<8x2x8xf32, #tpu.memory_space<vmem>>, vector<1x2x8xf32>
    %7 = vector.shape_cast %6 : vector<1x2x8xf32> to vector<2x8xf32>
    %c1 = arith.constant 1 : index
    %c0_2 = arith.constant 0 : index
    %c0_3 = arith.constant 0 : index
    %8 = vector.load %arg0[%c1, %c0_2, %c0_3] : memref<8x2x8xf32, #tpu.memory_space<vmem>>, vector<1x2x8xf32>
    %9 = vector.shape_cast %8 : vector<1x2x8xf32> to vector<2x8xf32>
    %c2 = arith.constant 2 : index
    %c0_4 = arith.constant 0 : index
    %c0_5 = arith.constant 0 : index
    %10 = vector.load %arg0[%c2, %c0_4, %c0_5] : memref<8x2x8xf32, #tpu.memory_space<vmem>>, vector<1x2x8xf32>
    %11 = vector.shape_cast %10 : vector<1x2x8xf32> to vector<2x8xf32>
    %c3 = arith.constant 3 : index
    %c0_6 = arith.constant 0 : index
    %c0_7 = arith.constant 0 : index
    %12 = vector.load %arg0[%c3, %c0_6, %c0_7] : memref<8x2x8xf32, #tpu.memory_space<vmem>>, vector<1x2x8xf32>
    %13 = vector.shape_cast %12 : vector<1x2x8xf32> to vector<2x8xf32>
    %c4 = arith.constant 4 : index
    %c0_8 = arith.constant 0 : index
    %c0_9 = arith.constant 0 : index
    %14 = vector.load %arg0[%c4, %c0_8, %c0_9] : memref<8x2x8xf32, #tpu.memory_space<vmem>>, vector<1x2x8xf32>
    %15 = vector.shape_cast %14 : vector<1x2x8xf32> to vector<2x8xf32>
    %c5 = arith.constant 5 : index
    %c0_10 = arith.constant 0 : index
    %c0_11 = arith.constant 0 : index
    %16 = vector.load %arg0[%c5, %c0_10, %c0_11] : memref<8x2x8xf32, #tpu.memory_space<vmem>>, vector<1x2x8xf32>
    %17 = vector.shape_cast %16 : vector<1x2x8xf32> to vector<2x8xf32>
    %c6 = arith.constant 6 : index
    %c0_12 = arith.constant 0 : index
    %c0_13 = arith.constant 0 : index
    %18 = vector.load %arg0[%c6, %c0_12, %c0_13] : memref<8x2x8xf32, #tpu.memory_space<vmem>>, vector<1x2x8xf32>
    %19 = vector.shape_cast %18 : vector<1x2x8xf32> to vector<2x8xf32>
    %c7 = arith.constant 7 : index
    %c0_14 = arith.constant 0 : index
    %c0_15 = arith.constant 0 : index
    %20 = vector.load %arg0[%c7, %c0_14, %c0_15] : memref<8x2x8xf32, #tpu.memory_space<vmem>>, vector<1x2x8xf32>
    %21 = vector.shape_cast %20 : vector<1x2x8xf32> to vector<2x8xf32>
    %c0_16 = arith.constant 0 : index
    %c0_17 = arith.constant 0 : index
    %22 = vector.load %arg1[%c0_16, %c0_17] : memref<8x128xf32, #tpu.memory_space<vmem>>, vector<8x128xf32>
    %c0_18 = arith.constant 0 : index
    %c0_19 = arith.constant 0 : index
    %23 = vector.load %arg2[%c0_18, %c0_19] : memref<32x128xf32, #tpu.memory_space<vmem>>, vector<32x128xf32>
    %c0_20 = arith.constant 0 : index
    %c0_21 = arith.constant 0 : index
    %24 = vector.load %arg3[%c0_20, %c0_21] : memref<1x128xf32, #tpu.memory_space<vmem>>, vector<1x128xf32>
    %25 = vector.shape_cast %24 : vector<1x128xf32> to vector<1x128xf32>
    %26 = vector.broadcast %25 : vector<1x128xf32> to vector<2x128xf32>
    %cst = arith.constant dense<0.000000e+00> : vector<2x128xf32>
    %27 = tpu.matmul %7, %22, %cst {dimension_numbers = #tpu.dot_dimension_numbers<[1], [0], [0], [1], [0, 0, 1, 1], [], []>} : vector<2x8xf32>, vector<8x128xf32>, vector<2x128xf32> -> vector<2x128xf32>
    %28 = arith.addf %27, %26 : vector<2x128xf32>
    %cst_22 = arith.constant dense<0.000000e+00> : vector<2x128xf32>
    %29 = tpu.matmul %9, %22, %cst_22 {dimension_numbers = #tpu.dot_dimension_numbers<[1], [0], [0], [1], [0, 0, 1, 1], [], []>} : vector<2x8xf32>, vector<8x128xf32>, vector<2x128xf32> -> vector<2x128xf32>
    %30 = arith.addf %29, %26 : vector<2x128xf32>
    %cst_23 = arith.constant dense<0.000000e+00> : vector<2x128xf32>
    %31 = tpu.matmul %11, %22, %cst_23 {dimension_numbers = #tpu.dot_dimension_numbers<[1], [0], [0], [1], [0, 0, 1, 1], [], []>} : vector<2x8xf32>, vector<8x128xf32>, vector<2x128xf32> -> vector<2x128xf32>
    %32 = arith.addf %31, %26 : vector<2x128xf32>
    %cst_24 = arith.constant dense<0.000000e+00> : vector<2x128xf32>
    %33 = tpu.matmul %13, %22, %cst_24 {dimension_numbers = #tpu.dot_dimension_numbers<[1], [0], [0], [1], [0, 0, 1, 1], [], []>} : vector<2x8xf32>, vector<8x128xf32>, vector<2x128xf32> -> vector<2x128xf32>
    %34 = arith.addf %33, %26 : vector<2x128xf32>
    %cst_25 = arith.constant dense<0.000000e+00> : vector<2x128xf32>
    %35 = tpu.matmul %15, %22, %cst_25 {dimension_numbers = #tpu.dot_dimension_numbers<[1], [0], [0], [1], [0, 0, 1, 1], [], []>} : vector<2x8xf32>, vector<8x128xf32>, vector<2x128xf32> -> vector<2x128xf32>
    %36 = arith.addf %35, %26 : vector<2x128xf32>
    %cst_26 = arith.constant dense<0.000000e+00> : vector<2x128xf32>
    %37 = tpu.matmul %17, %22, %cst_26 {dimension_numbers = #tpu.dot_dimension_numbers<[1], [0], [0], [1], [0, 0, 1, 1], [], []>} : vector<2x8xf32>, vector<8x128xf32>, vector<2x128xf32> -> vector<2x128xf32>
    %38 = arith.addf %37, %26 : vector<2x128xf32>
    %cst_27 = arith.constant dense<0.000000e+00> : vector<2x128xf32>
    %39 = tpu.matmul %19, %22, %cst_27 {dimension_numbers = #tpu.dot_dimension_numbers<[1], [0], [0], [1], [0, 0, 1, 1], [], []>} : vector<2x8xf32>, vector<8x128xf32>, vector<2x128xf32> -> vector<2x128xf32>
    %40 = arith.addf %39, %26 : vector<2x128xf32>
    %cst_28 = arith.constant dense<0.000000e+00> : vector<2x128xf32>
    %41 = tpu.matmul %21, %22, %cst_28 {dimension_numbers = #tpu.dot_dimension_numbers<[1], [0], [0], [1], [0, 0, 1, 1], [], []>} : vector<2x8xf32>, vector<8x128xf32>, vector<2x128xf32> -> vector<2x128xf32>
    %42 = arith.addf %41, %26 : vector<2x128xf32>
    %cst_29 = arith.constant 0.000000e+00 : f32
    %43 = vector.broadcast %cst_29 : f32 to vector<2x32xf32>
    %cst_30 = arith.constant 0.000000e+00 : f32
    %44 = vector.broadcast %cst_30 : f32 to vector<2x32xf32>
    %cst_31 = arith.constant dense<0.000000e+00> : vector<2x128xf32>
    %45 = tpu.matmul %43, %23, %cst_31 {dimension_numbers = #tpu.dot_dimension_numbers<[1], [0], [0], [1], [0, 0, 1, 1], [], []>} : vector<2x32xf32>, vector<32x128xf32>, vector<2x128xf32> -> vector<2x128xf32>
    %46 = arith.addf %28, %45 : vector<2x128xf32>
    %47 = arith.negf %46 : vector<2x128xf32>
    %48 = math.exp %47 : vector<2x128xf32>
    %cst_32 = arith.constant 1.000000e+00 : f32
    %49 = vector.broadcast %cst_32 : f32 to vector<2x128xf32>
    %50 = arith.addf %49, %48 : vector<2x128xf32>
    %51 = arith.divf %49, %50 : vector<2x128xf32>
    %cst_33 = arith.constant 2.000000e+00 : f32
    %52 = vector.broadcast %cst_33 : f32 to vector<2x128xf32>
    %53 = arith.mulf %52, %51 : vector<2x128xf32>
    %cst_34 = arith.constant 1.000000e+00 : f32
    %54 = vector.broadcast %cst_34 : f32 to vector<2x128xf32>
    %55 = arith.subf %53, %54 : vector<2x128xf32>
    %56 = arith.select %5, %55, %51 : vector<2x128xi1>, vector<2x128xf32>
    %57 = vector.extract_strided_slice %56 {offsets = [0, 0], sizes = [2, 32], strides = [1, 1]} : vector<2x128xf32> to vector<2x32xf32>
    %58 = vector.extract_strided_slice %56 {offsets = [0, 32], sizes = [2, 32], strides = [1, 1]} : vector<2x128xf32> to vector<2x32xf32>
    %59 = vector.extract_strided_slice %56 {offsets = [0, 64], sizes = [2, 32], strides = [1, 1]} : vector<2x128xf32> to vector<2x32xf32>
    %60 = vector.extract_strided_slice %56 {offsets = [0, 96], sizes = [2, 32], strides = [1, 1]} : vector<2x128xf32> to vector<2x32xf32>
    %61 = arith.mulf %58, %44 : vector<2x32xf32>
    %62 = arith.mulf %57, %59 : vector<2x32xf32>
    %63 = arith.addf %61, %62 : vector<2x32xf32>
    %64 = math.tanh %63 : vector<2x32xf32>
    %65 = arith.mulf %60, %64 : vector<2x32xf32>
    %cst_35 = arith.constant dense<0.000000e+00> : vector<2x128xf32>
    %66 = tpu.matmul %65, %23, %cst_35 {dimension_numbers = #tpu.dot_dimension_numbers<[1], [0], [0], [1], [0, 0, 1, 1], [], []>} : vector<2x32xf32>, vector<32x128xf32>, vector<2x128xf32> -> vector<2x128xf32>
    %67 = arith.addf %30, %66 : vector<2x128xf32>
    %68 = arith.negf %67 : vector<2x128xf32>
    %69 = math.exp %68 : vector<2x128xf32>
    %cst_36 = arith.constant 1.000000e+00 : f32
    %70 = vector.broadcast %cst_36 : f32 to vector<2x128xf32>
    %71 = arith.addf %70, %69 : vector<2x128xf32>
    %72 = arith.divf %70, %71 : vector<2x128xf32>
    %cst_37 = arith.constant 2.000000e+00 : f32
    %73 = vector.broadcast %cst_37 : f32 to vector<2x128xf32>
    %74 = arith.mulf %73, %72 : vector<2x128xf32>
    %cst_38 = arith.constant 1.000000e+00 : f32
    %75 = vector.broadcast %cst_38 : f32 to vector<2x128xf32>
    %76 = arith.subf %74, %75 : vector<2x128xf32>
    %77 = arith.select %5, %76, %72 : vector<2x128xi1>, vector<2x128xf32>
    %78 = vector.extract_strided_slice %77 {offsets = [0, 0], sizes = [2, 32], strides = [1, 1]} : vector<2x128xf32> to vector<2x32xf32>
    %79 = vector.extract_strided_slice %77 {offsets = [0, 32], sizes = [2, 32], strides = [1, 1]} : vector<2x128xf32> to vector<2x32xf32>
    %80 = vector.extract_strided_slice %77 {offsets = [0, 64], sizes = [2, 32], strides = [1, 1]} : vector<2x128xf32> to vector<2x32xf32>
    %81 = vector.extract_strided_slice %77 {offsets = [0, 96], sizes = [2, 32], strides = [1, 1]} : vector<2x128xf32> to vector<2x32xf32>
    %82 = arith.mulf %79, %63 : vector<2x32xf32>
    %83 = arith.mulf %78, %80 : vector<2x32xf32>
    %84 = arith.addf %82, %83 : vector<2x32xf32>
    %85 = math.tanh %84 : vector<2x32xf32>
    %86 = arith.mulf %81, %85 : vector<2x32xf32>
    %cst_39 = arith.constant dense<0.000000e+00> : vector<2x128xf32>
    %87 = tpu.matmul %86, %23, %cst_39 {dimension_numbers = #tpu.dot_dimension_numbers<[1], [0], [0], [1], [0, 0, 1, 1], [], []>} : vector<2x32xf32>, vector<32x128xf32>, vector<2x128xf32> -> vector<2x128xf32>
    %88 = arith.addf %32, %87 : vector<2x128xf32>
    %89 = arith.negf %88 : vector<2x128xf32>
    %90 = math.exp %89 : vector<2x128xf32>
    %cst_40 = arith.constant 1.000000e+00 : f32
    %91 = vector.broadcast %cst_40 : f32 to vector<2x128xf32>
    %92 = arith.addf %91, %90 : vector<2x128xf32>
    %93 = arith.divf %91, %92 : vector<2x128xf32>
    %cst_41 = arith.constant 2.000000e+00 : f32
    %94 = vector.broadcast %cst_41 : f32 to vector<2x128xf32>
    %95 = arith.mulf %94, %93 : vector<2x128xf32>
    %cst_42 = arith.constant 1.000000e+00 : f32
    %96 = vector.broadcast %cst_42 : f32 to vector<2x128xf32>
    %97 = arith.subf %95, %96 : vector<2x128xf32>
    %98 = arith.select %5, %97, %93 : vector<2x128xi1>, vector<2x128xf32>
    %99 = vector.extract_strided_slice %98 {offsets = [0, 0], sizes = [2, 32], strides = [1, 1]} : vector<2x128xf32> to vector<2x32xf32>
    %100 = vector.extract_strided_slice %98 {offsets = [0, 32], sizes = [2, 32], strides = [1, 1]} : vector<2x128xf32> to vector<2x32xf32>
    %101 = vector.extract_strided_slice %98 {offsets = [0, 64], sizes = [2, 32], strides = [1, 1]} : vector<2x128xf32> to vector<2x32xf32>
    %102 = vector.extract_strided_slice %98 {offsets = [0, 96], sizes = [2, 32], strides = [1, 1]} : vector<2x128xf32> to vector<2x32xf32>
    %103 = arith.mulf %100, %84 : vector<2x32xf32>
    %104 = arith.mulf %99, %101 : vector<2x32xf32>
    %105 = arith.addf %103, %104 : vector<2x32xf32>
    %106 = math.tanh %105 : vector<2x32xf32>
    %107 = arith.mulf %102, %106 : vector<2x32xf32>
    %cst_43 = arith.constant dense<0.000000e+00> : vector<2x128xf32>
    %108 = tpu.matmul %107, %23, %cst_43 {dimension_numbers = #tpu.dot_dimension_numbers<[1], [0], [0], [1], [0, 0, 1, 1], [], []>} : vector<2x32xf32>, vector<32x128xf32>, vector<2x128xf32> -> vector<2x128xf32>
    %109 = arith.addf %34, %108 : vector<2x128xf32>
    %110 = arith.negf %109 : vector<2x128xf32>
    %111 = math.exp %110 : vector<2x128xf32>
    %cst_44 = arith.constant 1.000000e+00 : f32
    %112 = vector.broadcast %cst_44 : f32 to vector<2x128xf32>
    %113 = arith.addf %112, %111 : vector<2x128xf32>
    %114 = arith.divf %112, %113 : vector<2x128xf32>
    %cst_45 = arith.constant 2.000000e+00 : f32
    %115 = vector.broadcast %cst_45 : f32 to vector<2x128xf32>
    %116 = arith.mulf %115, %114 : vector<2x128xf32>
    %cst_46 = arith.constant 1.000000e+00 : f32
    %117 = vector.broadcast %cst_46 : f32 to vector<2x128xf32>
    %118 = arith.subf %116, %117 : vector<2x128xf32>
    %119 = arith.select %5, %118, %114 : vector<2x128xi1>, vector<2x128xf32>
    %120 = vector.extract_strided_slice %119 {offsets = [0, 0], sizes = [2, 32], strides = [1, 1]} : vector<2x128xf32> to vector<2x32xf32>
    %121 = vector.extract_strided_slice %119 {offsets = [0, 32], sizes = [2, 32], strides = [1, 1]} : vector<2x128xf32> to vector<2x32xf32>
    %122 = vector.extract_strided_slice %119 {offsets = [0, 64], sizes = [2, 32], strides = [1, 1]} : vector<2x128xf32> to vector<2x32xf32>
    %123 = vector.extract_strided_slice %119 {offsets = [0, 96], sizes = [2, 32], strides = [1, 1]} : vector<2x128xf32> to vector<2x32xf32>
    %124 = arith.mulf %121, %105 : vector<2x32xf32>
    %125 = arith.mulf %120, %122 : vector<2x32xf32>
    %126 = arith.addf %124, %125 : vector<2x32xf32>
    %127 = math.tanh %126 : vector<2x32xf32>
    %128 = arith.mulf %123, %127 : vector<2x32xf32>
    %cst_47 = arith.constant dense<0.000000e+00> : vector<2x128xf32>
    %129 = tpu.matmul %128, %23, %cst_47 {dimension_numbers = #tpu.dot_dimension_numbers<[1], [0], [0], [1], [0, 0, 1, 1], [], []>} : vector<2x32xf32>, vector<32x128xf32>, vector<2x128xf32> -> vector<2x128xf32>
    %130 = arith.addf %36, %129 : vector<2x128xf32>
    %131 = arith.negf %130 : vector<2x128xf32>
    %132 = math.exp %131 : vector<2x128xf32>
    %cst_48 = arith.constant 1.000000e+00 : f32
    %133 = vector.broadcast %cst_48 : f32 to vector<2x128xf32>
    %134 = arith.addf %133, %132 : vector<2x128xf32>
    %135 = arith.divf %133, %134 : vector<2x128xf32>
    %cst_49 = arith.constant 2.000000e+00 : f32
    %136 = vector.broadcast %cst_49 : f32 to vector<2x128xf32>
    %137 = arith.mulf %136, %135 : vector<2x128xf32>
    %cst_50 = arith.constant 1.000000e+00 : f32
    %138 = vector.broadcast %cst_50 : f32 to vector<2x128xf32>
    %139 = arith.subf %137, %138 : vector<2x128xf32>
    %140 = arith.select %5, %139, %135 : vector<2x128xi1>, vector<2x128xf32>
    %141 = vector.extract_strided_slice %140 {offsets = [0, 0], sizes = [2, 32], strides = [1, 1]} : vector<2x128xf32> to vector<2x32xf32>
    %142 = vector.extract_strided_slice %140 {offsets = [0, 32], sizes = [2, 32], strides = [1, 1]} : vector<2x128xf32> to vector<2x32xf32>
    %143 = vector.extract_strided_slice %140 {offsets = [0, 64], sizes = [2, 32], strides = [1, 1]} : vector<2x128xf32> to vector<2x32xf32>
    %144 = vector.extract_strided_slice %140 {offsets = [0, 96], sizes = [2, 32], strides = [1, 1]} : vector<2x128xf32> to vector<2x32xf32>
    %145 = arith.mulf %142, %126 : vector<2x32xf32>
    %146 = arith.mulf %141, %143 : vector<2x32xf32>
    %147 = arith.addf %145, %146 : vector<2x32xf32>
    %148 = math.tanh %147 : vector<2x32xf32>
    %149 = arith.mulf %144, %148 : vector<2x32xf32>
    %cst_51 = arith.constant dense<0.000000e+00> : vector<2x128xf32>
    %150 = tpu.matmul %149, %23, %cst_51 {dimension_numbers = #tpu.dot_dimension_numbers<[1], [0], [0], [1], [0, 0, 1, 1], [], []>} : vector<2x32xf32>, vector<32x128xf32>, vector<2x128xf32> -> vector<2x128xf32>
    %151 = arith.addf %38, %150 : vector<2x128xf32>
    %152 = arith.negf %151 : vector<2x128xf32>
    %153 = math.exp %152 : vector<2x128xf32>
    %cst_52 = arith.constant 1.000000e+00 : f32
    %154 = vector.broadcast %cst_52 : f32 to vector<2x128xf32>
    %155 = arith.addf %154, %153 : vector<2x128xf32>
    %156 = arith.divf %154, %155 : vector<2x128xf32>
    %cst_53 = arith.constant 2.000000e+00 : f32
    %157 = vector.broadcast %cst_53 : f32 to vector<2x128xf32>
    %158 = arith.mulf %157, %156 : vector<2x128xf32>
    %cst_54 = arith.constant 1.000000e+00 : f32
    %159 = vector.broadcast %cst_54 : f32 to vector<2x128xf32>
    %160 = arith.subf %158, %159 : vector<2x128xf32>
    %161 = arith.select %5, %160, %156 : vector<2x128xi1>, vector<2x128xf32>
    %162 = vector.extract_strided_slice %161 {offsets = [0, 0], sizes = [2, 32], strides = [1, 1]} : vector<2x128xf32> to vector<2x32xf32>
    %163 = vector.extract_strided_slice %161 {offsets = [0, 32], sizes = [2, 32], strides = [1, 1]} : vector<2x128xf32> to vector<2x32xf32>
    %164 = vector.extract_strided_slice %161 {offsets = [0, 64], sizes = [2, 32], strides = [1, 1]} : vector<2x128xf32> to vector<2x32xf32>
    %165 = vector.extract_strided_slice %161 {offsets = [0, 96], sizes = [2, 32], strides = [1, 1]} : vector<2x128xf32> to vector<2x32xf32>
    %166 = arith.mulf %163, %147 : vector<2x32xf32>
    %167 = arith.mulf %162, %164 : vector<2x32xf32>
    %168 = arith.addf %166, %167 : vector<2x32xf32>
    %169 = math.tanh %168 : vector<2x32xf32>
    %170 = arith.mulf %165, %169 : vector<2x32xf32>
    %cst_55 = arith.constant dense<0.000000e+00> : vector<2x128xf32>
    %171 = tpu.matmul %170, %23, %cst_55 {dimension_numbers = #tpu.dot_dimension_numbers<[1], [0], [0], [1], [0, 0, 1, 1], [], []>} : vector<2x32xf32>, vector<32x128xf32>, vector<2x128xf32> -> vector<2x128xf32>
    %172 = arith.addf %40, %171 : vector<2x128xf32>
    %173 = arith.negf %172 : vector<2x128xf32>
    %174 = math.exp %173 : vector<2x128xf32>
    %cst_56 = arith.constant 1.000000e+00 : f32
    %175 = vector.broadcast %cst_56 : f32 to vector<2x128xf32>
    %176 = arith.addf %175, %174 : vector<2x128xf32>
    %177 = arith.divf %175, %176 : vector<2x128xf32>
    %cst_57 = arith.constant 2.000000e+00 : f32
    %178 = vector.broadcast %cst_57 : f32 to vector<2x128xf32>
    %179 = arith.mulf %178, %177 : vector<2x128xf32>
    %cst_58 = arith.constant 1.000000e+00 : f32
    %180 = vector.broadcast %cst_58 : f32 to vector<2x128xf32>
    %181 = arith.subf %179, %180 : vector<2x128xf32>
    %182 = arith.select %5, %181, %177 : vector<2x128xi1>, vector<2x128xf32>
    %183 = vector.extract_strided_slice %182 {offsets = [0, 0], sizes = [2, 32], strides = [1, 1]} : vector<2x128xf32> to vector<2x32xf32>
    %184 = vector.extract_strided_slice %182 {offsets = [0, 32], sizes = [2, 32], strides = [1, 1]} : vector<2x128xf32> to vector<2x32xf32>
    %185 = vector.extract_strided_slice %182 {offsets = [0, 64], sizes = [2, 32], strides = [1, 1]} : vector<2x128xf32> to vector<2x32xf32>
    %186 = vector.extract_strided_slice %182 {offsets = [0, 96], sizes = [2, 32], strides = [1, 1]} : vector<2x128xf32> to vector<2x32xf32>
    %187 = arith.mulf %184, %168 : vector<2x32xf32>
    %188 = arith.mulf %183, %185 : vector<2x32xf32>
    %189 = arith.addf %187, %188 : vector<2x32xf32>
    %190 = math.tanh %189 : vector<2x32xf32>
    %191 = arith.mulf %186, %190 : vector<2x32xf32>
    %cst_59 = arith.constant dense<0.000000e+00> : vector<2x128xf32>
    %192 = tpu.matmul %191, %23, %cst_59 {dimension_numbers = #tpu.dot_dimension_numbers<[1], [0], [0], [1], [0, 0, 1, 1], [], []>} : vector<2x32xf32>, vector<32x128xf32>, vector<2x128xf32> -> vector<2x128xf32>
    %193 = arith.addf %42, %192 : vector<2x128xf32>
    %194 = arith.negf %193 : vector<2x128xf32>
    %195 = math.exp %194 : vector<2x128xf32>
    %cst_60 = arith.constant 1.000000e+00 : f32
    %196 = vector.broadcast %cst_60 : f32 to vector<2x128xf32>
    %197 = arith.addf %196, %195 : vector<2x128xf32>
    %198 = arith.divf %196, %197 : vector<2x128xf32>
    %cst_61 = arith.constant 2.000000e+00 : f32
    %199 = vector.broadcast %cst_61 : f32 to vector<2x128xf32>
    %200 = arith.mulf %199, %198 : vector<2x128xf32>
    %cst_62 = arith.constant 1.000000e+00 : f32
    %201 = vector.broadcast %cst_62 : f32 to vector<2x128xf32>
    %202 = arith.subf %200, %201 : vector<2x128xf32>
    %203 = arith.select %5, %202, %198 : vector<2x128xi1>, vector<2x128xf32>
    %204 = vector.extract_strided_slice %203 {offsets = [0, 0], sizes = [2, 32], strides = [1, 1]} : vector<2x128xf32> to vector<2x32xf32>
    %205 = vector.extract_strided_slice %203 {offsets = [0, 32], sizes = [2, 32], strides = [1, 1]} : vector<2x128xf32> to vector<2x32xf32>
    %206 = vector.extract_strided_slice %203 {offsets = [0, 64], sizes = [2, 32], strides = [1, 1]} : vector<2x128xf32> to vector<2x32xf32>
    %207 = vector.extract_strided_slice %203 {offsets = [0, 96], sizes = [2, 32], strides = [1, 1]} : vector<2x128xf32> to vector<2x32xf32>
    %208 = arith.mulf %205, %189 : vector<2x32xf32>
    %209 = arith.mulf %204, %206 : vector<2x32xf32>
    %210 = arith.addf %208, %209 : vector<2x32xf32>
    %211 = math.tanh %210 : vector<2x32xf32>
    %212 = arith.mulf %207, %211 : vector<2x32xf32>
    %c0_63 = arith.constant 0 : index
    %c0_64 = arith.constant 0 : index
    %213 = vector.load %arg4[%c0_63, %c0_64] : memref<32x128xf32, #tpu.memory_space<vmem>>, vector<32x128xf32>
    %c0_65 = arith.constant 0 : index
    %c0_66 = arith.constant 0 : index
    %214 = vector.load %arg5[%c0_65, %c0_66] : memref<32x128xf32, #tpu.memory_space<vmem>>, vector<32x128xf32>
    %c0_67 = arith.constant 0 : index
    %c0_68 = arith.constant 0 : index
    %215 = vector.load %arg6[%c0_67, %c0_68] : memref<1x128xf32, #tpu.memory_space<vmem>>, vector<1x128xf32>
    %216 = vector.shape_cast %215 : vector<1x128xf32> to vector<1x128xf32>
    %217 = vector.broadcast %216 : vector<1x128xf32> to vector<2x128xf32>
    %cst_69 = arith.constant dense<0.000000e+00> : vector<2x128xf32>
    %218 = tpu.matmul %65, %213, %cst_69 {dimension_numbers = #tpu.dot_dimension_numbers<[1], [0], [0], [1], [0, 0, 1, 1], [], []>} : vector<2x32xf32>, vector<32x128xf32>, vector<2x128xf32> -> vector<2x128xf32>
    %219 = arith.addf %218, %217 : vector<2x128xf32>
    %cst_70 = arith.constant dense<0.000000e+00> : vector<2x128xf32>
    %220 = tpu.matmul %86, %213, %cst_70 {dimension_numbers = #tpu.dot_dimension_numbers<[1], [0], [0], [1], [0, 0, 1, 1], [], []>} : vector<2x32xf32>, vector<32x128xf32>, vector<2x128xf32> -> vector<2x128xf32>
    %221 = arith.addf %220, %217 : vector<2x128xf32>
    %cst_71 = arith.constant dense<0.000000e+00> : vector<2x128xf32>
    %222 = tpu.matmul %107, %213, %cst_71 {dimension_numbers = #tpu.dot_dimension_numbers<[1], [0], [0], [1], [0, 0, 1, 1], [], []>} : vector<2x32xf32>, vector<32x128xf32>, vector<2x128xf32> -> vector<2x128xf32>
    %223 = arith.addf %222, %217 : vector<2x128xf32>
    %cst_72 = arith.constant dense<0.000000e+00> : vector<2x128xf32>
    %224 = tpu.matmul %128, %213, %cst_72 {dimension_numbers = #tpu.dot_dimension_numbers<[1], [0], [0], [1], [0, 0, 1, 1], [], []>} : vector<2x32xf32>, vector<32x128xf32>, vector<2x128xf32> -> vector<2x128xf32>
    %225 = arith.addf %224, %217 : vector<2x128xf32>
    %cst_73 = arith.constant dense<0.000000e+00> : vector<2x128xf32>
    %226 = tpu.matmul %149, %213, %cst_73 {dimension_numbers = #tpu.dot_dimension_numbers<[1], [0], [0], [1], [0, 0, 1, 1], [], []>} : vector<2x32xf32>, vector<32x128xf32>, vector<2x128xf32> -> vector<2x128xf32>
    %227 = arith.addf %226, %217 : vector<2x128xf32>
    %cst_74 = arith.constant dense<0.000000e+00> : vector<2x128xf32>
    %228 = tpu.matmul %170, %213, %cst_74 {dimension_numbers = #tpu.dot_dimension_numbers<[1], [0], [0], [1], [0, 0, 1, 1], [], []>} : vector<2x32xf32>, vector<32x128xf32>, vector<2x128xf32> -> vector<2x128xf32>
    %229 = arith.addf %228, %217 : vector<2x128xf32>
    %cst_75 = arith.constant dense<0.000000e+00> : vector<2x128xf32>
    %230 = tpu.matmul %191, %213, %cst_75 {dimension_numbers = #tpu.dot_dimension_numbers<[1], [0], [0], [1], [0, 0, 1, 1], [], []>} : vector<2x32xf32>, vector<32x128xf32>, vector<2x128xf32> -> vector<2x128xf32>
    %231 = arith.addf %230, %217 : vector<2x128xf32>
    %cst_76 = arith.constant dense<0.000000e+00> : vector<2x128xf32>
    %232 = tpu.matmul %212, %213, %cst_76 {dimension_numbers = #tpu.dot_dimension_numbers<[1], [0], [0], [1], [0, 0, 1, 1], [], []>} : vector<2x32xf32>, vector<32x128xf32>, vector<2x128xf32> -> vector<2x128xf32>
    %233 = arith.addf %232, %217 : vector<2x128xf32>
    %cst_77 = arith.constant 0.000000e+00 : f32
    %234 = vector.broadcast %cst_77 : f32 to vector<2x32xf32>
    %cst_78 = arith.constant 0.000000e+00 : f32
    %235 = vector.broadcast %cst_78 : f32 to vector<2x32xf32>
    %cst_79 = arith.constant dense<0.000000e+00> : vector<2x128xf32>
    %236 = tpu.matmul %234, %214, %cst_79 {dimension_numbers = #tpu.dot_dimension_numbers<[1], [0], [0], [1], [0, 0, 1, 1], [], []>} : vector<2x32xf32>, vector<32x128xf32>, vector<2x128xf32> -> vector<2x128xf32>
    %237 = arith.addf %219, %236 : vector<2x128xf32>
    %238 = arith.negf %237 : vector<2x128xf32>
    %239 = math.exp %238 : vector<2x128xf32>
    %cst_80 = arith.constant 1.000000e+00 : f32
    %240 = vector.broadcast %cst_80 : f32 to vector<2x128xf32>
    %241 = arith.addf %240, %239 : vector<2x128xf32>
    %242 = arith.divf %240, %241 : vector<2x128xf32>
    %cst_81 = arith.constant 2.000000e+00 : f32
    %243 = vector.broadcast %cst_81 : f32 to vector<2x128xf32>
    %244 = arith.mulf %243, %242 : vector<2x128xf32>
    %cst_82 = arith.constant 1.000000e+00 : f32
    %245 = vector.broadcast %cst_82 : f32 to vector<2x128xf32>
    %246 = arith.subf %244, %245 : vector<2x128xf32>
    %247 = arith.select %5, %246, %242 : vector<2x128xi1>, vector<2x128xf32>
    %248 = vector.extract_strided_slice %247 {offsets = [0, 0], sizes = [2, 32], strides = [1, 1]} : vector<2x128xf32> to vector<2x32xf32>
    %249 = vector.extract_strided_slice %247 {offsets = [0, 32], sizes = [2, 32], strides = [1, 1]} : vector<2x128xf32> to vector<2x32xf32>
    %250 = vector.extract_strided_slice %247 {offsets = [0, 64], sizes = [2, 32], strides = [1, 1]} : vector<2x128xf32> to vector<2x32xf32>
    %251 = vector.extract_strided_slice %247 {offsets = [0, 96], sizes = [2, 32], strides = [1, 1]} : vector<2x128xf32> to vector<2x32xf32>
    %252 = arith.mulf %249, %235 : vector<2x32xf32>
    %253 = arith.mulf %248, %250 : vector<2x32xf32>
    %254 = arith.addf %252, %253 : vector<2x32xf32>
    %255 = math.tanh %254 : vector<2x32xf32>
    %256 = arith.mulf %251, %255 : vector<2x32xf32>
    %cst_83 = arith.constant dense<0.000000e+00> : vector<2x128xf32>
    %257 = tpu.matmul %256, %214, %cst_83 {dimension_numbers = #tpu.dot_dimension_numbers<[1], [0], [0], [1], [0, 0, 1, 1], [], []>} : vector<2x32xf32>, vector<32x128xf32>, vector<2x128xf32> -> vector<2x128xf32>
    %258 = arith.addf %221, %257 : vector<2x128xf32>
    %259 = arith.negf %258 : vector<2x128xf32>
    %260 = math.exp %259 : vector<2x128xf32>
    %cst_84 = arith.constant 1.000000e+00 : f32
    %261 = vector.broadcast %cst_84 : f32 to vector<2x128xf32>
    %262 = arith.addf %261, %260 : vector<2x128xf32>
    %263 = arith.divf %261, %262 : vector<2x128xf32>
    %cst_85 = arith.constant 2.000000e+00 : f32
    %264 = vector.broadcast %cst_85 : f32 to vector<2x128xf32>
    %265 = arith.mulf %264, %263 : vector<2x128xf32>
    %cst_86 = arith.constant 1.000000e+00 : f32
    %266 = vector.broadcast %cst_86 : f32 to vector<2x128xf32>
    %267 = arith.subf %265, %266 : vector<2x128xf32>
    %268 = arith.select %5, %267, %263 : vector<2x128xi1>, vector<2x128xf32>
    %269 = vector.extract_strided_slice %268 {offsets = [0, 0], sizes = [2, 32], strides = [1, 1]} : vector<2x128xf32> to vector<2x32xf32>
    %270 = vector.extract_strided_slice %268 {offsets = [0, 32], sizes = [2, 32], strides = [1, 1]} : vector<2x128xf32> to vector<2x32xf32>
    %271 = vector.extract_strided_slice %268 {offsets = [0, 64], sizes = [2, 32], strides = [1, 1]} : vector<2x128xf32> to vector<2x32xf32>
    %272 = vector.extract_strided_slice %268 {offsets = [0, 96], sizes = [2, 32], strides = [1, 1]} : vector<2x128xf32> to vector<2x32xf32>
    %273 = arith.mulf %270, %254 : vector<2x32xf32>
    %274 = arith.mulf %269, %271 : vector<2x32xf32>
    %275 = arith.addf %273, %274 : vector<2x32xf32>
    %276 = math.tanh %275 : vector<2x32xf32>
    %277 = arith.mulf %272, %276 : vector<2x32xf32>
    %cst_87 = arith.constant dense<0.000000e+00> : vector<2x128xf32>
    %278 = tpu.matmul %277, %214, %cst_87 {dimension_numbers = #tpu.dot_dimension_numbers<[1], [0], [0], [1], [0, 0, 1, 1], [], []>} : vector<2x32xf32>, vector<32x128xf32>, vector<2x128xf32> -> vector<2x128xf32>
    %279 = arith.addf %223, %278 : vector<2x128xf32>
    %280 = arith.negf %279 : vector<2x128xf32>
    %281 = math.exp %280 : vector<2x128xf32>
    %cst_88 = arith.constant 1.000000e+00 : f32
    %282 = vector.broadcast %cst_88 : f32 to vector<2x128xf32>
    %283 = arith.addf %282, %281 : vector<2x128xf32>
    %284 = arith.divf %282, %283 : vector<2x128xf32>
    %cst_89 = arith.constant 2.000000e+00 : f32
    %285 = vector.broadcast %cst_89 : f32 to vector<2x128xf32>
    %286 = arith.mulf %285, %284 : vector<2x128xf32>
    %cst_90 = arith.constant 1.000000e+00 : f32
    %287 = vector.broadcast %cst_90 : f32 to vector<2x128xf32>
    %288 = arith.subf %286, %287 : vector<2x128xf32>
    %289 = arith.select %5, %288, %284 : vector<2x128xi1>, vector<2x128xf32>
    %290 = vector.extract_strided_slice %289 {offsets = [0, 0], sizes = [2, 32], strides = [1, 1]} : vector<2x128xf32> to vector<2x32xf32>
    %291 = vector.extract_strided_slice %289 {offsets = [0, 32], sizes = [2, 32], strides = [1, 1]} : vector<2x128xf32> to vector<2x32xf32>
    %292 = vector.extract_strided_slice %289 {offsets = [0, 64], sizes = [2, 32], strides = [1, 1]} : vector<2x128xf32> to vector<2x32xf32>
    %293 = vector.extract_strided_slice %289 {offsets = [0, 96], sizes = [2, 32], strides = [1, 1]} : vector<2x128xf32> to vector<2x32xf32>
    %294 = arith.mulf %291, %275 : vector<2x32xf32>
    %295 = arith.mulf %290, %292 : vector<2x32xf32>
    %296 = arith.addf %294, %295 : vector<2x32xf32>
    %297 = math.tanh %296 : vector<2x32xf32>
    %298 = arith.mulf %293, %297 : vector<2x32xf32>
    %cst_91 = arith.constant dense<0.000000e+00> : vector<2x128xf32>
    %299 = tpu.matmul %298, %214, %cst_91 {dimension_numbers = #tpu.dot_dimension_numbers<[1], [0], [0], [1], [0, 0, 1, 1], [], []>} : vector<2x32xf32>, vector<32x128xf32>, vector<2x128xf32> -> vector<2x128xf32>
    %300 = arith.addf %225, %299 : vector<2x128xf32>
    %301 = arith.negf %300 : vector<2x128xf32>
    %302 = math.exp %301 : vector<2x128xf32>
    %cst_92 = arith.constant 1.000000e+00 : f32
    %303 = vector.broadcast %cst_92 : f32 to vector<2x128xf32>
    %304 = arith.addf %303, %302 : vector<2x128xf32>
    %305 = arith.divf %303, %304 : vector<2x128xf32>
    %cst_93 = arith.constant 2.000000e+00 : f32
    %306 = vector.broadcast %cst_93 : f32 to vector<2x128xf32>
    %307 = arith.mulf %306, %305 : vector<2x128xf32>
    %cst_94 = arith.constant 1.000000e+00 : f32
    %308 = vector.broadcast %cst_94 : f32 to vector<2x128xf32>
    %309 = arith.subf %307, %308 : vector<2x128xf32>
    %310 = arith.select %5, %309, %305 : vector<2x128xi1>, vector<2x128xf32>
    %311 = vector.extract_strided_slice %310 {offsets = [0, 0], sizes = [2, 32], strides = [1, 1]} : vector<2x128xf32> to vector<2x32xf32>
    %312 = vector.extract_strided_slice %310 {offsets = [0, 32], sizes = [2, 32], strides = [1, 1]} : vector<2x128xf32> to vector<2x32xf32>
    %313 = vector.extract_strided_slice %310 {offsets = [0, 64], sizes = [2, 32], strides = [1, 1]} : vector<2x128xf32> to vector<2x32xf32>
    %314 = vector.extract_strided_slice %310 {offsets = [0, 96], sizes = [2, 32], strides = [1, 1]} : vector<2x128xf32> to vector<2x32xf32>
    %315 = arith.mulf %312, %296 : vector<2x32xf32>
    %316 = arith.mulf %311, %313 : vector<2x32xf32>
    %317 = arith.addf %315, %316 : vector<2x32xf32>
    %318 = math.tanh %317 : vector<2x32xf32>
    %319 = arith.mulf %314, %318 : vector<2x32xf32>
    %cst_95 = arith.constant dense<0.000000e+00> : vector<2x128xf32>
    %320 = tpu.matmul %319, %214, %cst_95 {dimension_numbers = #tpu.dot_dimension_numbers<[1], [0], [0], [1], [0, 0, 1, 1], [], []>} : vector<2x32xf32>, vector<32x128xf32>, vector<2x128xf32> -> vector<2x128xf32>
    %321 = arith.addf %227, %320 : vector<2x128xf32>
    %322 = arith.negf %321 : vector<2x128xf32>
    %323 = math.exp %322 : vector<2x128xf32>
    %cst_96 = arith.constant 1.000000e+00 : f32
    %324 = vector.broadcast %cst_96 : f32 to vector<2x128xf32>
    %325 = arith.addf %324, %323 : vector<2x128xf32>
    %326 = arith.divf %324, %325 : vector<2x128xf32>
    %cst_97 = arith.constant 2.000000e+00 : f32
    %327 = vector.broadcast %cst_97 : f32 to vector<2x128xf32>
    %328 = arith.mulf %327, %326 : vector<2x128xf32>
    %cst_98 = arith.constant 1.000000e+00 : f32
    %329 = vector.broadcast %cst_98 : f32 to vector<2x128xf32>
    %330 = arith.subf %328, %329 : vector<2x128xf32>
    %331 = arith.select %5, %330, %326 : vector<2x128xi1>, vector<2x128xf32>
    %332 = vector.extract_strided_slice %331 {offsets = [0, 0], sizes = [2, 32], strides = [1, 1]} : vector<2x128xf32> to vector<2x32xf32>
    %333 = vector.extract_strided_slice %331 {offsets = [0, 32], sizes = [2, 32], strides = [1, 1]} : vector<2x128xf32> to vector<2x32xf32>
    %334 = vector.extract_strided_slice %331 {offsets = [0, 64], sizes = [2, 32], strides = [1, 1]} : vector<2x128xf32> to vector<2x32xf32>
    %335 = vector.extract_strided_slice %331 {offsets = [0, 96], sizes = [2, 32], strides = [1, 1]} : vector<2x128xf32> to vector<2x32xf32>
    %336 = arith.mulf %333, %317 : vector<2x32xf32>
    %337 = arith.mulf %332, %334 : vector<2x32xf32>
    %338 = arith.addf %336, %337 : vector<2x32xf32>
    %339 = math.tanh %338 : vector<2x32xf32>
    %340 = arith.mulf %335, %339 : vector<2x32xf32>
    %cst_99 = arith.constant dense<0.000000e+00> : vector<2x128xf32>
    %341 = tpu.matmul %340, %214, %cst_99 {dimension_numbers = #tpu.dot_dimension_numbers<[1], [0], [0], [1], [0, 0, 1, 1], [], []>} : vector<2x32xf32>, vector<32x128xf32>, vector<2x128xf32> -> vector<2x128xf32>
    %342 = arith.addf %229, %341 : vector<2x128xf32>
    %343 = arith.negf %342 : vector<2x128xf32>
    %344 = math.exp %343 : vector<2x128xf32>
    %cst_100 = arith.constant 1.000000e+00 : f32
    %345 = vector.broadcast %cst_100 : f32 to vector<2x128xf32>
    %346 = arith.addf %345, %344 : vector<2x128xf32>
    %347 = arith.divf %345, %346 : vector<2x128xf32>
    %cst_101 = arith.constant 2.000000e+00 : f32
    %348 = vector.broadcast %cst_101 : f32 to vector<2x128xf32>
    %349 = arith.mulf %348, %347 : vector<2x128xf32>
    %cst_102 = arith.constant 1.000000e+00 : f32
    %350 = vector.broadcast %cst_102 : f32 to vector<2x128xf32>
    %351 = arith.subf %349, %350 : vector<2x128xf32>
    %352 = arith.select %5, %351, %347 : vector<2x128xi1>, vector<2x128xf32>
    %353 = vector.extract_strided_slice %352 {offsets = [0, 0], sizes = [2, 32], strides = [1, 1]} : vector<2x128xf32> to vector<2x32xf32>
    %354 = vector.extract_strided_slice %352 {offsets = [0, 32], sizes = [2, 32], strides = [1, 1]} : vector<2x128xf32> to vector<2x32xf32>
    %355 = vector.extract_strided_slice %352 {offsets = [0, 64], sizes = [2, 32], strides = [1, 1]} : vector<2x128xf32> to vector<2x32xf32>
    %356 = vector.extract_strided_slice %352 {offsets = [0, 96], sizes = [2, 32], strides = [1, 1]} : vector<2x128xf32> to vector<2x32xf32>
    %357 = arith.mulf %354, %338 : vector<2x32xf32>
    %358 = arith.mulf %353, %355 : vector<2x32xf32>
    %359 = arith.addf %357, %358 : vector<2x32xf32>
    %360 = math.tanh %359 : vector<2x32xf32>
    %361 = arith.mulf %356, %360 : vector<2x32xf32>
    %cst_103 = arith.constant dense<0.000000e+00> : vector<2x128xf32>
    %362 = tpu.matmul %361, %214, %cst_103 {dimension_numbers = #tpu.dot_dimension_numbers<[1], [0], [0], [1], [0, 0, 1, 1], [], []>} : vector<2x32xf32>, vector<32x128xf32>, vector<2x128xf32> -> vector<2x128xf32>
    %363 = arith.addf %231, %362 : vector<2x128xf32>
    %364 = arith.negf %363 : vector<2x128xf32>
    %365 = math.exp %364 : vector<2x128xf32>
    %cst_104 = arith.constant 1.000000e+00 : f32
    %366 = vector.broadcast %cst_104 : f32 to vector<2x128xf32>
    %367 = arith.addf %366, %365 : vector<2x128xf32>
    %368 = arith.divf %366, %367 : vector<2x128xf32>
    %cst_105 = arith.constant 2.000000e+00 : f32
    %369 = vector.broadcast %cst_105 : f32 to vector<2x128xf32>
    %370 = arith.mulf %369, %368 : vector<2x128xf32>
    %cst_106 = arith.constant 1.000000e+00 : f32
    %371 = vector.broadcast %cst_106 : f32 to vector<2x128xf32>
    %372 = arith.subf %370, %371 : vector<2x128xf32>
    %373 = arith.select %5, %372, %368 : vector<2x128xi1>, vector<2x128xf32>
    %374 = vector.extract_strided_slice %373 {offsets = [0, 0], sizes = [2, 32], strides = [1, 1]} : vector<2x128xf32> to vector<2x32xf32>
    %375 = vector.extract_strided_slice %373 {offsets = [0, 32], sizes = [2, 32], strides = [1, 1]} : vector<2x128xf32> to vector<2x32xf32>
    %376 = vector.extract_strided_slice %373 {offsets = [0, 64], sizes = [2, 32], strides = [1, 1]} : vector<2x128xf32> to vector<2x32xf32>
    %377 = vector.extract_strided_slice %373 {offsets = [0, 96], sizes = [2, 32], strides = [1, 1]} : vector<2x128xf32> to vector<2x32xf32>
    %378 = arith.mulf %375, %359 : vector<2x32xf32>
    %379 = arith.mulf %374, %376 : vector<2x32xf32>
    %380 = arith.addf %378, %379 : vector<2x32xf32>
    %381 = math.tanh %380 : vector<2x32xf32>
    %382 = arith.mulf %377, %381 : vector<2x32xf32>
    %cst_107 = arith.constant dense<0.000000e+00> : vector<2x128xf32>
    %383 = tpu.matmul %382, %214, %cst_107 {dimension_numbers = #tpu.dot_dimension_numbers<[1], [0], [0], [1], [0, 0, 1, 1], [], []>} : vector<2x32xf32>, vector<32x128xf32>, vector<2x128xf32> -> vector<2x128xf32>
    %384 = arith.addf %233, %383 : vector<2x128xf32>
    %385 = arith.negf %384 : vector<2x128xf32>
    %386 = math.exp %385 : vector<2x128xf32>
    %cst_108 = arith.constant 1.000000e+00 : f32
    %387 = vector.broadcast %cst_108 : f32 to vector<2x128xf32>
    %388 = arith.addf %387, %386 : vector<2x128xf32>
    %389 = arith.divf %387, %388 : vector<2x128xf32>
    %cst_109 = arith.constant 2.000000e+00 : f32
    %390 = vector.broadcast %cst_109 : f32 to vector<2x128xf32>
    %391 = arith.mulf %390, %389 : vector<2x128xf32>
    %cst_110 = arith.constant 1.000000e+00 : f32
    %392 = vector.broadcast %cst_110 : f32 to vector<2x128xf32>
    %393 = arith.subf %391, %392 : vector<2x128xf32>
    %394 = arith.select %5, %393, %389 : vector<2x128xi1>, vector<2x128xf32>
    %395 = vector.extract_strided_slice %394 {offsets = [0, 0], sizes = [2, 32], strides = [1, 1]} : vector<2x128xf32> to vector<2x32xf32>
    %396 = vector.extract_strided_slice %394 {offsets = [0, 32], sizes = [2, 32], strides = [1, 1]} : vector<2x128xf32> to vector<2x32xf32>
    %397 = vector.extract_strided_slice %394 {offsets = [0, 64], sizes = [2, 32], strides = [1, 1]} : vector<2x128xf32> to vector<2x32xf32>
    %398 = vector.extract_strided_slice %394 {offsets = [0, 96], sizes = [2, 32], strides = [1, 1]} : vector<2x128xf32> to vector<2x32xf32>
    %399 = arith.mulf %396, %380 : vector<2x32xf32>
    %400 = arith.mulf %395, %397 : vector<2x32xf32>
    %401 = arith.addf %399, %400 : vector<2x32xf32>
    %402 = math.tanh %401 : vector<2x32xf32>
    %403 = arith.mulf %398, %402 : vector<2x32xf32>
    %cst_111 = arith.constant 0.000000e+00 : f32
    %404 = vector.broadcast %cst_111 : f32 to vector<2x32xf32>
    %405 = arith.maximumf %403, %404 : vector<2x32xf32>
    %c0_112 = arith.constant 0 : index
    %c0_113 = arith.constant 0 : index
    %406 = vector.load %arg19[%c0_112, %c0_113] : memref<2x32xf32, #tpu.memory_space<vmem>>, vector<2x32xf32>
    tpu.vector_store %arg19[%c0_112, %c0_113], %405 {strides = array<i32>} : memref<2x32xf32, #tpu.memory_space<vmem>>, vector<2x32xf32>,
    %c0_114 = arith.constant 0 : index
    %c0_115 = arith.constant 0 : index
    %407 = vector.load %arg15[%c0_114, %c0_115] : memref<32x3xf32, #tpu.memory_space<vmem>>, vector<32x3xf32>
    %cst_116 = arith.constant dense<0.000000e+00> : vector<2x3xf32>
    %408 = tpu.matmul %405, %407, %cst_116 {dimension_numbers = #tpu.dot_dimension_numbers<[1], [0], [0], [1], [0, 0, 1, 1], [], []>} : vector<2x32xf32>, vector<32x3xf32>, vector<2x3xf32> -> vector<2x3xf32>
    %c0_117 = arith.constant 0 : index
    %c0_118 = arith.constant 0 : index
    %409 = vector.load %arg16[%c0_117, %c0_118] : memref<1x3xf32, #tpu.memory_space<vmem>>, vector<1x3xf32>
    %410 = vector.broadcast %409 : vector<1x3xf32> to vector<2x3xf32>
    %411 = arith.addf %408, %410 : vector<2x3xf32>
    %c0_119 = arith.constant 0 : index
    %c0_120 = arith.constant 0 : index
    %412 = vector.load %arg18[%c0_119, %c0_120] : memref<2x3xf32, #tpu.memory_space<vmem>>, vector<2x3xf32>
    tpu.vector_store %arg18[%c0_119, %c0_120], %411 {strides = array<i32>} : memref<2x3xf32, #tpu.memory_space<vmem>>, vector<2x3xf32>,
    %c0_121 = arith.constant 0 : index
    %c0_122 = arith.constant 0 : index
    %413 = vector.load %arg8[%c0_121, %c0_122] : memref<32x128xf32, #tpu.memory_space<vmem>>, vector<32x128xf32>
    %cst_123 = arith.constant dense<0.000000e+00> : vector<2x128xf32>
    %414 = tpu.matmul %212, %413, %cst_123 {dimension_numbers = #tpu.dot_dimension_numbers<[1], [0], [0], [1], [0, 0, 1, 1], [], []>} : vector<2x32xf32>, vector<32x128xf32>, vector<2x128xf32> -> vector<2x128xf32>
    %c0_124 = arith.constant 0 : index
    %c0_125 = arith.constant 0 : index
    %415 = vector.load %arg9[%c0_124, %c0_125] : memref<1x128xf32, #tpu.memory_space<vmem>>, vector<1x128xf32>
    %416 = vector.broadcast %415 : vector<1x128xf32> to vector<2x128xf32>
    %417 = arith.addf %414, %416 : vector<2x128xf32>
    %c0_126 = arith.constant 0 : index
    %c0_127 = arith.constant 0 : index
    %418 = vector.load %arg7[%c0_126, %c0_127] : memref<128x128xf32, #tpu.memory_space<vmem>>, vector<128x128xf32>
    %c0_128 = arith.constant 0 : index
    %c0_129 = arith.constant 0 : index
    %419 = vector.load %arg11[%c0_128, %c0_129] : memref<32x128xf32, #tpu.memory_space<vmem>>, vector<32x128xf32>
    %cst_130 = arith.constant dense<0.000000e+00> : vector<2x128xf32>
    %420 = tpu.matmul %403, %419, %cst_130 {dimension_numbers = #tpu.dot_dimension_numbers<[1], [0], [0], [1], [0, 0, 1, 1], [], []>} : vector<2x32xf32>, vector<32x128xf32>, vector<2x128xf32> -> vector<2x128xf32>
    %c0_131 = arith.constant 0 : index
    %c0_132 = arith.constant 0 : index
    %421 = vector.load %arg12[%c0_131, %c0_132] : memref<1x128xf32, #tpu.memory_space<vmem>>, vector<1x128xf32>
    %422 = vector.broadcast %421 : vector<1x128xf32> to vector<2x128xf32>
    %423 = arith.addf %420, %422 : vector<2x128xf32>
    %c0_133 = arith.constant 0 : index
    %c0_134 = arith.constant 0 : index
    %424 = vector.load %arg10[%c0_133, %c0_134] : memref<32x128xf32, #tpu.memory_space<vmem>>, vector<32x128xf32>
    %c0_135 = arith.constant 0 : index
    %c0_136 = arith.constant 0 : index
    %425 = vector.load %arg13[%c0_135, %c0_136] : memref<32x128xf32, #tpu.memory_space<vmem>>, vector<32x128xf32>
    %c0_137 = arith.constant 0 : index
    %c0_138 = arith.constant 0 : index
    %426 = vector.load %arg14[%c0_137, %c0_138] : memref<1x128xf32, #tpu.memory_space<vmem>>, vector<1x128xf32>
    %427 = vector.shape_cast %426 : vector<1x128xf32> to vector<1x128xf32>
    %428 = vector.broadcast %427 : vector<1x128xf32> to vector<2x128xf32>
    %cst_139 = arith.constant 0.000000e+00 : f32
    %429 = vector.broadcast %cst_139 : f32 to vector<2x128xf32>
    %cst_140 = arith.constant dense<0.000000e+00> : vector<2x128xf32>
    %430 = tpu.matmul %429, %418, %cst_140 {dimension_numbers = #tpu.dot_dimension_numbers<[1], [0], [0], [1], [0, 0, 1, 1], [], []>} : vector<2x128xf32>, vector<128x128xf32>, vector<2x128xf32> -> vector<2x128xf32>
    %431 = arith.addf %430, %417 : vector<2x128xf32>
    %432 = arith.negf %431 : vector<2x128xf32>
    %433 = math.exp %432 : vector<2x128xf32>
    %cst_141 = arith.constant 1.000000e+00 : f32
    %434 = vector.broadcast %cst_141 : f32 to vector<2x128xf32>
    %435 = arith.addf %434, %433 : vector<2x128xf32>
    %436 = arith.divf %434, %435 : vector<2x128xf32>
    %cst_142 = arith.constant 2.000000e+00 : f32
    %437 = vector.broadcast %cst_142 : f32 to vector<2x128xf32>
    %438 = arith.mulf %437, %436 : vector<2x128xf32>
    %cst_143 = arith.constant 1.000000e+00 : f32
    %439 = vector.broadcast %cst_143 : f32 to vector<2x128xf32>
    %440 = arith.subf %438, %439 : vector<2x128xf32>
    %441 = arith.select %5, %440, %436 : vector<2x128xi1>, vector<2x128xf32>
    %442 = vector.extract_strided_slice %441 {offsets = [0, 0], sizes = [2, 32], strides = [1, 1]} : vector<2x128xf32> to vector<2x32xf32>
    %443 = vector.extract_strided_slice %441 {offsets = [0, 32], sizes = [2, 32], strides = [1, 1]} : vector<2x128xf32> to vector<2x32xf32>
    %444 = vector.extract_strided_slice %441 {offsets = [0, 64], sizes = [2, 32], strides = [1, 1]} : vector<2x128xf32> to vector<2x32xf32>
    %445 = vector.extract_strided_slice %441 {offsets = [0, 96], sizes = [2, 32], strides = [1, 1]} : vector<2x128xf32> to vector<2x32xf32>
    %446 = arith.mulf %443, %210 : vector<2x32xf32>
    %447 = arith.mulf %442, %444 : vector<2x32xf32>
    %448 = arith.addf %446, %447 : vector<2x32xf32>
    %449 = math.tanh %448 : vector<2x32xf32>
    %450 = arith.mulf %445, %449 : vector<2x32xf32>
    %cst_144 = arith.constant dense<0.000000e+00> : vector<2x128xf32>
    %451 = tpu.matmul %450, %424, %cst_144 {dimension_numbers = #tpu.dot_dimension_numbers<[1], [0], [0], [1], [0, 0, 1, 1], [], []>} : vector<2x32xf32>, vector<32x128xf32>, vector<2x128xf32> -> vector<2x128xf32>
    %452 = arith.addf %451, %423 : vector<2x128xf32>
    %453 = arith.negf %452 : vector<2x128xf32>
    %454 = math.exp %453 : vector<2x128xf32>
    %cst_145 = arith.constant 1.000000e+00 : f32
    %455 = vector.broadcast %cst_145 : f32 to vector<2x128xf32>
    %456 = arith.addf %455, %454 : vector<2x128xf32>
    %457 = arith.divf %455, %456 : vector<2x128xf32>
    %cst_146 = arith.constant 2.000000e+00 : f32
    %458 = vector.broadcast %cst_146 : f32 to vector<2x128xf32>
    %459 = arith.mulf %458, %457 : vector<2x128xf32>
    %cst_147 = arith.constant 1.000000e+00 : f32
    %460 = vector.broadcast %cst_147 : f32 to vector<2x128xf32>
    %461 = arith.subf %459, %460 : vector<2x128xf32>
    %462 = arith.select %5, %461, %457 : vector<2x128xi1>, vector<2x128xf32>
    %463 = vector.extract_strided_slice %462 {offsets = [0, 0], sizes = [2, 32], strides = [1, 1]} : vector<2x128xf32> to vector<2x32xf32>
    %464 = vector.extract_strided_slice %462 {offsets = [0, 32], sizes = [2, 32], strides = [1, 1]} : vector<2x128xf32> to vector<2x32xf32>
    %465 = vector.extract_strided_slice %462 {offsets = [0, 64], sizes = [2, 32], strides = [1, 1]} : vector<2x128xf32> to vector<2x32xf32>
    %466 = vector.extract_strided_slice %462 {offsets = [0, 96], sizes = [2, 32], strides = [1, 1]} : vector<2x128xf32> to vector<2x32xf32>
    %467 = arith.mulf %464, %401 : vector<2x32xf32>
    %468 = arith.mulf %463, %465 : vector<2x32xf32>
    %469 = arith.addf %467, %468 : vector<2x32xf32>
    %470 = math.tanh %469 : vector<2x32xf32>
    %471 = arith.mulf %466, %470 : vector<2x32xf32>
    %cst_148 = arith.constant dense<0.000000e+00> : vector<2x128xf32>
    %472 = tpu.matmul %471, %425, %cst_148 {dimension_numbers = #tpu.dot_dimension_numbers<[1], [0], [0], [1], [0, 0, 1, 1], [], []>} : vector<2x32xf32>, vector<32x128xf32>, vector<2x128xf32> -> vector<2x128xf32>
    %473 = arith.addf %472, %428 : vector<2x128xf32>
    %474 = vector.shape_cast %473 : vector<2x128xf32> to vector<1x2x128xf32>
    %c0_149 = arith.constant 0 : index
    %c0_150 = arith.constant 0 : index
    %c0_151 = arith.constant 0 : index
    %475 = vector.load %arg17[%c0_149, %c0_150, %c0_151] : memref<8x2x128xf32, #tpu.memory_space<vmem>>, vector<1x2x128xf32>
    tpu.vector_store %arg17[%c0_149, %c0_150, %c0_151], %474 {strides = array<i32>} : memref<8x2x128xf32, #tpu.memory_space<vmem>>, vector<1x2x128xf32>,
    %cst_152 = arith.constant dense<0.000000e+00> : vector<2x128xf32>
    %476 = tpu.matmul %473, %418, %cst_152 {dimension_numbers = #tpu.dot_dimension_numbers<[1], [0], [0], [1], [0, 0, 1, 1], [], []>} : vector<2x128xf32>, vector<128x128xf32>, vector<2x128xf32> -> vector<2x128xf32>
    %477 = arith.addf %476, %417 : vector<2x128xf32>
    %478 = arith.negf %477 : vector<2x128xf32>
    %479 = math.exp %478 : vector<2x128xf32>
    %cst_153 = arith.constant 1.000000e+00 : f32
    %480 = vector.broadcast %cst_153 : f32 to vector<2x128xf32>
    %481 = arith.addf %480, %479 : vector<2x128xf32>
    %482 = arith.divf %480, %481 : vector<2x128xf32>
    %cst_154 = arith.constant 2.000000e+00 : f32
    %483 = vector.broadcast %cst_154 : f32 to vector<2x128xf32>
    %484 = arith.mulf %483, %482 : vector<2x128xf32>
    %cst_155 = arith.constant 1.000000e+00 : f32
    %485 = vector.broadcast %cst_155 : f32 to vector<2x128xf32>
    %486 = arith.subf %484, %485 : vector<2x128xf32>
    %487 = arith.select %5, %486, %482 : vector<2x128xi1>, vector<2x128xf32>
    %488 = vector.extract_strided_slice %487 {offsets = [0, 0], sizes = [2, 32], strides = [1, 1]} : vector<2x128xf32> to vector<2x32xf32>
    %489 = vector.extract_strided_slice %487 {offsets = [0, 32], sizes = [2, 32], strides = [1, 1]} : vector<2x128xf32> to vector<2x32xf32>
    %490 = vector.extract_strided_slice %487 {offsets = [0, 64], sizes = [2, 32], strides = [1, 1]} : vector<2x128xf32> to vector<2x32xf32>
    %491 = vector.extract_strided_slice %487 {offsets = [0, 96], sizes = [2, 32], strides = [1, 1]} : vector<2x128xf32> to vector<2x32xf32>
    %492 = arith.mulf %489, %210 : vector<2x32xf32>
    %493 = arith.mulf %488, %490 : vector<2x32xf32>
    %494 = arith.addf %492, %493 : vector<2x32xf32>
    %495 = math.tanh %494 : vector<2x32xf32>
    %496 = arith.mulf %491, %495 : vector<2x32xf32>
    %cst_156 = arith.constant dense<0.000000e+00> : vector<2x128xf32>
    %497 = tpu.matmul %496, %424, %cst_156 {dimension_numbers = #tpu.dot_dimension_numbers<[1], [0], [0], [1], [0, 0, 1, 1], [], []>} : vector<2x32xf32>, vector<32x128xf32>, vector<2x128xf32> -> vector<2x128xf32>
    %498 = arith.addf %497, %423 : vector<2x128xf32>
    %499 = arith.negf %498 : vector<2x128xf32>
    %500 = math.exp %499 : vector<2x128xf32>
    %cst_157 = arith.constant 1.000000e+00 : f32
    %501 = vector.broadcast %cst_157 : f32 to vector<2x128xf32>
    %502 = arith.addf %501, %500 : vector<2x128xf32>
    %503 = arith.divf %501, %502 : vector<2x128xf32>
    %cst_158 = arith.constant 2.000000e+00 : f32
    %504 = vector.broadcast %cst_158 : f32 to vector<2x128xf32>
    %505 = arith.mulf %504, %503 : vector<2x128xf32>
    %cst_159 = arith.constant 1.000000e+00 : f32
    %506 = vector.broadcast %cst_159 : f32 to vector<2x128xf32>
    %507 = arith.subf %505, %506 : vector<2x128xf32>
    %508 = arith.select %5, %507, %503 : vector<2x128xi1>, vector<2x128xf32>
    %509 = vector.extract_strided_slice %508 {offsets = [0, 0], sizes = [2, 32], strides = [1, 1]} : vector<2x128xf32> to vector<2x32xf32>
    %510 = vector.extract_strided_slice %508 {offsets = [0, 32], sizes = [2, 32], strides = [1, 1]} : vector<2x128xf32> to vector<2x32xf32>
    %511 = vector.extract_strided_slice %508 {offsets = [0, 64], sizes = [2, 32], strides = [1, 1]} : vector<2x128xf32> to vector<2x32xf32>
    %512 = vector.extract_strided_slice %508 {offsets = [0, 96], sizes = [2, 32], strides = [1, 1]} : vector<2x128xf32> to vector<2x32xf32>
    %513 = arith.mulf %510, %401 : vector<2x32xf32>
    %514 = arith.mulf %509, %511 : vector<2x32xf32>
    %515 = arith.addf %513, %514 : vector<2x32xf32>
    %516 = math.tanh %515 : vector<2x32xf32>
    %517 = arith.mulf %512, %516 : vector<2x32xf32>
    %cst_160 = arith.constant dense<0.000000e+00> : vector<2x128xf32>
    %518 = tpu.matmul %517, %425, %cst_160 {dimension_numbers = #tpu.dot_dimension_numbers<[1], [0], [0], [1], [0, 0, 1, 1], [], []>} : vector<2x32xf32>, vector<32x128xf32>, vector<2x128xf32> -> vector<2x128xf32>
    %519 = arith.addf %518, %428 : vector<2x128xf32>
    %520 = vector.shape_cast %519 : vector<2x128xf32> to vector<1x2x128xf32>
    %c1_161 = arith.constant 1 : index
    %c0_162 = arith.constant 0 : index
    %c0_163 = arith.constant 0 : index
    %521 = vector.load %arg17[%c1_161, %c0_162, %c0_163] : memref<8x2x128xf32, #tpu.memory_space<vmem>>, vector<1x2x128xf32>
    tpu.vector_store %arg17[%c1_161, %c0_162, %c0_163], %520 {strides = array<i32>} : memref<8x2x128xf32, #tpu.memory_space<vmem>>, vector<1x2x128xf32>,
    %cst_164 = arith.constant dense<0.000000e+00> : vector<2x128xf32>
    %522 = tpu.matmul %519, %418, %cst_164 {dimension_numbers = #tpu.dot_dimension_numbers<[1], [0], [0], [1], [0, 0, 1, 1], [], []>} : vector<2x128xf32>, vector<128x128xf32>, vector<2x128xf32> -> vector<2x128xf32>
    %523 = arith.addf %522, %417 : vector<2x128xf32>
    %524 = arith.negf %523 : vector<2x128xf32>
    %525 = math.exp %524 : vector<2x128xf32>
    %cst_165 = arith.constant 1.000000e+00 : f32
    %526 = vector.broadcast %cst_165 : f32 to vector<2x128xf32>
    %527 = arith.addf %526, %525 : vector<2x128xf32>
    %528 = arith.divf %526, %527 : vector<2x128xf32>
    %cst_166 = arith.constant 2.000000e+00 : f32
    %529 = vector.broadcast %cst_166 : f32 to vector<2x128xf32>
    %530 = arith.mulf %529, %528 : vector<2x128xf32>
    %cst_167 = arith.constant 1.000000e+00 : f32
    %531 = vector.broadcast %cst_167 : f32 to vector<2x128xf32>
    %532 = arith.subf %530, %531 : vector<2x128xf32>
    %533 = arith.select %5, %532, %528 : vector<2x128xi1>, vector<2x128xf32>
    %534 = vector.extract_strided_slice %533 {offsets = [0, 0], sizes = [2, 32], strides = [1, 1]} : vector<2x128xf32> to vector<2x32xf32>
    %535 = vector.extract_strided_slice %533 {offsets = [0, 32], sizes = [2, 32], strides = [1, 1]} : vector<2x128xf32> to vector<2x32xf32>
    %536 = vector.extract_strided_slice %533 {offsets = [0, 64], sizes = [2, 32], strides = [1, 1]} : vector<2x128xf32> to vector<2x32xf32>
    %537 = vector.extract_strided_slice %533 {offsets = [0, 96], sizes = [2, 32], strides = [1, 1]} : vector<2x128xf32> to vector<2x32xf32>
    %538 = arith.mulf %535, %210 : vector<2x32xf32>
    %539 = arith.mulf %534, %536 : vector<2x32xf32>
    %540 = arith.addf %538, %539 : vector<2x32xf32>
    %541 = math.tanh %540 : vector<2x32xf32>
    %542 = arith.mulf %537, %541 : vector<2x32xf32>
    %cst_168 = arith.constant dense<0.000000e+00> : vector<2x128xf32>
    %543 = tpu.matmul %542, %424, %cst_168 {dimension_numbers = #tpu.dot_dimension_numbers<[1], [0], [0], [1], [0, 0, 1, 1], [], []>} : vector<2x32xf32>, vector<32x128xf32>, vector<2x128xf32> -> vector<2x128xf32>
    %544 = arith.addf %543, %423 : vector<2x128xf32>
    %545 = arith.negf %544 : vector<2x128xf32>
    %546 = math.exp %545 : vector<2x128xf32>
    %cst_169 = arith.constant 1.000000e+00 : f32
    %547 = vector.broadcast %cst_169 : f32 to vector<2x128xf32>
    %548 = arith.addf %547, %546 : vector<2x128xf32>
    %549 = arith.divf %547, %548 : vector<2x128xf32>
    %cst_170 = arith.constant 2.000000e+00 : f32
    %550 = vector.broadcast %cst_170 : f32 to vector<2x128xf32>
    %551 = arith.mulf %550, %549 : vector<2x128xf32>
    %cst_171 = arith.constant 1.000000e+00 : f32
    %552 = vector.broadcast %cst_171 : f32 to vector<2x128xf32>
    %553 = arith.subf %551, %552 : vector<2x128xf32>
    %554 = arith.select %5, %553, %549 : vector<2x128xi1>, vector<2x128xf32>
    %555 = vector.extract_strided_slice %554 {offsets = [0, 0], sizes = [2, 32], strides = [1, 1]} : vector<2x128xf32> to vector<2x32xf32>
    %556 = vector.extract_strided_slice %554 {offsets = [0, 32], sizes = [2, 32], strides = [1, 1]} : vector<2x128xf32> to vector<2x32xf32>
    %557 = vector.extract_strided_slice %554 {offsets = [0, 64], sizes = [2, 32], strides = [1, 1]} : vector<2x128xf32> to vector<2x32xf32>
    %558 = vector.extract_strided_slice %554 {offsets = [0, 96], sizes = [2, 32], strides = [1, 1]} : vector<2x128xf32> to vector<2x32xf32>
    %559 = arith.mulf %556, %401 : vector<2x32xf32>
    %560 = arith.mulf %555, %557 : vector<2x32xf32>
    %561 = arith.addf %559, %560 : vector<2x32xf32>
    %562 = math.tanh %561 : vector<2x32xf32>
    %563 = arith.mulf %558, %562 : vector<2x32xf32>
    %cst_172 = arith.constant dense<0.000000e+00> : vector<2x128xf32>
    %564 = tpu.matmul %563, %425, %cst_172 {dimension_numbers = #tpu.dot_dimension_numbers<[1], [0], [0], [1], [0, 0, 1, 1], [], []>} : vector<2x32xf32>, vector<32x128xf32>, vector<2x128xf32> -> vector<2x128xf32>
    %565 = arith.addf %564, %428 : vector<2x128xf32>
    %566 = vector.shape_cast %565 : vector<2x128xf32> to vector<1x2x128xf32>
    %c2_173 = arith.constant 2 : index
    %c0_174 = arith.constant 0 : index
    %c0_175 = arith.constant 0 : index
    %567 = vector.load %arg17[%c2_173, %c0_174, %c0_175] : memref<8x2x128xf32, #tpu.memory_space<vmem>>, vector<1x2x128xf32>
    tpu.vector_store %arg17[%c2_173, %c0_174, %c0_175], %566 {strides = array<i32>} : memref<8x2x128xf32, #tpu.memory_space<vmem>>, vector<1x2x128xf32>,
    %cst_176 = arith.constant dense<0.000000e+00> : vector<2x128xf32>
    %568 = tpu.matmul %565, %418, %cst_176 {dimension_numbers = #tpu.dot_dimension_numbers<[1], [0], [0], [1], [0, 0, 1, 1], [], []>} : vector<2x128xf32>, vector<128x128xf32>, vector<2x128xf32> -> vector<2x128xf32>
    %569 = arith.addf %568, %417 : vector<2x128xf32>
    %570 = arith.negf %569 : vector<2x128xf32>
    %571 = math.exp %570 : vector<2x128xf32>
    %cst_177 = arith.constant 1.000000e+00 : f32
    %572 = vector.broadcast %cst_177 : f32 to vector<2x128xf32>
    %573 = arith.addf %572, %571 : vector<2x128xf32>
    %574 = arith.divf %572, %573 : vector<2x128xf32>
    %cst_178 = arith.constant 2.000000e+00 : f32
    %575 = vector.broadcast %cst_178 : f32 to vector<2x128xf32>
    %576 = arith.mulf %575, %574 : vector<2x128xf32>
    %cst_179 = arith.constant 1.000000e+00 : f32
    %577 = vector.broadcast %cst_179 : f32 to vector<2x128xf32>
    %578 = arith.subf %576, %577 : vector<2x128xf32>
    %579 = arith.select %5, %578, %574 : vector<2x128xi1>, vector<2x128xf32>
    %580 = vector.extract_strided_slice %579 {offsets = [0, 0], sizes = [2, 32], strides = [1, 1]} : vector<2x128xf32> to vector<2x32xf32>
    %581 = vector.extract_strided_slice %579 {offsets = [0, 32], sizes = [2, 32], strides = [1, 1]} : vector<2x128xf32> to vector<2x32xf32>
    %582 = vector.extract_strided_slice %579 {offsets = [0, 64], sizes = [2, 32], strides = [1, 1]} : vector<2x128xf32> to vector<2x32xf32>
    %583 = vector.extract_strided_slice %579 {offsets = [0, 96], sizes = [2, 32], strides = [1, 1]} : vector<2x128xf32> to vector<2x32xf32>
    %584 = arith.mulf %581, %210 : vector<2x32xf32>
    %585 = arith.mulf %580, %582 : vector<2x32xf32>
    %586 = arith.addf %584, %585 : vector<2x32xf32>
    %587 = math.tanh %586 : vector<2x32xf32>
    %588 = arith.mulf %583, %587 : vector<2x32xf32>
    %cst_180 = arith.constant dense<0.000000e+00> : vector<2x128xf32>
    %589 = tpu.matmul %588, %424, %cst_180 {dimension_numbers = #tpu.dot_dimension_numbers<[1], [0], [0], [1], [0, 0, 1, 1], [], []>} : vector<2x32xf32>, vector<32x128xf32>, vector<2x128xf32> -> vector<2x128xf32>
    %590 = arith.addf %589, %423 : vector<2x128xf32>
    %591 = arith.negf %590 : vector<2x128xf32>
    %592 = math.exp %591 : vector<2x128xf32>
    %cst_181 = arith.constant 1.000000e+00 : f32
    %593 = vector.broadcast %cst_181 : f32 to vector<2x128xf32>
    %594 = arith.addf %593, %592 : vector<2x128xf32>
    %595 = arith.divf %593, %594 : vector<2x128xf32>
    %cst_182 = arith.constant 2.000000e+00 : f32
    %596 = vector.broadcast %cst_182 : f32 to vector<2x128xf32>
    %597 = arith.mulf %596, %595 : vector<2x128xf32>
    %cst_183 = arith.constant 1.000000e+00 : f32
    %598 = vector.broadcast %cst_183 : f32 to vector<2x128xf32>
    %599 = arith.subf %597, %598 : vector<2x128xf32>
    %600 = arith.select %5, %599, %595 : vector<2x128xi1>, vector<2x128xf32>
    %601 = vector.extract_strided_slice %600 {offsets = [0, 0], sizes = [2, 32], strides = [1, 1]} : vector<2x128xf32> to vector<2x32xf32>
    %602 = vector.extract_strided_slice %600 {offsets = [0, 32], sizes = [2, 32], strides = [1, 1]} : vector<2x128xf32> to vector<2x32xf32>
    %603 = vector.extract_strided_slice %600 {offsets = [0, 64], sizes = [2, 32], strides = [1, 1]} : vector<2x128xf32> to vector<2x32xf32>
    %604 = vector.extract_strided_slice %600 {offsets = [0, 96], sizes = [2, 32], strides = [1, 1]} : vector<2x128xf32> to vector<2x32xf32>
    %605 = arith.mulf %602, %401 : vector<2x32xf32>
    %606 = arith.mulf %601, %603 : vector<2x32xf32>
    %607 = arith.addf %605, %606 : vector<2x32xf32>
    %608 = math.tanh %607 : vector<2x32xf32>
    %609 = arith.mulf %604, %608 : vector<2x32xf32>
    %cst_184 = arith.constant dense<0.000000e+00> : vector<2x128xf32>
    %610 = tpu.matmul %609, %425, %cst_184 {dimension_numbers = #tpu.dot_dimension_numbers<[1], [0], [0], [1], [0, 0, 1, 1], [], []>} : vector<2x32xf32>, vector<32x128xf32>, vector<2x128xf32> -> vector<2x128xf32>
    %611 = arith.addf %610, %428 : vector<2x128xf32>
    %612 = vector.shape_cast %611 : vector<2x128xf32> to vector<1x2x128xf32>
    %c3_185 = arith.constant 3 : index
    %c0_186 = arith.constant 0 : index
    %c0_187 = arith.constant 0 : index
    %613 = vector.load %arg17[%c3_185, %c0_186, %c0_187] : memref<8x2x128xf32, #tpu.memory_space<vmem>>, vector<1x2x128xf32>
    tpu.vector_store %arg17[%c3_185, %c0_186, %c0_187], %612 {strides = array<i32>} : memref<8x2x128xf32, #tpu.memory_space<vmem>>, vector<1x2x128xf32>,
    %cst_188 = arith.constant dense<0.000000e+00> : vector<2x128xf32>
    %614 = tpu.matmul %611, %418, %cst_188 {dimension_numbers = #tpu.dot_dimension_numbers<[1], [0], [0], [1], [0, 0, 1, 1], [], []>} : vector<2x128xf32>, vector<128x128xf32>, vector<2x128xf32> -> vector<2x128xf32>
    %615 = arith.addf %614, %417 : vector<2x128xf32>
    %616 = arith.negf %615 : vector<2x128xf32>
    %617 = math.exp %616 : vector<2x128xf32>
    %cst_189 = arith.constant 1.000000e+00 : f32
    %618 = vector.broadcast %cst_189 : f32 to vector<2x128xf32>
    %619 = arith.addf %618, %617 : vector<2x128xf32>
    %620 = arith.divf %618, %619 : vector<2x128xf32>
    %cst_190 = arith.constant 2.000000e+00 : f32
    %621 = vector.broadcast %cst_190 : f32 to vector<2x128xf32>
    %622 = arith.mulf %621, %620 : vector<2x128xf32>
    %cst_191 = arith.constant 1.000000e+00 : f32
    %623 = vector.broadcast %cst_191 : f32 to vector<2x128xf32>
    %624 = arith.subf %622, %623 : vector<2x128xf32>
    %625 = arith.select %5, %624, %620 : vector<2x128xi1>, vector<2x128xf32>
    %626 = vector.extract_strided_slice %625 {offsets = [0, 0], sizes = [2, 32], strides = [1, 1]} : vector<2x128xf32> to vector<2x32xf32>
    %627 = vector.extract_strided_slice %625 {offsets = [0, 32], sizes = [2, 32], strides = [1, 1]} : vector<2x128xf32> to vector<2x32xf32>
    %628 = vector.extract_strided_slice %625 {offsets = [0, 64], sizes = [2, 32], strides = [1, 1]} : vector<2x128xf32> to vector<2x32xf32>
    %629 = vector.extract_strided_slice %625 {offsets = [0, 96], sizes = [2, 32], strides = [1, 1]} : vector<2x128xf32> to vector<2x32xf32>
    %630 = arith.mulf %627, %210 : vector<2x32xf32>
    %631 = arith.mulf %626, %628 : vector<2x32xf32>
    %632 = arith.addf %630, %631 : vector<2x32xf32>
    %633 = math.tanh %632 : vector<2x32xf32>
    %634 = arith.mulf %629, %633 : vector<2x32xf32>
    %cst_192 = arith.constant dense<0.000000e+00> : vector<2x128xf32>
    %635 = tpu.matmul %634, %424, %cst_192 {dimension_numbers = #tpu.dot_dimension_numbers<[1], [0], [0], [1], [0, 0, 1, 1], [], []>} : vector<2x32xf32>, vector<32x128xf32>, vector<2x128xf32> -> vector<2x128xf32>
    %636 = arith.addf %635, %423 : vector<2x128xf32>
    %637 = arith.negf %636 : vector<2x128xf32>
    %638 = math.exp %637 : vector<2x128xf32>
    %cst_193 = arith.constant 1.000000e+00 : f32
    %639 = vector.broadcast %cst_193 : f32 to vector<2x128xf32>
    %640 = arith.addf %639, %638 : vector<2x128xf32>
    %641 = arith.divf %639, %640 : vector<2x128xf32>
    %cst_194 = arith.constant 2.000000e+00 : f32
    %642 = vector.broadcast %cst_194 : f32 to vector<2x128xf32>
    %643 = arith.mulf %642, %641 : vector<2x128xf32>
    %cst_195 = arith.constant 1.000000e+00 : f32
    %644 = vector.broadcast %cst_195 : f32 to vector<2x128xf32>
    %645 = arith.subf %643, %644 : vector<2x128xf32>
    %646 = arith.select %5, %645, %641 : vector<2x128xi1>, vector<2x128xf32>
    %647 = vector.extract_strided_slice %646 {offsets = [0, 0], sizes = [2, 32], strides = [1, 1]} : vector<2x128xf32> to vector<2x32xf32>
    %648 = vector.extract_strided_slice %646 {offsets = [0, 32], sizes = [2, 32], strides = [1, 1]} : vector<2x128xf32> to vector<2x32xf32>
    %649 = vector.extract_strided_slice %646 {offsets = [0, 64], sizes = [2, 32], strides = [1, 1]} : vector<2x128xf32> to vector<2x32xf32>
    %650 = vector.extract_strided_slice %646 {offsets = [0, 96], sizes = [2, 32], strides = [1, 1]} : vector<2x128xf32> to vector<2x32xf32>
    %651 = arith.mulf %648, %401 : vector<2x32xf32>
    %652 = arith.mulf %647, %649 : vector<2x32xf32>
    %653 = arith.addf %651, %652 : vector<2x32xf32>
    %654 = math.tanh %653 : vector<2x32xf32>
    %655 = arith.mulf %650, %654 : vector<2x32xf32>
    %cst_196 = arith.constant dense<0.000000e+00> : vector<2x128xf32>
    %656 = tpu.matmul %655, %425, %cst_196 {dimension_numbers = #tpu.dot_dimension_numbers<[1], [0], [0], [1], [0, 0, 1, 1], [], []>} : vector<2x32xf32>, vector<32x128xf32>, vector<2x128xf32> -> vector<2x128xf32>
    %657 = arith.addf %656, %428 : vector<2x128xf32>
    %658 = vector.shape_cast %657 : vector<2x128xf32> to vector<1x2x128xf32>
    %c4_197 = arith.constant 4 : index
    %c0_198 = arith.constant 0 : index
    %c0_199 = arith.constant 0 : index
    %659 = vector.load %arg17[%c4_197, %c0_198, %c0_199] : memref<8x2x128xf32, #tpu.memory_space<vmem>>, vector<1x2x128xf32>
    tpu.vector_store %arg17[%c4_197, %c0_198, %c0_199], %658 {strides = array<i32>} : memref<8x2x128xf32, #tpu.memory_space<vmem>>, vector<1x2x128xf32>,
    %cst_200 = arith.constant dense<0.000000e+00> : vector<2x128xf32>
    %660 = tpu.matmul %657, %418, %cst_200 {dimension_numbers = #tpu.dot_dimension_numbers<[1], [0], [0], [1], [0, 0, 1, 1], [], []>} : vector<2x128xf32>, vector<128x128xf32>, vector<2x128xf32> -> vector<2x128xf32>
    %661 = arith.addf %660, %417 : vector<2x128xf32>
    %662 = arith.negf %661 : vector<2x128xf32>
    %663 = math.exp %662 : vector<2x128xf32>
    %cst_201 = arith.constant 1.000000e+00 : f32
    %664 = vector.broadcast %cst_201 : f32 to vector<2x128xf32>
    %665 = arith.addf %664, %663 : vector<2x128xf32>
    %666 = arith.divf %664, %665 : vector<2x128xf32>
    %cst_202 = arith.constant 2.000000e+00 : f32
    %667 = vector.broadcast %cst_202 : f32 to vector<2x128xf32>
    %668 = arith.mulf %667, %666 : vector<2x128xf32>
    %cst_203 = arith.constant 1.000000e+00 : f32
    %669 = vector.broadcast %cst_203 : f32 to vector<2x128xf32>
    %670 = arith.subf %668, %669 : vector<2x128xf32>
    %671 = arith.select %5, %670, %666 : vector<2x128xi1>, vector<2x128xf32>
    %672 = vector.extract_strided_slice %671 {offsets = [0, 0], sizes = [2, 32], strides = [1, 1]} : vector<2x128xf32> to vector<2x32xf32>
    %673 = vector.extract_strided_slice %671 {offsets = [0, 32], sizes = [2, 32], strides = [1, 1]} : vector<2x128xf32> to vector<2x32xf32>
    %674 = vector.extract_strided_slice %671 {offsets = [0, 64], sizes = [2, 32], strides = [1, 1]} : vector<2x128xf32> to vector<2x32xf32>
    %675 = vector.extract_strided_slice %671 {offsets = [0, 96], sizes = [2, 32], strides = [1, 1]} : vector<2x128xf32> to vector<2x32xf32>
    %676 = arith.mulf %673, %210 : vector<2x32xf32>
    %677 = arith.mulf %672, %674 : vector<2x32xf32>
    %678 = arith.addf %676, %677 : vector<2x32xf32>
    %679 = math.tanh %678 : vector<2x32xf32>
    %680 = arith.mulf %675, %679 : vector<2x32xf32>
    %cst_204 = arith.constant dense<0.000000e+00> : vector<2x128xf32>
    %681 = tpu.matmul %680, %424, %cst_204 {dimension_numbers = #tpu.dot_dimension_numbers<[1], [0], [0], [1], [0, 0, 1, 1], [], []>} : vector<2x32xf32>, vector<32x128xf32>, vector<2x128xf32> -> vector<2x128xf32>
    %682 = arith.addf %681, %423 : vector<2x128xf32>
    %683 = arith.negf %682 : vector<2x128xf32>
    %684 = math.exp %683 : vector<2x128xf32>
    %cst_205 = arith.constant 1.000000e+00 : f32
    %685 = vector.broadcast %cst_205 : f32 to vector<2x128xf32>
    %686 = arith.addf %685, %684 : vector<2x128xf32>
    %687 = arith.divf %685, %686 : vector<2x128xf32>
    %cst_206 = arith.constant 2.000000e+00 : f32
    %688 = vector.broadcast %cst_206 : f32 to vector<2x128xf32>
    %689 = arith.mulf %688, %687 : vector<2x128xf32>
    %cst_207 = arith.constant 1.000000e+00 : f32
    %690 = vector.broadcast %cst_207 : f32 to vector<2x128xf32>
    %691 = arith.subf %689, %690 : vector<2x128xf32>
    %692 = arith.select %5, %691, %687 : vector<2x128xi1>, vector<2x128xf32>
    %693 = vector.extract_strided_slice %692 {offsets = [0, 0], sizes = [2, 32], strides = [1, 1]} : vector<2x128xf32> to vector<2x32xf32>
    %694 = vector.extract_strided_slice %692 {offsets = [0, 32], sizes = [2, 32], strides = [1, 1]} : vector<2x128xf32> to vector<2x32xf32>
    %695 = vector.extract_strided_slice %692 {offsets = [0, 64], sizes = [2, 32], strides = [1, 1]} : vector<2x128xf32> to vector<2x32xf32>
    %696 = vector.extract_strided_slice %692 {offsets = [0, 96], sizes = [2, 32], strides = [1, 1]} : vector<2x128xf32> to vector<2x32xf32>
    %697 = arith.mulf %694, %401 : vector<2x32xf32>
    %698 = arith.mulf %693, %695 : vector<2x32xf32>
    %699 = arith.addf %697, %698 : vector<2x32xf32>
    %700 = math.tanh %699 : vector<2x32xf32>
    %701 = arith.mulf %696, %700 : vector<2x32xf32>
    %cst_208 = arith.constant dense<0.000000e+00> : vector<2x128xf32>
    %702 = tpu.matmul %701, %425, %cst_208 {dimension_numbers = #tpu.dot_dimension_numbers<[1], [0], [0], [1], [0, 0, 1, 1], [], []>} : vector<2x32xf32>, vector<32x128xf32>, vector<2x128xf32> -> vector<2x128xf32>
    %703 = arith.addf %702, %428 : vector<2x128xf32>
    %704 = vector.shape_cast %703 : vector<2x128xf32> to vector<1x2x128xf32>
    %c5_209 = arith.constant 5 : index
    %c0_210 = arith.constant 0 : index
    %c0_211 = arith.constant 0 : index
    %705 = vector.load %arg17[%c5_209, %c0_210, %c0_211] : memref<8x2x128xf32, #tpu.memory_space<vmem>>, vector<1x2x128xf32>
    tpu.vector_store %arg17[%c5_209, %c0_210, %c0_211], %704 {strides = array<i32>} : memref<8x2x128xf32, #tpu.memory_space<vmem>>, vector<1x2x128xf32>,
    %cst_212 = arith.constant dense<0.000000e+00> : vector<2x128xf32>
    %706 = tpu.matmul %703, %418, %cst_212 {dimension_numbers = #tpu.dot_dimension_numbers<[1], [0], [0], [1], [0, 0, 1, 1], [], []>} : vector<2x128xf32>, vector<128x128xf32>, vector<2x128xf32> -> vector<2x128xf32>
    %707 = arith.addf %706, %417 : vector<2x128xf32>
    %708 = arith.negf %707 : vector<2x128xf32>
    %709 = math.exp %708 : vector<2x128xf32>
    %cst_213 = arith.constant 1.000000e+00 : f32
    %710 = vector.broadcast %cst_213 : f32 to vector<2x128xf32>
    %711 = arith.addf %710, %709 : vector<2x128xf32>
    %712 = arith.divf %710, %711 : vector<2x128xf32>
    %cst_214 = arith.constant 2.000000e+00 : f32
    %713 = vector.broadcast %cst_214 : f32 to vector<2x128xf32>
    %714 = arith.mulf %713, %712 : vector<2x128xf32>
    %cst_215 = arith.constant 1.000000e+00 : f32
    %715 = vector.broadcast %cst_215 : f32 to vector<2x128xf32>
    %716 = arith.subf %714, %715 : vector<2x128xf32>
    %717 = arith.select %5, %716, %712 : vector<2x128xi1>, vector<2x128xf32>
    %718 = vector.extract_strided_slice %717 {offsets = [0, 0], sizes = [2, 32], strides = [1, 1]} : vector<2x128xf32> to vector<2x32xf32>
    %719 = vector.extract_strided_slice %717 {offsets = [0, 32], sizes = [2, 32], strides = [1, 1]} : vector<2x128xf32> to vector<2x32xf32>
    %720 = vector.extract_strided_slice %717 {offsets = [0, 64], sizes = [2, 32], strides = [1, 1]} : vector<2x128xf32> to vector<2x32xf32>
    %721 = vector.extract_strided_slice %717 {offsets = [0, 96], sizes = [2, 32], strides = [1, 1]} : vector<2x128xf32> to vector<2x32xf32>
    %722 = arith.mulf %719, %210 : vector<2x32xf32>
    %723 = arith.mulf %718, %720 : vector<2x32xf32>
    %724 = arith.addf %722, %723 : vector<2x32xf32>
    %725 = math.tanh %724 : vector<2x32xf32>
    %726 = arith.mulf %721, %725 : vector<2x32xf32>
    %cst_216 = arith.constant dense<0.000000e+00> : vector<2x128xf32>
    %727 = tpu.matmul %726, %424, %cst_216 {dimension_numbers = #tpu.dot_dimension_numbers<[1], [0], [0], [1], [0, 0, 1, 1], [], []>} : vector<2x32xf32>, vector<32x128xf32>, vector<2x128xf32> -> vector<2x128xf32>
    %728 = arith.addf %727, %423 : vector<2x128xf32>
    %729 = arith.negf %728 : vector<2x128xf32>
    %730 = math.exp %729 : vector<2x128xf32>
    %cst_217 = arith.constant 1.000000e+00 : f32
    %731 = vector.broadcast %cst_217 : f32 to vector<2x128xf32>
    %732 = arith.addf %731, %730 : vector<2x128xf32>
    %733 = arith.divf %731, %732 : vector<2x128xf32>
    %cst_218 = arith.constant 2.000000e+00 : f32
    %734 = vector.broadcast %cst_218 : f32 to vector<2x128xf32>
    %735 = arith.mulf %734, %733 : vector<2x128xf32>
    %cst_219 = arith.constant 1.000000e+00 : f32
    %736 = vector.broadcast %cst_219 : f32 to vector<2x128xf32>
    %737 = arith.subf %735, %736 : vector<2x128xf32>
    %738 = arith.select %5, %737, %733 : vector<2x128xi1>, vector<2x128xf32>
    %739 = vector.extract_strided_slice %738 {offsets = [0, 0], sizes = [2, 32], strides = [1, 1]} : vector<2x128xf32> to vector<2x32xf32>
    %740 = vector.extract_strided_slice %738 {offsets = [0, 32], sizes = [2, 32], strides = [1, 1]} : vector<2x128xf32> to vector<2x32xf32>
    %741 = vector.extract_strided_slice %738 {offsets = [0, 64], sizes = [2, 32], strides = [1, 1]} : vector<2x128xf32> to vector<2x32xf32>
    %742 = vector.extract_strided_slice %738 {offsets = [0, 96], sizes = [2, 32], strides = [1, 1]} : vector<2x128xf32> to vector<2x32xf32>
    %743 = arith.mulf %740, %401 : vector<2x32xf32>
    %744 = arith.mulf %739, %741 : vector<2x32xf32>
    %745 = arith.addf %743, %744 : vector<2x32xf32>
    %746 = math.tanh %745 : vector<2x32xf32>
    %747 = arith.mulf %742, %746 : vector<2x32xf32>
    %cst_220 = arith.constant dense<0.000000e+00> : vector<2x128xf32>
    %748 = tpu.matmul %747, %425, %cst_220 {dimension_numbers = #tpu.dot_dimension_numbers<[1], [0], [0], [1], [0, 0, 1, 1], [], []>} : vector<2x32xf32>, vector<32x128xf32>, vector<2x128xf32> -> vector<2x128xf32>
    %749 = arith.addf %748, %428 : vector<2x128xf32>
    %750 = vector.shape_cast %749 : vector<2x128xf32> to vector<1x2x128xf32>
    %c6_221 = arith.constant 6 : index
    %c0_222 = arith.constant 0 : index
    %c0_223 = arith.constant 0 : index
    %751 = vector.load %arg17[%c6_221, %c0_222, %c0_223] : memref<8x2x128xf32, #tpu.memory_space<vmem>>, vector<1x2x128xf32>
    tpu.vector_store %arg17[%c6_221, %c0_222, %c0_223], %750 {strides = array<i32>} : memref<8x2x128xf32, #tpu.memory_space<vmem>>, vector<1x2x128xf32>,
    %cst_224 = arith.constant dense<0.000000e+00> : vector<2x128xf32>
    %752 = tpu.matmul %749, %418, %cst_224 {dimension_numbers = #tpu.dot_dimension_numbers<[1], [0], [0], [1], [0, 0, 1, 1], [], []>} : vector<2x128xf32>, vector<128x128xf32>, vector<2x128xf32> -> vector<2x128xf32>
    %753 = arith.addf %752, %417 : vector<2x128xf32>
    %754 = arith.negf %753 : vector<2x128xf32>
    %755 = math.exp %754 : vector<2x128xf32>
    %cst_225 = arith.constant 1.000000e+00 : f32
    %756 = vector.broadcast %cst_225 : f32 to vector<2x128xf32>
    %757 = arith.addf %756, %755 : vector<2x128xf32>
    %758 = arith.divf %756, %757 : vector<2x128xf32>
    %cst_226 = arith.constant 2.000000e+00 : f32
    %759 = vector.broadcast %cst_226 : f32 to vector<2x128xf32>
    %760 = arith.mulf %759, %758 : vector<2x128xf32>
    %cst_227 = arith.constant 1.000000e+00 : f32
    %761 = vector.broadcast %cst_227 : f32 to vector<2x128xf32>
    %762 = arith.subf %760, %761 : vector<2x128xf32>
    %763 = arith.select %5, %762, %758 : vector<2x128xi1>, vector<2x128xf32>
    %764 = vector.extract_strided_slice %763 {offsets = [0, 0], sizes = [2, 32], strides = [1, 1]} : vector<2x128xf32> to vector<2x32xf32>
    %765 = vector.extract_strided_slice %763 {offsets = [0, 32], sizes = [2, 32], strides = [1, 1]} : vector<2x128xf32> to vector<2x32xf32>
    %766 = vector.extract_strided_slice %763 {offsets = [0, 64], sizes = [2, 32], strides = [1, 1]} : vector<2x128xf32> to vector<2x32xf32>
    %767 = vector.extract_strided_slice %763 {offsets = [0, 96], sizes = [2, 32], strides = [1, 1]} : vector<2x128xf32> to vector<2x32xf32>
    %768 = arith.mulf %765, %210 : vector<2x32xf32>
    %769 = arith.mulf %764, %766 : vector<2x32xf32>
    %770 = arith.addf %768, %769 : vector<2x32xf32>
    %771 = math.tanh %770 : vector<2x32xf32>
    %772 = arith.mulf %767, %771 : vector<2x32xf32>
    %cst_228 = arith.constant dense<0.000000e+00> : vector<2x128xf32>
    %773 = tpu.matmul %772, %424, %cst_228 {dimension_numbers = #tpu.dot_dimension_numbers<[1], [0], [0], [1], [0, 0, 1, 1], [], []>} : vector<2x32xf32>, vector<32x128xf32>, vector<2x128xf32> -> vector<2x128xf32>
    %774 = arith.addf %773, %423 : vector<2x128xf32>
    %775 = arith.negf %774 : vector<2x128xf32>
    %776 = math.exp %775 : vector<2x128xf32>
    %cst_229 = arith.constant 1.000000e+00 : f32
    %777 = vector.broadcast %cst_229 : f32 to vector<2x128xf32>
    %778 = arith.addf %777, %776 : vector<2x128xf32>
    %779 = arith.divf %777, %778 : vector<2x128xf32>
    %cst_230 = arith.constant 2.000000e+00 : f32
    %780 = vector.broadcast %cst_230 : f32 to vector<2x128xf32>
    %781 = arith.mulf %780, %779 : vector<2x128xf32>
    %cst_231 = arith.constant 1.000000e+00 : f32
    %782 = vector.broadcast %cst_231 : f32 to vector<2x128xf32>
    %783 = arith.subf %781, %782 : vector<2x128xf32>
    %784 = arith.select %5, %783, %779 : vector<2x128xi1>, vector<2x128xf32>
    %785 = vector.extract_strided_slice %784 {offsets = [0, 0], sizes = [2, 32], strides = [1, 1]} : vector<2x128xf32> to vector<2x32xf32>
    %786 = vector.extract_strided_slice %784 {offsets = [0, 32], sizes = [2, 32], strides = [1, 1]} : vector<2x128xf32> to vector<2x32xf32>
    %787 = vector.extract_strided_slice %784 {offsets = [0, 64], sizes = [2, 32], strides = [1, 1]} : vector<2x128xf32> to vector<2x32xf32>
    %788 = vector.extract_strided_slice %784 {offsets = [0, 96], sizes = [2, 32], strides = [1, 1]} : vector<2x128xf32> to vector<2x32xf32>
    %789 = arith.mulf %786, %401 : vector<2x32xf32>
    %790 = arith.mulf %785, %787 : vector<2x32xf32>
    %791 = arith.addf %789, %790 : vector<2x32xf32>
    %792 = math.tanh %791 : vector<2x32xf32>
    %793 = arith.mulf %788, %792 : vector<2x32xf32>
    %cst_232 = arith.constant dense<0.000000e+00> : vector<2x128xf32>
    %794 = tpu.matmul %793, %425, %cst_232 {dimension_numbers = #tpu.dot_dimension_numbers<[1], [0], [0], [1], [0, 0, 1, 1], [], []>} : vector<2x32xf32>, vector<32x128xf32>, vector<2x128xf32> -> vector<2x128xf32>
    %795 = arith.addf %794, %428 : vector<2x128xf32>
    %796 = vector.shape_cast %795 : vector<2x128xf32> to vector<1x2x128xf32>
    %c7_233 = arith.constant 7 : index
    %c0_234 = arith.constant 0 : index
    %c0_235 = arith.constant 0 : index
    %797 = vector.load %arg17[%c7_233, %c0_234, %c0_235] : memref<8x2x128xf32, #tpu.memory_space<vmem>>, vector<1x2x128xf32>
    tpu.vector_store %arg17[%c7_233, %c0_234, %c0_235], %796 {strides = array<i32>} : memref<8x2x128xf32, #tpu.memory_space<vmem>>, vector<1x2x128xf32>,
    return
  }
}

</mosaic_0001>

<llo_original>
// kernel: forward.1
$region0: #{forward.1}
  #allocation0 [shape = 'u32[]', space=smem, size = 0x4, offset = 0x4, fixed_abs, tag = 'smem constant byte address 0x4 - core index']
  #allocation1 [shape = 'u32[144,128]{1,0:T(1,128)}', space=vmem, size = 0x12000, scoped, tag = 'internal scratch']
  %s0 = inlined_call_operand.vmem [shape: f32[8,2,8], index: 0, kind: input, shape index: {}]
  %s1 = inlined_call_operand.vmem [shape: f32[8,128], index: 1, kind: input, shape index: {}]
  %s2 = inlined_call_operand.vmem [shape: f32[32,128], index: 2, kind: input, shape index: {}]
  %s3 = inlined_call_operand.vmem [shape: f32[1,128], index: 3, kind: input, shape index: {}]
  %s4 = inlined_call_operand.vmem [shape: f32[32,128], index: 4, kind: input, shape index: {}]
  %s5 = inlined_call_operand.vmem [shape: f32[32,128], index: 5, kind: input, shape index: {}]
  %s6 = inlined_call_operand.vmem [shape: f32[1,128], index: 6, kind: input, shape index: {}]
  %s7 = inlined_call_operand.vmem [shape: f32[128,128], index: 7, kind: input, shape index: {}]
  %s8 = inlined_call_operand.vmem [shape: f32[32,128], index: 8, kind: input, shape index: {}]
  %s9 = inlined_call_operand.vmem [shape: f32[1,128], index: 9, kind: input, shape index: {}]
  %s10 = inlined_call_operand.vmem [shape: f32[32,128], index: 10, kind: input, shape index: {}]
  %s11 = inlined_call_operand.vmem [shape: f32[32,128], index: 11, kind: input, shape index: {}]
  %s12 = inlined_call_operand.vmem [shape: f32[1,128], index: 12, kind: input, shape index: {}]
  %s13 = inlined_call_operand.vmem [shape: f32[32,128], index: 13, kind: input, shape index: {}]
  %s14 = inlined_call_operand.vmem [shape: f32[1,128], index: 14, kind: input, shape index: {}]
  %s15 = inlined_call_operand.vmem [shape: f32[32,3], index: 15, kind: input, shape index: {}]
  %s16 = inlined_call_operand.vmem [shape: f32[1,3], index: 16, kind: input, shape index: {}]
  %s17 = inlined_call_operand.vmem [shape: f32[8,2,128], index: 17, kind: output, shape index: {0}]
  %s18 = inlined_call_operand.hbm [shape: f32[2,3], index: 18, kind: output, shape index: {1}]
  %s19 = inlined_call_operand.hbm [shape: f32[2,32], index: 19, kind: output, shape index: {2}]
  %20 = xla_tuple %s17, %s18, %s19
  %s21 = sld [smem:[#allocation0]]
  $region94: #{forward.1} parent=0
    _
  %s23 = ssub.s32 1, %s21
  %s24 = scalar_select 0, %s23, %s21
  $region1: #{forward.1} parent=0
    #allocation2 [shape = 'u8[1024]{0}', space=vmem, size = 0x400, scoped, tag = 'output window, operand 1, single buffered']
    #allocation3 [shape = 's32[1]{0}', space=sflag, size = 0x4, scoped, tag = 'scoped memory for forward.1']
    #allocation4 [shape = 'u8[1024]{0}', space=vmem, size = 0x400, scoped, tag = 'output window, operand 2, single buffered']
    #allocation5 [shape = 's32[1]{0}', space=sflag, size = 0x4, scoped, tag = 'scoped memory for forward.1']
    %25 = vsyncpa [#allocation3], 0
    %26 = vsyncpa [#allocation5], 0
    // Predicated region
    $region2: #{forward.1} parent=1 // pred_check
      _
    $region3: #{forward.1} parent=1 // pred_check_branch
      %28 = sbr.rel (0) target = $region5
    $region4: #{forward.1} parent=1 // pred_region
      _
    $region5: #{forward.1} parent=1 // pred_fallthru
      _
    // Predicated region
    $region6: #{forward.1} parent=1 // pred_check
      _
    $region7: #{forward.1} parent=1 // pred_check_branch
      %30 = sbr.rel (0) target = $region9
    $region8: #{forward.1} parent=1 // pred_region
      _
    $region9: #{forward.1} parent=1 // pred_fallthru
      _
    // Predicated region
    $region10: #{forward.1} parent=1 // pred_check
      _
    $region11: #{forward.1} parent=1 // pred_check_branch
      %32 = sbr.rel (0) target = $region13
    $region12: #{forward.1} parent=1 // pred_region
      _
    $region13: #{forward.1} parent=1 // pred_fallthru
      _
    // Predicated region
    $region14: #{forward.1} parent=1 // pred_check
      _
    $region15: #{forward.1} parent=1 // pred_check_branch
      %34 = sbr.rel (0) target = $region17
    $region16: #{forward.1} parent=1 // pred_region
      _
    $region17: #{forward.1} parent=1 // pred_fallthru
      _
    // Predicated region
    $region18: #{forward.1} parent=1 // pred_check
      _
    $region19: #{forward.1} parent=1 // pred_check_branch
      %36 = sbr.rel (0) target = $region21
    $region20: #{forward.1} parent=1 // pred_region
      _
    $region21: #{forward.1} parent=1 // pred_fallthru
      _
    // Predicated region
    $region22: #{forward.1} parent=1 // pred_check
      _
    $region23: #{forward.1} parent=1 // pred_check_branch
      %38 = sbr.rel (0) target = $region25
    $region24: #{forward.1} parent=1 // pred_region
      _
    $region25: #{forward.1} parent=1 // pred_fallthru
      _
    // Predicated region
    $region26: #{forward.1} parent=1 // pred_check
      _
    $region27: #{forward.1} parent=1 // pred_check_branch
      %40 = sbr.rel (0) target = $region29
    $region28: #{forward.1} parent=1 // pred_region
      _
    $region29: #{forward.1} parent=1 // pred_fallthru
      _
    // Predicated region
    $region30: #{forward.1} parent=1 // pred_check
      _
    $region31: #{forward.1} parent=1 // pred_check_branch
      %42 = sbr.rel (0) target = $region33
    $region32: #{forward.1} parent=1 // pred_region
      _
    $region33: #{forward.1} parent=1 // pred_fallthru
      _
    // Predicated region
    $region34: #{forward.1} parent=1 // pred_check
      _
    $region35: #{forward.1} parent=1 // pred_check_branch
      %44 = sbr.rel (0) target = $region37
    $region36: #{forward.1} parent=1 // pred_region
      _
    $region37: #{forward.1} parent=1 // pred_fallthru
      _
    // Predicated region
    $region38: #{forward.1} parent=1 // pred_check
      _
    $region39: #{forward.1} parent=1 // pred_check_branch
      %46 = sbr.rel (0) target = $region41
    $region40: #{forward.1} parent=1 // pred_region
      _
    $region41: #{forward.1} parent=1 // pred_fallthru
      _
    // Predicated region
    $region42: #{forward.1} parent=1 // pred_check
      _
    $region43: #{forward.1} parent=1 // pred_check_branch
      %48 = sbr.rel (0) target = $region45
    $region44: #{forward.1} parent=1 // pred_region
      _
    $region45: #{forward.1} parent=1 // pred_fallthru
      _
    // Predicated region
    $region46: #{forward.1} parent=1 // pred_check
      _
    $region47: #{forward.1} parent=1 // pred_check_branch
      %50 = sbr.rel (0) target = $region49
    $region48: #{forward.1} parent=1 // pred_region
      _
    $region49: #{forward.1} parent=1 // pred_fallthru
      _
    // Predicated region
    $region50: #{forward.1} parent=1 // pred_check
      _
    $region51: #{forward.1} parent=1 // pred_check_branch
      %52 = sbr.rel (0) target = $region53
    $region52: #{forward.1} parent=1 // pred_region
      _
    $region53: #{forward.1} parent=1 // pred_fallthru
      _
    // Predicated region
    $region54: #{forward.1} parent=1 // pred_check
      _
    $region55: #{forward.1} parent=1 // pred_check_branch
      %54 = sbr.rel (0) target = $region57
    $region56: #{forward.1} parent=1 // pred_region
      _
    $region57: #{forward.1} parent=1 // pred_fallthru
      _
    // Predicated region
    $region58: #{forward.1} parent=1 // pred_check
      _
    $region59: #{forward.1} parent=1 // pred_check_branch
      %56 = sbr.rel (0) target = $region61
    $region60: #{forward.1} parent=1 // pred_region
      _
    $region61: #{forward.1} parent=1 // pred_fallthru
      _
    // Predicated region
    $region62: #{forward.1} parent=1 // pred_check
      _
    $region63: #{forward.1} parent=1 // pred_check_branch
      %58 = sbr.rel (0) target = $region65
    $region64: #{forward.1} parent=1 // pred_region
      _
    $region65: #{forward.1} parent=1 // pred_fallthru
      _
    // Predicated region
    $region66: #{forward.1} parent=1 // pred_check
      _
    $region67: #{forward.1} parent=1 // pred_check_branch
      %60 = sbr.rel (0) target = $region69
    $region68: #{forward.1} parent=1 // pred_region
      _
    $region69: #{forward.1} parent=1 // pred_fallthru
      _
    %v61 = vlaneseq
    %v62 = vand.u32 %v61, 127
    %vm63 = vcmp.ge.s32.totalorder %v62, 64
    %vm64 = vcmp.lt.s32.totalorder %v62, 96
    %vm65 = vmand %vm63, %vm64
    %v66 = vld [vmem:[%s0] sm:$0x3]
    %s67 = scalar_lea.vmem %s0, 2
    %v68 = vld [vmem:[%s67] sm:$0x3]
    %s69 = scalar_lea.vmem %s0, 4
    %v70 = vld [vmem:[%s69] sm:$0x3]
    %s71 = scalar_lea.vmem %s0, 6
    %v72 = vld [vmem:[%s71] sm:$0x3]
    %s73 = scalar_lea.vmem %s0, 8
    %v74 = vld [vmem:[%s73] sm:$0x3]
    %s75 = scalar_lea.vmem %s0, 10
    %v76 = vld [vmem:[%s75] sm:$0x3]
    %s77 = scalar_lea.vmem %s0, 12
    %v78 = vld [vmem:[%s77] sm:$0x3]
    %s79 = scalar_lea.vmem %s0, 14
    %v80 = vld [vmem:[%s79] sm:$0x3]
    %v81 = vld [vmem:[%s1] sm:$0xff]
    %v82 = vld [vmem:[%s2] sm:$0xff]
    %v83 = vld [vmem:[%s2 + $0x8] sm:$0xff]
    %v84 = vld [vmem:[%s2 + $0x10] sm:$0xff]
    %v85 = vld [vmem:[%s2 + $0x18] sm:$0xff]
    %v86 = vld [vmem:[%s3] sm:$0x1]
    %v88 = vlaneseq
    %v89 = vshrl.u32 %v88, 7
    %v90 = vsub.s32 0, %v89
    %v91 = vrot.slane %v86, %v90
    %vm93 = vcmask 64512
    %v95 = vsel %vm93, %v66, 0
    %97 = vmatprep.subr.mxu0 0.0
    %98 = vmatpush1.msra.mxu0 %v81
    %99 = vmatprep.subr.mxu0 0.0
    %100 = vmatpush1.msra.mxu0 0.0
    %101 = vmatprep.subr.mxu0 0.0
    %102 = vmatpush1.msra.mxu0 0.0
    %103 = vmatprep.subr.mxu0 0.0
    %104 = vmatpush1.msra.mxu0 0.0
    %105 = vmatprep.subr.mxu0 0.0
    %106 = vmatpush1.msra.mxu0 0.0
    %107 = vmatprep.subr.mxu0 0.0
    %108 = vmatpush1.msra.mxu0 0.0
    %109 = vmatprep.subr.mxu0 0.0
    %110 = vmatpush1.msra.mxu0 0.0
    %111 = vmatprep.subr.mxu0 0.0
    %112 = vmatpush1.msra.mxu0 0.0
    %113 = vmatprep.subr.mxu0 0.0
    %114 = vmatpush1.msra.mxu0 0.0
    %115 = vmatprep.subr.mxu0 0.0
    %116 = vmatpush1.msra.mxu0 0.0
    %117 = vmatprep.subr.mxu0 0.0
    %118 = vmatpush1.msra.mxu0 0.0
    %119 = vmatprep.subr.mxu0 0.0
    %120 = vmatpush1.msra.mxu0 0.0
    %121 = vmatprep.subr.mxu0 0.0
    %122 = vmatpush1.msra.mxu0 0.0
    %123 = vmatprep.subr.mxu0 0.0
    %124 = vmatpush1.msra.mxu0 0.0
    %125 = vmatprep.subr.mxu0 0.0
    %126 = vmatpush1.msra.mxu0 0.0
    %127 = vmatprep.subr.mxu0 0.0
    %128 = vmatpush1.msra.mxu0 0.0
    %129 = vmatprep.subr.mxu0 0.0
    %130 = vmatpush1.msra.mxu0 0.0
    %131 = vmatprep.subr.mxu0 0.0
    %132 = vmatpush1.msra.mxu0 0.0
    %133 = vmatprep.subr.mxu0 0.0
    %134 = vmatpush1.msra.mxu0 0.0
    %135 = vmatprep.subr.mxu0 0.0
    %136 = vmatpush1.msra.mxu0 0.0
    %137 = vmatprep.subr.mxu0 0.0
    %138 = vmatpush1.msra.mxu0 0.0
    %139 = vmatprep.subr.mxu0 0.0
    %140 = vmatpush1.msra.mxu0 0.0
    %141 = vmatprep.subr.mxu0 0.0
    %142 = vmatpush1.msra.mxu0 0.0
    %143 = vmatprep.subr.mxu0 0.0
    %144 = vmatpush1.msra.mxu0 0.0
    %145 = vmatprep.subr.mxu0 0.0
    %146 = vmatpush1.msra.mxu0 0.0
    %147 = vmatprep.subr.mxu0 0.0
    %148 = vmatpush1.msra.mxu0 0.0
    %149 = vmatprep.subr.mxu0 0.0
    %150 = vmatpush1.msra.mxu0 0.0
    %151 = vmatprep.subr.mxu0 0.0
    %152 = vmatpush1.msra.mxu0 0.0
    %153 = vmatprep.subr.mxu0 0.0
    %154 = vmatpush1.msra.mxu0 0.0
    %155 = vmatprep.subr.mxu0 0.0
    %156 = vmatpush1.msra.mxu0 0.0
    %157 = vmatprep.subr.mxu0 0.0
    %158 = vmatpush1.msra.mxu0 0.0
    %159 = vmatprep.subr.mxu0 0.0
    %160 = vmatpush1.msra.mxu0 0.0
    %161 = vmatprep.mubr.f32.mxu0 0.0
    %162 = vmatmul.mubr.f32.gmra.mrb[0].mxu0 %v95
    %v163 = vpop.f32.mrb[0].mxu0
    %v164 = vadd.f32 %v91, %v163
    %v165 = vpop.f32.mrb[0].mxu0
    %166 = vdwg.mxu0
    %v168 = vsel %vm93, %v68, 0
    %170 = vmatprep.subr.mxu0 0.0
    %171 = vmatpush1.msra.mxu0 %v81
    %172 = vmatprep.subr.mxu0 0.0
    %173 = vmatpush1.msra.mxu0 0.0
    %174 = vmatprep.subr.mxu0 0.0
    %175 = vmatpush1.msra.mxu0 0.0
    %176 = vmatprep.subr.mxu0 0.0
    %177 = vmatpush1.msra.mxu0 0.0
    %178 = vmatprep.subr.mxu0 0.0
    %179 = vmatpush1.msra.mxu0 0.0
    %180 = vmatprep.subr.mxu0 0.0
    %181 = vmatpush1.msra.mxu0 0.0
    %182 = vmatprep.subr.mxu0 0.0
    %183 = vmatpush1.msra.mxu0 0.0
    %184 = vmatprep.subr.mxu0 0.0
    %185 = vmatpush1.msra.mxu0 0.0
    %186 = vmatprep.subr.mxu0 0.0
    %187 = vmatpush1.msra.mxu0 0.0
    %188 = vmatprep.subr.mxu0 0.0
    %189 = vmatpush1.msra.mxu0 0.0
    %190 = vmatprep.subr.mxu0 0.0
    %191 = vmatpush1.msra.mxu0 0.0
    %192 = vmatprep.subr.mxu0 0.0
    %193 = vmatpush1.msra.mxu0 0.0
    %194 = vmatprep.subr.mxu0 0.0
    %195 = vmatpush1.msra.mxu0 0.0
    %196 = vmatprep.subr.mxu0 0.0
    %197 = vmatpush1.msra.mxu0 0.0
    %198 = vmatprep.subr.mxu0 0.0
    %199 = vmatpush1.msra.mxu0 0.0
    %200 = vmatprep.subr.mxu0 0.0
    %201 = vmatpush1.msra.mxu0 0.0
    %202 = vmatprep.subr.mxu0 0.0
    %203 = vmatpush1.msra.mxu0 0.0
    %204 = vmatprep.subr.mxu0 0.0
    %205 = vmatpush1.msra.mxu0 0.0
    %206 = vmatprep.subr.mxu0 0.0
    %207 = vmatpush1.msra.mxu0 0.0
    %208 = vmatprep.subr.mxu0 0.0
    %209 = vmatpush1.msra.mxu0 0.0
    %210 = vmatprep.subr.mxu0 0.0
    %211 = vmatpush1.msra.mxu0 0.0
    %212 = vmatprep.subr.mxu0 0.0
    %213 = vmatpush1.msra.mxu0 0.0
    %214 = vmatprep.subr.mxu0 0.0
    %215 = vmatpush1.msra.mxu0 0.0
    %216 = vmatprep.subr.mxu0 0.0
    %217 = vmatpush1.msra.mxu0 0.0
    %218 = vmatprep.subr.mxu0 0.0
    %219 = vmatpush1.msra.mxu0 0.0
    %220 = vmatprep.subr.mxu0 0.0
    %221 = vmatpush1.msra.mxu0 0.0
    %222 = vmatprep.subr.mxu0 0.0
    %223 = vmatpush1.msra.mxu0 0.0
    %224 = vmatprep.subr.mxu0 0.0
    %225 = vmatpush1.msra.mxu0 0.0
    %226 = vmatprep.subr.mxu0 0.0
    %227 = vmatpush1.msra.mxu0 0.0
    %228 = vmatprep.subr.mxu0 0.0
    %229 = vmatpush1.msra.mxu0 0.0
    %230 = vmatprep.subr.mxu0 0.0
    %231 = vmatpush1.msra.mxu0 0.0
    %232 = vmatprep.subr.mxu0 0.0
    %233 = vmatpush1.msra.mxu0 0.0
    %234 = vmatprep.mubr.f32.mxu0 0.0
    %235 = vmatmul.mubr.f32.gmra.mrb[0].mxu0 %v168
    %v236 = vpop.f32.mrb[0].mxu0
    %v237 = vadd.f32 %v91, %v236
    %v238 = vpop.f32.mrb[0].mxu0
    %239 = vdwg.mxu0
    %v241 = vsel %vm93, %v70, 0
    %243 = vmatprep.subr.mxu0 0.0
    %244 = vmatpush1.msra.mxu0 %v81
    %245 = vmatprep.subr.mxu0 0.0
    %246 = vmatpush1.msra.mxu0 0.0
    %247 = vmatprep.subr.mxu0 0.0
    %248 = vmatpush1.msra.mxu0 0.0
    %249 = vmatprep.subr.mxu0 0.0
    %250 = vmatpush1.msra.mxu0 0.0
    %251 = vmatprep.subr.mxu0 0.0
    %252 = vmatpush1.msra.mxu0 0.0
    %253 = vmatprep.subr.mxu0 0.0
    %254 = vmatpush1.msra.mxu0 0.0
    %255 = vmatprep.subr.mxu0 0.0
    %256 = vmatpush1.msra.mxu0 0.0
    %257 = vmatprep.subr.mxu0 0.0
    %258 = vmatpush1.msra.mxu0 0.0
    %259 = vmatprep.subr.mxu0 0.0
    %260 = vmatpush1.msra.mxu0 0.0
    %261 = vmatprep.subr.mxu0 0.0
    %262 = vmatpush1.msra.mxu0 0.0
    %263 = vmatprep.subr.mxu0 0.0
    %264 = vmatpush1.msra.mxu0 0.0
    %265 = vmatprep.subr.mxu0 0.0
    %266 = vmatpush1.msra.mxu0 0.0
    %267 = vmatprep.subr.mxu0 0.0
    %268 = vmatpush1.msra.mxu0 0.0
    %269 = vmatprep.subr.mxu0 0.0
    %270 = vmatpush1.msra.mxu0 0.0
    %271 = vmatprep.subr.mxu0 0.0
    %272 = vmatpush1.msra.mxu0 0.0
    %273 = vmatprep.subr.mxu0 0.0
    %274 = vmatpush1.msra.mxu0 0.0
    %275 = vmatprep.subr.mxu0 0.0
    %276 = vmatpush1.msra.mxu0 0.0
    %277 = vmatprep.subr.mxu0 0.0
    %278 = vmatpush1.msra.mxu0 0.0
    %279 = vmatprep.subr.mxu0 0.0
    %280 = vmatpush1.msra.mxu0 0.0
    %281 = vmatprep.subr.mxu0 0.0
    %282 = vmatpush1.msra.mxu0 0.0
    %283 = vmatprep.subr.mxu0 0.0
    %284 = vmatpush1.msra.mxu0 0.0
    %285 = vmatprep.subr.mxu0 0.0
    %286 = vmatpush1.msra.mxu0 0.0
    %287 = vmatprep.subr.mxu0 0.0
    %288 = vmatpush1.msra.mxu0 0.0
    %289 = vmatprep.subr.mxu0 0.0
    %290 = vmatpush1.msra.mxu0 0.0
    %291 = vmatprep.subr.mxu0 0.0
    %292 = vmatpush1.msra.mxu0 0.0
    %293 = vmatprep.subr.mxu0 0.0
    %294 = vmatpush1.msra.mxu0 0.0
    %295 = vmatprep.subr.mxu0 0.0
    %296 = vmatpush1.msra.mxu0 0.0
    %297 = vmatprep.subr.mxu0 0.0
    %298 = vmatpush1.msra.mxu0 0.0
    %299 = vmatprep.subr.mxu0 0.0
    %300 = vmatpush1.msra.mxu0 0.0
    %301 = vmatprep.subr.mxu0 0.0
    %302 = vmatpush1.msra.mxu0 0.0
    %303 = vmatprep.subr.mxu0 0.0
    %304 = vmatpush1.msra.mxu0 0.0
    %305 = vmatprep.subr.mxu0 0.0
    %306 = vmatpush1.msra.mxu0 0.0
    %307 = vmatprep.mubr.f32.mxu0 0.0
    %308 = vmatmul.mubr.f32.gmra.mrb[0].mxu0 %v241
    %v309 = vpop.f32.mrb[0].mxu0
    %v310 = vadd.f32 %v91, %v309
    %v311 = vpop.f32.mrb[0].mxu0
    %312 = vdwg.mxu0
    %v314 = vsel %vm93, %v72, 0
    %316 = vmatprep.subr.mxu0 0.0
    %317 = vmatpush1.msra.mxu0 %v81
    %318 = vmatprep.subr.mxu0 0.0
    %319 = vmatpush1.msra.mxu0 0.0
    %320 = vmatprep.subr.mxu0 0.0
    %321 = vmatpush1.msra.mxu0 0.0
    %322 = vmatprep.subr.mxu0 0.0
    %323 = vmatpush1.msra.mxu0 0.0
    %324 = vmatprep.subr.mxu0 0.0
    %325 = vmatpush1.msra.mxu0 0.0
    %326 = vmatprep.subr.mxu0 0.0
    %327 = vmatpush1.msra.mxu0 0.0
    %328 = vmatprep.subr.mxu0 0.0
    %329 = vmatpush1.msra.mxu0 0.0
    %330 = vmatprep.subr.mxu0 0.0
    %331 = vmatpush1.msra.mxu0 0.0
    %332 = vmatprep.subr.mxu0 0.0
    %333 = vmatpush1.msra.mxu0 0.0
    %334 = vmatprep.subr.mxu0 0.0
    %335 = vmatpush1.msra.mxu0 0.0
    %336 = vmatprep.subr.mxu0 0.0
    %337 = vmatpush1.msra.mxu0 0.0
    %338 = vmatprep.subr.mxu0 0.0
    %339 = vmatpush1.msra.mxu0 0.0
    %340 = vmatprep.subr.mxu0 0.0
    %341 = vmatpush1.msra.mxu0 0.0
    %342 = vmatprep.subr.mxu0 0.0
    %343 = vmatpush1.msra.mxu0 0.0
    %344 = vmatprep.subr.mxu0 0.0
    %345 = vmatpush1.msra.mxu0 0.0
    %346 = vmatprep.subr.mxu0 0.0
    %347 = vmatpush1.msra.mxu0 0.0
    %348 = vmatprep.subr.mxu0 0.0
    %349 = vmatpush1.msra.mxu0 0.0
    %350 = vmatprep.subr.mxu0 0.0
    %351 = vmatpush1.msra.mxu0 0.0
    %352 = vmatprep.subr.mxu0 0.0
    %353 = vmatpush1.msra.mxu0 0.0
    %354 = vmatprep.subr.mxu0 0.0
    %355 = vmatpush1.msra.mxu0 0.0
    %356 = vmatprep.subr.mxu0 0.0
    %357 = vmatpush1.msra.mxu0 0.0
    %358 = vmatprep.subr.mxu0 0.0
    %359 = vmatpush1.msra.mxu0 0.0
    %360 = vmatprep.subr.mxu0 0.0
    %361 = vmatpush1.msra.mxu0 0.0
    %362 = vmatprep.subr.mxu0 0.0
    %363 = vmatpush1.msra.mxu0 0.0
    %364 = vmatprep.subr.mxu0 0.0
    %365 = vmatpush1.msra.mxu0 0.0
    %366 = vmatprep.subr.mxu0 0.0
    %367 = vmatpush1.msra.mxu0 0.0
    %368 = vmatprep.subr.mxu0 0.0
    %369 = vmatpush1.msra.mxu0 0.0
    %370 = vmatprep.subr.mxu0 0.0
    %371 = vmatpush1.msra.mxu0 0.0
    %372 = vmatprep.subr.mxu0 0.0
    %373 = vmatpush1.msra.mxu0 0.0
    %374 = vmatprep.subr.mxu0 0.0
    %375 = vmatpush1.msra.mxu0 0.0
    %376 = vmatprep.subr.mxu0 0.0
    %377 = vmatpush1.msra.mxu0 0.0
    %378 = vmatprep.subr.mxu0 0.0
    %379 = vmatpush1.msra.mxu0 0.0
    %380 = vmatprep.mubr.f32.mxu0 0.0
    %381 = vmatmul.mubr.f32.gmra.mrb[0].mxu0 %v314
    %v382 = vpop.f32.mrb[0].mxu0
    %v383 = vadd.f32 %v91, %v382
    %v384 = vpop.f32.mrb[0].mxu0
    %385 = vdwg.mxu0
    %v387 = vsel %vm93, %v74, 0
    %389 = vmatprep.subr.mxu0 0.0
    %390 = vmatpush1.msra.mxu0 %v81
    %391 = vmatprep.subr.mxu0 0.0
    %392 = vmatpush1.msra.mxu0 0.0
    %393 = vmatprep.subr.mxu0 0.0
    %394 = vmatpush1.msra.mxu0 0.0
    %395 = vmatprep.subr.mxu0 0.0
    %396 = vmatpush1.msra.mxu0 0.0
    %397 = vmatprep.subr.mxu0 0.0
    %398 = vmatpush1.msra.mxu0 0.0
    %399 = vmatprep.subr.mxu0 0.0
    %400 = vmatpush1.msra.mxu0 0.0
    %401 = vmatprep.subr.mxu0 0.0
    %402 = vmatpush1.msra.mxu0 0.0
    %403 = vmatprep.subr.mxu0 0.0
    %404 = vmatpush1.msra.mxu0 0.0
    %405 = vmatprep.subr.mxu0 0.0
    %406 = vmatpush1.msra.mxu0 0.0
    %407 = vmatprep.subr.mxu0 0.0
    %408 = vmatpush1.msra.mxu0 0.0
    %409 = vmatprep.subr.mxu0 0.0
    %410 = vmatpush1.msra.mxu0 0.0
    %411 = vmatprep.subr.mxu0 0.0
    %412 = vmatpush1.msra.mxu0 0.0
    %413 = vmatprep.subr.mxu0 0.0
    %414 = vmatpush1.msra.mxu0 0.0
    %415 = vmatprep.subr.mxu0 0.0
    %416 = vmatpush1.msra.mxu0 0.0
    %417 = vmatprep.subr.mxu0 0.0
    %418 = vmatpush1.msra.mxu0 0.0
    %419 = vmatprep.subr.mxu0 0.0
    %420 = vmatpush1.msra.mxu0 0.0
    %421 = vmatprep.subr.mxu0 0.0
    %422 = vmatpush1.msra.mxu0 0.0
    %423 = vmatprep.subr.mxu0 0.0
    %424 = vmatpush1.msra.mxu0 0.0
    %425 = vmatprep.subr.mxu0 0.0
    %426 = vmatpush1.msra.mxu0 0.0
    %427 = vmatprep.subr.mxu0 0.0
    %428 = vmatpush1.msra.mxu0 0.0
    %429 = vmatprep.subr.mxu0 0.0
    %430 = vmatpush1.msra.mxu0 0.0
    %431 = vmatprep.subr.mxu0 0.0
    %432 = vmatpush1.msra.mxu0 0.0
    %433 = vmatprep.subr.mxu0 0.0
    %434 = vmatpush1.msra.mxu0 0.0
    %435 = vmatprep.subr.mxu0 0.0
    %436 = vmatpush1.msra.mxu0 0.0
    %437 = vmatprep.subr.mxu0 0.0
    %438 = vmatpush1.msra.mxu0 0.0
    %439 = vmatprep.subr.mxu0 0.0
    %440 = vmatpush1.msra.mxu0 0.0
    %441 = vmatprep.subr.mxu0 0.0
    %442 = vmatpush1.msra.mxu0 0.0
    %443 = vmatprep.subr.mxu0 0.0
    %444 = vmatpush1.msra.mxu0 0.0
    %445 = vmatprep.subr.mxu0 0.0
    %446 = vmatpush1.msra.mxu0 0.0
    %447 = vmatprep.subr.mxu0 0.0
    %448 = vmatpush1.msra.mxu0 0.0
    %449 = vmatprep.subr.mxu0 0.0
    %450 = vmatpush1.msra.mxu0 0.0
    %451 = vmatprep.subr.mxu0 0.0
    %452 = vmatpush1.msra.mxu0 0.0
    %453 = vmatprep.mubr.f32.mxu0 0.0
    %454 = vmatmul.mubr.f32.gmra.mrb[0].mxu0 %v387
    %v455 = vpop.f32.mrb[0].mxu0
    %v456 = vadd.f32 %v91, %v455
    %v457 = vpop.f32.mrb[0].mxu0
    %458 = vdwg.mxu0
    %v460 = vsel %vm93, %v76, 0
    %462 = vmatprep.subr.mxu0 0.0
    %463 = vmatpush1.msra.mxu0 %v81
    %464 = vmatprep.subr.mxu0 0.0
    %465 = vmatpush1.msra.mxu0 0.0
    %466 = vmatprep.subr.mxu0 0.0
    %467 = vmatpush1.msra.mxu0 0.0
    %468 = vmatprep.subr.mxu0 0.0
    %469 = vmatpush1.msra.mxu0 0.0
    %470 = vmatprep.subr.mxu0 0.0
    %471 = vmatpush1.msra.mxu0 0.0
    %472 = vmatprep.subr.mxu0 0.0
    %473 = vmatpush1.msra.mxu0 0.0
    %474 = vmatprep.subr.mxu0 0.0
    %475 = vmatpush1.msra.mxu0 0.0
    %476 = vmatprep.subr.mxu0 0.0
    %477 = vmatpush1.msra.mxu0 0.0
    %478 = vmatprep.subr.mxu0 0.0
    %479 = vmatpush1.msra.mxu0 0.0
    %480 = vmatprep.subr.mxu0 0.0
    %481 = vmatpush1.msra.mxu0 0.0
    %482 = vmatprep.subr.mxu0 0.0
    %483 = vmatpush1.msra.mxu0 0.0
    %484 = vmatprep.subr.mxu0 0.0
    %485 = vmatpush1.msra.mxu0 0.0
    %486 = vmatprep.subr.mxu0 0.0
    %487 = vmatpush1.msra.mxu0 0.0
    %488 = vmatprep.subr.mxu0 0.0
    %489 = vmatpush1.msra.mxu0 0.0
    %490 = vmatprep.subr.mxu0 0.0
    %491 = vmatpush1.msra.mxu0 0.0
    %492 = vmatprep.subr.mxu0 0.0
    %493 = vmatpush1.msra.mxu0 0.0
    %494 = vmatprep.subr.mxu0 0.0
    %495 = vmatpush1.msra.mxu0 0.0
    %496 = vmatprep.subr.mxu0 0.0
    %497 = vmatpush1.msra.mxu0 0.0
    %498 = vmatprep.subr.mxu0 0.0
    %499 = vmatpush1.msra.mxu0 0.0
    %500 = vmatprep.subr.mxu0 0.0
    %501 = vmatpush1.msra.mxu0 0.0
    %502 = vmatprep.subr.mxu0 0.0
    %503 = vmatpush1.msra.mxu0 0.0
    %504 = vmatprep.subr.mxu0 0.0
    %505 = vmatpush1.msra.mxu0 0.0
    %506 = vmatprep.subr.mxu0 0.0
    %507 = vmatpush1.msra.mxu0 0.0
    %508 = vmatprep.subr.mxu0 0.0
    %509 = vmatpush1.msra.mxu0 0.0
    %510 = vmatprep.subr.mxu0 0.0
    %511 = vmatpush1.msra.mxu0 0.0
    %512 = vmatprep.subr.mxu0 0.0
    %513 = vmatpush1.msra.mxu0 0.0
    %514 = vmatprep.subr.mxu0 0.0
    %515 = vmatpush1.msra.mxu0 0.0
    %516 = vmatprep.subr.mxu0 0.0
    %517 = vmatpush1.msra.mxu0 0.0
    %518 = vmatprep.subr.mxu0 0.0
    %519 = vmatpush1.msra.mxu0 0.0
    %520 = vmatprep.subr.mxu0 0.0
    %521 = vmatpush1.msra.mxu0 0.0
    %522 = vmatprep.subr.mxu0 0.0
    %523 = vmatpush1.msra.mxu0 0.0
    %524 = vmatprep.subr.mxu0 0.0
    %525 = vmatpush1.msra.mxu0 0.0
    %526 = vmatprep.mubr.f32.mxu0 0.0
    %527 = vmatmul.mubr.f32.gmra.mrb[0].mxu0 %v460
    %v528 = vpop.f32.mrb[0].mxu0
    %v529 = vadd.f32 %v91, %v528
    %v530 = vpop.f32.mrb[0].mxu0
    %531 = vdwg.mxu0
    %v533 = vsel %vm93, %v78, 0
    %535 = vmatprep.subr.mxu0 0.0
    %536 = vmatpush1.msra.mxu0 %v81
    %537 = vmatprep.subr.mxu0 0.0
    %538 = vmatpush1.msra.mxu0 0.0
    %539 = vmatprep.subr.mxu0 0.0
    %540 = vmatpush1.msra.mxu0 0.0
    %541 = vmatprep.subr.mxu0 0.0
    %542 = vmatpush1.msra.mxu0 0.0
    %543 = vmatprep.subr.mxu0 0.0
    %544 = vmatpush1.msra.mxu0 0.0
    %545 = vmatprep.subr.mxu0 0.0
    %546 = vmatpush1.msra.mxu0 0.0
    %547 = vmatprep.subr.mxu0 0.0
    %548 = vmatpush1.msra.mxu0 0.0
    %549 = vmatprep.subr.mxu0 0.0
    %550 = vmatpush1.msra.mxu0 0.0
    %551 = vmatprep.subr.mxu0 0.0
    %552 = vmatpush1.msra.mxu0 0.0
    %553 = vmatprep.subr.mxu0 0.0
    %554 = vmatpush1.msra.mxu0 0.0
    %555 = vmatprep.subr.mxu0 0.0
    %556 = vmatpush1.msra.mxu0 0.0
    %557 = vmatprep.subr.mxu0 0.0
    %558 = vmatpush1.msra.mxu0 0.0
    %559 = vmatprep.subr.mxu0 0.0
    %560 = vmatpush1.msra.mxu0 0.0
    %561 = vmatprep.subr.mxu0 0.0
    %562 = vmatpush1.msra.mxu0 0.0
    %563 = vmatprep.subr.mxu0 0.0
    %564 = vmatpush1.msra.mxu0 0.0
    %565 = vmatprep.subr.mxu0 0.0
    %566 = vmatpush1.msra.mxu0 0.0
    %567 = vmatprep.subr.mxu0 0.0
    %568 = vmatpush1.msra.mxu0 0.0
    %569 = vmatprep.subr.mxu0 0.0
    %570 = vmatpush1.msra.mxu0 0.0
    %571 = vmatprep.subr.mxu0 0.0
    %572 = vmatpush1.msra.mxu0 0.0
    %573 = vmatprep.subr.mxu0 0.0
    %574 = vmatpush1.msra.mxu0 0.0
    %575 = vmatprep.subr.mxu0 0.0
    %576 = vmatpush1.msra.mxu0 0.0
    %577 = vmatprep.subr.mxu0 0.0
    %578 = vmatpush1.msra.mxu0 0.0
    %579 = vmatprep.subr.mxu0 0.0
    %580 = vmatpush1.msra.mxu0 0.0
    %581 = vmatprep.subr.mxu0 0.0
    %582 = vmatpush1.msra.mxu0 0.0
    %583 = vmatprep.subr.mxu0 0.0
    %584 = vmatpush1.msra.mxu0 0.0
    %585 = vmatprep.subr.mxu0 0.0
    %586 = vmatpush1.msra.mxu0 0.0
    %587 = vmatprep.subr.mxu0 0.0
    %588 = vmatpush1.msra.mxu0 0.0
    %589 = vmatprep.subr.mxu0 0.0
    %590 = vmatpush1.msra.mxu0 0.0
    %591 = vmatprep.subr.mxu0 0.0
    %592 = vmatpush1.msra.mxu0 0.0
    %593 = vmatprep.subr.mxu0 0.0
    %594 = vmatpush1.msra.mxu0 0.0
    %595 = vmatprep.subr.mxu0 0.0
    %596 = vmatpush1.msra.mxu0 0.0
    %597 = vmatprep.subr.mxu0 0.0
    %598 = vmatpush1.msra.mxu0 0.0
    %599 = vmatprep.mubr.f32.mxu0 0.0
    %600 = vmatmul.mubr.f32.gmra.mrb[0].mxu0 %v533
    %v601 = vpop.f32.mrb[0].mxu0
    %v602 = vadd.f32 %v91, %v601
    %v603 = vpop.f32.mrb[0].mxu0
    %604 = vdwg.mxu0
    %v606 = vsel %vm93, %v80, 0
    %608 = vmatprep.subr.mxu0 0.0
    %609 = vmatpush1.msra.mxu0 %v81
    %610 = vmatprep.subr.mxu0 0.0
    %611 = vmatpush1.msra.mxu0 0.0
    %612 = vmatprep.subr.mxu0 0.0
    %613 = vmatpush1.msra.mxu0 0.0
    %614 = vmatprep.subr.mxu0 0.0
    %615 = vmatpush1.msra.mxu0 0.0
    %616 = vmatprep.subr.mxu0 0.0
    %617 = vmatpush1.msra.mxu0 0.0
    %618 = vmatprep.subr.mxu0 0.0
    %619 = vmatpush1.msra.mxu0 0.0
    %620 = vmatprep.subr.mxu0 0.0
    %621 = vmatpush1.msra.mxu0 0.0
    %622 = vmatprep.subr.mxu0 0.0
    %623 = vmatpush1.msra.mxu0 0.0
    %624 = vmatprep.subr.mxu0 0.0
    %625 = vmatpush1.msra.mxu0 0.0
    %626 = vmatprep.subr.mxu0 0.0
    %627 = vmatpush1.msra.mxu0 0.0
    %628 = vmatprep.subr.mxu0 0.0
    %629 = vmatpush1.msra.mxu0 0.0
    %630 = vmatprep.subr.mxu0 0.0
    %631 = vmatpush1.msra.mxu0 0.0
    %632 = vmatprep.subr.mxu0 0.0
    %633 = vmatpush1.msra.mxu0 0.0
    %634 = vmatprep.subr.mxu0 0.0
    %635 = vmatpush1.msra.mxu0 0.0
    %636 = vmatprep.subr.mxu0 0.0
    %637 = vmatpush1.msra.mxu0 0.0
    %638 = vmatprep.subr.mxu0 0.0
    %639 = vmatpush1.msra.mxu0 0.0
    %640 = vmatprep.subr.mxu0 0.0
    %641 = vmatpush1.msra.mxu0 0.0
    %642 = vmatprep.subr.mxu0 0.0
    %643 = vmatpush1.msra.mxu0 0.0
    %644 = vmatprep.subr.mxu0 0.0
    %645 = vmatpush1.msra.mxu0 0.0
    %646 = vmatprep.subr.mxu0 0.0
    %647 = vmatpush1.msra.mxu0 0.0
    %648 = vmatprep.subr.mxu0 0.0
    %649 = vmatpush1.msra.mxu0 0.0
    %650 = vmatprep.subr.mxu0 0.0
    %651 = vmatpush1.msra.mxu0 0.0
    %652 = vmatprep.subr.mxu0 0.0
    %653 = vmatpush1.msra.mxu0 0.0
    %654 = vmatprep.subr.mxu0 0.0
    %655 = vmatpush1.msra.mxu0 0.0
    %656 = vmatprep.subr.mxu0 0.0
    %657 = vmatpush1.msra.mxu0 0.0
    %658 = vmatprep.subr.mxu0 0.0
    %659 = vmatpush1.msra.mxu0 0.0
    %660 = vmatprep.subr.mxu0 0.0
    %661 = vmatpush1.msra.mxu0 0.0
    %662 = vmatprep.subr.mxu0 0.0
    %663 = vmatpush1.msra.mxu0 0.0
    %664 = vmatprep.subr.mxu0 0.0
    %665 = vmatpush1.msra.mxu0 0.0
    %666 = vmatprep.subr.mxu0 0.0
    %667 = vmatpush1.msra.mxu0 0.0
    %668 = vmatprep.subr.mxu0 0.0
    %669 = vmatpush1.msra.mxu0 0.0
    %670 = vmatprep.subr.mxu0 0.0
    %671 = vmatpush1.msra.mxu0 0.0
    %672 = vmatprep.mubr.f32.mxu0 0.0
    %673 = vmatmul.mubr.f32.gmra.mrb[0].mxu0 %v606
    %v674 = vpop.f32.mrb[0].mxu0
    %v675 = vadd.f32 %v91, %v674
    %v676 = vpop.f32.mrb[0].mxu0
    %677 = vdwg.mxu0
    %vm678 = vcmask 261120
    %v680 = vsel %vm678, 0.0, 0
    %682 = vmatprep.subr.mxu0 0.0
    %683 = vmatpush1.msra.mxu0 %v82
    %684 = vmatprep.subr.mxu0 0.0
    %685 = vmatpush1.msra.mxu0 %v83
    %686 = vmatprep.subr.mxu0 0.0
    %687 = vmatpush1.msra.mxu0 %v84
    %688 = vmatprep.subr.mxu0 0.0
    %689 = vmatpush1.msra.mxu0 %v85
    %690 = vmatprep.subr.mxu0 0.0
    %691 = vmatpush1.msra.mxu0 0.0
    %692 = vmatprep.subr.mxu0 0.0
    %693 = vmatpush1.msra.mxu0 0.0
    %694 = vmatprep.subr.mxu0 0.0
    %695 = vmatpush1.msra.mxu0 0.0
    %696 = vmatprep.subr.mxu0 0.0
    %697 = vmatpush1.msra.mxu0 0.0
    %698 = vmatprep.subr.mxu0 0.0
    %699 = vmatpush1.msra.mxu0 0.0
    %700 = vmatprep.subr.mxu0 0.0
    %701 = vmatpush1.msra.mxu0 0.0
    %702 = vmatprep.subr.mxu0 0.0
    %703 = vmatpush1.msra.mxu0 0.0
    %704 = vmatprep.subr.mxu0 0.0
    %705 = vmatpush1.msra.mxu0 0.0
    %706 = vmatprep.subr.mxu0 0.0
    %707 = vmatpush1.msra.mxu0 0.0
    %708 = vmatprep.subr.mxu0 0.0
    %709 = vmatpush1.msra.mxu0 0.0
    %710 = vmatprep.subr.mxu0 0.0
    %711 = vmatpush1.msra.mxu0 0.0
    %712 = vmatprep.subr.mxu0 0.0
    %713 = vmatpush1.msra.mxu0 0.0
    %714 = vmatprep.subr.mxu0 0.0
    %715 = vmatpush1.msra.mxu0 0.0
    %716 = vmatprep.subr.mxu0 0.0
    %717 = vmatpush1.msra.mxu0 0.0
    %718 = vmatprep.subr.mxu0 0.0
    %719 = vmatpush1.msra.mxu0 0.0
    %720 = vmatprep.subr.mxu0 0.0
    %721 = vmatpush1.msra.mxu0 0.0
    %722 = vmatprep.subr.mxu0 0.0
    %723 = vmatpush1.msra.mxu0 0.0
    %724 = vmatprep.subr.mxu0 0.0
    %725 = vmatpush1.msra.mxu0 0.0
    %726 = vmatprep.subr.mxu0 0.0
    %727 = vmatpush1.msra.mxu0 0.0
    %728 = vmatprep.subr.mxu0 0.0
    %729 = vmatpush1.msra.mxu0 0.0
    %730 = vmatprep.subr.mxu0 0.0
    %731 = vmatpush1.msra.mxu0 0.0
    %732 = vmatprep.subr.mxu0 0.0
    %733 = vmatpush1.msra.mxu0 0.0
    %734 = vmatprep.subr.mxu0 0.0
    %735 = vmatpush1.msra.mxu0 0.0
    %736 = vmatprep.subr.mxu0 0.0
    %737 = vmatpush1.msra.mxu0 0.0
    %738 = vmatprep.subr.mxu0 0.0
    %739 = vmatpush1.msra.mxu0 0.0
    %740 = vmatprep.subr.mxu0 0.0
    %741 = vmatpush1.msra.mxu0 0.0
    %742 = vmatprep.subr.mxu0 0.0
    %743 = vmatpush1.msra.mxu0 0.0
    %744 = vmatprep.subr.mxu0 0.0
    %745 = vmatpush1.msra.mxu0 0.0
    %746 = vmatprep.mubr.f32.mxu0 0.0
    %747 = vmatmul.mubr.f32.gmra.mrb[0].mxu0 %v680
    %v748 = vpop.f32.mrb[0].mxu0
    %v749 = vadd.f32 0.0, %v748
    %v750 = vpop.f32.mrb[0].mxu0
    %751 = vdwg.mxu0
    %v752 = vadd.f32 %v164, %v749
    %v753 = vxor.u32 %v752, 2147483648
    %v754 = vmul.f32 %v753, 1.442695
    %v755 = vpow.pop %v754
    %v756 = vadd.f32 %v755, 1.0
    %v757 = vrcp.pop %v756
    %v758 = vmul.f32 1.0, %v757
    %v759 = vmul.f32 %v758, 2.0
    %v760 = vsub.f32 %v759, 1.0
    %v761 = vsel %vm65, %v760, %v758
    %v762 = vmul.f32 %v761, 0.0
    %764 = vrot.lane.b32.xlu0 %v761, 64
    %v765 = vpop.permute.xlu0 %764
    %v767 = vmul.f32 %v761, %v765
    %769 = vrot.lane.b32.xlu0 %v767, 32
    %v770 = vpop.permute.xlu0 %769
    %v772 = vadd.f32 %v762, %v770
    %v773 = vtanh.pop %v772
    %775 = vrot.lane.b32.xlu0 %v773, 64
    %v776 = vpop.permute.xlu0 %775
    %v778 = vmul.f32 %v761, %v776
    %780 = vrot.lane.b32.xlu0 %v778, 32
    %v781 = vpop.permute.xlu0 %780
    %v782 = vsel %vm678, %v781, 0
    %784 = vmatprep.subr.mxu0 0.0
    %785 = vmatpush1.msra.mxu0 %v82
    %786 = vmatprep.subr.mxu0 0.0
    %787 = vmatpush1.msra.mxu0 %v83
    %788 = vmatprep.subr.mxu0 0.0
    %789 = vmatpush1.msra.mxu0 %v84
    %790 = vmatprep.subr.mxu0 0.0
    %791 = vmatpush1.msra.mxu0 %v85
    %792 = vmatprep.subr.mxu0 0.0
    %793 = vmatpush1.msra.mxu0 0.0
    %794 = vmatprep.subr.mxu0 0.0
    %795 = vmatpush1.msra.mxu0 0.0
    %796 = vmatprep.subr.mxu0 0.0
    %797 = vmatpush1.msra.mxu0 0.0
    %798 = vmatprep.subr.mxu0 0.0
    %799 = vmatpush1.msra.mxu0 0.0
    %800 = vmatprep.subr.mxu0 0.0
    %801 = vmatpush1.msra.mxu0 0.0
    %802 = vmatprep.subr.mxu0 0.0
    %803 = vmatpush1.msra.mxu0 0.0
    %804 = vmatprep.subr.mxu0 0.0
    %805 = vmatpush1.msra.mxu0 0.0
    %806 = vmatprep.subr.mxu0 0.0
    %807 = vmatpush1.msra.mxu0 0.0
    %808 = vmatprep.subr.mxu0 0.0
    %809 = vmatpush1.msra.mxu0 0.0
    %810 = vmatprep.subr.mxu0 0.0
    %811 = vmatpush1.msra.mxu0 0.0
    %812 = vmatprep.subr.mxu0 0.0
    %813 = vmatpush1.msra.mxu0 0.0
    %814 = vmatprep.subr.mxu0 0.0
    %815 = vmatpush1.msra.mxu0 0.0
    %816 = vmatprep.subr.mxu0 0.0
    %817 = vmatpush1.msra.mxu0 0.0
    %818 = vmatprep.subr.mxu0 0.0
    %819 = vmatpush1.msra.mxu0 0.0
    %820 = vmatprep.subr.mxu0 0.0
    %821 = vmatpush1.msra.mxu0 0.0
    %822 = vmatprep.subr.mxu0 0.0
    %823 = vmatpush1.msra.mxu0 0.0
    %824 = vmatprep.subr.mxu0 0.0
    %825 = vmatpush1.msra.mxu0 0.0
    %826 = vmatprep.subr.mxu0 0.0
    %827 = vmatpush1.msra.mxu0 0.0
    %828 = vmatprep.subr.mxu0 0.0
    %829 = vmatpush1.msra.mxu0 0.0
    %830 = vmatprep.subr.mxu0 0.0
    %831 = vmatpush1.msra.mxu0 0.0
    %832 = vmatprep.subr.mxu0 0.0
    %833 = vmatpush1.msra.mxu0 0.0
    %834 = vmatprep.subr.mxu0 0.0
    %835 = vmatpush1.msra.mxu0 0.0
    %836 = vmatprep.subr.mxu0 0.0
    %837 = vmatpush1.msra.mxu0 0.0
    %838 = vmatprep.subr.mxu0 0.0
    %839 = vmatpush1.msra.mxu0 0.0
    %840 = vmatprep.subr.mxu0 0.0
    %841 = vmatpush1.msra.mxu0 0.0
    %842 = vmatprep.subr.mxu0 0.0
    %843 = vmatpush1.msra.mxu0 0.0
    %844 = vmatprep.subr.mxu0 0.0
    %845 = vmatpush1.msra.mxu0 0.0
    %846 = vmatprep.subr.mxu0 0.0
    %847 = vmatpush1.msra.mxu0 0.0
    %848 = vmatprep.mubr.f32.mxu0 0.0
    %849 = vmatmul.mubr.f32.gmra.mrb[0].mxu0 %v782
    %v850 = vpop.f32.mrb[0].mxu0
    %v851 = vadd.f32 0.0, %v850
    %v852 = vpop.f32.mrb[0].mxu0
    %853 = vdwg.mxu0
    %v854 = vadd.f32 %v237, %v851
    %v855 = vxor.u32 %v854, 2147483648
    %v856 = vmul.f32 %v855, 1.442695
    %v857 = vpow.pop %v856
    %v858 = vadd.f32 %v857, 1.0
    %v859 = vrcp.pop %v858
    %v860 = vmul.f32 1.0, %v859
    %v861 = vmul.f32 %v860, 2.0
    %v862 = vsub.f32 %v861, 1.0
    %v863 = vsel %vm65, %v862, %v860
    %v864 = vmul.f32 %v863, %v772
    %866 = vrot.lane.b32.xlu0 %v863, 64
    %v867 = vpop.permute.xlu0 %866
    %v869 = vmul.f32 %v863, %v867
    %871 = vrot.lane.b32.xlu0 %v869, 32
    %v872 = vpop.permute.xlu0 %871
    %v874 = vadd.f32 %v864, %v872
    %v875 = vtanh.pop %v874
    %877 = vrot.lane.b32.xlu0 %v875, 64
    %v878 = vpop.permute.xlu0 %877
    %v880 = vmul.f32 %v863, %v878
    %882 = vrot.lane.b32.xlu0 %v880, 32
    %v883 = vpop.permute.xlu0 %882
    %v884 = vsel %vm678, %v883, 0
    %886 = vmatprep.subr.mxu0 0.0
    %887 = vmatpush1.msra.mxu0 %v82
    %888 = vmatprep.subr.mxu0 0.0
    %889 = vmatpush1.msra.mxu0 %v83
    %890 = vmatprep.subr.mxu0 0.0
    %891 = vmatpush1.msra.mxu0 %v84
    %892 = vmatprep.subr.mxu0 0.0
    %893 = vmatpush1.msra.mxu0 %v85
    %894 = vmatprep.subr.mxu0 0.0
    %895 = vmatpush1.msra.mxu0 0.0
    %896 = vmatprep.subr.mxu0 0.0
    %897 = vmatpush1.msra.mxu0 0.0
    %898 = vmatprep.subr.mxu0 0.0
    %899 = vmatpush1.msra.mxu0 0.0
    %900 = vmatprep.subr.mxu0 0.0
    %901 = vmatpush1.msra.mxu0 0.0
    %902 = vmatprep.subr.mxu0 0.0
    %903 = vmatpush1.msra.mxu0 0.0
    %904 = vmatprep.subr.mxu0 0.0
    %905 = vmatpush1.msra.mxu0 0.0
    %906 = vmatprep.subr.mxu0 0.0
    %907 = vmatpush1.msra.mxu0 0.0
    %908 = vmatprep.subr.mxu0 0.0
    %909 = vmatpush1.msra.mxu0 0.0
    %910 = vmatprep.subr.mxu0 0.0
    %911 = vmatpush1.msra.mxu0 0.0
    %912 = vmatprep.subr.mxu0 0.0
    %913 = vmatpush1.msra.mxu0 0.0
    %914 = vmatprep.subr.mxu0 0.0
    %915 = vmatpush1.msra.mxu0 0.0
    %916 = vmatprep.subr.mxu0 0.0
    %917 = vmatpush1.msra.mxu0 0.0
    %918 = vmatprep.subr.mxu0 0.0
    %919 = vmatpush1.msra.mxu0 0.0
    %920 = vmatprep.subr.mxu0 0.0
    %921 = vmatpush1.msra.mxu0 0.0
    %922 = vmatprep.subr.mxu0 0.0
    %923 = vmatpush1.msra.mxu0 0.0
    %924 = vmatprep.subr.mxu0 0.0
    %925 = vmatpush1.msra.mxu0 0.0
    %926 = vmatprep.subr.mxu0 0.0
    %927 = vmatpush1.msra.mxu0 0.0
    %928 = vmatprep.subr.mxu0 0.0
    %929 = vmatpush1.msra.mxu0 0.0
    %930 = vmatprep.subr.mxu0 0.0
    %931 = vmatpush1.msra.mxu0 0.0
    %932 = vmatprep.subr.mxu0 0.0
    %933 = vmatpush1.msra.mxu0 0.0
    %934 = vmatprep.subr.mxu0 0.0
    %935 = vmatpush1.msra.mxu0 0.0
    %936 = vmatprep.subr.mxu0 0.0
    %937 = vmatpush1.msra.mxu0 0.0
    %938 = vmatprep.subr.mxu0 0.0
    %939 = vmatpush1.msra.mxu0 0.0
    %940 = vmatprep.subr.mxu0 0.0
    %941 = vmatpush1.msra.mxu0 0.0
    %942 = vmatprep.subr.mxu0 0.0
    %943 = vmatpush1.msra.mxu0 0.0
    %944 = vmatprep.subr.mxu0 0.0
    %945 = vmatpush1.msra.mxu0 0.0
    %946 = vmatprep.subr.mxu0 0.0
    %947 = vmatpush1.msra.mxu0 0.0
    %948 = vmatprep.subr.mxu0 0.0
    %949 = vmatpush1.msra.mxu0 0.0
    %950 = vmatprep.mubr.f32.mxu0 0.0
    %951 = vmatmul.mubr.f32.gmra.mrb[0].mxu0 %v884
    %v952 = vpop.f32.mrb[0].mxu0
    %v953 = vadd.f32 0.0, %v952
    %v954 = vpop.f32.mrb[0].mxu0
    %955 = vdwg.mxu0
    %v956 = vadd.f32 %v310, %v953
    %v957 = vxor.u32 %v956, 2147483648
    %v958 = vmul.f32 %v957, 1.442695
    %v959 = vpow.pop %v958
    %v960 = vadd.f32 %v959, 1.0
    %v961 = vrcp.pop %v960
    %v962 = vmul.f32 1.0, %v961
    %v963 = vmul.f32 %v962, 2.0
    %v964 = vsub.f32 %v963, 1.0
    %v965 = vsel %vm65, %v964, %v962
    %v966 = vmul.f32 %v965, %v874
    %968 = vrot.lane.b32.xlu0 %v965, 64
    %v969 = vpop.permute.xlu0 %968
    %v971 = vmul.f32 %v965, %v969
    %973 = vrot.lane.b32.xlu0 %v971, 32
    %v974 = vpop.permute.xlu0 %973
    %v976 = vadd.f32 %v966, %v974
    %v977 = vtanh.pop %v976
    %979 = vrot.lane.b32.xlu0 %v977, 64
    %v980 = vpop.permute.xlu0 %979
    %v982 = vmul.f32 %v965, %v980
    %984 = vrot.lane.b32.xlu0 %v982, 32
    %v985 = vpop.permute.xlu0 %984
    %v986 = vsel %vm678, %v985, 0
    %988 = vmatprep.subr.mxu0 0.0
    %989 = vmatpush1.msra.mxu0 %v82
    %990 = vmatprep.subr.mxu0 0.0
    %991 = vmatpush1.msra.mxu0 %v83
    %992 = vmatprep.subr.mxu0 0.0
    %993 = vmatpush1.msra.mxu0 %v84
    %994 = vmatprep.subr.mxu0 0.0
    %995 = vmatpush1.msra.mxu0 %v85
    %996 = vmatprep.subr.mxu0 0.0
    %997 = vmatpush1.msra.mxu0 0.0
    %998 = vmatprep.subr.mxu0 0.0
    %999 = vmatpush1.msra.mxu0 0.0
    %1000 = vmatprep.subr.mxu0 0.0
    %1001 = vmatpush1.msra.mxu0 0.0
    %1002 = vmatprep.subr.mxu0 0.0
    %1003 = vmatpush1.msra.mxu0 0.0
    %1004 = vmatprep.subr.mxu0 0.0
    %1005 = vmatpush1.msra.mxu0 0.0
    %1006 = vmatprep.subr.mxu0 0.0
    %1007 = vmatpush1.msra.mxu0 0.0
    %1008 = vmatprep.subr.mxu0 0.0
    %1009 = vmatpush1.msra.mxu0 0.0
    %1010 = vmatprep.subr.mxu0 0.0
    %1011 = vmatpush1.msra.mxu0 0.0
    %1012 = vmatprep.subr.mxu0 0.0
    %1013 = vmatpush1.msra.mxu0 0.0
    %1014 = vmatprep.subr.mxu0 0.0
    %1015 = vmatpush1.msra.mxu0 0.0
    %1016 = vmatprep.subr.mxu0 0.0
    %1017 = vmatpush1.msra.mxu0 0.0
    %1018 = vmatprep.subr.mxu0 0.0
    %1019 = vmatpush1.msra.mxu0 0.0
    %1020 = vmatprep.subr.mxu0 0.0
    %1021 = vmatpush1.msra.mxu0 0.0
    %1022 = vmatprep.subr.mxu0 0.0
    %1023 = vmatpush1.msra.mxu0 0.0
    %1024 = vmatprep.subr.mxu0 0.0
    %1025 = vmatpush1.msra.mxu0 0.0
    %1026 = vmatprep.subr.mxu0 0.0
    %1027 = vmatpush1.msra.mxu0 0.0
    %1028 = vmatprep.subr.mxu0 0.0
    %1029 = vmatpush1.msra.mxu0 0.0
    %1030 = vmatprep.subr.mxu0 0.0
    %1031 = vmatpush1.msra.mxu0 0.0
    %1032 = vmatprep.subr.mxu0 0.0
    %1033 = vmatpush1.msra.mxu0 0.0
    %1034 = vmatprep.subr.mxu0 0.0
    %1035 = vmatpush1.msra.mxu0 0.0
    %1036 = vmatprep.subr.mxu0 0.0
    %1037 = vmatpush1.msra.mxu0 0.0
    %1038 = vmatprep.subr.mxu0 0.0
    %1039 = vmatpush1.msra.mxu0 0.0
    %1040 = vmatprep.subr.mxu0 0.0
    %1041 = vmatpush1.msra.mxu0 0.0
    %1042 = vmatprep.subr.mxu0 0.0
    %1043 = vmatpush1.msra.mxu0 0.0
    %1044 = vmatprep.subr.mxu0 0.0
    %1045 = vmatpush1.msra.mxu0 0.0
    %1046 = vmatprep.subr.mxu0 0.0
    %1047 = vmatpush1.msra.mxu0 0.0
    %1048 = vmatprep.subr.mxu0 0.0
    %1049 = vmatpush1.msra.mxu0 0.0
    %1050 = vmatprep.subr.mxu0 0.0
    %1051 = vmatpush1.msra.mxu0 0.0
    %1052 = vmatprep.mubr.f32.mxu0 0.0
    %1053 = vmatmul.mubr.f32.gmra.mrb[0].mxu0 %v986
    %v1054 = vpop.f32.mrb[0].mxu0
    %v1055 = vadd.f32 0.0, %v1054
    %v1056 = vpop.f32.mrb[0].mxu0
    %1057 = vdwg.mxu0
    %v1058 = vadd.f32 %v383, %v1055
    %v1059 = vxor.u32 %v1058, 2147483648
    %v1060 = vmul.f32 %v1059, 1.442695
    %v1061 = vpow.pop %v1060
    %v1062 = vadd.f32 %v1061, 1.0
    %v1063 = vrcp.pop %v1062
    %v1064 = vmul.f32 1.0, %v1063
    %v1065 = vmul.f32 %v1064, 2.0
    %v1066 = vsub.f32 %v1065, 1.0
    %v1067 = vsel %vm65, %v1066, %v1064
    %v1068 = vmul.f32 %v1067, %v976
    %1070 = vrot.lane.b32.xlu0 %v1067, 64
    %v1071 = vpop.permute.xlu0 %1070
    %v1073 = vmul.f32 %v1067, %v1071
    %1075 = vrot.lane.b32.xlu0 %v1073, 32
    %v1076 = vpop.permute.xlu0 %1075
    %v1078 = vadd.f32 %v1068, %v1076
    %v1079 = vtanh.pop %v1078
    %1081 = vrot.lane.b32.xlu0 %v1079, 64
    %v1082 = vpop.permute.xlu0 %1081
    %v1084 = vmul.f32 %v1067, %v1082
    %1086 = vrot.lane.b32.xlu0 %v1084, 32
    %v1087 = vpop.permute.xlu0 %1086
    %v1088 = vsel %vm678, %v1087, 0
    %1090 = vmatprep.subr.mxu0 0.0
    %1091 = vmatpush1.msra.mxu0 %v82
    %1092 = vmatprep.subr.mxu0 0.0
    %1093 = vmatpush1.msra.mxu0 %v83
    %1094 = vmatprep.subr.mxu0 0.0
    %1095 = vmatpush1.msra.mxu0 %v84
    %1096 = vmatprep.subr.mxu0 0.0
    %1097 = vmatpush1.msra.mxu0 %v85
    %1098 = vmatprep.subr.mxu0 0.0
    %1099 = vmatpush1.msra.mxu0 0.0
    %1100 = vmatprep.subr.mxu0 0.0
    %1101 = vmatpush1.msra.mxu0 0.0
    %1102 = vmatprep.subr.mxu0 0.0
    %1103 = vmatpush1.msra.mxu0 0.0
    %1104 = vmatprep.subr.mxu0 0.0
    %1105 = vmatpush1.msra.mxu0 0.0
    %1106 = vmatprep.subr.mxu0 0.0
    %1107 = vmatpush1.msra.mxu0 0.0
    %1108 = vmatprep.subr.mxu0 0.0
    %1109 = vmatpush1.msra.mxu0 0.0
    %1110 = vmatprep.subr.mxu0 0.0
    %1111 = vmatpush1.msra.mxu0 0.0
    %1112 = vmatprep.subr.mxu0 0.0
    %1113 = vmatpush1.msra.mxu0 0.0
    %1114 = vmatprep.subr.mxu0 0.0
    %1115 = vmatpush1.msra.mxu0 0.0
    %1116 = vmatprep.subr.mxu0 0.0
    %1117 = vmatpush1.msra.mxu0 0.0
    %1118 = vmatprep.subr.mxu0 0.0
    %1119 = vmatpush1.msra.mxu0 0.0
    %1120 = vmatprep.subr.mxu0 0.0
    %1121 = vmatpush1.msra.mxu0 0.0
    %1122 = vmatprep.subr.mxu0 0.0
    %1123 = vmatpush1.msra.mxu0 0.0
    %1124 = vmatprep.subr.mxu0 0.0
    %1125 = vmatpush1.msra.mxu0 0.0
    %1126 = vmatprep.subr.mxu0 0.0
    %1127 = vmatpush1.msra.mxu0 0.0
    %1128 = vmatprep.subr.mxu0 0.0
    %1129 = vmatpush1.msra.mxu0 0.0
    %1130 = vmatprep.subr.mxu0 0.0
    %1131 = vmatpush1.msra.mxu0 0.0
    %1132 = vmatprep.subr.mxu0 0.0
    %1133 = vmatpush1.msra.mxu0 0.0
    %1134 = vmatprep.subr.mxu0 0.0
    %1135 = vmatpush1.msra.mxu0 0.0
    %1136 = vmatprep.subr.mxu0 0.0
    %1137 = vmatpush1.msra.mxu0 0.0
    %1138 = vmatprep.subr.mxu0 0.0
    %1139 = vmatpush1.msra.mxu0 0.0
    %1140 = vmatprep.subr.mxu0 0.0
    %1141 = vmatpush1.msra.mxu0 0.0
    %1142 = vmatprep.subr.mxu0 0.0
    %1143 = vmatpush1.msra.mxu0 0.0
    %1144 = vmatprep.subr.mxu0 0.0
    %1145 = vmatpush1.msra.mxu0 0.0
    %1146 = vmatprep.subr.mxu0 0.0
    %1147 = vmatpush1.msra.mxu0 0.0
    %1148 = vmatprep.subr.mxu0 0.0
    %1149 = vmatpush1.msra.mxu0 0.0
    %1150 = vmatprep.subr.mxu0 0.0
    %1151 = vmatpush1.msra.mxu0 0.0
    %1152 = vmatprep.subr.mxu0 0.0
    %1153 = vmatpush1.msra.mxu0 0.0
    %1154 = vmatprep.mubr.f32.mxu0 0.0
    %1155 = vmatmul.mubr.f32.gmra.mrb[0].mxu0 %v1088
    %v1156 = vpop.f32.mrb[0].mxu0
    %v1157 = vadd.f32 0.0, %v1156
    %v1158 = vpop.f32.mrb[0].mxu0
    %1159 = vdwg.mxu0
    %v1160 = vadd.f32 %v456, %v1157
    %v1161 = vxor.u32 %v1160, 2147483648
    %v1162 = vmul.f32 %v1161, 1.442695
    %v1163 = vpow.pop %v1162
    %v1164 = vadd.f32 %v1163, 1.0
    %v1165 = vrcp.pop %v1164
    %v1166 = vmul.f32 1.0, %v1165
    %v1167 = vmul.f32 %v1166, 2.0
    %v1168 = vsub.f32 %v1167, 1.0
    %v1169 = vsel %vm65, %v1168, %v1166
    %v1170 = vmul.f32 %v1169, %v1078
    %1172 = vrot.lane.b32.xlu0 %v1169, 64
    %v1173 = vpop.permute.xlu0 %1172
    %v1175 = vmul.f32 %v1169, %v1173
    %1177 = vrot.lane.b32.xlu0 %v1175, 32
    %v1178 = vpop.permute.xlu0 %1177
    %v1180 = vadd.f32 %v1170, %v1178
    %v1181 = vtanh.pop %v1180
    %1183 = vrot.lane.b32.xlu0 %v1181, 64
    %v1184 = vpop.permute.xlu0 %1183
    %v1186 = vmul.f32 %v1169, %v1184
    %1188 = vrot.lane.b32.xlu0 %v1186, 32
    %v1189 = vpop.permute.xlu0 %1188
    %v1190 = vsel %vm678, %v1189, 0
    %1192 = vmatprep.subr.mxu0 0.0
    %1193 = vmatpush1.msra.mxu0 %v82
    %1194 = vmatprep.subr.mxu0 0.0
    %1195 = vmatpush1.msra.mxu0 %v83
    %1196 = vmatprep.subr.mxu0 0.0
    %1197 = vmatpush1.msra.mxu0 %v84
    %1198 = vmatprep.subr.mxu0 0.0
    %1199 = vmatpush1.msra.mxu0 %v85
    %1200 = vmatprep.subr.mxu0 0.0
    %1201 = vmatpush1.msra.mxu0 0.0
    %1202 = vmatprep.subr.mxu0 0.0
    %1203 = vmatpush1.msra.mxu0 0.0
    %1204 = vmatprep.subr.mxu0 0.0
    %1205 = vmatpush1.msra.mxu0 0.0
    %1206 = vmatprep.subr.mxu0 0.0
    %1207 = vmatpush1.msra.mxu0 0.0
    %1208 = vmatprep.subr.mxu0 0.0
    %1209 = vmatpush1.msra.mxu0 0.0
    %1210 = vmatprep.subr.mxu0 0.0
    %1211 = vmatpush1.msra.mxu0 0.0
    %1212 = vmatprep.subr.mxu0 0.0
    %1213 = vmatpush1.msra.mxu0 0.0
    %1214 = vmatprep.subr.mxu0 0.0
    %1215 = vmatpush1.msra.mxu0 0.0
    %1216 = vmatprep.subr.mxu0 0.0
    %1217 = vmatpush1.msra.mxu0 0.0
    %1218 = vmatprep.subr.mxu0 0.0
    %1219 = vmatpush1.msra.mxu0 0.0
    %1220 = vmatprep.subr.mxu0 0.0
    %1221 = vmatpush1.msra.mxu0 0.0
    %1222 = vmatprep.subr.mxu0 0.0
    %1223 = vmatpush1.msra.mxu0 0.0
    %1224 = vmatprep.subr.mxu0 0.0
    %1225 = vmatpush1.msra.mxu0 0.0
    %1226 = vmatprep.subr.mxu0 0.0
    %1227 = vmatpush1.msra.mxu0 0.0
    %1228 = vmatprep.subr.mxu0 0.0
    %1229 = vmatpush1.msra.mxu0 0.0
    %1230 = vmatprep.subr.mxu0 0.0
    %1231 = vmatpush1.msra.mxu0 0.0
    %1232 = vmatprep.subr.mxu0 0.0
    %1233 = vmatpush1.msra.mxu0 0.0
    %1234 = vmatprep.subr.mxu0 0.0
    %1235 = vmatpush1.msra.mxu0 0.0
    %1236 = vmatprep.subr.mxu0 0.0
    %1237 = vmatpush1.msra.mxu0 0.0
    %1238 = vmatprep.subr.mxu0 0.0
    %1239 = vmatpush1.msra.mxu0 0.0
    %1240 = vmatprep.subr.mxu0 0.0
    %1241 = vmatpush1.msra.mxu0 0.0
    %1242 = vmatprep.subr.mxu0 0.0
    %1243 = vmatpush1.msra.mxu0 0.0
    %1244 = vmatprep.subr.mxu0 0.0
    %1245 = vmatpush1.msra.mxu0 0.0
    %1246 = vmatprep.subr.mxu0 0.0
    %1247 = vmatpush1.msra.mxu0 0.0
    %1248 = vmatprep.subr.mxu0 0.0
    %1249 = vmatpush1.msra.mxu0 0.0
    %1250 = vmatprep.subr.mxu0 0.0
    %1251 = vmatpush1.msra.mxu0 0.0
    %1252 = vmatprep.subr.mxu0 0.0
    %1253 = vmatpush1.msra.mxu0 0.0
    %1254 = vmatprep.subr.mxu0 0.0
    %1255 = vmatpush1.msra.mxu0 0.0
    %1256 = vmatprep.mubr.f32.mxu0 0.0
    %1257 = vmatmul.mubr.f32.gmra.mrb[0].mxu0 %v1190
    %v1258 = vpop.f32.mrb[0].mxu0
    %v1259 = vadd.f32 0.0, %v1258
    %v1260 = vpop.f32.mrb[0].mxu0
    %1261 = vdwg.mxu0
    %v1262 = vadd.f32 %v529, %v1259
    %v1263 = vxor.u32 %v1262, 2147483648
    %v1264 = vmul.f32 %v1263, 1.442695
    %v1265 = vpow.pop %v1264
    %v1266 = vadd.f32 %v1265, 1.0
    %v1267 = vrcp.pop %v1266
    %v1268 = vmul.f32 1.0, %v1267
    %v1269 = vmul.f32 %v1268, 2.0
    %v1270 = vsub.f32 %v1269, 1.0
    %v1271 = vsel %vm65, %v1270, %v1268
    %v1272 = vmul.f32 %v1271, %v1180
    %1274 = vrot.lane.b32.xlu0 %v1271, 64
    %v1275 = vpop.permute.xlu0 %1274
    %v1277 = vmul.f32 %v1271, %v1275
    %1279 = vrot.lane.b32.xlu0 %v1277, 32
    %v1280 = vpop.permute.xlu0 %1279
    %v1282 = vadd.f32 %v1272, %v1280
    %v1283 = vtanh.pop %v1282
    %1285 = vrot.lane.b32.xlu0 %v1283, 64
    %v1286 = vpop.permute.xlu0 %1285
    %v1288 = vmul.f32 %v1271, %v1286
    %1290 = vrot.lane.b32.xlu0 %v1288, 32
    %v1291 = vpop.permute.xlu0 %1290
    %v1292 = vsel %vm678, %v1291, 0
    %1294 = vmatprep.subr.mxu0 0.0
    %1295 = vmatpush1.msra.mxu0 %v82
    %1296 = vmatprep.subr.mxu0 0.0
    %1297 = vmatpush1.msra.mxu0 %v83
    %1298 = vmatprep.subr.mxu0 0.0
    %1299 = vmatpush1.msra.mxu0 %v84
    %1300 = vmatprep.subr.mxu0 0.0
    %1301 = vmatpush1.msra.mxu0 %v85
    %1302 = vmatprep.subr.mxu0 0.0
    %1303 = vmatpush1.msra.mxu0 0.0
    %1304 = vmatprep.subr.mxu0 0.0
    %1305 = vmatpush1.msra.mxu0 0.0
    %1306 = vmatprep.subr.mxu0 0.0
    %1307 = vmatpush1.msra.mxu0 0.0
    %1308 = vmatprep.subr.mxu0 0.0
    %1309 = vmatpush1.msra.mxu0 0.0
    %1310 = vmatprep.subr.mxu0 0.0
    %1311 = vmatpush1.msra.mxu0 0.0
    %1312 = vmatprep.subr.mxu0 0.0
    %1313 = vmatpush1.msra.mxu0 0.0
    %1314 = vmatprep.subr.mxu0 0.0
    %1315 = vmatpush1.msra.mxu0 0.0
    %1316 = vmatprep.subr.mxu0 0.0
    %1317 = vmatpush1.msra.mxu0 0.0
    %1318 = vmatprep.subr.mxu0 0.0
    %1319 = vmatpush1.msra.mxu0 0.0
    %1320 = vmatprep.subr.mxu0 0.0
    %1321 = vmatpush1.msra.mxu0 0.0
    %1322 = vmatprep.subr.mxu0 0.0
    %1323 = vmatpush1.msra.mxu0 0.0
    %1324 = vmatprep.subr.mxu0 0.0
    %1325 = vmatpush1.msra.mxu0 0.0
    %1326 = vmatprep.subr.mxu0 0.0
    %1327 = vmatpush1.msra.mxu0 0.0
    %1328 = vmatprep.subr.mxu0 0.0
    %1329 = vmatpush1.msra.mxu0 0.0
    %1330 = vmatprep.subr.mxu0 0.0
    %1331 = vmatpush1.msra.mxu0 0.0
    %1332 = vmatprep.subr.mxu0 0.0
    %1333 = vmatpush1.msra.mxu0 0.0
    %1334 = vmatprep.subr.mxu0 0.0
    %1335 = vmatpush1.msra.mxu0 0.0
    %1336 = vmatprep.subr.mxu0 0.0
    %1337 = vmatpush1.msra.mxu0 0.0
    %1338 = vmatprep.subr.mxu0 0.0
    %1339 = vmatpush1.msra.mxu0 0.0
    %1340 = vmatprep.subr.mxu0 0.0
    %1341 = vmatpush1.msra.mxu0 0.0
    %1342 = vmatprep.subr.mxu0 0.0
    %1343 = vmatpush1.msra.mxu0 0.0
    %1344 = vmatprep.subr.mxu0 0.0
    %1345 = vmatpush1.msra.mxu0 0.0
    %1346 = vmatprep.subr.mxu0 0.0
    %1347 = vmatpush1.msra.mxu0 0.0
    %1348 = vmatprep.subr.mxu0 0.0
    %1349 = vmatpush1.msra.mxu0 0.0
    %1350 = vmatprep.subr.mxu0 0.0
    %1351 = vmatpush1.msra.mxu0 0.0
    %1352 = vmatprep.subr.mxu0 0.0
    %1353 = vmatpush1.msra.mxu0 0.0
    %1354 = vmatprep.subr.mxu0 0.0
    %1355 = vmatpush1.msra.mxu0 0.0
    %1356 = vmatprep.subr.mxu0 0.0
    %1357 = vmatpush1.msra.mxu0 0.0
    %1358 = vmatprep.mubr.f32.mxu0 0.0
    %1359 = vmatmul.mubr.f32.gmra.mrb[0].mxu0 %v1292
    %v1360 = vpop.f32.mrb[0].mxu0
    %v1361 = vadd.f32 0.0, %v1360
    %v1362 = vpop.f32.mrb[0].mxu0
    %1363 = vdwg.mxu0
    %v1364 = vadd.f32 %v602, %v1361
    %v1365 = vxor.u32 %v1364, 2147483648
    %v1366 = vmul.f32 %v1365, 1.442695
    %v1367 = vpow.pop %v1366
    %v1368 = vadd.f32 %v1367, 1.0
    %v1369 = vrcp.pop %v1368
    %v1370 = vmul.f32 1.0, %v1369
    %v1371 = vmul.f32 %v1370, 2.0
    %v1372 = vsub.f32 %v1371, 1.0
    %v1373 = vsel %vm65, %v1372, %v1370
    %v1374 = vmul.f32 %v1373, %v1282
    %1376 = vrot.lane.b32.xlu0 %v1373, 64
    %v1377 = vpop.permute.xlu0 %1376
    %v1379 = vmul.f32 %v1373, %v1377
    %1381 = vrot.lane.b32.xlu0 %v1379, 32
    %v1382 = vpop.permute.xlu0 %1381
    %v1384 = vadd.f32 %v1374, %v1382
    %v1385 = vtanh.pop %v1384
    %1387 = vrot.lane.b32.xlu0 %v1385, 64
    %v1388 = vpop.permute.xlu0 %1387
    %v1390 = vmul.f32 %v1373, %v1388
    %1392 = vrot.lane.b32.xlu0 %v1390, 32
    %v1393 = vpop.permute.xlu0 %1392
    %v1394 = vsel %vm678, %v1393, 0
    %1396 = vmatprep.subr.mxu0 0.0
    %1397 = vmatpush1.msra.mxu0 %v82
    %1398 = vmatprep.subr.mxu0 0.0
    %1399 = vmatpush1.msra.mxu0 %v83
    %1400 = vmatprep.subr.mxu0 0.0
    %1401 = vmatpush1.msra.mxu0 %v84
    %1402 = vmatprep.subr.mxu0 0.0
    %1403 = vmatpush1.msra.mxu0 %v85
    %1404 = vmatprep.subr.mxu0 0.0
    %1405 = vmatpush1.msra.mxu0 0.0
    %1406 = vmatprep.subr.mxu0 0.0
    %1407 = vmatpush1.msra.mxu0 0.0
    %1408 = vmatprep.subr.mxu0 0.0
    %1409 = vmatpush1.msra.mxu0 0.0
    %1410 = vmatprep.subr.mxu0 0.0
    %1411 = vmatpush1.msra.mxu0 0.0
    %1412 = vmatprep.subr.mxu0 0.0
    %1413 = vmatpush1.msra.mxu0 0.0
    %1414 = vmatprep.subr.mxu0 0.0
    %1415 = vmatpush1.msra.mxu0 0.0
    %1416 = vmatprep.subr.mxu0 0.0
    %1417 = vmatpush1.msra.mxu0 0.0
    %1418 = vmatprep.subr.mxu0 0.0
    %1419 = vmatpush1.msra.mxu0 0.0
    %1420 = vmatprep.subr.mxu0 0.0
    %1421 = vmatpush1.msra.mxu0 0.0
    %1422 = vmatprep.subr.mxu0 0.0
    %1423 = vmatpush1.msra.mxu0 0.0
    %1424 = vmatprep.subr.mxu0 0.0
    %1425 = vmatpush1.msra.mxu0 0.0
    %1426 = vmatprep.subr.mxu0 0.0
    %1427 = vmatpush1.msra.mxu0 0.0
    %1428 = vmatprep.subr.mxu0 0.0
    %1429 = vmatpush1.msra.mxu0 0.0
    %1430 = vmatprep.subr.mxu0 0.0
    %1431 = vmatpush1.msra.mxu0 0.0
    %1432 = vmatprep.subr.mxu0 0.0
    %1433 = vmatpush1.msra.mxu0 0.0
    %1434 = vmatprep.subr.mxu0 0.0
    %1435 = vmatpush1.msra.mxu0 0.0
    %1436 = vmatprep.subr.mxu0 0.0
    %1437 = vmatpush1.msra.mxu0 0.0
    %1438 = vmatprep.subr.mxu0 0.0
    %1439 = vmatpush1.msra.mxu0 0.0
    %1440 = vmatprep.subr.mxu0 0.0
    %1441 = vmatpush1.msra.mxu0 0.0
    %1442 = vmatprep.subr.mxu0 0.0
    %1443 = vmatpush1.msra.mxu0 0.0
    %1444 = vmatprep.subr.mxu0 0.0
    %1445 = vmatpush1.msra.mxu0 0.0
    %1446 = vmatprep.subr.mxu0 0.0
    %1447 = vmatpush1.msra.mxu0 0.0
    %1448 = vmatprep.subr.mxu0 0.0
    %1449 = vmatpush1.msra.mxu0 0.0
    %1450 = vmatprep.subr.mxu0 0.0
    %1451 = vmatpush1.msra.mxu0 0.0
    %1452 = vmatprep.subr.mxu0 0.0
    %1453 = vmatpush1.msra.mxu0 0.0
    %1454 = vmatprep.subr.mxu0 0.0
    %1455 = vmatpush1.msra.mxu0 0.0
    %1456 = vmatprep.subr.mxu0 0.0
    %1457 = vmatpush1.msra.mxu0 0.0
    %1458 = vmatprep.subr.mxu0 0.0
    %1459 = vmatpush1.msra.mxu0 0.0
    %1460 = vmatprep.mubr.f32.mxu0 0.0
    %1461 = vmatmul.mubr.f32.gmra.mrb[0].mxu0 %v1394
    %v1462 = vpop.f32.mrb[0].mxu0
    %v1463 = vadd.f32 0.0, %v1462
    %v1464 = vpop.f32.mrb[0].mxu0
    %1465 = vdwg.mxu0
    %v1466 = vadd.f32 %v675, %v1463
    %v1467 = vxor.u32 %v1466, 2147483648
    %v1468 = vmul.f32 %v1467, 1.442695
    %v1469 = vpow.pop %v1468
    %v1470 = vadd.f32 %v1469, 1.0
    %v1471 = vrcp.pop %v1470
    %v1472 = vmul.f32 1.0, %v1471
    %v1473 = vmul.f32 %v1472, 2.0
    %v1474 = vsub.f32 %v1473, 1.0
    %v1475 = vsel %vm65, %v1474, %v1472
    %v1476 = vmul.f32 %v1475, %v1384
    %1478 = vrot.lane.b32.xlu0 %v1475, 64
    %v1479 = vpop.permute.xlu0 %1478
    %v1481 = vmul.f32 %v1475, %v1479
    %1483 = vrot.lane.b32.xlu0 %v1481, 32
    %v1484 = vpop.permute.xlu0 %1483
    %v1486 = vadd.f32 %v1476, %v1484
    %v1487 = vtanh.pop %v1486
    %1489 = vrot.lane.b32.xlu0 %v1487, 64
    %v1490 = vpop.permute.xlu0 %1489
    %v1492 = vmul.f32 %v1475, %v1490
    %v1493 = vld [vmem:[%s4] sm:$0xff]
    %v1494 = vld [vmem:[%s4 + $0x8] sm:$0xff]
    %v1495 = vld [vmem:[%s4 + $0x10] sm:$0xff]
    %v1496 = vld [vmem:[%s4 + $0x18] sm:$0xff]
    %v1497 = vld [vmem:[%s5] sm:$0xff]
    %v1498 = vld [vmem:[%s5 + $0x8] sm:$0xff]
    %v1499 = vld [vmem:[%s5 + $0x10] sm:$0xff]
    %v1500 = vld [vmem:[%s5 + $0x18] sm:$0xff]
    %v1501 = vld [vmem:[%s6] sm:$0x1]
    %v1503 = vlaneseq
    %v1504 = vshrl.u32 %v1503, 7
    %v1505 = vsub.s32 0, %v1504
    %v1506 = vrot.slane %v1501, %v1505
    %1508 = vmatprep.subr.mxu0 0.0
    %1509 = vmatpush1.msra.mxu0 %v1493
    %1510 = vmatprep.subr.mxu0 0.0
    %1511 = vmatpush1.msra.mxu0 %v1494
    %1512 = vmatprep.subr.mxu0 0.0
    %1513 = vmatpush1.msra.mxu0 %v1495
    %1514 = vmatprep.subr.mxu0 0.0
    %1515 = vmatpush1.msra.mxu0 %v1496
    %1516 = vmatprep.subr.mxu0 0.0
    %1517 = vmatpush1.msra.mxu0 0.0
    %1518 = vmatprep.subr.mxu0 0.0
    %1519 = vmatpush1.msra.mxu0 0.0
    %1520 = vmatprep.subr.mxu0 0.0
    %1521 = vmatpush1.msra.mxu0 0.0
    %1522 = vmatprep.subr.mxu0 0.0
    %1523 = vmatpush1.msra.mxu0 0.0
    %1524 = vmatprep.subr.mxu0 0.0
    %1525 = vmatpush1.msra.mxu0 0.0
    %1526 = vmatprep.subr.mxu0 0.0
    %1527 = vmatpush1.msra.mxu0 0.0
    %1528 = vmatprep.subr.mxu0 0.0
    %1529 = vmatpush1.msra.mxu0 0.0
    %1530 = vmatprep.subr.mxu0 0.0
    %1531 = vmatpush1.msra.mxu0 0.0
    %1532 = vmatprep.subr.mxu0 0.0
    %1533 = vmatpush1.msra.mxu0 0.0
    %1534 = vmatprep.subr.mxu0 0.0
    %1535 = vmatpush1.msra.mxu0 0.0
    %1536 = vmatprep.subr.mxu0 0.0
    %1537 = vmatpush1.msra.mxu0 0.0
    %1538 = vmatprep.subr.mxu0 0.0
    %1539 = vmatpush1.msra.mxu0 0.0
    %1540 = vmatprep.subr.mxu0 0.0
    %1541 = vmatpush1.msra.mxu0 0.0
    %1542 = vmatprep.subr.mxu0 0.0
    %1543 = vmatpush1.msra.mxu0 0.0
    %1544 = vmatprep.subr.mxu0 0.0
    %1545 = vmatpush1.msra.mxu0 0.0
    %1546 = vmatprep.subr.mxu0 0.0
    %1547 = vmatpush1.msra.mxu0 0.0
    %1548 = vmatprep.subr.mxu0 0.0
    %1549 = vmatpush1.msra.mxu0 0.0
    %1550 = vmatprep.subr.mxu0 0.0
    %1551 = vmatpush1.msra.mxu0 0.0
    %1552 = vmatprep.subr.mxu0 0.0
    %1553 = vmatpush1.msra.mxu0 0.0
    %1554 = vmatprep.subr.mxu0 0.0
    %1555 = vmatpush1.msra.mxu0 0.0
    %1556 = vmatprep.subr.mxu0 0.0
    %1557 = vmatpush1.msra.mxu0 0.0
    %1558 = vmatprep.subr.mxu0 0.0
    %1559 = vmatpush1.msra.mxu0 0.0
    %1560 = vmatprep.subr.mxu0 0.0
    %1561 = vmatpush1.msra.mxu0 0.0
    %1562 = vmatprep.subr.mxu0 0.0
    %1563 = vmatpush1.msra.mxu0 0.0
    %1564 = vmatprep.subr.mxu0 0.0
    %1565 = vmatpush1.msra.mxu0 0.0
    %1566 = vmatprep.subr.mxu0 0.0
    %1567 = vmatpush1.msra.mxu0 0.0
    %1568 = vmatprep.subr.mxu0 0.0
    %1569 = vmatpush1.msra.mxu0 0.0
    %1570 = vmatprep.subr.mxu0 0.0
    %1571 = vmatpush1.msra.mxu0 0.0
    %1572 = vmatprep.mubr.f32.mxu0 0.0
    %1573 = vmatmul.mubr.f32.gmra.mrb[0].mxu0 %v782
    %v1574 = vpop.f32.mrb[0].mxu0
    %v1575 = vadd.f32 %v1506, %v1574
    %v1576 = vpop.f32.mrb[0].mxu0
    %1577 = vdwg.mxu0
    %1578 = vmatprep.subr.mxu0 0.0
    %1579 = vmatpush1.msra.mxu0 %v1493
    %1580 = vmatprep.subr.mxu0 0.0
    %1581 = vmatpush1.msra.mxu0 %v1494
    %1582 = vmatprep.subr.mxu0 0.0
    %1583 = vmatpush1.msra.mxu0 %v1495
    %1584 = vmatprep.subr.mxu0 0.0
    %1585 = vmatpush1.msra.mxu0 %v1496
    %1586 = vmatprep.subr.mxu0 0.0
    %1587 = vmatpush1.msra.mxu0 0.0
    %1588 = vmatprep.subr.mxu0 0.0
    %1589 = vmatpush1.msra.mxu0 0.0
    %1590 = vmatprep.subr.mxu0 0.0
    %1591 = vmatpush1.msra.mxu0 0.0
    %1592 = vmatprep.subr.mxu0 0.0
    %1593 = vmatpush1.msra.mxu0 0.0
    %1594 = vmatprep.subr.mxu0 0.0
    %1595 = vmatpush1.msra.mxu0 0.0
    %1596 = vmatprep.subr.mxu0 0.0
    %1597 = vmatpush1.msra.mxu0 0.0
    %1598 = vmatprep.subr.mxu0 0.0
    %1599 = vmatpush1.msra.mxu0 0.0
    %1600 = vmatprep.subr.mxu0 0.0
    %1601 = vmatpush1.msra.mxu0 0.0
    %1602 = vmatprep.subr.mxu0 0.0
    %1603 = vmatpush1.msra.mxu0 0.0
    %1604 = vmatprep.subr.mxu0 0.0
    %1605 = vmatpush1.msra.mxu0 0.0
    %1606 = vmatprep.subr.mxu0 0.0
    %1607 = vmatpush1.msra.mxu0 0.0
    %1608 = vmatprep.subr.mxu0 0.0
    %1609 = vmatpush1.msra.mxu0 0.0
    %1610 = vmatprep.subr.mxu0 0.0
    %1611 = vmatpush1.msra.mxu0 0.0
    %1612 = vmatprep.subr.mxu0 0.0
    %1613 = vmatpush1.msra.mxu0 0.0
    %1614 = vmatprep.subr.mxu0 0.0
    %1615 = vmatpush1.msra.mxu0 0.0
    %1616 = vmatprep.subr.mxu0 0.0
    %1617 = vmatpush1.msra.mxu0 0.0
    %1618 = vmatprep.subr.mxu0 0.0
    %1619 = vmatpush1.msra.mxu0 0.0
    %1620 = vmatprep.subr.mxu0 0.0
    %1621 = vmatpush1.msra.mxu0 0.0
    %1622 = vmatprep.subr.mxu0 0.0
    %1623 = vmatpush1.msra.mxu0 0.0
    %1624 = vmatprep.subr.mxu0 0.0
    %1625 = vmatpush1.msra.mxu0 0.0
    %1626 = vmatprep.subr.mxu0 0.0
    %1627 = vmatpush1.msra.mxu0 0.0
    %1628 = vmatprep.subr.mxu0 0.0
    %1629 = vmatpush1.msra.mxu0 0.0
    %1630 = vmatprep.subr.mxu0 0.0
    %1631 = vmatpush1.msra.mxu0 0.0
    %1632 = vmatprep.subr.mxu0 0.0
    %1633 = vmatpush1.msra.mxu0 0.0
    %1634 = vmatprep.subr.mxu0 0.0
    %1635 = vmatpush1.msra.mxu0 0.0
    %1636 = vmatprep.subr.mxu0 0.0
    %1637 = vmatpush1.msra.mxu0 0.0
    %1638 = vmatprep.subr.mxu0 0.0
    %1639 = vmatpush1.msra.mxu0 0.0
    %1640 = vmatprep.subr.mxu0 0.0
    %1641 = vmatpush1.msra.mxu0 0.0
    %1642 = vmatprep.mubr.f32.mxu0 0.0
    %1643 = vmatmul.mubr.f32.gmra.mrb[0].mxu0 %v884
    %v1644 = vpop.f32.mrb[0].mxu0
    %v1645 = vadd.f32 %v1506, %v1644
    %v1646 = vpop.f32.mrb[0].mxu0
    %1647 = vdwg.mxu0
    %1648 = vmatprep.subr.mxu0 0.0
    %1649 = vmatpush1.msra.mxu0 %v1493
    %1650 = vmatprep.subr.mxu0 0.0
    %1651 = vmatpush1.msra.mxu0 %v1494
    %1652 = vmatprep.subr.mxu0 0.0
    %1653 = vmatpush1.msra.mxu0 %v1495
    %1654 = vmatprep.subr.mxu0 0.0
    %1655 = vmatpush1.msra.mxu0 %v1496
    %1656 = vmatprep.subr.mxu0 0.0
    %1657 = vmatpush1.msra.mxu0 0.0
    %1658 = vmatprep.subr.mxu0 0.0
    %1659 = vmatpush1.msra.mxu0 0.0
    %1660 = vmatprep.subr.mxu0 0.0
    %1661 = vmatpush1.msra.mxu0 0.0
    %1662 = vmatprep.subr.mxu0 0.0
    %1663 = vmatpush1.msra.mxu0 0.0
    %1664 = vmatprep.subr.mxu0 0.0
    %1665 = vmatpush1.msra.mxu0 0.0
    %1666 = vmatprep.subr.mxu0 0.0
    %1667 = vmatpush1.msra.mxu0 0.0
    %1668 = vmatprep.subr.mxu0 0.0
    %1669 = vmatpush1.msra.mxu0 0.0
    %1670 = vmatprep.subr.mxu0 0.0
    %1671 = vmatpush1.msra.mxu0 0.0
    %1672 = vmatprep.subr.mxu0 0.0
    %1673 = vmatpush1.msra.mxu0 0.0
    %1674 = vmatprep.subr.mxu0 0.0
    %1675 = vmatpush1.msra.mxu0 0.0
    %1676 = vmatprep.subr.mxu0 0.0
    %1677 = vmatpush1.msra.mxu0 0.0
    %1678 = vmatprep.subr.mxu0 0.0
    %1679 = vmatpush1.msra.mxu0 0.0
    %1680 = vmatprep.subr.mxu0 0.0
    %1681 = vmatpush1.msra.mxu0 0.0
    %1682 = vmatprep.subr.mxu0 0.0
    %1683 = vmatpush1.msra.mxu0 0.0
    %1684 = vmatprep.subr.mxu0 0.0
    %1685 = vmatpush1.msra.mxu0 0.0
    %1686 = vmatprep.subr.mxu0 0.0
    %1687 = vmatpush1.msra.mxu0 0.0
    %1688 = vmatprep.subr.mxu0 0.0
    %1689 = vmatpush1.msra.mxu0 0.0
    %1690 = vmatprep.subr.mxu0 0.0
    %1691 = vmatpush1.msra.mxu0 0.0
    %1692 = vmatprep.subr.mxu0 0.0
    %1693 = vmatpush1.msra.mxu0 0.0
    %1694 = vmatprep.subr.mxu0 0.0
    %1695 = vmatpush1.msra.mxu0 0.0
    %1696 = vmatprep.subr.mxu0 0.0
    %1697 = vmatpush1.msra.mxu0 0.0
    %1698 = vmatprep.subr.mxu0 0.0
    %1699 = vmatpush1.msra.mxu0 0.0
    %1700 = vmatprep.subr.mxu0 0.0
    %1701 = vmatpush1.msra.mxu0 0.0
    %1702 = vmatprep.subr.mxu0 0.0
    %1703 = vmatpush1.msra.mxu0 0.0
    %1704 = vmatprep.subr.mxu0 0.0
    %1705 = vmatpush1.msra.mxu0 0.0
    %1706 = vmatprep.subr.mxu0 0.0
    %1707 = vmatpush1.msra.mxu0 0.0
    %1708 = vmatprep.subr.mxu0 0.0
    %1709 = vmatpush1.msra.mxu0 0.0
    %1710 = vmatprep.subr.mxu0 0.0
    %1711 = vmatpush1.msra.mxu0 0.0
    %1712 = vmatprep.mubr.f32.mxu0 0.0
    %1713 = vmatmul.mubr.f32.gmra.mrb[0].mxu0 %v986
    %v1714 = vpop.f32.mrb[0].mxu0
    %v1715 = vadd.f32 %v1506, %v1714
    %v1716 = vpop.f32.mrb[0].mxu0
    %1717 = vdwg.mxu0
    %1718 = vmatprep.subr.mxu0 0.0
    %1719 = vmatpush1.msra.mxu0 %v1493
    %1720 = vmatprep.subr.mxu0 0.0
    %1721 = vmatpush1.msra.mxu0 %v1494
    %1722 = vmatprep.subr.mxu0 0.0
    %1723 = vmatpush1.msra.mxu0 %v1495
    %1724 = vmatprep.subr.mxu0 0.0
    %1725 = vmatpush1.msra.mxu0 %v1496
    %1726 = vmatprep.subr.mxu0 0.0
    %1727 = vmatpush1.msra.mxu0 0.0
    %1728 = vmatprep.subr.mxu0 0.0
    %1729 = vmatpush1.msra.mxu0 0.0
    %1730 = vmatprep.subr.mxu0 0.0
    %1731 = vmatpush1.msra.mxu0 0.0
    %1732 = vmatprep.subr.mxu0 0.0
    %1733 = vmatpush1.msra.mxu0 0.0
    %1734 = vmatprep.subr.mxu0 0.0
    %1735 = vmatpush1.msra.mxu0 0.0
    %1736 = vmatprep.subr.mxu0 0.0
    %1737 = vmatpush1.msra.mxu0 0.0
    %1738 = vmatprep.subr.mxu0 0.0
    %1739 = vmatpush1.msra.mxu0 0.0
    %1740 = vmatprep.subr.mxu0 0.0
    %1741 = vmatpush1.msra.mxu0 0.0
    %1742 = vmatprep.subr.mxu0 0.0
    %1743 = vmatpush1.msra.mxu0 0.0
    %1744 = vmatprep.subr.mxu0 0.0
    %1745 = vmatpush1.msra.mxu0 0.0
    %1746 = vmatprep.subr.mxu0 0.0
    %1747 = vmatpush1.msra.mxu0 0.0
    %1748 = vmatprep.subr.mxu0 0.0
    %1749 = vmatpush1.msra.mxu0 0.0
    %1750 = vmatprep.subr.mxu0 0.0
    %1751 = vmatpush1.msra.mxu0 0.0
    %1752 = vmatprep.subr.mxu0 0.0
    %1753 = vmatpush1.msra.mxu0 0.0
    %1754 = vmatprep.subr.mxu0 0.0
    %1755 = vmatpush1.msra.mxu0 0.0
    %1756 = vmatprep.subr.mxu0 0.0
    %1757 = vmatpush1.msra.mxu0 0.0
    %1758 = vmatprep.subr.mxu0 0.0
    %1759 = vmatpush1.msra.mxu0 0.0
    %1760 = vmatprep.subr.mxu0 0.0
    %1761 = vmatpush1.msra.mxu0 0.0
    %1762 = vmatprep.subr.mxu0 0.0
    %1763 = vmatpush1.msra.mxu0 0.0
    %1764 = vmatprep.subr.mxu0 0.0
    %1765 = vmatpush1.msra.mxu0 0.0
    %1766 = vmatprep.subr.mxu0 0.0
    %1767 = vmatpush1.msra.mxu0 0.0
    %1768 = vmatprep.subr.mxu0 0.0
    %1769 = vmatpush1.msra.mxu0 0.0
    %1770 = vmatprep.subr.mxu0 0.0
    %1771 = vmatpush1.msra.mxu0 0.0
    %1772 = vmatprep.subr.mxu0 0.0
    %1773 = vmatpush1.msra.mxu0 0.0
    %1774 = vmatprep.subr.mxu0 0.0
    %1775 = vmatpush1.msra.mxu0 0.0
    %1776 = vmatprep.subr.mxu0 0.0
    %1777 = vmatpush1.msra.mxu0 0.0
    %1778 = vmatprep.subr.mxu0 0.0
    %1779 = vmatpush1.msra.mxu0 0.0
    %1780 = vmatprep.subr.mxu0 0.0
    %1781 = vmatpush1.msra.mxu0 0.0
    %1782 = vmatprep.mubr.f32.mxu0 0.0
    %1783 = vmatmul.mubr.f32.gmra.mrb[0].mxu0 %v1088
    %v1784 = vpop.f32.mrb[0].mxu0
    %v1785 = vadd.f32 %v1506, %v1784
    %v1786 = vpop.f32.mrb[0].mxu0
    %1787 = vdwg.mxu0
    %1788 = vmatprep.subr.mxu0 0.0
    %1789 = vmatpush1.msra.mxu0 %v1493
    %1790 = vmatprep.subr.mxu0 0.0
    %1791 = vmatpush1.msra.mxu0 %v1494
    %1792 = vmatprep.subr.mxu0 0.0
    %1793 = vmatpush1.msra.mxu0 %v1495
    %1794 = vmatprep.subr.mxu0 0.0
    %1795 = vmatpush1.msra.mxu0 %v1496
    %1796 = vmatprep.subr.mxu0 0.0
    %1797 = vmatpush1.msra.mxu0 0.0
    %1798 = vmatprep.subr.mxu0 0.0
    %1799 = vmatpush1.msra.mxu0 0.0
    %1800 = vmatprep.subr.mxu0 0.0
    %1801 = vmatpush1.msra.mxu0 0.0
    %1802 = vmatprep.subr.mxu0 0.0
    %1803 = vmatpush1.msra.mxu0 0.0
    %1804 = vmatprep.subr.mxu0 0.0
    %1805 = vmatpush1.msra.mxu0 0.0
    %1806 = vmatprep.subr.mxu0 0.0
    %1807 = vmatpush1.msra.mxu0 0.0
    %1808 = vmatprep.subr.mxu0 0.0
    %1809 = vmatpush1.msra.mxu0 0.0
    %1810 = vmatprep.subr.mxu0 0.0
    %1811 = vmatpush1.msra.mxu0 0.0
    %1812 = vmatprep.subr.mxu0 0.0
    %1813 = vmatpush1.msra.mxu0 0.0
    %1814 = vmatprep.subr.mxu0 0.0
    %1815 = vmatpush1.msra.mxu0 0.0
    %1816 = vmatprep.subr.mxu0 0.0
    %1817 = vmatpush1.msra.mxu0 0.0
    %1818 = vmatprep.subr.mxu0 0.0
    %1819 = vmatpush1.msra.mxu0 0.0
    %1820 = vmatprep.subr.mxu0 0.0
    %1821 = vmatpush1.msra.mxu0 0.0
    %1822 = vmatprep.subr.mxu0 0.0
    %1823 = vmatpush1.msra.mxu0 0.0
    %1824 = vmatprep.subr.mxu0 0.0
    %1825 = vmatpush1.msra.mxu0 0.0
    %1826 = vmatprep.subr.mxu0 0.0
    %1827 = vmatpush1.msra.mxu0 0.0
    %1828 = vmatprep.subr.mxu0 0.0
    %1829 = vmatpush1.msra.mxu0 0.0
    %1830 = vmatprep.subr.mxu0 0.0
    %1831 = vmatpush1.msra.mxu0 0.0
    %1832 = vmatprep.subr.mxu0 0.0
    %1833 = vmatpush1.msra.mxu0 0.0
    %1834 = vmatprep.subr.mxu0 0.0
    %1835 = vmatpush1.msra.mxu0 0.0
    %1836 = vmatprep.subr.mxu0 0.0
    %1837 = vmatpush1.msra.mxu0 0.0
    %1838 = vmatprep.subr.mxu0 0.0
    %1839 = vmatpush1.msra.mxu0 0.0
    %1840 = vmatprep.subr.mxu0 0.0
    %1841 = vmatpush1.msra.mxu0 0.0
    %1842 = vmatprep.subr.mxu0 0.0
    %1843 = vmatpush1.msra.mxu0 0.0
    %1844 = vmatprep.subr.mxu0 0.0
    %1845 = vmatpush1.msra.mxu0 0.0
    %1846 = vmatprep.subr.mxu0 0.0
    %1847 = vmatpush1.msra.mxu0 0.0
    %1848 = vmatprep.subr.mxu0 0.0
    %1849 = vmatpush1.msra.mxu0 0.0
    %1850 = vmatprep.subr.mxu0 0.0
    %1851 = vmatpush1.msra.mxu0 0.0
    %1852 = vmatprep.mubr.f32.mxu0 0.0
    %1853 = vmatmul.mubr.f32.gmra.mrb[0].mxu0 %v1190
    %v1854 = vpop.f32.mrb[0].mxu0
    %v1855 = vadd.f32 %v1506, %v1854
    %v1856 = vpop.f32.mrb[0].mxu0
    %1857 = vdwg.mxu0
    %1858 = vmatprep.subr.mxu0 0.0
    %1859 = vmatpush1.msra.mxu0 %v1493
    %1860 = vmatprep.subr.mxu0 0.0
    %1861 = vmatpush1.msra.mxu0 %v1494
    %1862 = vmatprep.subr.mxu0 0.0
    %1863 = vmatpush1.msra.mxu0 %v1495
    %1864 = vmatprep.subr.mxu0 0.0
    %1865 = vmatpush1.msra.mxu0 %v1496
    %1866 = vmatprep.subr.mxu0 0.0
    %1867 = vmatpush1.msra.mxu0 0.0
    %1868 = vmatprep.subr.mxu0 0.0
    %1869 = vmatpush1.msra.mxu0 0.0
    %1870 = vmatprep.subr.mxu0 0.0
    %1871 = vmatpush1.msra.mxu0 0.0
    %1872 = vmatprep.subr.mxu0 0.0
    %1873 = vmatpush1.msra.mxu0 0.0
    %1874 = vmatprep.subr.mxu0 0.0
    %1875 = vmatpush1.msra.mxu0 0.0
    %1876 = vmatprep.subr.mxu0 0.0
    %1877 = vmatpush1.msra.mxu0 0.0
    %1878 = vmatprep.subr.mxu0 0.0
    %1879 = vmatpush1.msra.mxu0 0.0
    %1880 = vmatprep.subr.mxu0 0.0
    %1881 = vmatpush1.msra.mxu0 0.0
    %1882 = vmatprep.subr.mxu0 0.0
    %1883 = vmatpush1.msra.mxu0 0.0
    %1884 = vmatprep.subr.mxu0 0.0
    %1885 = vmatpush1.msra.mxu0 0.0
    %1886 = vmatprep.subr.mxu0 0.0
    %1887 = vmatpush1.msra.mxu0 0.0
    %1888 = vmatprep.subr.mxu0 0.0
    %1889 = vmatpush1.msra.mxu0 0.0
    %1890 = vmatprep.subr.mxu0 0.0
    %1891 = vmatpush1.msra.mxu0 0.0
    %1892 = vmatprep.subr.mxu0 0.0
    %1893 = vmatpush1.msra.mxu0 0.0
    %1894 = vmatprep.subr.mxu0 0.0
    %1895 = vmatpush1.msra.mxu0 0.0
    %1896 = vmatprep.subr.mxu0 0.0
    %1897 = vmatpush1.msra.mxu0 0.0
    %1898 = vmatprep.subr.mxu0 0.0
    %1899 = vmatpush1.msra.mxu0 0.0
    %1900 = vmatprep.subr.mxu0 0.0
    %1901 = vmatpush1.msra.mxu0 0.0
    %1902 = vmatprep.subr.mxu0 0.0
    %1903 = vmatpush1.msra.mxu0 0.0
    %1904 = vmatprep.subr.mxu0 0.0
    %1905 = vmatpush1.msra.mxu0 0.0
    %1906 = vmatprep.subr.mxu0 0.0
    %1907 = vmatpush1.msra.mxu0 0.0
    %1908 = vmatprep.subr.mxu0 0.0
    %1909 = vmatpush1.msra.mxu0 0.0
    %1910 = vmatprep.subr.mxu0 0.0
    %1911 = vmatpush1.msra.mxu0 0.0
    %1912 = vmatprep.subr.mxu0 0.0
    %1913 = vmatpush1.msra.mxu0 0.0
    %1914 = vmatprep.subr.mxu0 0.0
    %1915 = vmatpush1.msra.mxu0 0.0
    %1916 = vmatprep.subr.mxu0 0.0
    %1917 = vmatpush1.msra.mxu0 0.0
    %1918 = vmatprep.subr.mxu0 0.0
    %1919 = vmatpush1.msra.mxu0 0.0
    %1920 = vmatprep.subr.mxu0 0.0
    %1921 = vmatpush1.msra.mxu0 0.0
    %1922 = vmatprep.mubr.f32.mxu0 0.0
    %1923 = vmatmul.mubr.f32.gmra.mrb[0].mxu0 %v1292
    %v1924 = vpop.f32.mrb[0].mxu0
    %v1925 = vadd.f32 %v1506, %v1924
    %v1926 = vpop.f32.mrb[0].mxu0
    %1927 = vdwg.mxu0
    %1928 = vmatprep.subr.mxu0 0.0
    %1929 = vmatpush1.msra.mxu0 %v1493
    %1930 = vmatprep.subr.mxu0 0.0
    %1931 = vmatpush1.msra.mxu0 %v1494
    %1932 = vmatprep.subr.mxu0 0.0
    %1933 = vmatpush1.msra.mxu0 %v1495
    %1934 = vmatprep.subr.mxu0 0.0
    %1935 = vmatpush1.msra.mxu0 %v1496
    %1936 = vmatprep.subr.mxu0 0.0
    %1937 = vmatpush1.msra.mxu0 0.0
    %1938 = vmatprep.subr.mxu0 0.0
    %1939 = vmatpush1.msra.mxu0 0.0
    %1940 = vmatprep.subr.mxu0 0.0
    %1941 = vmatpush1.msra.mxu0 0.0
    %1942 = vmatprep.subr.mxu0 0.0
    %1943 = vmatpush1.msra.mxu0 0.0
    %1944 = vmatprep.subr.mxu0 0.0
    %1945 = vmatpush1.msra.mxu0 0.0
    %1946 = vmatprep.subr.mxu0 0.0
    %1947 = vmatpush1.msra.mxu0 0.0
    %1948 = vmatprep.subr.mxu0 0.0
    %1949 = vmatpush1.msra.mxu0 0.0
    %1950 = vmatprep.subr.mxu0 0.0
    %1951 = vmatpush1.msra.mxu0 0.0
    %1952 = vmatprep.subr.mxu0 0.0
    %1953 = vmatpush1.msra.mxu0 0.0
    %1954 = vmatprep.subr.mxu0 0.0
    %1955 = vmatpush1.msra.mxu0 0.0
    %1956 = vmatprep.subr.mxu0 0.0
    %1957 = vmatpush1.msra.mxu0 0.0
    %1958 = vmatprep.subr.mxu0 0.0
    %1959 = vmatpush1.msra.mxu0 0.0
    %1960 = vmatprep.subr.mxu0 0.0
    %1961 = vmatpush1.msra.mxu0 0.0
    %1962 = vmatprep.subr.mxu0 0.0
    %1963 = vmatpush1.msra.mxu0 0.0
    %1964 = vmatprep.subr.mxu0 0.0
    %1965 = vmatpush1.msra.mxu0 0.0
    %1966 = vmatprep.subr.mxu0 0.0
    %1967 = vmatpush1.msra.mxu0 0.0
    %1968 = vmatprep.subr.mxu0 0.0
    %1969 = vmatpush1.msra.mxu0 0.0
    %1970 = vmatprep.subr.mxu0 0.0
    %1971 = vmatpush1.msra.mxu0 0.0
    %1972 = vmatprep.subr.mxu0 0.0
    %1973 = vmatpush1.msra.mxu0 0.0
    %1974 = vmatprep.subr.mxu0 0.0
    %1975 = vmatpush1.msra.mxu0 0.0
    %1976 = vmatprep.subr.mxu0 0.0
    %1977 = vmatpush1.msra.mxu0 0.0
    %1978 = vmatprep.subr.mxu0 0.0
    %1979 = vmatpush1.msra.mxu0 0.0
    %1980 = vmatprep.subr.mxu0 0.0
    %1981 = vmatpush1.msra.mxu0 0.0
    %1982 = vmatprep.subr.mxu0 0.0
    %1983 = vmatpush1.msra.mxu0 0.0
    %1984 = vmatprep.subr.mxu0 0.0
    %1985 = vmatpush1.msra.mxu0 0.0
    %1986 = vmatprep.subr.mxu0 0.0
    %1987 = vmatpush1.msra.mxu0 0.0
    %1988 = vmatprep.subr.mxu0 0.0
    %1989 = vmatpush1.msra.mxu0 0.0
    %1990 = vmatprep.subr.mxu0 0.0
    %1991 = vmatpush1.msra.mxu0 0.0
    %1992 = vmatprep.mubr.f32.mxu0 0.0
    %1993 = vmatmul.mubr.f32.gmra.mrb[0].mxu0 %v1394
    %v1994 = vpop.f32.mrb[0].mxu0
    %v1995 = vadd.f32 %v1506, %v1994
    %v1996 = vpop.f32.mrb[0].mxu0
    %1997 = vdwg.mxu0
    %1999 = vrot.lane.b32.xlu0 %v1492, 32
    %v2000 = vpop.permute.xlu0 %1999
    %v2001 = vsel %vm678, %v2000, 0
    %2003 = vmatprep.subr.mxu0 0.0
    %2004 = vmatpush1.msra.mxu0 %v1493
    %2005 = vmatprep.subr.mxu0 0.0
    %2006 = vmatpush1.msra.mxu0 %v1494
    %2007 = vmatprep.subr.mxu0 0.0
    %2008 = vmatpush1.msra.mxu0 %v1495
    %2009 = vmatprep.subr.mxu0 0.0
    %2010 = vmatpush1.msra.mxu0 %v1496
    %2011 = vmatprep.subr.mxu0 0.0
    %2012 = vmatpush1.msra.mxu0 0.0
    %2013 = vmatprep.subr.mxu0 0.0
    %2014 = vmatpush1.msra.mxu0 0.0
    %2015 = vmatprep.subr.mxu0 0.0
    %2016 = vmatpush1.msra.mxu0 0.0
    %2017 = vmatprep.subr.mxu0 0.0
    %2018 = vmatpush1.msra.mxu0 0.0
    %2019 = vmatprep.subr.mxu0 0.0
    %2020 = vmatpush1.msra.mxu0 0.0
    %2021 = vmatprep.subr.mxu0 0.0
    %2022 = vmatpush1.msra.mxu0 0.0
    %2023 = vmatprep.subr.mxu0 0.0
    %2024 = vmatpush1.msra.mxu0 0.0
    %2025 = vmatprep.subr.mxu0 0.0
    %2026 = vmatpush1.msra.mxu0 0.0
    %2027 = vmatprep.subr.mxu0 0.0
    %2028 = vmatpush1.msra.mxu0 0.0
    %2029 = vmatprep.subr.mxu0 0.0
    %2030 = vmatpush1.msra.mxu0 0.0
    %2031 = vmatprep.subr.mxu0 0.0
    %2032 = vmatpush1.msra.mxu0 0.0
    %2033 = vmatprep.subr.mxu0 0.0
    %2034 = vmatpush1.msra.mxu0 0.0
    %2035 = vmatprep.subr.mxu0 0.0
    %2036 = vmatpush1.msra.mxu0 0.0
    %2037 = vmatprep.subr.mxu0 0.0
    %2038 = vmatpush1.msra.mxu0 0.0
    %2039 = vmatprep.subr.mxu0 0.0
    %2040 = vmatpush1.msra.mxu0 0.0
    %2041 = vmatprep.subr.mxu0 0.0
    %2042 = vmatpush1.msra.mxu0 0.0
    %2043 = vmatprep.subr.mxu0 0.0
    %2044 = vmatpush1.msra.mxu0 0.0
    %2045 = vmatprep.subr.mxu0 0.0
    %2046 = vmatpush1.msra.mxu0 0.0
    %2047 = vmatprep.subr.mxu0 0.0
    %2048 = vmatpush1.msra.mxu0 0.0
    %2049 = vmatprep.subr.mxu0 0.0
    %2050 = vmatpush1.msra.mxu0 0.0
    %2051 = vmatprep.subr.mxu0 0.0
    %2052 = vmatpush1.msra.mxu0 0.0
    %2053 = vmatprep.subr.mxu0 0.0
    %2054 = vmatpush1.msra.mxu0 0.0
    %2055 = vmatprep.subr.mxu0 0.0
    %2056 = vmatpush1.msra.mxu0 0.0
    %2057 = vmatprep.subr.mxu0 0.0
    %2058 = vmatpush1.msra.mxu0 0.0
    %2059 = vmatprep.subr.mxu0 0.0
    %2060 = vmatpush1.msra.mxu0 0.0
    %2061 = vmatprep.subr.mxu0 0.0
    %2062 = vmatpush1.msra.mxu0 0.0
    %2063 = vmatprep.subr.mxu0 0.0
    %2064 = vmatpush1.msra.mxu0 0.0
    %2065 = vmatprep.subr.mxu0 0.0
    %2066 = vmatpush1.msra.mxu0 0.0
    %2067 = vmatprep.mubr.f32.mxu0 0.0
    %2068 = vmatmul.mubr.f32.gmra.mrb[0].mxu0 %v2001
    %v2069 = vpop.f32.mrb[0].mxu0
    %v2070 = vadd.f32 %v1506, %v2069
    %v2071 = vpop.f32.mrb[0].mxu0
    %2072 = vdwg.mxu0
    %2073 = vmatprep.subr.mxu0 0.0
    %2074 = vmatpush1.msra.mxu0 %v1497
    %2075 = vmatprep.subr.mxu0 0.0
    %2076 = vmatpush1.msra.mxu0 %v1498
    %2077 = vmatprep.subr.mxu0 0.0
    %2078 = vmatpush1.msra.mxu0 %v1499
    %2079 = vmatprep.subr.mxu0 0.0
    %2080 = vmatpush1.msra.mxu0 %v1500
    %2081 = vmatprep.subr.mxu0 0.0
    %2082 = vmatpush1.msra.mxu0 0.0
    %2083 = vmatprep.subr.mxu0 0.0
    %2084 = vmatpush1.msra.mxu0 0.0
    %2085 = vmatprep.subr.mxu0 0.0
    %2086 = vmatpush1.msra.mxu0 0.0
    %2087 = vmatprep.subr.mxu0 0.0
    %2088 = vmatpush1.msra.mxu0 0.0
    %2089 = vmatprep.subr.mxu0 0.0
    %2090 = vmatpush1.msra.mxu0 0.0
    %2091 = vmatprep.subr.mxu0 0.0
    %2092 = vmatpush1.msra.mxu0 0.0
    %2093 = vmatprep.subr.mxu0 0.0
    %2094 = vmatpush1.msra.mxu0 0.0
    %2095 = vmatprep.subr.mxu0 0.0
    %2096 = vmatpush1.msra.mxu0 0.0
    %2097 = vmatprep.subr.mxu0 0.0
    %2098 = vmatpush1.msra.mxu0 0.0
    %2099 = vmatprep.subr.mxu0 0.0
    %2100 = vmatpush1.msra.mxu0 0.0
    %2101 = vmatprep.subr.mxu0 0.0
    %2102 = vmatpush1.msra.mxu0 0.0
    %2103 = vmatprep.subr.mxu0 0.0
    %2104 = vmatpush1.msra.mxu0 0.0
    %2105 = vmatprep.subr.mxu0 0.0
    %2106 = vmatpush1.msra.mxu0 0.0
    %2107 = vmatprep.subr.mxu0 0.0
    %2108 = vmatpush1.msra.mxu0 0.0
    %2109 = vmatprep.subr.mxu0 0.0
    %2110 = vmatpush1.msra.mxu0 0.0
    %2111 = vmatprep.subr.mxu0 0.0
    %2112 = vmatpush1.msra.mxu0 0.0
    %2113 = vmatprep.subr.mxu0 0.0
    %2114 = vmatpush1.msra.mxu0 0.0
    %2115 = vmatprep.subr.mxu0 0.0
    %2116 = vmatpush1.msra.mxu0 0.0
    %2117 = vmatprep.subr.mxu0 0.0
    %2118 = vmatpush1.msra.mxu0 0.0
    %2119 = vmatprep.subr.mxu0 0.0
    %2120 = vmatpush1.msra.mxu0 0.0
    %2121 = vmatprep.subr.mxu0 0.0
    %2122 = vmatpush1.msra.mxu0 0.0
    %2123 = vmatprep.subr.mxu0 0.0
    %2124 = vmatpush1.msra.mxu0 0.0
    %2125 = vmatprep.subr.mxu0 0.0
    %2126 = vmatpush1.msra.mxu0 0.0
    %2127 = vmatprep.subr.mxu0 0.0
    %2128 = vmatpush1.msra.mxu0 0.0
    %2129 = vmatprep.subr.mxu0 0.0
    %2130 = vmatpush1.msra.mxu0 0.0
    %2131 = vmatprep.subr.mxu0 0.0
    %2132 = vmatpush1.msra.mxu0 0.0
    %2133 = vmatprep.subr.mxu0 0.0
    %2134 = vmatpush1.msra.mxu0 0.0
    %2135 = vmatprep.subr.mxu0 0.0
    %2136 = vmatpush1.msra.mxu0 0.0
    %2137 = vmatprep.mubr.f32.mxu0 0.0
    %2138 = vmatmul.mubr.f32.gmra.mrb[0].mxu0 %v680
    %v2139 = vpop.f32.mrb[0].mxu0
    %v2140 = vadd.f32 0.0, %v2139
    %v2141 = vpop.f32.mrb[0].mxu0
    %2142 = vdwg.mxu0
    %v2143 = vadd.f32 %v1575, %v2140
    %v2144 = vxor.u32 %v2143, 2147483648
    %v2145 = vmul.f32 %v2144, 1.442695
    %v2146 = vpow.pop %v2145
    %v2147 = vadd.f32 %v2146, 1.0
    %v2148 = vrcp.pop %v2147
    %v2149 = vmul.f32 1.0, %v2148
    %v2150 = vmul.f32 %v2149, 2.0
    %v2151 = vsub.f32 %v2150, 1.0
    %v2152 = vsel %vm65, %v2151, %v2149
    %v2153 = vmul.f32 %v2152, 0.0
    %2155 = vrot.lane.b32.xlu0 %v2152, 64
    %v2156 = vpop.permute.xlu0 %2155
    %v2158 = vmul.f32 %v2152, %v2156
    %2160 = vrot.lane.b32.xlu0 %v2158, 32
    %v2161 = vpop.permute.xlu0 %2160
    %v2163 = vadd.f32 %v2153, %v2161
    %v2164 = vtanh.pop %v2163
    %2166 = vrot.lane.b32.xlu0 %v2164, 64
    %v2167 = vpop.permute.xlu0 %2166
    %v2169 = vmul.f32 %v2152, %v2167
    %2171 = vrot.lane.b32.xlu0 %v2169, 32
    %v2172 = vpop.permute.xlu0 %2171
    %v2173 = vsel %vm678, %v2172, 0
    %2175 = vmatprep.subr.mxu0 0.0
    %2176 = vmatpush1.msra.mxu0 %v1497
    %2177 = vmatprep.subr.mxu0 0.0
    %2178 = vmatpush1.msra.mxu0 %v1498
    %2179 = vmatprep.subr.mxu0 0.0
    %2180 = vmatpush1.msra.mxu0 %v1499
    %2181 = vmatprep.subr.mxu0 0.0
    %2182 = vmatpush1.msra.mxu0 %v1500
    %2183 = vmatprep.subr.mxu0 0.0
    %2184 = vmatpush1.msra.mxu0 0.0
    %2185 = vmatprep.subr.mxu0 0.0
    %2186 = vmatpush1.msra.mxu0 0.0
    %2187 = vmatprep.subr.mxu0 0.0
    %2188 = vmatpush1.msra.mxu0 0.0
    %2189 = vmatprep.subr.mxu0 0.0
    %2190 = vmatpush1.msra.mxu0 0.0
    %2191 = vmatprep.subr.mxu0 0.0
    %2192 = vmatpush1.msra.mxu0 0.0
    %2193 = vmatprep.subr.mxu0 0.0
    %2194 = vmatpush1.msra.mxu0 0.0
    %2195 = vmatprep.subr.mxu0 0.0
    %2196 = vmatpush1.msra.mxu0 0.0
    %2197 = vmatprep.subr.mxu0 0.0
    %2198 = vmatpush1.msra.mxu0 0.0
    %2199 = vmatprep.subr.mxu0 0.0
    %2200 = vmatpush1.msra.mxu0 0.0
    %2201 = vmatprep.subr.mxu0 0.0
    %2202 = vmatpush1.msra.mxu0 0.0
    %2203 = vmatprep.subr.mxu0 0.0
    %2204 = vmatpush1.msra.mxu0 0.0
    %2205 = vmatprep.subr.mxu0 0.0
    %2206 = vmatpush1.msra.mxu0 0.0
    %2207 = vmatprep.subr.mxu0 0.0
    %2208 = vmatpush1.msra.mxu0 0.0
    %2209 = vmatprep.subr.mxu0 0.0
    %2210 = vmatpush1.msra.mxu0 0.0
    %2211 = vmatprep.subr.mxu0 0.0
    %2212 = vmatpush1.msra.mxu0 0.0
    %2213 = vmatprep.subr.mxu0 0.0
    %2214 = vmatpush1.msra.mxu0 0.0
    %2215 = vmatprep.subr.mxu0 0.0
    %2216 = vmatpush1.msra.mxu0 0.0
    %2217 = vmatprep.subr.mxu0 0.0
    %2218 = vmatpush1.msra.mxu0 0.0
    %2219 = vmatprep.subr.mxu0 0.0
    %2220 = vmatpush1.msra.mxu0 0.0
    %2221 = vmatprep.subr.mxu0 0.0
    %2222 = vmatpush1.msra.mxu0 0.0
    %2223 = vmatprep.subr.mxu0 0.0
    %2224 = vmatpush1.msra.mxu0 0.0
    %2225 = vmatprep.subr.mxu0 0.0
    %2226 = vmatpush1.msra.mxu0 0.0
    %2227 = vmatprep.subr.mxu0 0.0
    %2228 = vmatpush1.msra.mxu0 0.0
    %2229 = vmatprep.subr.mxu0 0.0
    %2230 = vmatpush1.msra.mxu0 0.0
    %2231 = vmatprep.subr.mxu0 0.0
    %2232 = vmatpush1.msra.mxu0 0.0
    %2233 = vmatprep.subr.mxu0 0.0
    %2234 = vmatpush1.msra.mxu0 0.0
    %2235 = vmatprep.subr.mxu0 0.0
    %2236 = vmatpush1.msra.mxu0 0.0
    %2237 = vmatprep.subr.mxu0 0.0
    %2238 = vmatpush1.msra.mxu0 0.0
    %2239 = vmatprep.mubr.f32.mxu0 0.0
    %2240 = vmatmul.mubr.f32.gmra.mrb[0].mxu0 %v2173
    %v2241 = vpop.f32.mrb[0].mxu0
    %v2242 = vadd.f32 0.0, %v2241
    %v2243 = vpop.f32.mrb[0].mxu0
    %2244 = vdwg.mxu0
    %v2245 = vadd.f32 %v1645, %v2242
    %v2246 = vxor.u32 %v2245, 2147483648
    %v2247 = vmul.f32 %v2246, 1.442695
    %v2248 = vpow.pop %v2247
    %v2249 = vadd.f32 %v2248, 1.0
    %v2250 = vrcp.pop %v2249
    %v2251 = vmul.f32 1.0, %v2250
    %v2252 = vmul.f32 %v2251, 2.0
    %v2253 = vsub.f32 %v2252, 1.0
    %v2254 = vsel %vm65, %v2253, %v2251
    %v2255 = vmul.f32 %v2254, %v2163
    %2257 = vrot.lane.b32.xlu0 %v2254, 64
    %v2258 = vpop.permute.xlu0 %2257
    %v2260 = vmul.f32 %v2254, %v2258
    %2262 = vrot.lane.b32.xlu0 %v2260, 32
    %v2263 = vpop.permute.xlu0 %2262
    %v2265 = vadd.f32 %v2255, %v2263
    %v2266 = vtanh.pop %v2265
    %2268 = vrot.lane.b32.xlu0 %v2266, 64
    %v2269 = vpop.permute.xlu0 %2268
    %v2271 = vmul.f32 %v2254, %v2269
    %2273 = vrot.lane.b32.xlu0 %v2271, 32
    %v2274 = vpop.permute.xlu0 %2273
    %v2275 = vsel %vm678, %v2274, 0
    %2277 = vmatprep.subr.mxu0 0.0
    %2278 = vmatpush1.msra.mxu0 %v1497
    %2279 = vmatprep.subr.mxu0 0.0
    %2280 = vmatpush1.msra.mxu0 %v1498
    %2281 = vmatprep.subr.mxu0 0.0
    %2282 = vmatpush1.msra.mxu0 %v1499
    %2283 = vmatprep.subr.mxu0 0.0
    %2284 = vmatpush1.msra.mxu0 %v1500
    %2285 = vmatprep.subr.mxu0 0.0
    %2286 = vmatpush1.msra.mxu0 0.0
    %2287 = vmatprep.subr.mxu0 0.0
    %2288 = vmatpush1.msra.mxu0 0.0
    %2289 = vmatprep.subr.mxu0 0.0
    %2290 = vmatpush1.msra.mxu0 0.0
    %2291 = vmatprep.subr.mxu0 0.0
    %2292 = vmatpush1.msra.mxu0 0.0
    %2293 = vmatprep.subr.mxu0 0.0
    %2294 = vmatpush1.msra.mxu0 0.0
    %2295 = vmatprep.subr.mxu0 0.0
    %2296 = vmatpush1.msra.mxu0 0.0
    %2297 = vmatprep.subr.mxu0 0.0
    %2298 = vmatpush1.msra.mxu0 0.0
    %2299 = vmatprep.subr.mxu0 0.0
    %2300 = vmatpush1.msra.mxu0 0.0
    %2301 = vmatprep.subr.mxu0 0.0
    %2302 = vmatpush1.msra.mxu0 0.0
    %2303 = vmatprep.subr.mxu0 0.0
    %2304 = vmatpush1.msra.mxu0 0.0
    %2305 = vmatprep.subr.mxu0 0.0
    %2306 = vmatpush1.msra.mxu0 0.0
    %2307 = vmatprep.subr.mxu0 0.0
    %2308 = vmatpush1.msra.mxu0 0.0
    %2309 = vmatprep.subr.mxu0 0.0
    %2310 = vmatpush1.msra.mxu0 0.0
    %2311 = vmatprep.subr.mxu0 0.0
    %2312 = vmatpush1.msra.mxu0 0.0
    %2313 = vmatprep.subr.mxu0 0.0
    %2314 = vmatpush1.msra.mxu0 0.0
    %2315 = vmatprep.subr.mxu0 0.0
    %2316 = vmatpush1.msra.mxu0 0.0
    %2317 = vmatprep.subr.mxu0 0.0
    %2318 = vmatpush1.msra.mxu0 0.0
    %2319 = vmatprep.subr.mxu0 0.0
    %2320 = vmatpush1.msra.mxu0 0.0
    %2321 = vmatprep.subr.mxu0 0.0
    %2322 = vmatpush1.msra.mxu0 0.0
    %2323 = vmatprep.subr.mxu0 0.0
    %2324 = vmatpush1.msra.mxu0 0.0
    %2325 = vmatprep.subr.mxu0 0.0
    %2326 = vmatpush1.msra.mxu0 0.0
    %2327 = vmatprep.subr.mxu0 0.0
    %2328 = vmatpush1.msra.mxu0 0.0
    %2329 = vmatprep.subr.mxu0 0.0
    %2330 = vmatpush1.msra.mxu0 0.0
    %2331 = vmatprep.subr.mxu0 0.0
    %2332 = vmatpush1.msra.mxu0 0.0
    %2333 = vmatprep.subr.mxu0 0.0
    %2334 = vmatpush1.msra.mxu0 0.0
    %2335 = vmatprep.subr.mxu0 0.0
    %2336 = vmatpush1.msra.mxu0 0.0
    %2337 = vmatprep.subr.mxu0 0.0
    %2338 = vmatpush1.msra.mxu0 0.0
    %2339 = vmatprep.subr.mxu0 0.0
    %2340 = vmatpush1.msra.mxu0 0.0
    %2341 = vmatprep.mubr.f32.mxu0 0.0
    %2342 = vmatmul.mubr.f32.gmra.mrb[0].mxu0 %v2275
    %v2343 = vpop.f32.mrb[0].mxu0
    %v2344 = vadd.f32 0.0, %v2343
    %v2345 = vpop.f32.mrb[0].mxu0
    %2346 = vdwg.mxu0
    %v2347 = vadd.f32 %v1715, %v2344
    %v2348 = vxor.u32 %v2347, 2147483648
    %v2349 = vmul.f32 %v2348, 1.442695
    %v2350 = vpow.pop %v2349
    %v2351 = vadd.f32 %v2350, 1.0
    %v2352 = vrcp.pop %v2351
    %v2353 = vmul.f32 1.0, %v2352
    %v2354 = vmul.f32 %v2353, 2.0
    %v2355 = vsub.f32 %v2354, 1.0
    %v2356 = vsel %vm65, %v2355, %v2353
    %v2357 = vmul.f32 %v2356, %v2265
    %2359 = vrot.lane.b32.xlu0 %v2356, 64
    %v2360 = vpop.permute.xlu0 %2359
    %v2362 = vmul.f32 %v2356, %v2360
    %2364 = vrot.lane.b32.xlu0 %v2362, 32
    %v2365 = vpop.permute.xlu0 %2364
    %v2367 = vadd.f32 %v2357, %v2365
    %v2368 = vtanh.pop %v2367
    %2370 = vrot.lane.b32.xlu0 %v2368, 64
    %v2371 = vpop.permute.xlu0 %2370
    %v2373 = vmul.f32 %v2356, %v2371
    %2375 = vrot.lane.b32.xlu0 %v2373, 32
    %v2376 = vpop.permute.xlu0 %2375
    %v2377 = vsel %vm678, %v2376, 0
    %2379 = vmatprep.subr.mxu0 0.0
    %2380 = vmatpush1.msra.mxu0 %v1497
    %2381 = vmatprep.subr.mxu0 0.0
    %2382 = vmatpush1.msra.mxu0 %v1498
    %2383 = vmatprep.subr.mxu0 0.0
    %2384 = vmatpush1.msra.mxu0 %v1499
    %2385 = vmatprep.subr.mxu0 0.0
    %2386 = vmatpush1.msra.mxu0 %v1500
    %2387 = vmatprep.subr.mxu0 0.0
    %2388 = vmatpush1.msra.mxu0 0.0
    %2389 = vmatprep.subr.mxu0 0.0
    %2390 = vmatpush1.msra.mxu0 0.0
    %2391 = vmatprep.subr.mxu0 0.0
    %2392 = vmatpush1.msra.mxu0 0.0
    %2393 = vmatprep.subr.mxu0 0.0
    %2394 = vmatpush1.msra.mxu0 0.0
    %2395 = vmatprep.subr.mxu0 0.0
    %2396 = vmatpush1.msra.mxu0 0.0
    %2397 = vmatprep.subr.mxu0 0.0
    %2398 = vmatpush1.msra.mxu0 0.0
    %2399 = vmatprep.subr.mxu0 0.0
    %2400 = vmatpush1.msra.mxu0 0.0
    %2401 = vmatprep.subr.mxu0 0.0
    %2402 = vmatpush1.msra.mxu0 0.0
    %2403 = vmatprep.subr.mxu0 0.0
    %2404 = vmatpush1.msra.mxu0 0.0
    %2405 = vmatprep.subr.mxu0 0.0
    %2406 = vmatpush1.msra.mxu0 0.0
    %2407 = vmatprep.subr.mxu0 0.0
    %2408 = vmatpush1.msra.mxu0 0.0
    %2409 = vmatprep.subr.mxu0 0.0
    %2410 = vmatpush1.msra.mxu0 0.0
    %2411 = vmatprep.subr.mxu0 0.0
    %2412 = vmatpush1.msra.mxu0 0.0
    %2413 = vmatprep.subr.mxu0 0.0
    %2414 = vmatpush1.msra.mxu0 0.0
    %2415 = vmatprep.subr.mxu0 0.0
    %2416 = vmatpush1.msra.mxu0 0.0
    %2417 = vmatprep.subr.mxu0 0.0
    %2418 = vmatpush1.msra.mxu0 0.0
    %2419 = vmatprep.subr.mxu0 0.0
    %2420 = vmatpush1.msra.mxu0 0.0
    %2421 = vmatprep.subr.mxu0 0.0
    %2422 = vmatpush1.msra.mxu0 0.0
    %2423 = vmatprep.subr.mxu0 0.0
    %2424 = vmatpush1.msra.mxu0 0.0
    %2425 = vmatprep.subr.mxu0 0.0
    %2426 = vmatpush1.msra.mxu0 0.0
    %2427 = vmatprep.subr.mxu0 0.0
    %2428 = vmatpush1.msra.mxu0 0.0
    %2429 = vmatprep.subr.mxu0 0.0
    %2430 = vmatpush1.msra.mxu0 0.0
    %2431 = vmatprep.subr.mxu0 0.0
    %2432 = vmatpush1.msra.mxu0 0.0
    %2433 = vmatprep.subr.mxu0 0.0
    %2434 = vmatpush1.msra.mxu0 0.0
    %2435 = vmatprep.subr.mxu0 0.0
    %2436 = vmatpush1.msra.mxu0 0.0
    %2437 = vmatprep.subr.mxu0 0.0
    %2438 = vmatpush1.msra.mxu0 0.0
    %2439 = vmatprep.subr.mxu0 0.0
    %2440 = vmatpush1.msra.mxu0 0.0
    %2441 = vmatprep.subr.mxu0 0.0
    %2442 = vmatpush1.msra.mxu0 0.0
    %2443 = vmatprep.mubr.f32.mxu0 0.0
    %2444 = vmatmul.mubr.f32.gmra.mrb[0].mxu0 %v2377
    %v2445 = vpop.f32.mrb[0].mxu0
    %v2446 = vadd.f32 0.0, %v2445
    %v2447 = vpop.f32.mrb[0].mxu0
    %2448 = vdwg.mxu0
    %v2449 = vadd.f32 %v1785, %v2446
    %v2450 = vxor.u32 %v2449, 2147483648
    %v2451 = vmul.f32 %v2450, 1.442695
    %v2452 = vpow.pop %v2451
    %v2453 = vadd.f32 %v2452, 1.0
    %v2454 = vrcp.pop %v2453
    %v2455 = vmul.f32 1.0, %v2454
    %v2456 = vmul.f32 %v2455, 2.0
    %v2457 = vsub.f32 %v2456, 1.0
    %v2458 = vsel %vm65, %v2457, %v2455
    %v2459 = vmul.f32 %v2458, %v2367
    %2461 = vrot.lane.b32.xlu0 %v2458, 64
    %v2462 = vpop.permute.xlu0 %2461
    %v2464 = vmul.f32 %v2458, %v2462
    %2466 = vrot.lane.b32.xlu0 %v2464, 32
    %v2467 = vpop.permute.xlu0 %2466
    %v2469 = vadd.f32 %v2459, %v2467
    %v2470 = vtanh.pop %v2469
    %2472 = vrot.lane.b32.xlu0 %v2470, 64
    %v2473 = vpop.permute.xlu0 %2472
    %v2475 = vmul.f32 %v2458, %v2473
    %2477 = vrot.lane.b32.xlu0 %v2475, 32
    %v2478 = vpop.permute.xlu0 %2477
    %v2479 = vsel %vm678, %v2478, 0
    %2481 = vmatprep.subr.mxu0 0.0
    %2482 = vmatpush1.msra.mxu0 %v1497
    %2483 = vmatprep.subr.mxu0 0.0
    %2484 = vmatpush1.msra.mxu0 %v1498
    %2485 = vmatprep.subr.mxu0 0.0
    %2486 = vmatpush1.msra.mxu0 %v1499
    %2487 = vmatprep.subr.mxu0 0.0
    %2488 = vmatpush1.msra.mxu0 %v1500
    %2489 = vmatprep.subr.mxu0 0.0
    %2490 = vmatpush1.msra.mxu0 0.0
    %2491 = vmatprep.subr.mxu0 0.0
    %2492 = vmatpush1.msra.mxu0 0.0
    %2493 = vmatprep.subr.mxu0 0.0
    %2494 = vmatpush1.msra.mxu0 0.0
    %2495 = vmatprep.subr.mxu0 0.0
    %2496 = vmatpush1.msra.mxu0 0.0
    %2497 = vmatprep.subr.mxu0 0.0
    %2498 = vmatpush1.msra.mxu0 0.0
    %2499 = vmatprep.subr.mxu0 0.0
    %2500 = vmatpush1.msra.mxu0 0.0
    %2501 = vmatprep.subr.mxu0 0.0
    %2502 = vmatpush1.msra.mxu0 0.0
    %2503 = vmatprep.subr.mxu0 0.0
    %2504 = vmatpush1.msra.mxu0 0.0
    %2505 = vmatprep.subr.mxu0 0.0
    %2506 = vmatpush1.msra.mxu0 0.0
    %2507 = vmatprep.subr.mxu0 0.0
    %2508 = vmatpush1.msra.mxu0 0.0
    %2509 = vmatprep.subr.mxu0 0.0
    %2510 = vmatpush1.msra.mxu0 0.0
    %2511 = vmatprep.subr.mxu0 0.0
    %2512 = vmatpush1.msra.mxu0 0.0
    %2513 = vmatprep.subr.mxu0 0.0
    %2514 = vmatpush1.msra.mxu0 0.0
    %2515 = vmatprep.subr.mxu0 0.0
    %2516 = vmatpush1.msra.mxu0 0.0
    %2517 = vmatprep.subr.mxu0 0.0
    %2518 = vmatpush1.msra.mxu0 0.0
    %2519 = vmatprep.subr.mxu0 0.0
    %2520 = vmatpush1.msra.mxu0 0.0
    %2521 = vmatprep.subr.mxu0 0.0
    %2522 = vmatpush1.msra.mxu0 0.0
    %2523 = vmatprep.subr.mxu0 0.0
    %2524 = vmatpush1.msra.mxu0 0.0
    %2525 = vmatprep.subr.mxu0 0.0
    %2526 = vmatpush1.msra.mxu0 0.0
    %2527 = vmatprep.subr.mxu0 0.0
    %2528 = vmatpush1.msra.mxu0 0.0
    %2529 = vmatprep.subr.mxu0 0.0
    %2530 = vmatpush1.msra.mxu0 0.0
    %2531 = vmatprep.subr.mxu0 0.0
    %2532 = vmatpush1.msra.mxu0 0.0
    %2533 = vmatprep.subr.mxu0 0.0
    %2534 = vmatpush1.msra.mxu0 0.0
    %2535 = vmatprep.subr.mxu0 0.0
    %2536 = vmatpush1.msra.mxu0 0.0
    %2537 = vmatprep.subr.mxu0 0.0
    %2538 = vmatpush1.msra.mxu0 0.0
    %2539 = vmatprep.subr.mxu0 0.0
    %2540 = vmatpush1.msra.mxu0 0.0
    %2541 = vmatprep.subr.mxu0 0.0
    %2542 = vmatpush1.msra.mxu0 0.0
    %2543 = vmatprep.subr.mxu0 0.0
    %2544 = vmatpush1.msra.mxu0 0.0
    %2545 = vmatprep.mubr.f32.mxu0 0.0
    %2546 = vmatmul.mubr.f32.gmra.mrb[0].mxu0 %v2479
    %v2547 = vpop.f32.mrb[0].mxu0
    %v2548 = vadd.f32 0.0, %v2547
    %v2549 = vpop.f32.mrb[0].mxu0
    %2550 = vdwg.mxu0
    %v2551 = vadd.f32 %v1855, %v2548
    %v2552 = vxor.u32 %v2551, 2147483648
    %v2553 = vmul.f32 %v2552, 1.442695
    %v2554 = vpow.pop %v2553
    %v2555 = vadd.f32 %v2554, 1.0
    %v2556 = vrcp.pop %v2555
    %v2557 = vmul.f32 1.0, %v2556
    %v2558 = vmul.f32 %v2557, 2.0
    %v2559 = vsub.f32 %v2558, 1.0
    %v2560 = vsel %vm65, %v2559, %v2557
    %v2561 = vmul.f32 %v2560, %v2469
    %2563 = vrot.lane.b32.xlu0 %v2560, 64
    %v2564 = vpop.permute.xlu0 %2563
    %v2566 = vmul.f32 %v2560, %v2564
    %2568 = vrot.lane.b32.xlu0 %v2566, 32
    %v2569 = vpop.permute.xlu0 %2568
    %v2571 = vadd.f32 %v2561, %v2569
    %v2572 = vtanh.pop %v2571
    %2574 = vrot.lane.b32.xlu0 %v2572, 64
    %v2575 = vpop.permute.xlu0 %2574
    %v2577 = vmul.f32 %v2560, %v2575
    %2579 = vrot.lane.b32.xlu0 %v2577, 32
    %v2580 = vpop.permute.xlu0 %2579
    %v2581 = vsel %vm678, %v2580, 0
    %2583 = vmatprep.subr.mxu0 0.0
    %2584 = vmatpush1.msra.mxu0 %v1497
    %2585 = vmatprep.subr.mxu0 0.0
    %2586 = vmatpush1.msra.mxu0 %v1498
    %2587 = vmatprep.subr.mxu0 0.0
    %2588 = vmatpush1.msra.mxu0 %v1499
    %2589 = vmatprep.subr.mxu0 0.0
    %2590 = vmatpush1.msra.mxu0 %v1500
    %2591 = vmatprep.subr.mxu0 0.0
    %2592 = vmatpush1.msra.mxu0 0.0
    %2593 = vmatprep.subr.mxu0 0.0
    %2594 = vmatpush1.msra.mxu0 0.0
    %2595 = vmatprep.subr.mxu0 0.0
    %2596 = vmatpush1.msra.mxu0 0.0
    %2597 = vmatprep.subr.mxu0 0.0
    %2598 = vmatpush1.msra.mxu0 0.0
    %2599 = vmatprep.subr.mxu0 0.0
    %2600 = vmatpush1.msra.mxu0 0.0
    %2601 = vmatprep.subr.mxu0 0.0
    %2602 = vmatpush1.msra.mxu0 0.0
    %2603 = vmatprep.subr.mxu0 0.0
    %2604 = vmatpush1.msra.mxu0 0.0
    %2605 = vmatprep.subr.mxu0 0.0
    %2606 = vmatpush1.msra.mxu0 0.0
    %2607 = vmatprep.subr.mxu0 0.0
    %2608 = vmatpush1.msra.mxu0 0.0
    %2609 = vmatprep.subr.mxu0 0.0
    %2610 = vmatpush1.msra.mxu0 0.0
    %2611 = vmatprep.subr.mxu0 0.0
    %2612 = vmatpush1.msra.mxu0 0.0
    %2613 = vmatprep.subr.mxu0 0.0
    %2614 = vmatpush1.msra.mxu0 0.0
    %2615 = vmatprep.subr.mxu0 0.0
    %2616 = vmatpush1.msra.mxu0 0.0
    %2617 = vmatprep.subr.mxu0 0.0
    %2618 = vmatpush1.msra.mxu0 0.0
    %2619 = vmatprep.subr.mxu0 0.0
    %2620 = vmatpush1.msra.mxu0 0.0
    %2621 = vmatprep.subr.mxu0 0.0
    %2622 = vmatpush1.msra.mxu0 0.0
    %2623 = vmatprep.subr.mxu0 0.0
    %2624 = vmatpush1.msra.mxu0 0.0
    %2625 = vmatprep.subr.mxu0 0.0
    %2626 = vmatpush1.msra.mxu0 0.0
    %2627 = vmatprep.subr.mxu0 0.0
    %2628 = vmatpush1.msra.mxu0 0.0
    %2629 = vmatprep.subr.mxu0 0.0
    %2630 = vmatpush1.msra.mxu0 0.0
    %2631 = vmatprep.subr.mxu0 0.0
    %2632 = vmatpush1.msra.mxu0 0.0
    %2633 = vmatprep.subr.mxu0 0.0
    %2634 = vmatpush1.msra.mxu0 0.0
    %2635 = vmatprep.subr.mxu0 0.0
    %2636 = vmatpush1.msra.mxu0 0.0
    %2637 = vmatprep.subr.mxu0 0.0
    %2638 = vmatpush1.msra.mxu0 0.0
    %2639 = vmatprep.subr.mxu0 0.0
    %2640 = vmatpush1.msra.mxu0 0.0
    %2641 = vmatprep.subr.mxu0 0.0
    %2642 = vmatpush1.msra.mxu0 0.0
    %2643 = vmatprep.subr.mxu0 0.0
    %2644 = vmatpush1.msra.mxu0 0.0
    %2645 = vmatprep.subr.mxu0 0.0
    %2646 = vmatpush1.msra.mxu0 0.0
    %2647 = vmatprep.mubr.f32.mxu0 0.0
    %2648 = vmatmul.mubr.f32.gmra.mrb[0].mxu0 %v2581
    %v2649 = vpop.f32.mrb[0].mxu0
    %v2650 = vadd.f32 0.0, %v2649
    %v2651 = vpop.f32.mrb[0].mxu0
    %2652 = vdwg.mxu0
    %v2653 = vadd.f32 %v1925, %v2650
    %v2654 = vxor.u32 %v2653, 2147483648
    %v2655 = vmul.f32 %v2654, 1.442695
    %v2656 = vpow.pop %v2655
    %v2657 = vadd.f32 %v2656, 1.0
    %v2658 = vrcp.pop %v2657
    %v2659 = vmul.f32 1.0, %v2658
    %v2660 = vmul.f32 %v2659, 2.0
    %v2661 = vsub.f32 %v2660, 1.0
    %v2662 = vsel %vm65, %v2661, %v2659
    %v2663 = vmul.f32 %v2662, %v2571
    %2665 = vrot.lane.b32.xlu0 %v2662, 64
    %v2666 = vpop.permute.xlu0 %2665
    %v2668 = vmul.f32 %v2662, %v2666
    %2670 = vrot.lane.b32.xlu0 %v2668, 32
    %v2671 = vpop.permute.xlu0 %2670
    %v2673 = vadd.f32 %v2663, %v2671
    %v2674 = vtanh.pop %v2673
    %2676 = vrot.lane.b32.xlu0 %v2674, 64
    %v2677 = vpop.permute.xlu0 %2676
    %v2679 = vmul.f32 %v2662, %v2677
    %2681 = vrot.lane.b32.xlu0 %v2679, 32
    %v2682 = vpop.permute.xlu0 %2681
    %v2683 = vsel %vm678, %v2682, 0
    %2685 = vmatprep.subr.mxu0 0.0
    %2686 = vmatpush1.msra.mxu0 %v1497
    %2687 = vmatprep.subr.mxu0 0.0
    %2688 = vmatpush1.msra.mxu0 %v1498
    %2689 = vmatprep.subr.mxu0 0.0
    %2690 = vmatpush1.msra.mxu0 %v1499
    %2691 = vmatprep.subr.mxu0 0.0
    %2692 = vmatpush1.msra.mxu0 %v1500
    %2693 = vmatprep.subr.mxu0 0.0
    %2694 = vmatpush1.msra.mxu0 0.0
    %2695 = vmatprep.subr.mxu0 0.0
    %2696 = vmatpush1.msra.mxu0 0.0
    %2697 = vmatprep.subr.mxu0 0.0
    %2698 = vmatpush1.msra.mxu0 0.0
    %2699 = vmatprep.subr.mxu0 0.0
    %2700 = vmatpush1.msra.mxu0 0.0
    %2701 = vmatprep.subr.mxu0 0.0
    %2702 = vmatpush1.msra.mxu0 0.0
    %2703 = vmatprep.subr.mxu0 0.0
    %2704 = vmatpush1.msra.mxu0 0.0
    %2705 = vmatprep.subr.mxu0 0.0
    %2706 = vmatpush1.msra.mxu0 0.0
    %2707 = vmatprep.subr.mxu0 0.0
    %2708 = vmatpush1.msra.mxu0 0.0
    %2709 = vmatprep.subr.mxu0 0.0
    %2710 = vmatpush1.msra.mxu0 0.0
    %2711 = vmatprep.subr.mxu0 0.0
    %2712 = vmatpush1.msra.mxu0 0.0
    %2713 = vmatprep.subr.mxu0 0.0
    %2714 = vmatpush1.msra.mxu0 0.0
    %2715 = vmatprep.subr.mxu0 0.0
    %2716 = vmatpush1.msra.mxu0 0.0
    %2717 = vmatprep.subr.mxu0 0.0
    %2718 = vmatpush1.msra.mxu0 0.0
    %2719 = vmatprep.subr.mxu0 0.0
    %2720 = vmatpush1.msra.mxu0 0.0
    %2721 = vmatprep.subr.mxu0 0.0
    %2722 = vmatpush1.msra.mxu0 0.0
    %2723 = vmatprep.subr.mxu0 0.0
    %2724 = vmatpush1.msra.mxu0 0.0
    %2725 = vmatprep.subr.mxu0 0.0
    %2726 = vmatpush1.msra.mxu0 0.0
    %2727 = vmatprep.subr.mxu0 0.0
    %2728 = vmatpush1.msra.mxu0 0.0
    %2729 = vmatprep.subr.mxu0 0.0
    %2730 = vmatpush1.msra.mxu0 0.0
    %2731 = vmatprep.subr.mxu0 0.0
    %2732 = vmatpush1.msra.mxu0 0.0
    %2733 = vmatprep.subr.mxu0 0.0
    %2734 = vmatpush1.msra.mxu0 0.0
    %2735 = vmatprep.subr.mxu0 0.0
    %2736 = vmatpush1.msra.mxu0 0.0
    %2737 = vmatprep.subr.mxu0 0.0
    %2738 = vmatpush1.msra.mxu0 0.0
    %2739 = vmatprep.subr.mxu0 0.0
    %2740 = vmatpush1.msra.mxu0 0.0
    %2741 = vmatprep.subr.mxu0 0.0
    %2742 = vmatpush1.msra.mxu0 0.0
    %2743 = vmatprep.subr.mxu0 0.0
    %2744 = vmatpush1.msra.mxu0 0.0
    %2745 = vmatprep.subr.mxu0 0.0
    %2746 = vmatpush1.msra.mxu0 0.0
    %2747 = vmatprep.subr.mxu0 0.0
    %2748 = vmatpush1.msra.mxu0 0.0
    %2749 = vmatprep.mubr.f32.mxu0 0.0
    %2750 = vmatmul.mubr.f32.gmra.mrb[0].mxu0 %v2683
    %v2751 = vpop.f32.mrb[0].mxu0
    %v2752 = vadd.f32 0.0, %v2751
    %v2753 = vpop.f32.mrb[0].mxu0
    %2754 = vdwg.mxu0
    %v2755 = vadd.f32 %v1995, %v2752
    %v2756 = vxor.u32 %v2755, 2147483648
    %v2757 = vmul.f32 %v2756, 1.442695
    %v2758 = vpow.pop %v2757
    %v2759 = vadd.f32 %v2758, 1.0
    %v2760 = vrcp.pop %v2759
    %v2761 = vmul.f32 1.0, %v2760
    %v2762 = vmul.f32 %v2761, 2.0
    %v2763 = vsub.f32 %v2762, 1.0
    %v2764 = vsel %vm65, %v2763, %v2761
    %v2765 = vmul.f32 %v2764, %v2673
    %2767 = vrot.lane.b32.xlu0 %v2764, 64
    %v2768 = vpop.permute.xlu0 %2767
    %v2770 = vmul.f32 %v2764, %v2768
    %2772 = vrot.lane.b32.xlu0 %v2770, 32
    %v2773 = vpop.permute.xlu0 %2772
    %v2775 = vadd.f32 %v2765, %v2773
    %v2776 = vtanh.pop %v2775
    %2778 = vrot.lane.b32.xlu0 %v2776, 64
    %v2779 = vpop.permute.xlu0 %2778
    %v2781 = vmul.f32 %v2764, %v2779
    %2783 = vrot.lane.b32.xlu0 %v2781, 32
    %v2784 = vpop.permute.xlu0 %2783
    %v2785 = vsel %vm678, %v2784, 0
    %2787 = vmatprep.subr.mxu0 0.0
    %2788 = vmatpush1.msra.mxu0 %v1497
    %2789 = vmatprep.subr.mxu0 0.0
    %2790 = vmatpush1.msra.mxu0 %v1498
    %2791 = vmatprep.subr.mxu0 0.0
    %2792 = vmatpush1.msra.mxu0 %v1499
    %2793 = vmatprep.subr.mxu0 0.0
    %2794 = vmatpush1.msra.mxu0 %v1500
    %2795 = vmatprep.subr.mxu0 0.0
    %2796 = vmatpush1.msra.mxu0 0.0
    %2797 = vmatprep.subr.mxu0 0.0
    %2798 = vmatpush1.msra.mxu0 0.0
    %2799 = vmatprep.subr.mxu0 0.0
    %2800 = vmatpush1.msra.mxu0 0.0
    %2801 = vmatprep.subr.mxu0 0.0
    %2802 = vmatpush1.msra.mxu0 0.0
    %2803 = vmatprep.subr.mxu0 0.0
    %2804 = vmatpush1.msra.mxu0 0.0
    %2805 = vmatprep.subr.mxu0 0.0
    %2806 = vmatpush1.msra.mxu0 0.0
    %2807 = vmatprep.subr.mxu0 0.0
    %2808 = vmatpush1.msra.mxu0 0.0
    %2809 = vmatprep.subr.mxu0 0.0
    %2810 = vmatpush1.msra.mxu0 0.0
    %2811 = vmatprep.subr.mxu0 0.0
    %2812 = vmatpush1.msra.mxu0 0.0
    %2813 = vmatprep.subr.mxu0 0.0
    %2814 = vmatpush1.msra.mxu0 0.0
    %2815 = vmatprep.subr.mxu0 0.0
    %2816 = vmatpush1.msra.mxu0 0.0
    %2817 = vmatprep.subr.mxu0 0.0
    %2818 = vmatpush1.msra.mxu0 0.0
    %2819 = vmatprep.subr.mxu0 0.0
    %2820 = vmatpush1.msra.mxu0 0.0
    %2821 = vmatprep.subr.mxu0 0.0
    %2822 = vmatpush1.msra.mxu0 0.0
    %2823 = vmatprep.subr.mxu0 0.0
    %2824 = vmatpush1.msra.mxu0 0.0
    %2825 = vmatprep.subr.mxu0 0.0
    %2826 = vmatpush1.msra.mxu0 0.0
    %2827 = vmatprep.subr.mxu0 0.0
    %2828 = vmatpush1.msra.mxu0 0.0
    %2829 = vmatprep.subr.mxu0 0.0
    %2830 = vmatpush1.msra.mxu0 0.0
    %2831 = vmatprep.subr.mxu0 0.0
    %2832 = vmatpush1.msra.mxu0 0.0
    %2833 = vmatprep.subr.mxu0 0.0
    %2834 = vmatpush1.msra.mxu0 0.0
    %2835 = vmatprep.subr.mxu0 0.0
    %2836 = vmatpush1.msra.mxu0 0.0
    %2837 = vmatprep.subr.mxu0 0.0
    %2838 = vmatpush1.msra.mxu0 0.0
    %2839 = vmatprep.subr.mxu0 0.0
    %2840 = vmatpush1.msra.mxu0 0.0
    %2841 = vmatprep.subr.mxu0 0.0
    %2842 = vmatpush1.msra.mxu0 0.0
    %2843 = vmatprep.subr.mxu0 0.0
    %2844 = vmatpush1.msra.mxu0 0.0
    %2845 = vmatprep.subr.mxu0 0.0
    %2846 = vmatpush1.msra.mxu0 0.0
    %2847 = vmatprep.subr.mxu0 0.0
    %2848 = vmatpush1.msra.mxu0 0.0
    %2849 = vmatprep.subr.mxu0 0.0
    %2850 = vmatpush1.msra.mxu0 0.0
    %2851 = vmatprep.mubr.f32.mxu0 0.0
    %2852 = vmatmul.mubr.f32.gmra.mrb[0].mxu0 %v2785
    %v2853 = vpop.f32.mrb[0].mxu0
    %v2854 = vadd.f32 0.0, %v2853
    %v2855 = vpop.f32.mrb[0].mxu0
    %2856 = vdwg.mxu0
    %v2857 = vadd.f32 %v2070, %v2854
    %v2858 = vxor.u32 %v2857, 2147483648
    %v2859 = vmul.f32 %v2858, 1.442695
    %v2860 = vpow.pop %v2859
    %v2861 = vadd.f32 %v2860, 1.0
    %v2862 = vrcp.pop %v2861
    %v2863 = vmul.f32 1.0, %v2862
    %v2864 = vmul.f32 %v2863, 2.0
    %v2865 = vsub.f32 %v2864, 1.0
    %v2866 = vsel %vm65, %v2865, %v2863
    %v2867 = vmul.f32 %v2866, %v2775
    %2869 = vrot.lane.b32.xlu0 %v2866, 64
    %v2870 = vpop.permute.xlu0 %2869
    %v2872 = vmul.f32 %v2866, %v2870
    %2874 = vrot.lane.b32.xlu0 %v2872, 32
    %v2875 = vpop.permute.xlu0 %2874
    %v2877 = vadd.f32 %v2867, %v2875
    %v2878 = vtanh.pop %v2877
    %2880 = vrot.lane.b32.xlu0 %v2878, 64
    %v2881 = vpop.permute.xlu0 %2880
    %v2883 = vmul.f32 %v2866, %v2881
    %v2884 = vmax.f32 %v2883, 0.0
    %2886 = vrot.lane.b32.xlu0 %v2884, 32
    %v2887 = vpop.permute.xlu0 %2886
    %vm2889 = vcmask 254976
    %2890 = vst.msk [vmem:[#allocation4] sm:$0x3] %vm2889, %v2887
    %v2891 = vld [vmem:[%s15] sm:$0xff]
    %v2892 = vld [vmem:[%s15 + $0x8] sm:$0xff]
    %v2893 = vld [vmem:[%s15 + $0x10] sm:$0xff]
    %v2894 = vld [vmem:[%s15 + $0x18] sm:$0xff]
    %v2895 = vld [vmem:[%s16] sm:$0x1]
    %v2897 = vlaneseq
    %v2898 = vshrl.u32 %v2897, 7
    %v2899 = vsub.s32 0, %v2898
    %v2900 = vrot.slane %v2895, %v2899
    %v2902 = vsel %vm678, %v2887, 0
    %2904 = vmatprep.subr.mxu0 0.0
    %2905 = vmatpush1.msra.mxu0 %v2891
    %2906 = vmatprep.subr.mxu0 0.0
    %2907 = vmatpush1.msra.mxu0 %v2892
    %2908 = vmatprep.subr.mxu0 0.0
    %2909 = vmatpush1.msra.mxu0 %v2893
    %2910 = vmatprep.subr.mxu0 0.0
    %2911 = vmatpush1.msra.mxu0 %v2894
    %2912 = vmatprep.subr.mxu0 0.0
    %2913 = vmatpush1.msra.mxu0 0.0
    %2914 = vmatprep.subr.mxu0 0.0
    %2915 = vmatpush1.msra.mxu0 0.0
    %2916 = vmatprep.subr.mxu0 0.0
    %2917 = vmatpush1.msra.mxu0 0.0
    %2918 = vmatprep.subr.mxu0 0.0
    %2919 = vmatpush1.msra.mxu0 0.0
    %2920 = vmatprep.subr.mxu0 0.0
    %2921 = vmatpush1.msra.mxu0 0.0
    %2922 = vmatprep.subr.mxu0 0.0
    %2923 = vmatpush1.msra.mxu0 0.0
    %2924 = vmatprep.subr.mxu0 0.0
    %2925 = vmatpush1.msra.mxu0 0.0
    %2926 = vmatprep.subr.mxu0 0.0
    %2927 = vmatpush1.msra.mxu0 0.0
    %2928 = vmatprep.subr.mxu0 0.0
    %2929 = vmatpush1.msra.mxu0 0.0
    %2930 = vmatprep.subr.mxu0 0.0
    %2931 = vmatpush1.msra.mxu0 0.0
    %2932 = vmatprep.subr.mxu0 0.0
    %2933 = vmatpush1.msra.mxu0 0.0
    %2934 = vmatprep.subr.mxu0 0.0
    %2935 = vmatpush1.msra.mxu0 0.0
    %2936 = vmatprep.subr.mxu0 0.0
    %2937 = vmatpush1.msra.mxu0 0.0
    %2938 = vmatprep.subr.mxu0 0.0
    %2939 = vmatpush1.msra.mxu0 0.0
    %2940 = vmatprep.subr.mxu0 0.0
    %2941 = vmatpush1.msra.mxu0 0.0
    %2942 = vmatprep.subr.mxu0 0.0
    %2943 = vmatpush1.msra.mxu0 0.0
    %2944 = vmatprep.subr.mxu0 0.0
    %2945 = vmatpush1.msra.mxu0 0.0
    %2946 = vmatprep.subr.mxu0 0.0
    %2947 = vmatpush1.msra.mxu0 0.0
    %2948 = vmatprep.subr.mxu0 0.0
    %2949 = vmatpush1.msra.mxu0 0.0
    %2950 = vmatprep.subr.mxu0 0.0
    %2951 = vmatpush1.msra.mxu0 0.0
    %2952 = vmatprep.subr.mxu0 0.0
    %2953 = vmatpush1.msra.mxu0 0.0
    %2954 = vmatprep.subr.mxu0 0.0
    %2955 = vmatpush1.msra.mxu0 0.0
    %2956 = vmatprep.subr.mxu0 0.0
    %2957 = vmatpush1.msra.mxu0 0.0
    %2958 = vmatprep.subr.mxu0 0.0
    %2959 = vmatpush1.msra.mxu0 0.0
    %2960 = vmatprep.subr.mxu0 0.0
    %2961 = vmatpush1.msra.mxu0 0.0
    %2962 = vmatprep.subr.mxu0 0.0
    %2963 = vmatpush1.msra.mxu0 0.0
    %2964 = vmatprep.subr.mxu0 0.0
    %2965 = vmatpush1.msra.mxu0 0.0
    %2966 = vmatprep.subr.mxu0 0.0
    %2967 = vmatpush1.msra.mxu0 0.0
    %2968 = vmatprep.mubr.f32.mxu0 0.0
    %2969 = vmatmul.mubr.f32.gmra.mrb[0].mxu0 %v2902
    %v2970 = vpop.f32.mrb[0].mxu0
    %v2971 = vadd.f32 %v2900, %v2970
    %v2972 = vpop.f32.mrb[0].mxu0
    %2973 = vdwg.mxu0
    %vm2974 = vcmask 17408
    %2975 = vst.msk [vmem:[#allocation2] sm:$0x3] %vm2974, %v2971
    %v2976 = vld [vmem:[%s8] sm:$0xff]
    %v2977 = vld [vmem:[%s8 + $0x8] sm:$0xff]
    %v2978 = vld [vmem:[%s8 + $0x10] sm:$0xff]
    %v2979 = vld [vmem:[%s8 + $0x18] sm:$0xff]
    %v2980 = vld [vmem:[%s9] sm:$0x1]
    %v2982 = vlaneseq
    %v2983 = vshrl.u32 %v2982, 7
    %v2984 = vsub.s32 0, %v2983
    %v2985 = vrot.slane %v2980, %v2984
    %2987 = vmatprep.subr.mxu0 0.0
    %2988 = vmatpush1.msra.mxu0 %v2976
    %2989 = vmatprep.subr.mxu0 0.0
    %2990 = vmatpush1.msra.mxu0 %v2977
    %2991 = vmatprep.subr.mxu0 0.0
    %2992 = vmatpush1.msra.mxu0 %v2978
    %2993 = vmatprep.subr.mxu0 0.0
    %2994 = vmatpush1.msra.mxu0 %v2979
    %2995 = vmatprep.subr.mxu0 0.0
    %2996 = vmatpush1.msra.mxu0 0.0
    %2997 = vmatprep.subr.mxu0 0.0
    %2998 = vmatpush1.msra.mxu0 0.0
    %2999 = vmatprep.subr.mxu0 0.0
    %3000 = vmatpush1.msra.mxu0 0.0
    %3001 = vmatprep.subr.mxu0 0.0
    %3002 = vmatpush1.msra.mxu0 0.0
    %3003 = vmatprep.subr.mxu0 0.0
    %3004 = vmatpush1.msra.mxu0 0.0
    %3005 = vmatprep.subr.mxu0 0.0
    %3006 = vmatpush1.msra.mxu0 0.0
    %3007 = vmatprep.subr.mxu0 0.0
    %3008 = vmatpush1.msra.mxu0 0.0
    %3009 = vmatprep.subr.mxu0 0.0
    %3010 = vmatpush1.msra.mxu0 0.0
    %3011 = vmatprep.subr.mxu0 0.0
    %3012 = vmatpush1.msra.mxu0 0.0
    %3013 = vmatprep.subr.mxu0 0.0
    %3014 = vmatpush1.msra.mxu0 0.0
    %3015 = vmatprep.subr.mxu0 0.0
    %3016 = vmatpush1.msra.mxu0 0.0
    %3017 = vmatprep.subr.mxu0 0.0
    %3018 = vmatpush1.msra.mxu0 0.0
    %3019 = vmatprep.subr.mxu0 0.0
    %3020 = vmatpush1.msra.mxu0 0.0
    %3021 = vmatprep.subr.mxu0 0.0
    %3022 = vmatpush1.msra.mxu0 0.0
    %3023 = vmatprep.subr.mxu0 0.0
    %3024 = vmatpush1.msra.mxu0 0.0
    %3025 = vmatprep.subr.mxu0 0.0
    %3026 = vmatpush1.msra.mxu0 0.0
    %3027 = vmatprep.subr.mxu0 0.0
    %3028 = vmatpush1.msra.mxu0 0.0
    %3029 = vmatprep.subr.mxu0 0.0
    %3030 = vmatpush1.msra.mxu0 0.0
    %3031 = vmatprep.subr.mxu0 0.0
    %3032 = vmatpush1.msra.mxu0 0.0
    %3033 = vmatprep.subr.mxu0 0.0
    %3034 = vmatpush1.msra.mxu0 0.0
    %3035 = vmatprep.subr.mxu0 0.0
    %3036 = vmatpush1.msra.mxu0 0.0
    %3037 = vmatprep.subr.mxu0 0.0
    %3038 = vmatpush1.msra.mxu0 0.0
    %3039 = vmatprep.subr.mxu0 0.0
    %3040 = vmatpush1.msra.mxu0 0.0
    %3041 = vmatprep.subr.mxu0 0.0
    %3042 = vmatpush1.msra.mxu0 0.0
    %3043 = vmatprep.subr.mxu0 0.0
    %3044 = vmatpush1.msra.mxu0 0.0
    %3045 = vmatprep.subr.mxu0 0.0
    %3046 = vmatpush1.msra.mxu0 0.0
    %3047 = vmatprep.subr.mxu0 0.0
    %3048 = vmatpush1.msra.mxu0 0.0
    %3049 = vmatprep.subr.mxu0 0.0
    %3050 = vmatpush1.msra.mxu0 0.0
    %3051 = vmatprep.mubr.f32.mxu0 0.0
    %3052 = vmatmul.mubr.f32.gmra.mrb[0].mxu0 %v2001
    %v3053 = vpop.f32.mrb[0].mxu0
    %v3054 = vadd.f32 %v2985, %v3053
    %v3055 = vpop.f32.mrb[0].mxu0
    %3056 = vdwg.mxu0
    %v3057 = vld [vmem:[%s7] sm:$0xff]
    %v3058 = vld [vmem:[%s7 + $0x8] sm:$0xff]
    %v3059 = vld [vmem:[%s7 + $0x10] sm:$0xff]
    %v3060 = vld [vmem:[%s7 + $0x18] sm:$0xff]
    %v3061 = vld [vmem:[%s7 + $0x20] sm:$0xff]
    %v3062 = vld [vmem:[%s7 + $0x28] sm:$0xff]
    %v3063 = vld [vmem:[%s7 + $0x30] sm:$0xff]
    %v3064 = vld [vmem:[%s7 + $0x38] sm:$0xff]
    %v3065 = vld [vmem:[%s7 + $0x40] sm:$0xff]
    %v3066 = vld [vmem:[%s7 + $0x48] sm:$0xff]
    %v3067 = vld [vmem:[%s7 + $0x50] sm:$0xff]
    %v3068 = vld [vmem:[%s7 + $0x58] sm:$0xff]
    %v3069 = vld [vmem:[%s7 + $0x60] sm:$0xff]
    %v3070 = vld [vmem:[%s7 + $0x68] sm:$0xff]
    %v3071 = vld [vmem:[%s7 + $0x70] sm:$0xff]
    %v3072 = vld [vmem:[%s7 + $0x78] sm:$0xff]
    %v3073 = vld [vmem:[%s11] sm:$0xff]
    %v3074 = vld [vmem:[%s11 + $0x8] sm:$0xff]
    %v3075 = vld [vmem:[%s11 + $0x10] sm:$0xff]
    %v3076 = vld [vmem:[%s11 + $0x18] sm:$0xff]
    %v3077 = vld [vmem:[%s12] sm:$0x1]
    %v3079 = vlaneseq
    %v3080 = vshrl.u32 %v3079, 7
    %v3081 = vsub.s32 0, %v3080
    %v3082 = vrot.slane %v3077, %v3081
    %3085 = vrot.lane.b32.xlu0 %v2883, 32
    %v3086 = vpop.permute.xlu0 %3085
    %v3087 = vsel %vm678, %v3086, 0
    %3089 = vmatprep.subr.mxu0 0.0
    %3090 = vmatpush1.msra.mxu0 %v3073
    %3091 = vmatprep.subr.mxu0 0.0
    %3092 = vmatpush1.msra.mxu0 %v3074
    %3093 = vmatprep.subr.mxu0 0.0
    %3094 = vmatpush1.msra.mxu0 %v3075
    %3095 = vmatprep.subr.mxu0 0.0
    %3096 = vmatpush1.msra.mxu0 %v3076
    %3097 = vmatprep.subr.mxu0 0.0
    %3098 = vmatpush1.msra.mxu0 0.0
    %3099 = vmatprep.subr.mxu0 0.0
    %3100 = vmatpush1.msra.mxu0 0.0
    %3101 = vmatprep.subr.mxu0 0.0
    %3102 = vmatpush1.msra.mxu0 0.0
    %3103 = vmatprep.subr.mxu0 0.0
    %3104 = vmatpush1.msra.mxu0 0.0
    %3105 = vmatprep.subr.mxu0 0.0
    %3106 = vmatpush1.msra.mxu0 0.0
    %3107 = vmatprep.subr.mxu0 0.0
    %3108 = vmatpush1.msra.mxu0 0.0
    %3109 = vmatprep.subr.mxu0 0.0
    %3110 = vmatpush1.msra.mxu0 0.0
    %3111 = vmatprep.subr.mxu0 0.0
    %3112 = vmatpush1.msra.mxu0 0.0
    %3113 = vmatprep.subr.mxu0 0.0
    %3114 = vmatpush1.msra.mxu0 0.0
    %3115 = vmatprep.subr.mxu0 0.0
    %3116 = vmatpush1.msra.mxu0 0.0
    %3117 = vmatprep.subr.mxu0 0.0
    %3118 = vmatpush1.msra.mxu0 0.0
    %3119 = vmatprep.subr.mxu0 0.0
    %3120 = vmatpush1.msra.mxu0 0.0
    %3121 = vmatprep.subr.mxu0 0.0
    %3122 = vmatpush1.msra.mxu0 0.0
    %3123 = vmatprep.subr.mxu0 0.0
    %3124 = vmatpush1.msra.mxu0 0.0
    %3125 = vmatprep.subr.mxu0 0.0
    %3126 = vmatpush1.msra.mxu0 0.0
    %3127 = vmatprep.subr.mxu0 0.0
    %3128 = vmatpush1.msra.mxu0 0.0
    %3129 = vmatprep.subr.mxu0 0.0
    %3130 = vmatpush1.msra.mxu0 0.0
    %3131 = vmatprep.subr.mxu0 0.0
    %3132 = vmatpush1.msra.mxu0 0.0
    %3133 = vmatprep.subr.mxu0 0.0
    %3134 = vmatpush1.msra.mxu0 0.0
    %3135 = vmatprep.subr.mxu0 0.0
    %3136 = vmatpush1.msra.mxu0 0.0
    %3137 = vmatprep.subr.mxu0 0.0
    %3138 = vmatpush1.msra.mxu0 0.0
    %3139 = vmatprep.subr.mxu0 0.0
    %3140 = vmatpush1.msra.mxu0 0.0
    %3141 = vmatprep.subr.mxu0 0.0
    %3142 = vmatpush1.msra.mxu0 0.0
    %3143 = vmatprep.subr.mxu0 0.0
    %3144 = vmatpush1.msra.mxu0 0.0
    %3145 = vmatprep.subr.mxu0 0.0
    %3146 = vmatpush1.msra.mxu0 0.0
    %3147 = vmatprep.subr.mxu0 0.0
    %3148 = vmatpush1.msra.mxu0 0.0
    %3149 = vmatprep.subr.mxu0 0.0
    %3150 = vmatpush1.msra.mxu0 0.0
    %3151 = vmatprep.subr.mxu0 0.0
    %3152 = vmatpush1.msra.mxu0 0.0
    %3153 = vmatprep.mubr.f32.mxu0 0.0
    %3154 = vmatmul.mubr.f32.gmra.mrb[0].mxu0 %v3087
    %v3155 = vpop.f32.mrb[0].mxu0
    %v3156 = vadd.f32 %v3082, %v3155
    %v3157 = vpop.f32.mrb[0].mxu0
    %3158 = vdwg.mxu0
    %v3159 = vld [vmem:[%s10] sm:$0xff]
    %v3160 = vld [vmem:[%s10 + $0x8] sm:$0xff]
    %v3161 = vld [vmem:[%s10 + $0x10] sm:$0xff]
    %v3162 = vld [vmem:[%s10 + $0x18] sm:$0xff]
    %v3163 = vld [vmem:[%s13] sm:$0xff]
    %v3164 = vld [vmem:[%s13 + $0x8] sm:$0xff]
    %v3165 = vld [vmem:[%s13 + $0x10] sm:$0xff]
    %v3166 = vld [vmem:[%s13 + $0x18] sm:$0xff]
    %v3167 = vld [vmem:[%s14] sm:$0x1]
    %v3169 = vlaneseq
    %v3170 = vshrl.u32 %v3169, 7
    %v3171 = vsub.s32 0, %v3170
    %v3172 = vrot.slane %v3167, %v3171
    %3174 = vmatprep.subr.mxu0 0.0
    %3175 = vmatpush1.msra.mxu0 %v3057
    %3176 = vmatprep.subr.mxu0 0.0
    %3177 = vmatpush1.msra.mxu0 %v3058
    %3178 = vmatprep.subr.mxu0 0.0
    %3179 = vmatpush1.msra.mxu0 %v3059
    %3180 = vmatprep.subr.mxu0 0.0
    %3181 = vmatpush1.msra.mxu0 %v3060
    %3182 = vmatprep.subr.mxu0 0.0
    %3183 = vmatpush1.msra.mxu0 %v3061
    %3184 = vmatprep.subr.mxu0 0.0
    %3185 = vmatpush1.msra.mxu0 %v3062
    %3186 = vmatprep.subr.mxu0 0.0
    %3187 = vmatpush1.msra.mxu0 %v3063
    %3188 = vmatprep.subr.mxu0 0.0
    %3189 = vmatpush1.msra.mxu0 %v3064
    %3190 = vmatprep.subr.mxu0 0.0
    %3191 = vmatpush1.msra.mxu0 %v3065
    %3192 = vmatprep.subr.mxu0 0.0
    %3193 = vmatpush1.msra.mxu0 %v3066
    %3194 = vmatprep.subr.mxu0 0.0
    %3195 = vmatpush1.msra.mxu0 %v3067
    %3196 = vmatprep.subr.mxu0 0.0
    %3197 = vmatpush1.msra.mxu0 %v3068
    %3198 = vmatprep.subr.mxu0 0.0
    %3199 = vmatpush1.msra.mxu0 %v3069
    %3200 = vmatprep.subr.mxu0 0.0
    %3201 = vmatpush1.msra.mxu0 %v3070
    %3202 = vmatprep.subr.mxu0 0.0
    %3203 = vmatpush1.msra.mxu0 %v3071
    %3204 = vmatprep.subr.mxu0 0.0
    %3205 = vmatpush1.msra.mxu0 %v3072
    %3206 = vmatprep.subr.mxu0 0.0
    %3207 = vmatpush1.msra.mxu0 0.0
    %3208 = vmatprep.subr.mxu0 0.0
    %3209 = vmatpush1.msra.mxu0 0.0
    %3210 = vmatprep.subr.mxu0 0.0
    %3211 = vmatpush1.msra.mxu0 0.0
    %3212 = vmatprep.subr.mxu0 0.0
    %3213 = vmatpush1.msra.mxu0 0.0
    %3214 = vmatprep.subr.mxu0 0.0
    %3215 = vmatpush1.msra.mxu0 0.0
    %3216 = vmatprep.subr.mxu0 0.0
    %3217 = vmatpush1.msra.mxu0 0.0
    %3218 = vmatprep.subr.mxu0 0.0
    %3219 = vmatpush1.msra.mxu0 0.0
    %3220 = vmatprep.subr.mxu0 0.0
    %3221 = vmatpush1.msra.mxu0 0.0
    %3222 = vmatprep.subr.mxu0 0.0
    %3223 = vmatpush1.msra.mxu0 0.0
    %3224 = vmatprep.subr.mxu0 0.0
    %3225 = vmatpush1.msra.mxu0 0.0
    %3226 = vmatprep.subr.mxu0 0.0
    %3227 = vmatpush1.msra.mxu0 0.0
    %3228 = vmatprep.subr.mxu0 0.0
    %3229 = vmatpush1.msra.mxu0 0.0
    %3230 = vmatprep.subr.mxu0 0.0
    %3231 = vmatpush1.msra.mxu0 0.0
    %3232 = vmatprep.subr.mxu0 0.0
    %3233 = vmatpush1.msra.mxu0 0.0
    %3234 = vmatprep.subr.mxu0 0.0
    %3235 = vmatpush1.msra.mxu0 0.0
    %3236 = vmatprep.subr.mxu0 0.0
    %3237 = vmatpush1.msra.mxu0 0.0
    %3238 = vmatprep.mubr.f32.mxu0 0.0
    %3239 = vmatmul.mubr.f32.gmra.mrb[0].mxu0 0.0
    %v3240 = vpop.f32.mrb[0].mxu0
    %v3241 = vadd.f32 %v3054, %v3240
    %v3242 = vpop.f32.mrb[0].mxu0
    %3243 = vdwg.mxu0
    %v3244 = vxor.u32 %v3241, 2147483648
    %v3245 = vmul.f32 %v3244, 1.442695
    %v3246 = vpow.pop %v3245
    %v3247 = vadd.f32 %v3246, 1.0
    %v3248 = vrcp.pop %v3247
    %v3249 = vmul.f32 1.0, %v3248
    %v3250 = vmul.f32 %v3249, 2.0
    %v3251 = vsub.f32 %v3250, 1.0
    %v3252 = vsel %vm65, %v3251, %v3249
    %v3253 = vmul.f32 %v3252, %v1486
    %3255 = vrot.lane.b32.xlu0 %v3252, 64
    %v3256 = vpop.permute.xlu0 %3255
    %v3258 = vmul.f32 %v3252, %v3256
    %3260 = vrot.lane.b32.xlu0 %v3258, 32
    %v3261 = vpop.permute.xlu0 %3260
    %v3263 = vadd.f32 %v3253, %v3261
    %v3264 = vtanh.pop %v3263
    %3266 = vrot.lane.b32.xlu0 %v3264, 64
    %v3267 = vpop.permute.xlu0 %3266
    %v3269 = vmul.f32 %v3252, %v3267
    %3271 = vrot.lane.b32.xlu0 %v3269, 32
    %v3272 = vpop.permute.xlu0 %3271
    %v3273 = vsel %vm678, %v3272, 0
    %3275 = vmatprep.subr.mxu0 0.0
    %3276 = vmatpush1.msra.mxu0 %v3159
    %3277 = vmatprep.subr.mxu0 0.0
    %3278 = vmatpush1.msra.mxu0 %v3160
    %3279 = vmatprep.subr.mxu0 0.0
    %3280 = vmatpush1.msra.mxu0 %v3161
    %3281 = vmatprep.subr.mxu0 0.0
    %3282 = vmatpush1.msra.mxu0 %v3162
    %3283 = vmatprep.subr.mxu0 0.0
    %3284 = vmatpush1.msra.mxu0 0.0
    %3285 = vmatprep.subr.mxu0 0.0
    %3286 = vmatpush1.msra.mxu0 0.0
    %3287 = vmatprep.subr.mxu0 0.0
    %3288 = vmatpush1.msra.mxu0 0.0
    %3289 = vmatprep.subr.mxu0 0.0
    %3290 = vmatpush1.msra.mxu0 0.0
    %3291 = vmatprep.subr.mxu0 0.0
    %3292 = vmatpush1.msra.mxu0 0.0
    %3293 = vmatprep.subr.mxu0 0.0
    %3294 = vmatpush1.msra.mxu0 0.0
    %3295 = vmatprep.subr.mxu0 0.0
    %3296 = vmatpush1.msra.mxu0 0.0
    %3297 = vmatprep.subr.mxu0 0.0
    %3298 = vmatpush1.msra.mxu0 0.0
    %3299 = vmatprep.subr.mxu0 0.0
    %3300 = vmatpush1.msra.mxu0 0.0
    %3301 = vmatprep.subr.mxu0 0.0
    %3302 = vmatpush1.msra.mxu0 0.0
    %3303 = vmatprep.subr.mxu0 0.0
    %3304 = vmatpush1.msra.mxu0 0.0
    %3305 = vmatprep.subr.mxu0 0.0
    %3306 = vmatpush1.msra.mxu0 0.0
    %3307 = vmatprep.subr.mxu0 0.0
    %3308 = vmatpush1.msra.mxu0 0.0
    %3309 = vmatprep.subr.mxu0 0.0
    %3310 = vmatpush1.msra.mxu0 0.0
    %3311 = vmatprep.subr.mxu0 0.0
    %3312 = vmatpush1.msra.mxu0 0.0
    %3313 = vmatprep.subr.mxu0 0.0
    %3314 = vmatpush1.msra.mxu0 0.0
    %3315 = vmatprep.subr.mxu0 0.0
    %3316 = vmatpush1.msra.mxu0 0.0
    %3317 = vmatprep.subr.mxu0 0.0
    %3318 = vmatpush1.msra.mxu0 0.0
    %3319 = vmatprep.subr.mxu0 0.0
    %3320 = vmatpush1.msra.mxu0 0.0
    %3321 = vmatprep.subr.mxu0 0.0
    %3322 = vmatpush1.msra.mxu0 0.0
    %3323 = vmatprep.subr.mxu0 0.0
    %3324 = vmatpush1.msra.mxu0 0.0
    %3325 = vmatprep.subr.mxu0 0.0
    %3326 = vmatpush1.msra.mxu0 0.0
    %3327 = vmatprep.subr.mxu0 0.0
    %3328 = vmatpush1.msra.mxu0 0.0
    %3329 = vmatprep.subr.mxu0 0.0
    %3330 = vmatpush1.msra.mxu0 0.0
    %3331 = vmatprep.subr.mxu0 0.0
    %3332 = vmatpush1.msra.mxu0 0.0
    %3333 = vmatprep.subr.mxu0 0.0
    %3334 = vmatpush1.msra.mxu0 0.0
    %3335 = vmatprep.subr.mxu0 0.0
    %3336 = vmatpush1.msra.mxu0 0.0
    %3337 = vmatprep.subr.mxu0 0.0
    %3338 = vmatpush1.msra.mxu0 0.0
    %3339 = vmatprep.mubr.f32.mxu0 0.0
    %3340 = vmatmul.mubr.f32.gmra.mrb[0].mxu0 %v3273
    %v3341 = vpop.f32.mrb[0].mxu0
    %v3342 = vadd.f32 %v3156, %v3341
    %v3343 = vpop.f32.mrb[0].mxu0
    %3344 = vdwg.mxu0
    %v3345 = vxor.u32 %v3342, 2147483648
    %v3346 = vmul.f32 %v3345, 1.442695
    %v3347 = vpow.pop %v3346
    %v3348 = vadd.f32 %v3347, 1.0
    %v3349 = vrcp.pop %v3348
    %v3350 = vmul.f32 1.0, %v3349
    %v3351 = vmul.f32 %v3350, 2.0
    %v3352 = vsub.f32 %v3351, 1.0
    %v3353 = vsel %vm65, %v3352, %v3350
    %v3354 = vmul.f32 %v3353, %v2877
    %3356 = vrot.lane.b32.xlu0 %v3353, 64
    %v3357 = vpop.permute.xlu0 %3356
    %v3359 = vmul.f32 %v3353, %v3357
    %3361 = vrot.lane.b32.xlu0 %v3359, 32
    %v3362 = vpop.permute.xlu0 %3361
    %v3364 = vadd.f32 %v3354, %v3362
    %v3365 = vtanh.pop %v3364
    %3367 = vrot.lane.b32.xlu0 %v3365, 64
    %v3368 = vpop.permute.xlu0 %3367
    %v3370 = vmul.f32 %v3353, %v3368
    %3372 = vrot.lane.b32.xlu0 %v3370, 32
    %v3373 = vpop.permute.xlu0 %3372
    %v3374 = vsel %vm678, %v3373, 0
    %3376 = vmatprep.subr.mxu0 0.0
    %3377 = vmatpush1.msra.mxu0 %v3163
    %3378 = vmatprep.subr.mxu0 0.0
    %3379 = vmatpush1.msra.mxu0 %v3164
    %3380 = vmatprep.subr.mxu0 0.0
    %3381 = vmatpush1.msra.mxu0 %v3165
    %3382 = vmatprep.subr.mxu0 0.0
    %3383 = vmatpush1.msra.mxu0 %v3166
    %3384 = vmatprep.subr.mxu0 0.0
    %3385 = vmatpush1.msra.mxu0 0.0
    %3386 = vmatprep.subr.mxu0 0.0
    %3387 = vmatpush1.msra.mxu0 0.0
    %3388 = vmatprep.subr.mxu0 0.0
    %3389 = vmatpush1.msra.mxu0 0.0
    %3390 = vmatprep.subr.mxu0 0.0
    %3391 = vmatpush1.msra.mxu0 0.0
    %3392 = vmatprep.subr.mxu0 0.0
    %3393 = vmatpush1.msra.mxu0 0.0
    %3394 = vmatprep.subr.mxu0 0.0
    %3395 = vmatpush1.msra.mxu0 0.0
    %3396 = vmatprep.subr.mxu0 0.0
    %3397 = vmatpush1.msra.mxu0 0.0
    %3398 = vmatprep.subr.mxu0 0.0
    %3399 = vmatpush1.msra.mxu0 0.0
    %3400 = vmatprep.subr.mxu0 0.0
    %3401 = vmatpush1.msra.mxu0 0.0
    %3402 = vmatprep.subr.mxu0 0.0
    %3403 = vmatpush1.msra.mxu0 0.0
    %3404 = vmatprep.subr.mxu0 0.0
    %3405 = vmatpush1.msra.mxu0 0.0
    %3406 = vmatprep.subr.mxu0 0.0
    %3407 = vmatpush1.msra.mxu0 0.0
    %3408 = vmatprep.subr.mxu0 0.0
    %3409 = vmatpush1.msra.mxu0 0.0
    %3410 = vmatprep.subr.mxu0 0.0
    %3411 = vmatpush1.msra.mxu0 0.0
    %3412 = vmatprep.subr.mxu0 0.0
    %3413 = vmatpush1.msra.mxu0 0.0
    %3414 = vmatprep.subr.mxu0 0.0
    %3415 = vmatpush1.msra.mxu0 0.0
    %3416 = vmatprep.subr.mxu0 0.0
    %3417 = vmatpush1.msra.mxu0 0.0
    %3418 = vmatprep.subr.mxu0 0.0
    %3419 = vmatpush1.msra.mxu0 0.0
    %3420 = vmatprep.subr.mxu0 0.0
    %3421 = vmatpush1.msra.mxu0 0.0
    %3422 = vmatprep.subr.mxu0 0.0
    %3423 = vmatpush1.msra.mxu0 0.0
    %3424 = vmatprep.subr.mxu0 0.0
    %3425 = vmatpush1.msra.mxu0 0.0
    %3426 = vmatprep.subr.mxu0 0.0
    %3427 = vmatpush1.msra.mxu0 0.0
    %3428 = vmatprep.subr.mxu0 0.0
    %3429 = vmatpush1.msra.mxu0 0.0
    %3430 = vmatprep.subr.mxu0 0.0
    %3431 = vmatpush1.msra.mxu0 0.0
    %3432 = vmatprep.subr.mxu0 0.0
    %3433 = vmatpush1.msra.mxu0 0.0
    %3434 = vmatprep.subr.mxu0 0.0
    %3435 = vmatpush1.msra.mxu0 0.0
    %3436 = vmatprep.subr.mxu0 0.0
    %3437 = vmatpush1.msra.mxu0 0.0
    %3438 = vmatprep.subr.mxu0 0.0
    %3439 = vmatpush1.msra.mxu0 0.0
    %3440 = vmatprep.mubr.f32.mxu0 0.0
    %3441 = vmatmul.mubr.f32.gmra.mrb[0].mxu0 %v3374
    %v3442 = vpop.f32.mrb[0].mxu0
    %v3443 = vadd.f32 %v3172, %v3442
    %v3444 = vpop.f32.mrb[0].mxu0
    %3445 = vdwg.mxu0
    %3446 = vst [vmem:[%s17] sm:$0x3] %v3443
    %3447 = vmatprep.subr.mxu0 0.0
    %3448 = vmatpush1.msra.mxu0 %v3057
    %3449 = vmatprep.subr.mxu0 0.0
    %3450 = vmatpush1.msra.mxu0 %v3058
    %3451 = vmatprep.subr.mxu0 0.0
    %3452 = vmatpush1.msra.mxu0 %v3059
    %3453 = vmatprep.subr.mxu0 0.0
    %3454 = vmatpush1.msra.mxu0 %v3060
    %3455 = vmatprep.subr.mxu0 0.0
    %3456 = vmatpush1.msra.mxu0 %v3061
    %3457 = vmatprep.subr.mxu0 0.0
    %3458 = vmatpush1.msra.mxu0 %v3062
    %3459 = vmatprep.subr.mxu0 0.0
    %3460 = vmatpush1.msra.mxu0 %v3063
    %3461 = vmatprep.subr.mxu0 0.0
    %3462 = vmatpush1.msra.mxu0 %v3064
    %3463 = vmatprep.subr.mxu0 0.0
    %3464 = vmatpush1.msra.mxu0 %v3065
    %3465 = vmatprep.subr.mxu0 0.0
    %3466 = vmatpush1.msra.mxu0 %v3066
    %3467 = vmatprep.subr.mxu0 0.0
    %3468 = vmatpush1.msra.mxu0 %v3067
    %3469 = vmatprep.subr.mxu0 0.0
    %3470 = vmatpush1.msra.mxu0 %v3068
    %3471 = vmatprep.subr.mxu0 0.0
    %3472 = vmatpush1.msra.mxu0 %v3069
    %3473 = vmatprep.subr.mxu0 0.0
    %3474 = vmatpush1.msra.mxu0 %v3070
    %3475 = vmatprep.subr.mxu0 0.0
    %3476 = vmatpush1.msra.mxu0 %v3071
    %3477 = vmatprep.subr.mxu0 0.0
    %3478 = vmatpush1.msra.mxu0 %v3072
    %3479 = vmatprep.subr.mxu0 0.0
    %3480 = vmatpush1.msra.mxu0 0.0
    %3481 = vmatprep.subr.mxu0 0.0
    %3482 = vmatpush1.msra.mxu0 0.0
    %3483 = vmatprep.subr.mxu0 0.0
    %3484 = vmatpush1.msra.mxu0 0.0
    %3485 = vmatprep.subr.mxu0 0.0
    %3486 = vmatpush1.msra.mxu0 0.0
    %3487 = vmatprep.subr.mxu0 0.0
    %3488 = vmatpush1.msra.mxu0 0.0
    %3489 = vmatprep.subr.mxu0 0.0
    %3490 = vmatpush1.msra.mxu0 0.0
    %3491 = vmatprep.subr.mxu0 0.0
    %3492 = vmatpush1.msra.mxu0 0.0
    %3493 = vmatprep.subr.mxu0 0.0
    %3494 = vmatpush1.msra.mxu0 0.0
    %3495 = vmatprep.subr.mxu0 0.0
    %3496 = vmatpush1.msra.mxu0 0.0
    %3497 = vmatprep.subr.mxu0 0.0
    %3498 = vmatpush1.msra.mxu0 0.0
    %3499 = vmatprep.subr.mxu0 0.0
    %3500 = vmatpush1.msra.mxu0 0.0
    %3501 = vmatprep.subr.mxu0 0.0
    %3502 = vmatpush1.msra.mxu0 0.0
    %3503 = vmatprep.subr.mxu0 0.0
    %3504 = vmatpush1.msra.mxu0 0.0
    %3505 = vmatprep.subr.mxu0 0.0
    %3506 = vmatpush1.msra.mxu0 0.0
    %3507 = vmatprep.subr.mxu0 0.0
    %3508 = vmatpush1.msra.mxu0 0.0
    %3509 = vmatprep.subr.mxu0 0.0
    %3510 = vmatpush1.msra.mxu0 0.0
    %3511 = vmatprep.mubr.f32.mxu0 0.0
    %3512 = vmatmul.mubr.f32.gmra.mrb[0].mxu0 %v3443
    %v3513 = vpop.f32.mrb[0].mxu0
    %v3514 = vadd.f32 %v3054, %v3513
    %v3515 = vpop.f32.mrb[0].mxu0
    %3516 = vdwg.mxu0
    %v3517 = vxor.u32 %v3514, 2147483648
    %v3518 = vmul.f32 %v3517, 1.442695
    %v3519 = vpow.pop %v3518
    %v3520 = vadd.f32 %v3519, 1.0
    %v3521 = vrcp.pop %v3520
    %v3522 = vmul.f32 1.0, %v3521
    %v3523 = vmul.f32 %v3522, 2.0
    %v3524 = vsub.f32 %v3523, 1.0
    %v3525 = vsel %vm65, %v3524, %v3522
    %v3526 = vmul.f32 %v3525, %v1486
    %3528 = vrot.lane.b32.xlu0 %v3525, 64
    %v3529 = vpop.permute.xlu0 %3528
    %v3531 = vmul.f32 %v3525, %v3529
    %3533 = vrot.lane.b32.xlu0 %v3531, 32
    %v3534 = vpop.permute.xlu0 %3533
    %v3536 = vadd.f32 %v3526, %v3534
    %v3537 = vtanh.pop %v3536
    %3539 = vrot.lane.b32.xlu0 %v3537, 64
    %v3540 = vpop.permute.xlu0 %3539
    %v3542 = vmul.f32 %v3525, %v3540
    %3544 = vrot.lane.b32.xlu0 %v3542, 32
    %v3545 = vpop.permute.xlu0 %3544
    %v3546 = vsel %vm678, %v3545, 0
    %3548 = vmatprep.subr.mxu0 0.0
    %3549 = vmatpush1.msra.mxu0 %v3159
    %3550 = vmatprep.subr.mxu0 0.0
    %3551 = vmatpush1.msra.mxu0 %v3160
    %3552 = vmatprep.subr.mxu0 0.0
    %3553 = vmatpush1.msra.mxu0 %v3161
    %3554 = vmatprep.subr.mxu0 0.0
    %3555 = vmatpush1.msra.mxu0 %v3162
    %3556 = vmatprep.subr.mxu0 0.0
    %3557 = vmatpush1.msra.mxu0 0.0
    %3558 = vmatprep.subr.mxu0 0.0
    %3559 = vmatpush1.msra.mxu0 0.0
    %3560 = vmatprep.subr.mxu0 0.0
    %3561 = vmatpush1.msra.mxu0 0.0
    %3562 = vmatprep.subr.mxu0 0.0
    %3563 = vmatpush1.msra.mxu0 0.0
    %3564 = vmatprep.subr.mxu0 0.0
    %3565 = vmatpush1.msra.mxu0 0.0
    %3566 = vmatprep.subr.mxu0 0.0
    %3567 = vmatpush1.msra.mxu0 0.0
    %3568 = vmatprep.subr.mxu0 0.0
    %3569 = vmatpush1.msra.mxu0 0.0
    %3570 = vmatprep.subr.mxu0 0.0
    %3571 = vmatpush1.msra.mxu0 0.0
    %3572 = vmatprep.subr.mxu0 0.0
    %3573 = vmatpush1.msra.mxu0 0.0
    %3574 = vmatprep.subr.mxu0 0.0
    %3575 = vmatpush1.msra.mxu0 0.0
    %3576 = vmatprep.subr.mxu0 0.0
    %3577 = vmatpush1.msra.mxu0 0.0
    %3578 = vmatprep.subr.mxu0 0.0
    %3579 = vmatpush1.msra.mxu0 0.0
    %3580 = vmatprep.subr.mxu0 0.0
    %3581 = vmatpush1.msra.mxu0 0.0
    %3582 = vmatprep.subr.mxu0 0.0
    %3583 = vmatpush1.msra.mxu0 0.0
    %3584 = vmatprep.subr.mxu0 0.0
    %3585 = vmatpush1.msra.mxu0 0.0
    %3586 = vmatprep.subr.mxu0 0.0
    %3587 = vmatpush1.msra.mxu0 0.0
    %3588 = vmatprep.subr.mxu0 0.0
    %3589 = vmatpush1.msra.mxu0 0.0
    %3590 = vmatprep.subr.mxu0 0.0
    %3591 = vmatpush1.msra.mxu0 0.0
    %3592 = vmatprep.subr.mxu0 0.0
    %3593 = vmatpush1.msra.mxu0 0.0
    %3594 = vmatprep.subr.mxu0 0.0
    %3595 = vmatpush1.msra.mxu0 0.0
    %3596 = vmatprep.subr.mxu0 0.0
    %3597 = vmatpush1.msra.mxu0 0.0
    %3598 = vmatprep.subr.mxu0 0.0
    %3599 = vmatpush1.msra.mxu0 0.0
    %3600 = vmatprep.subr.mxu0 0.0
    %3601 = vmatpush1.msra.mxu0 0.0
    %3602 = vmatprep.subr.mxu0 0.0
    %3603 = vmatpush1.msra.mxu0 0.0
    %3604 = vmatprep.subr.mxu0 0.0
    %3605 = vmatpush1.msra.mxu0 0.0
    %3606 = vmatprep.subr.mxu0 0.0
    %3607 = vmatpush1.msra.mxu0 0.0
    %3608 = vmatprep.subr.mxu0 0.0
    %3609 = vmatpush1.msra.mxu0 0.0
    %3610 = vmatprep.subr.mxu0 0.0
    %3611 = vmatpush1.msra.mxu0 0.0
    %3612 = vmatprep.mubr.f32.mxu0 0.0
    %3613 = vmatmul.mubr.f32.gmra.mrb[0].mxu0 %v3546
    %v3614 = vpop.f32.mrb[0].mxu0
    %v3615 = vadd.f32 %v3156, %v3614
    %v3616 = vpop.f32.mrb[0].mxu0
    %3617 = vdwg.mxu0
    %v3618 = vxor.u32 %v3615, 2147483648
    %v3619 = vmul.f32 %v3618, 1.442695
    %v3620 = vpow.pop %v3619
    %v3621 = vadd.f32 %v3620, 1.0
    %v3622 = vrcp.pop %v3621
    %v3623 = vmul.f32 1.0, %v3622
    %v3624 = vmul.f32 %v3623, 2.0
    %v3625 = vsub.f32 %v3624, 1.0
    %v3626 = vsel %vm65, %v3625, %v3623
    %v3627 = vmul.f32 %v3626, %v2877
    %3629 = vrot.lane.b32.xlu0 %v3626, 64
    %v3630 = vpop.permute.xlu0 %3629
    %v3632 = vmul.f32 %v3626, %v3630
    %3634 = vrot.lane.b32.xlu0 %v3632, 32
    %v3635 = vpop.permute.xlu0 %3634
    %v3637 = vadd.f32 %v3627, %v3635
    %v3638 = vtanh.pop %v3637
    %3640 = vrot.lane.b32.xlu0 %v3638, 64
    %v3641 = vpop.permute.xlu0 %3640
    %v3643 = vmul.f32 %v3626, %v3641
    %3645 = vrot.lane.b32.xlu0 %v3643, 32
    %v3646 = vpop.permute.xlu0 %3645
    %v3647 = vsel %vm678, %v3646, 0
    %3649 = vmatprep.subr.mxu0 0.0
    %3650 = vmatpush1.msra.mxu0 %v3163
    %3651 = vmatprep.subr.mxu0 0.0
    %3652 = vmatpush1.msra.mxu0 %v3164
    %3653 = vmatprep.subr.mxu0 0.0
    %3654 = vmatpush1.msra.mxu0 %v3165
    %3655 = vmatprep.subr.mxu0 0.0
    %3656 = vmatpush1.msra.mxu0 %v3166
    %3657 = vmatprep.subr.mxu0 0.0
    %3658 = vmatpush1.msra.mxu0 0.0
    %3659 = vmatprep.subr.mxu0 0.0
    %3660 = vmatpush1.msra.mxu0 0.0
    %3661 = vmatprep.subr.mxu0 0.0
    %3662 = vmatpush1.msra.mxu0 0.0
    %3663 = vmatprep.subr.mxu0 0.0
    %3664 = vmatpush1.msra.mxu0 0.0
    %3665 = vmatprep.subr.mxu0 0.0
    %3666 = vmatpush1.msra.mxu0 0.0
    %3667 = vmatprep.subr.mxu0 0.0
    %3668 = vmatpush1.msra.mxu0 0.0
    %3669 = vmatprep.subr.mxu0 0.0
    %3670 = vmatpush1.msra.mxu0 0.0
    %3671 = vmatprep.subr.mxu0 0.0
    %3672 = vmatpush1.msra.mxu0 0.0
    %3673 = vmatprep.subr.mxu0 0.0
    %3674 = vmatpush1.msra.mxu0 0.0
    %3675 = vmatprep.subr.mxu0 0.0
    %3676 = vmatpush1.msra.mxu0 0.0
    %3677 = vmatprep.subr.mxu0 0.0
    %3678 = vmatpush1.msra.mxu0 0.0
    %3679 = vmatprep.subr.mxu0 0.0
    %3680 = vmatpush1.msra.mxu0 0.0
    %3681 = vmatprep.subr.mxu0 0.0
    %3682 = vmatpush1.msra.mxu0 0.0
    %3683 = vmatprep.subr.mxu0 0.0
    %3684 = vmatpush1.msra.mxu0 0.0
    %3685 = vmatprep.subr.mxu0 0.0
    %3686 = vmatpush1.msra.mxu0 0.0
    %3687 = vmatprep.subr.mxu0 0.0
    %3688 = vmatpush1.msra.mxu0 0.0
    %3689 = vmatprep.subr.mxu0 0.0
    %3690 = vmatpush1.msra.mxu0 0.0
    %3691 = vmatprep.subr.mxu0 0.0
    %3692 = vmatpush1.msra.mxu0 0.0
    %3693 = vmatprep.subr.mxu0 0.0
    %3694 = vmatpush1.msra.mxu0 0.0
    %3695 = vmatprep.subr.mxu0 0.0
    %3696 = vmatpush1.msra.mxu0 0.0
    %3697 = vmatprep.subr.mxu0 0.0
    %3698 = vmatpush1.msra.mxu0 0.0
    %3699 = vmatprep.subr.mxu0 0.0
    %3700 = vmatpush1.msra.mxu0 0.0
    %3701 = vmatprep.subr.mxu0 0.0
    %3702 = vmatpush1.msra.mxu0 0.0
    %3703 = vmatprep.subr.mxu0 0.0
    %3704 = vmatpush1.msra.mxu0 0.0
    %3705 = vmatprep.subr.mxu0 0.0
    %3706 = vmatpush1.msra.mxu0 0.0
    %3707 = vmatprep.subr.mxu0 0.0
    %3708 = vmatpush1.msra.mxu0 0.0
    %3709 = vmatprep.subr.mxu0 0.0
    %3710 = vmatpush1.msra.mxu0 0.0
    %3711 = vmatprep.subr.mxu0 0.0
    %3712 = vmatpush1.msra.mxu0 0.0
    %3713 = vmatprep.mubr.f32.mxu0 0.0
    %3714 = vmatmul.mubr.f32.gmra.mrb[0].mxu0 %v3647
    %v3715 = vpop.f32.mrb[0].mxu0
    %v3716 = vadd.f32 %v3172, %v3715
    %v3717 = vpop.f32.mrb[0].mxu0
    %3718 = vdwg.mxu0
    %s3719 = scalar_lea.vmem %s17, 2
    %3720 = vst [vmem:[%s3719] sm:$0x3] %v3716
    %3721 = vmatprep.subr.mxu0 0.0
    %3722 = vmatpush1.msra.mxu0 %v3057
    %3723 = vmatprep.subr.mxu0 0.0
    %3724 = vmatpush1.msra.mxu0 %v3058
    %3725 = vmatprep.subr.mxu0 0.0
    %3726 = vmatpush1.msra.mxu0 %v3059
    %3727 = vmatprep.subr.mxu0 0.0
    %3728 = vmatpush1.msra.mxu0 %v3060
    %3729 = vmatprep.subr.mxu0 0.0
    %3730 = vmatpush1.msra.mxu0 %v3061
    %3731 = vmatprep.subr.mxu0 0.0
    %3732 = vmatpush1.msra.mxu0 %v3062
    %3733 = vmatprep.subr.mxu0 0.0
    %3734 = vmatpush1.msra.mxu0 %v3063
    %3735 = vmatprep.subr.mxu0 0.0
    %3736 = vmatpush1.msra.mxu0 %v3064
    %3737 = vmatprep.subr.mxu0 0.0
    %3738 = vmatpush1.msra.mxu0 %v3065
    %3739 = vmatprep.subr.mxu0 0.0
    %3740 = vmatpush1.msra.mxu0 %v3066
    %3741 = vmatprep.subr.mxu0 0.0
    %3742 = vmatpush1.msra.mxu0 %v3067
    %3743 = vmatprep.subr.mxu0 0.0
    %3744 = vmatpush1.msra.mxu0 %v3068
    %3745 = vmatprep.subr.mxu0 0.0
    %3746 = vmatpush1.msra.mxu0 %v3069
    %3747 = vmatprep.subr.mxu0 0.0
    %3748 = vmatpush1.msra.mxu0 %v3070
    %3749 = vmatprep.subr.mxu0 0.0
    %3750 = vmatpush1.msra.mxu0 %v3071
    %3751 = vmatprep.subr.mxu0 0.0
    %3752 = vmatpush1.msra.mxu0 %v3072
    %3753 = vmatprep.subr.mxu0 0.0
    %3754 = vmatpush1.msra.mxu0 0.0
    %3755 = vmatprep.subr.mxu0 0.0
    %3756 = vmatpush1.msra.mxu0 0.0
    %3757 = vmatprep.subr.mxu0 0.0
    %3758 = vmatpush1.msra.mxu0 0.0
    %3759 = vmatprep.subr.mxu0 0.0
    %3760 = vmatpush1.msra.mxu0 0.0
    %3761 = vmatprep.subr.mxu0 0.0
    %3762 = vmatpush1.msra.mxu0 0.0
    %3763 = vmatprep.subr.mxu0 0.0
    %3764 = vmatpush1.msra.mxu0 0.0
    %3765 = vmatprep.subr.mxu0 0.0
    %3766 = vmatpush1.msra.mxu0 0.0
    %3767 = vmatprep.subr.mxu0 0.0
    %3768 = vmatpush1.msra.mxu0 0.0
    %3769 = vmatprep.subr.mxu0 0.0
    %3770 = vmatpush1.msra.mxu0 0.0
    %3771 = vmatprep.subr.mxu0 0.0
    %3772 = vmatpush1.msra.mxu0 0.0
    %3773 = vmatprep.subr.mxu0 0.0
    %3774 = vmatpush1.msra.mxu0 0.0
    %3775 = vmatprep.subr.mxu0 0.0
    %3776 = vmatpush1.msra.mxu0 0.0
    %3777 = vmatprep.subr.mxu0 0.0
    %3778 = vmatpush1.msra.mxu0 0.0
    %3779 = vmatprep.subr.mxu0 0.0
    %3780 = vmatpush1.msra.mxu0 0.0
    %3781 = vmatprep.subr.mxu0 0.0
    %3782 = vmatpush1.msra.mxu0 0.0
    %3783 = vmatprep.subr.mxu0 0.0
    %3784 = vmatpush1.msra.mxu0 0.0
    %3785 = vmatprep.mubr.f32.mxu0 0.0
    %3786 = vmatmul.mubr.f32.gmra.mrb[0].mxu0 %v3716
    %v3787 = vpop.f32.mrb[0].mxu0
    %v3788 = vadd.f32 %v3054, %v3787
    %v3789 = vpop.f32.mrb[0].mxu0
    %3790 = vdwg.mxu0
    %v3791 = vxor.u32 %v3788, 2147483648
    %v3792 = vmul.f32 %v3791, 1.442695
    %v3793 = vpow.pop %v3792
    %v3794 = vadd.f32 %v3793, 1.0
    %v3795 = vrcp.pop %v3794
    %v3796 = vmul.f32 1.0, %v3795
    %v3797 = vmul.f32 %v3796, 2.0
    %v3798 = vsub.f32 %v3797, 1.0
    %v3799 = vsel %vm65, %v3798, %v3796
    %v3800 = vmul.f32 %v3799, %v1486
    %3802 = vrot.lane.b32.xlu0 %v3799, 64
    %v3803 = vpop.permute.xlu0 %3802
    %v3805 = vmul.f32 %v3799, %v3803
    %3807 = vrot.lane.b32.xlu0 %v3805, 32
    %v3808 = vpop.permute.xlu0 %3807
    %v3810 = vadd.f32 %v3800, %v3808
    %v3811 = vtanh.pop %v3810
    %3813 = vrot.lane.b32.xlu0 %v3811, 64
    %v3814 = vpop.permute.xlu0 %3813
    %v3816 = vmul.f32 %v3799, %v3814
    %3818 = vrot.lane.b32.xlu0 %v3816, 32
    %v3819 = vpop.permute.xlu0 %3818
    %v3820 = vsel %vm678, %v3819, 0
    %3822 = vmatprep.subr.mxu0 0.0
    %3823 = vmatpush1.msra.mxu0 %v3159
    %3824 = vmatprep.subr.mxu0 0.0
    %3825 = vmatpush1.msra.mxu0 %v3160
    %3826 = vmatprep.subr.mxu0 0.0
    %3827 = vmatpush1.msra.mxu0 %v3161
    %3828 = vmatprep.subr.mxu0 0.0
    %3829 = vmatpush1.msra.mxu0 %v3162
    %3830 = vmatprep.subr.mxu0 0.0
    %3831 = vmatpush1.msra.mxu0 0.0
    %3832 = vmatprep.subr.mxu0 0.0
    %3833 = vmatpush1.msra.mxu0 0.0
    %3834 = vmatprep.subr.mxu0 0.0
    %3835 = vmatpush1.msra.mxu0 0.0
    %3836 = vmatprep.subr.mxu0 0.0
    %3837 = vmatpush1.msra.mxu0 0.0
    %3838 = vmatprep.subr.mxu0 0.0
    %3839 = vmatpush1.msra.mxu0 0.0
    %3840 = vmatprep.subr.mxu0 0.0
    %3841 = vmatpush1.msra.mxu0 0.0
    %3842 = vmatprep.subr.mxu0 0.0
    %3843 = vmatpush1.msra.mxu0 0.0
    %3844 = vmatprep.subr.mxu0 0.0
    %3845 = vmatpush1.msra.mxu0 0.0
    %3846 = vmatprep.subr.mxu0 0.0
    %3847 = vmatpush1.msra.mxu0 0.0
    %3848 = vmatprep.subr.mxu0 0.0
    %3849 = vmatpush1.msra.mxu0 0.0
    %3850 = vmatprep.subr.mxu0 0.0
    %3851 = vmatpush1.msra.mxu0 0.0
    %3852 = vmatprep.subr.mxu0 0.0
    %3853 = vmatpush1.msra.mxu0 0.0
    %3854 = vmatprep.subr.mxu0 0.0
    %3855 = vmatpush1.msra.mxu0 0.0
    %3856 = vmatprep.subr.mxu0 0.0
    %3857 = vmatpush1.msra.mxu0 0.0
    %3858 = vmatprep.subr.mxu0 0.0
    %3859 = vmatpush1.msra.mxu0 0.0
    %3860 = vmatprep.subr.mxu0 0.0
    %3861 = vmatpush1.msra.mxu0 0.0
    %3862 = vmatprep.subr.mxu0 0.0
    %3863 = vmatpush1.msra.mxu0 0.0
    %3864 = vmatprep.subr.mxu0 0.0
    %3865 = vmatpush1.msra.mxu0 0.0
    %3866 = vmatprep.subr.mxu0 0.0
    %3867 = vmatpush1.msra.mxu0 0.0
    %3868 = vmatprep.subr.mxu0 0.0
    %3869 = vmatpush1.msra.mxu0 0.0
    %3870 = vmatprep.subr.mxu0 0.0
    %3871 = vmatpush1.msra.mxu0 0.0
    %3872 = vmatprep.subr.mxu0 0.0
    %3873 = vmatpush1.msra.mxu0 0.0
    %3874 = vmatprep.subr.mxu0 0.0
    %3875 = vmatpush1.msra.mxu0 0.0
    %3876 = vmatprep.subr.mxu0 0.0
    %3877 = vmatpush1.msra.mxu0 0.0
    %3878 = vmatprep.subr.mxu0 0.0
    %3879 = vmatpush1.msra.mxu0 0.0
    %3880 = vmatprep.subr.mxu0 0.0
    %3881 = vmatpush1.msra.mxu0 0.0
    %3882 = vmatprep.subr.mxu0 0.0
    %3883 = vmatpush1.msra.mxu0 0.0
    %3884 = vmatprep.subr.mxu0 0.0
    %3885 = vmatpush1.msra.mxu0 0.0
    %3886 = vmatprep.mubr.f32.mxu0 0.0
    %3887 = vmatmul.mubr.f32.gmra.mrb[0].mxu0 %v3820
    %v3888 = vpop.f32.mrb[0].mxu0
    %v3889 = vadd.f32 %v3156, %v3888
    %v3890 = vpop.f32.mrb[0].mxu0
    %3891 = vdwg.mxu0
    %v3892 = vxor.u32 %v3889, 2147483648
    %v3893 = vmul.f32 %v3892, 1.442695
    %v3894 = vpow.pop %v3893
    %v3895 = vadd.f32 %v3894, 1.0
    %v3896 = vrcp.pop %v3895
    %v3897 = vmul.f32 1.0, %v3896
    %v3898 = vmul.f32 %v3897, 2.0
    %v3899 = vsub.f32 %v3898, 1.0
    %v3900 = vsel %vm65, %v3899, %v3897
    %v3901 = vmul.f32 %v3900, %v2877
    %3903 = vrot.lane.b32.xlu0 %v3900, 64
    %v3904 = vpop.permute.xlu0 %3903
    %v3906 = vmul.f32 %v3900, %v3904
    %3908 = vrot.lane.b32.xlu0 %v3906, 32
    %v3909 = vpop.permute.xlu0 %3908
    %v3911 = vadd.f32 %v3901, %v3909
    %v3912 = vtanh.pop %v3911
    %3914 = vrot.lane.b32.xlu0 %v3912, 64
    %v3915 = vpop.permute.xlu0 %3914
    %v3917 = vmul.f32 %v3900, %v3915
    %3919 = vrot.lane.b32.xlu0 %v3917, 32
    %v3920 = vpop.permute.xlu0 %3919
    %v3921 = vsel %vm678, %v3920, 0
    %3923 = vmatprep.subr.mxu0 0.0
    %3924 = vmatpush1.msra.mxu0 %v3163
    %3925 = vmatprep.subr.mxu0 0.0
    %3926 = vmatpush1.msra.mxu0 %v3164
    %3927 = vmatprep.subr.mxu0 0.0
    %3928 = vmatpush1.msra.mxu0 %v3165
    %3929 = vmatprep.subr.mxu0 0.0
    %3930 = vmatpush1.msra.mxu0 %v3166
    %3931 = vmatprep.subr.mxu0 0.0
    %3932 = vmatpush1.msra.mxu0 0.0
    %3933 = vmatprep.subr.mxu0 0.0
    %3934 = vmatpush1.msra.mxu0 0.0
    %3935 = vmatprep.subr.mxu0 0.0
    %3936 = vmatpush1.msra.mxu0 0.0
    %3937 = vmatprep.subr.mxu0 0.0
    %3938 = vmatpush1.msra.mxu0 0.0
    %3939 = vmatprep.subr.mxu0 0.0
    %3940 = vmatpush1.msra.mxu0 0.0
    %3941 = vmatprep.subr.mxu0 0.0
    %3942 = vmatpush1.msra.mxu0 0.0
    %3943 = vmatprep.subr.mxu0 0.0
    %3944 = vmatpush1.msra.mxu0 0.0
    %3945 = vmatprep.subr.mxu0 0.0
    %3946 = vmatpush1.msra.mxu0 0.0
    %3947 = vmatprep.subr.mxu0 0.0
    %3948 = vmatpush1.msra.mxu0 0.0
    %3949 = vmatprep.subr.mxu0 0.0
    %3950 = vmatpush1.msra.mxu0 0.0
    %3951 = vmatprep.subr.mxu0 0.0
    %3952 = vmatpush1.msra.mxu0 0.0
    %3953 = vmatprep.subr.mxu0 0.0
    %3954 = vmatpush1.msra.mxu0 0.0
    %3955 = vmatprep.subr.mxu0 0.0
    %3956 = vmatpush1.msra.mxu0 0.0
    %3957 = vmatprep.subr.mxu0 0.0
    %3958 = vmatpush1.msra.mxu0 0.0
    %3959 = vmatprep.subr.mxu0 0.0
    %3960 = vmatpush1.msra.mxu0 0.0
    %3961 = vmatprep.subr.mxu0 0.0
    %3962 = vmatpush1.msra.mxu0 0.0
    %3963 = vmatprep.subr.mxu0 0.0
    %3964 = vmatpush1.msra.mxu0 0.0
    %3965 = vmatprep.subr.mxu0 0.0
    %3966 = vmatpush1.msra.mxu0 0.0
    %3967 = vmatprep.subr.mxu0 0.0
    %3968 = vmatpush1.msra.mxu0 0.0
    %3969 = vmatprep.subr.mxu0 0.0
    %3970 = vmatpush1.msra.mxu0 0.0
    %3971 = vmatprep.subr.mxu0 0.0
    %3972 = vmatpush1.msra.mxu0 0.0
    %3973 = vmatprep.subr.mxu0 0.0
    %3974 = vmatpush1.msra.mxu0 0.0
    %3975 = vmatprep.subr.mxu0 0.0
    %3976 = vmatpush1.msra.mxu0 0.0
    %3977 = vmatprep.subr.mxu0 0.0
    %3978 = vmatpush1.msra.mxu0 0.0
    %3979 = vmatprep.subr.mxu0 0.0
    %3980 = vmatpush1.msra.mxu0 0.0
    %3981 = vmatprep.subr.mxu0 0.0
    %3982 = vmatpush1.msra.mxu0 0.0
    %3983 = vmatprep.subr.mxu0 0.0
    %3984 = vmatpush1.msra.mxu0 0.0
    %3985 = vmatprep.subr.mxu0 0.0
    %3986 = vmatpush1.msra.mxu0 0.0
    %3987 = vmatprep.mubr.f32.mxu0 0.0
    %3988 = vmatmul.mubr.f32.gmra.mrb[0].mxu0 %v3921
    %v3989 = vpop.f32.mrb[0].mxu0
    %v3990 = vadd.f32 %v3172, %v3989
    %v3991 = vpop.f32.mrb[0].mxu0
    %3992 = vdwg.mxu0
    %s3993 = scalar_lea.vmem %s17, 4
    %3994 = vst [vmem:[%s3993] sm:$0x3] %v3990
    %3995 = vmatprep.subr.mxu0 0.0
    %3996 = vmatpush1.msra.mxu0 %v3057
    %3997 = vmatprep.subr.mxu0 0.0
    %3998 = vmatpush1.msra.mxu0 %v3058
    %3999 = vmatprep.subr.mxu0 0.0
    %4000 = vmatpush1.msra.mxu0 %v3059
    %4001 = vmatprep.subr.mxu0 0.0
    %4002 = vmatpush1.msra.mxu0 %v3060
    %4003 = vmatprep.subr.mxu0 0.0
    %4004 = vmatpush1.msra.mxu0 %v3061
    %4005 = vmatprep.subr.mxu0 0.0
    %4006 = vmatpush1.msra.mxu0 %v3062
    %4007 = vmatprep.subr.mxu0 0.0
    %4008 = vmatpush1.msra.mxu0 %v3063
    %4009 = vmatprep.subr.mxu0 0.0
    %4010 = vmatpush1.msra.mxu0 %v3064
    %4011 = vmatprep.subr.mxu0 0.0
    %4012 = vmatpush1.msra.mxu0 %v3065
    %4013 = vmatprep.subr.mxu0 0.0
    %4014 = vmatpush1.msra.mxu0 %v3066
    %4015 = vmatprep.subr.mxu0 0.0
    %4016 = vmatpush1.msra.mxu0 %v3067
    %4017 = vmatprep.subr.mxu0 0.0
    %4018 = vmatpush1.msra.mxu0 %v3068
    %4019 = vmatprep.subr.mxu0 0.0
    %4020 = vmatpush1.msra.mxu0 %v3069
    %4021 = vmatprep.subr.mxu0 0.0
    %4022 = vmatpush1.msra.mxu0 %v3070
    %4023 = vmatprep.subr.mxu0 0.0
    %4024 = vmatpush1.msra.mxu0 %v3071
    %4025 = vmatprep.subr.mxu0 0.0
    %4026 = vmatpush1.msra.mxu0 %v3072
    %4027 = vmatprep.subr.mxu0 0.0
    %4028 = vmatpush1.msra.mxu0 0.0
    %4029 = vmatprep.subr.mxu0 0.0
    %4030 = vmatpush1.msra.mxu0 0.0
    %4031 = vmatprep.subr.mxu0 0.0
    %4032 = vmatpush1.msra.mxu0 0.0
    %4033 = vmatprep.subr.mxu0 0.0
    %4034 = vmatpush1.msra.mxu0 0.0
    %4035 = vmatprep.subr.mxu0 0.0
    %4036 = vmatpush1.msra.mxu0 0.0
    %4037 = vmatprep.subr.mxu0 0.0
    %4038 = vmatpush1.msra.mxu0 0.0
    %4039 = vmatprep.subr.mxu0 0.0
    %4040 = vmatpush1.msra.mxu0 0.0
    %4041 = vmatprep.subr.mxu0 0.0
    %4042 = vmatpush1.msra.mxu0 0.0
    %4043 = vmatprep.subr.mxu0 0.0
    %4044 = vmatpush1.msra.mxu0 0.0
    %4045 = vmatprep.subr.mxu0 0.0
    %4046 = vmatpush1.msra.mxu0 0.0
    %4047 = vmatprep.subr.mxu0 0.0
    %4048 = vmatpush1.msra.mxu0 0.0
    %4049 = vmatprep.subr.mxu0 0.0
    %4050 = vmatpush1.msra.mxu0 0.0
    %4051 = vmatprep.subr.mxu0 0.0
    %4052 = vmatpush1.msra.mxu0 0.0
    %4053 = vmatprep.subr.mxu0 0.0
    %4054 = vmatpush1.msra.mxu0 0.0
    %4055 = vmatprep.subr.mxu0 0.0
    %4056 = vmatpush1.msra.mxu0 0.0
    %4057 = vmatprep.subr.mxu0 0.0
    %4058 = vmatpush1.msra.mxu0 0.0
    %4059 = vmatprep.mubr.f32.mxu0 0.0
    %4060 = vmatmul.mubr.f32.gmra.mrb[0].mxu0 %v3990
    %v4061 = vpop.f32.mrb[0].mxu0
    %v4062 = vadd.f32 %v3054, %v4061
    %v4063 = vpop.f32.mrb[0].mxu0
    %4064 = vdwg.mxu0
    %v4065 = vxor.u32 %v4062, 2147483648
    %v4066 = vmul.f32 %v4065, 1.442695
    %v4067 = vpow.pop %v4066
    %v4068 = vadd.f32 %v4067, 1.0
    %v4069 = vrcp.pop %v4068
    %v4070 = vmul.f32 1.0, %v4069
    %v4071 = vmul.f32 %v4070, 2.0
    %v4072 = vsub.f32 %v4071, 1.0
    %v4073 = vsel %vm65, %v4072, %v4070
    %v4074 = vmul.f32 %v4073, %v1486
    %4076 = vrot.lane.b32.xlu0 %v4073, 64
    %v4077 = vpop.permute.xlu0 %4076
    %v4079 = vmul.f32 %v4073, %v4077
    %4081 = vrot.lane.b32.xlu0 %v4079, 32
    %v4082 = vpop.permute.xlu0 %4081
    %v4084 = vadd.f32 %v4074, %v4082
    %v4085 = vtanh.pop %v4084
    %4087 = vrot.lane.b32.xlu0 %v4085, 64
    %v4088 = vpop.permute.xlu0 %4087
    %v4090 = vmul.f32 %v4073, %v4088
    %4092 = vrot.lane.b32.xlu0 %v4090, 32
    %v4093 = vpop.permute.xlu0 %4092
    %v4094 = vsel %vm678, %v4093, 0
    %4096 = vmatprep.subr.mxu0 0.0
    %4097 = vmatpush1.msra.mxu0 %v3159
    %4098 = vmatprep.subr.mxu0 0.0
    %4099 = vmatpush1.msra.mxu0 %v3160
    %4100 = vmatprep.subr.mxu0 0.0
    %4101 = vmatpush1.msra.mxu0 %v3161
    %4102 = vmatprep.subr.mxu0 0.0
    %4103 = vmatpush1.msra.mxu0 %v3162
    %4104 = vmatprep.subr.mxu0 0.0
    %4105 = vmatpush1.msra.mxu0 0.0
    %4106 = vmatprep.subr.mxu0 0.0
    %4107 = vmatpush1.msra.mxu0 0.0
    %4108 = vmatprep.subr.mxu0 0.0
    %4109 = vmatpush1.msra.mxu0 0.0
    %4110 = vmatprep.subr.mxu0 0.0
    %4111 = vmatpush1.msra.mxu0 0.0
    %4112 = vmatprep.subr.mxu0 0.0
    %4113 = vmatpush1.msra.mxu0 0.0
    %4114 = vmatprep.subr.mxu0 0.0
    %4115 = vmatpush1.msra.mxu0 0.0
    %4116 = vmatprep.subr.mxu0 0.0
    %4117 = vmatpush1.msra.mxu0 0.0
    %4118 = vmatprep.subr.mxu0 0.0
    %4119 = vmatpush1.msra.mxu0 0.0
    %4120 = vmatprep.subr.mxu0 0.0
    %4121 = vmatpush1.msra.mxu0 0.0
    %4122 = vmatprep.subr.mxu0 0.0
    %4123 = vmatpush1.msra.mxu0 0.0
    %4124 = vmatprep.subr.mxu0 0.0
    %4125 = vmatpush1.msra.mxu0 0.0
    %4126 = vmatprep.subr.mxu0 0.0
    %4127 = vmatpush1.msra.mxu0 0.0
    %4128 = vmatprep.subr.mxu0 0.0
    %4129 = vmatpush1.msra.mxu0 0.0
    %4130 = vmatprep.subr.mxu0 0.0
    %4131 = vmatpush1.msra.mxu0 0.0
    %4132 = vmatprep.subr.mxu0 0.0
    %4133 = vmatpush1.msra.mxu0 0.0
    %4134 = vmatprep.subr.mxu0 0.0
    %4135 = vmatpush1.msra.mxu0 0.0
    %4136 = vmatprep.subr.mxu0 0.0
    %4137 = vmatpush1.msra.mxu0 0.0
    %4138 = vmatprep.subr.mxu0 0.0
    %4139 = vmatpush1.msra.mxu0 0.0
    %4140 = vmatprep.subr.mxu0 0.0
    %4141 = vmatpush1.msra.mxu0 0.0
    %4142 = vmatprep.subr.mxu0 0.0
    %4143 = vmatpush1.msra.mxu0 0.0
    %4144 = vmatprep.subr.mxu0 0.0
    %4145 = vmatpush1.msra.mxu0 0.0
    %4146 = vmatprep.subr.mxu0 0.0
    %4147 = vmatpush1.msra.mxu0 0.0
    %4148 = vmatprep.subr.mxu0 0.0
    %4149 = vmatpush1.msra.mxu0 0.0
    %4150 = vmatprep.subr.mxu0 0.0
    %4151 = vmatpush1.msra.mxu0 0.0
    %4152 = vmatprep.subr.mxu0 0.0
    %4153 = vmatpush1.msra.mxu0 0.0
    %4154 = vmatprep.subr.mxu0 0.0
    %4155 = vmatpush1.msra.mxu0 0.0
    %4156 = vmatprep.subr.mxu0 0.0
    %4157 = vmatpush1.msra.mxu0 0.0
    %4158 = vmatprep.subr.mxu0 0.0
    %4159 = vmatpush1.msra.mxu0 0.0
    %4160 = vmatprep.mubr.f32.mxu0 0.0
    %4161 = vmatmul.mubr.f32.gmra.mrb[0].mxu0 %v4094
    %v4162 = vpop.f32.mrb[0].mxu0
    %v4163 = vadd.f32 %v3156, %v4162
    %v4164 = vpop.f32.mrb[0].mxu0
    %4165 = vdwg.mxu0
    %v4166 = vxor.u32 %v4163, 2147483648
    %v4167 = vmul.f32 %v4166, 1.442695
    %v4168 = vpow.pop %v4167
    %v4169 = vadd.f32 %v4168, 1.0
    %v4170 = vrcp.pop %v4169
    %v4171 = vmul.f32 1.0, %v4170
    %v4172 = vmul.f32 %v4171, 2.0
    %v4173 = vsub.f32 %v4172, 1.0
    %v4174 = vsel %vm65, %v4173, %v4171
    %v4175 = vmul.f32 %v4174, %v2877
    %4177 = vrot.lane.b32.xlu0 %v4174, 64
    %v4178 = vpop.permute.xlu0 %4177
    %v4180 = vmul.f32 %v4174, %v4178
    %4182 = vrot.lane.b32.xlu0 %v4180, 32
    %v4183 = vpop.permute.xlu0 %4182
    %v4185 = vadd.f32 %v4175, %v4183
    %v4186 = vtanh.pop %v4185
    %4188 = vrot.lane.b32.xlu0 %v4186, 64
    %v4189 = vpop.permute.xlu0 %4188
    %v4191 = vmul.f32 %v4174, %v4189
    %4193 = vrot.lane.b32.xlu0 %v4191, 32
    %v4194 = vpop.permute.xlu0 %4193
    %v4195 = vsel %vm678, %v4194, 0
    %4197 = vmatprep.subr.mxu0 0.0
    %4198 = vmatpush1.msra.mxu0 %v3163
    %4199 = vmatprep.subr.mxu0 0.0
    %4200 = vmatpush1.msra.mxu0 %v3164
    %4201 = vmatprep.subr.mxu0 0.0
    %4202 = vmatpush1.msra.mxu0 %v3165
    %4203 = vmatprep.subr.mxu0 0.0
    %4204 = vmatpush1.msra.mxu0 %v3166
    %4205 = vmatprep.subr.mxu0 0.0
    %4206 = vmatpush1.msra.mxu0 0.0
    %4207 = vmatprep.subr.mxu0 0.0
    %4208 = vmatpush1.msra.mxu0 0.0
    %4209 = vmatprep.subr.mxu0 0.0
    %4210 = vmatpush1.msra.mxu0 0.0
    %4211 = vmatprep.subr.mxu0 0.0
    %4212 = vmatpush1.msra.mxu0 0.0
    %4213 = vmatprep.subr.mxu0 0.0
    %4214 = vmatpush1.msra.mxu0 0.0
    %4215 = vmatprep.subr.mxu0 0.0
    %4216 = vmatpush1.msra.mxu0 0.0
    %4217 = vmatprep.subr.mxu0 0.0
    %4218 = vmatpush1.msra.mxu0 0.0
    %4219 = vmatprep.subr.mxu0 0.0
    %4220 = vmatpush1.msra.mxu0 0.0
    %4221 = vmatprep.subr.mxu0 0.0
    %4222 = vmatpush1.msra.mxu0 0.0
    %4223 = vmatprep.subr.mxu0 0.0
    %4224 = vmatpush1.msra.mxu0 0.0
    %4225 = vmatprep.subr.mxu0 0.0
    %4226 = vmatpush1.msra.mxu0 0.0
    %4227 = vmatprep.subr.mxu0 0.0
    %4228 = vmatpush1.msra.mxu0 0.0
    %4229 = vmatprep.subr.mxu0 0.0
    %4230 = vmatpush1.msra.mxu0 0.0
    %4231 = vmatprep.subr.mxu0 0.0
    %4232 = vmatpush1.msra.mxu0 0.0
    %4233 = vmatprep.subr.mxu0 0.0
    %4234 = vmatpush1.msra.mxu0 0.0
    %4235 = vmatprep.subr.mxu0 0.0
    %4236 = vmatpush1.msra.mxu0 0.0
    %4237 = vmatprep.subr.mxu0 0.0
    %4238 = vmatpush1.msra.mxu0 0.0
    %4239 = vmatprep.subr.mxu0 0.0
    %4240 = vmatpush1.msra.mxu0 0.0
    %4241 = vmatprep.subr.mxu0 0.0
    %4242 = vmatpush1.msra.mxu0 0.0
    %4243 = vmatprep.subr.mxu0 0.0
    %4244 = vmatpush1.msra.mxu0 0.0
    %4245 = vmatprep.subr.mxu0 0.0
    %4246 = vmatpush1.msra.mxu0 0.0
    %4247 = vmatprep.subr.mxu0 0.0
    %4248 = vmatpush1.msra.mxu0 0.0
    %4249 = vmatprep.subr.mxu0 0.0
    %4250 = vmatpush1.msra.mxu0 0.0
    %4251 = vmatprep.subr.mxu0 0.0
    %4252 = vmatpush1.msra.mxu0 0.0
    %4253 = vmatprep.subr.mxu0 0.0
    %4254 = vmatpush1.msra.mxu0 0.0
    %4255 = vmatprep.subr.mxu0 0.0
    %4256 = vmatpush1.msra.mxu0 0.0
    %4257 = vmatprep.subr.mxu0 0.0
    %4258 = vmatpush1.msra.mxu0 0.0
    %4259 = vmatprep.subr.mxu0 0.0
    %4260 = vmatpush1.msra.mxu0 0.0
    %4261 = vmatprep.mubr.f32.mxu0 0.0
    %4262 = vmatmul.mubr.f32.gmra.mrb[0].mxu0 %v4195
    %v4263 = vpop.f32.mrb[0].mxu0
    %v4264 = vadd.f32 %v3172, %v4263
    %v4265 = vpop.f32.mrb[0].mxu0
    %4266 = vdwg.mxu0
    %s4267 = scalar_lea.vmem %s17, 6
    %4268 = vst [vmem:[%s4267] sm:$0x3] %v4264
    %4269 = vmatprep.subr.mxu0 0.0
    %4270 = vmatpush1.msra.mxu0 %v3057
    %4271 = vmatprep.subr.mxu0 0.0
    %4272 = vmatpush1.msra.mxu0 %v3058
    %4273 = vmatprep.subr.mxu0 0.0
    %4274 = vmatpush1.msra.mxu0 %v3059
    %4275 = vmatprep.subr.mxu0 0.0
    %4276 = vmatpush1.msra.mxu0 %v3060
    %4277 = vmatprep.subr.mxu0 0.0
    %4278 = vmatpush1.msra.mxu0 %v3061
    %4279 = vmatprep.subr.mxu0 0.0
    %4280 = vmatpush1.msra.mxu0 %v3062
    %4281 = vmatprep.subr.mxu0 0.0
    %4282 = vmatpush1.msra.mxu0 %v3063
    %4283 = vmatprep.subr.mxu0 0.0
    %4284 = vmatpush1.msra.mxu0 %v3064
    %4285 = vmatprep.subr.mxu0 0.0
    %4286 = vmatpush1.msra.mxu0 %v3065
    %4287 = vmatprep.subr.mxu0 0.0
    %4288 = vmatpush1.msra.mxu0 %v3066
    %4289 = vmatprep.subr.mxu0 0.0
    %4290 = vmatpush1.msra.mxu0 %v3067
    %4291 = vmatprep.subr.mxu0 0.0
    %4292 = vmatpush1.msra.mxu0 %v3068
    %4293 = vmatprep.subr.mxu0 0.0
    %4294 = vmatpush1.msra.mxu0 %v3069
    %4295 = vmatprep.subr.mxu0 0.0
    %4296 = vmatpush1.msra.mxu0 %v3070
    %4297 = vmatprep.subr.mxu0 0.0
    %4298 = vmatpush1.msra.mxu0 %v3071
    %4299 = vmatprep.subr.mxu0 0.0
    %4300 = vmatpush1.msra.mxu0 %v3072
    %4301 = vmatprep.subr.mxu0 0.0
    %4302 = vmatpush1.msra.mxu0 0.0
    %4303 = vmatprep.subr.mxu0 0.0
    %4304 = vmatpush1.msra.mxu0 0.0
    %4305 = vmatprep.subr.mxu0 0.0
    %4306 = vmatpush1.msra.mxu0 0.0
    %4307 = vmatprep.subr.mxu0 0.0
    %4308 = vmatpush1.msra.mxu0 0.0
    %4309 = vmatprep.subr.mxu0 0.0
    %4310 = vmatpush1.msra.mxu0 0.0
    %4311 = vmatprep.subr.mxu0 0.0
    %4312 = vmatpush1.msra.mxu0 0.0
    %4313 = vmatprep.subr.mxu0 0.0
    %4314 = vmatpush1.msra.mxu0 0.0
    %4315 = vmatprep.subr.mxu0 0.0
    %4316 = vmatpush1.msra.mxu0 0.0
    %4317 = vmatprep.subr.mxu0 0.0
    %4318 = vmatpush1.msra.mxu0 0.0
    %4319 = vmatprep.subr.mxu0 0.0
    %4320 = vmatpush1.msra.mxu0 0.0
    %4321 = vmatprep.subr.mxu0 0.0
    %4322 = vmatpush1.msra.mxu0 0.0
    %4323 = vmatprep.subr.mxu0 0.0
    %4324 = vmatpush1.msra.mxu0 0.0
    %4325 = vmatprep.subr.mxu0 0.0
    %4326 = vmatpush1.msra.mxu0 0.0
    %4327 = vmatprep.subr.mxu0 0.0
    %4328 = vmatpush1.msra.mxu0 0.0
    %4329 = vmatprep.subr.mxu0 0.0
    %4330 = vmatpush1.msra.mxu0 0.0
    %4331 = vmatprep.subr.mxu0 0.0
    %4332 = vmatpush1.msra.mxu0 0.0
    %4333 = vmatprep.mubr.f32.mxu0 0.0
    %4334 = vmatmul.mubr.f32.gmra.mrb[0].mxu0 %v4264
    %v4335 = vpop.f32.mrb[0].mxu0
    %v4336 = vadd.f32 %v3054, %v4335
    %v4337 = vpop.f32.mrb[0].mxu0
    %4338 = vdwg.mxu0
    %v4339 = vxor.u32 %v4336, 2147483648
    %v4340 = vmul.f32 %v4339, 1.442695
    %v4341 = vpow.pop %v4340
    %v4342 = vadd.f32 %v4341, 1.0
    %v4343 = vrcp.pop %v4342
    %v4344 = vmul.f32 1.0, %v4343
    %v4345 = vmul.f32 %v4344, 2.0
    %v4346 = vsub.f32 %v4345, 1.0
    %v4347 = vsel %vm65, %v4346, %v4344
    %v4348 = vmul.f32 %v4347, %v1486
    %4350 = vrot.lane.b32.xlu0 %v4347, 64
    %v4351 = vpop.permute.xlu0 %4350
    %v4353 = vmul.f32 %v4347, %v4351
    %4355 = vrot.lane.b32.xlu0 %v4353, 32
    %v4356 = vpop.permute.xlu0 %4355
    %v4358 = vadd.f32 %v4348, %v4356
    %v4359 = vtanh.pop %v4358
    %4361 = vrot.lane.b32.xlu0 %v4359, 64
    %v4362 = vpop.permute.xlu0 %4361
    %v4364 = vmul.f32 %v4347, %v4362
    %4366 = vrot.lane.b32.xlu0 %v4364, 32
    %v4367 = vpop.permute.xlu0 %4366
    %v4368 = vsel %vm678, %v4367, 0
    %4370 = vmatprep.subr.mxu0 0.0
    %4371 = vmatpush1.msra.mxu0 %v3159
    %4372 = vmatprep.subr.mxu0 0.0
    %4373 = vmatpush1.msra.mxu0 %v3160
    %4374 = vmatprep.subr.mxu0 0.0
    %4375 = vmatpush1.msra.mxu0 %v3161
    %4376 = vmatprep.subr.mxu0 0.0
    %4377 = vmatpush1.msra.mxu0 %v3162
    %4378 = vmatprep.subr.mxu0 0.0
    %4379 = vmatpush1.msra.mxu0 0.0
    %4380 = vmatprep.subr.mxu0 0.0
    %4381 = vmatpush1.msra.mxu0 0.0
    %4382 = vmatprep.subr.mxu0 0.0
    %4383 = vmatpush1.msra.mxu0 0.0
    %4384 = vmatprep.subr.mxu0 0.0
    %4385 = vmatpush1.msra.mxu0 0.0
    %4386 = vmatprep.subr.mxu0 0.0
    %4387 = vmatpush1.msra.mxu0 0.0
    %4388 = vmatprep.subr.mxu0 0.0
    %4389 = vmatpush1.msra.mxu0 0.0
    %4390 = vmatprep.subr.mxu0 0.0
    %4391 = vmatpush1.msra.mxu0 0.0
    %4392 = vmatprep.subr.mxu0 0.0
    %4393 = vmatpush1.msra.mxu0 0.0
    %4394 = vmatprep.subr.mxu0 0.0
    %4395 = vmatpush1.msra.mxu0 0.0
    %4396 = vmatprep.subr.mxu0 0.0
    %4397 = vmatpush1.msra.mxu0 0.0
    %4398 = vmatprep.subr.mxu0 0.0
    %4399 = vmatpush1.msra.mxu0 0.0
    %4400 = vmatprep.subr.mxu0 0.0
    %4401 = vmatpush1.msra.mxu0 0.0
    %4402 = vmatprep.subr.mxu0 0.0
    %4403 = vmatpush1.msra.mxu0 0.0
    %4404 = vmatprep.subr.mxu0 0.0
    %4405 = vmatpush1.msra.mxu0 0.0
    %4406 = vmatprep.subr.mxu0 0.0
    %4407 = vmatpush1.msra.mxu0 0.0
    %4408 = vmatprep.subr.mxu0 0.0
    %4409 = vmatpush1.msra.mxu0 0.0
    %4410 = vmatprep.subr.mxu0 0.0
    %4411 = vmatpush1.msra.mxu0 0.0
    %4412 = vmatprep.subr.mxu0 0.0
    %4413 = vmatpush1.msra.mxu0 0.0
    %4414 = vmatprep.subr.mxu0 0.0
    %4415 = vmatpush1.msra.mxu0 0.0
    %4416 = vmatprep.subr.mxu0 0.0
    %4417 = vmatpush1.msra.mxu0 0.0
    %4418 = vmatprep.subr.mxu0 0.0
    %4419 = vmatpush1.msra.mxu0 0.0
    %4420 = vmatprep.subr.mxu0 0.0
    %4421 = vmatpush1.msra.mxu0 0.0
    %4422 = vmatprep.subr.mxu0 0.0
    %4423 = vmatpush1.msra.mxu0 0.0
    %4424 = vmatprep.subr.mxu0 0.0
    %4425 = vmatpush1.msra.mxu0 0.0
    %4426 = vmatprep.subr.mxu0 0.0
    %4427 = vmatpush1.msra.mxu0 0.0
    %4428 = vmatprep.subr.mxu0 0.0
    %4429 = vmatpush1.msra.mxu0 0.0
    %4430 = vmatprep.subr.mxu0 0.0
    %4431 = vmatpush1.msra.mxu0 0.0
    %4432 = vmatprep.subr.mxu0 0.0
    %4433 = vmatpush1.msra.mxu0 0.0
    %4434 = vmatprep.mubr.f32.mxu0 0.0
    %4435 = vmatmul.mubr.f32.gmra.mrb[0].mxu0 %v4368
    %v4436 = vpop.f32.mrb[0].mxu0
    %v4437 = vadd.f32 %v3156, %v4436
    %v4438 = vpop.f32.mrb[0].mxu0
    %4439 = vdwg.mxu0
    %v4440 = vxor.u32 %v4437, 2147483648
    %v4441 = vmul.f32 %v4440, 1.442695
    %v4442 = vpow.pop %v4441
    %v4443 = vadd.f32 %v4442, 1.0
    %v4444 = vrcp.pop %v4443
    %v4445 = vmul.f32 1.0, %v4444
    %v4446 = vmul.f32 %v4445, 2.0
    %v4447 = vsub.f32 %v4446, 1.0
    %v4448 = vsel %vm65, %v4447, %v4445
    %v4449 = vmul.f32 %v4448, %v2877
    %4451 = vrot.lane.b32.xlu0 %v4448, 64
    %v4452 = vpop.permute.xlu0 %4451
    %v4454 = vmul.f32 %v4448, %v4452
    %4456 = vrot.lane.b32.xlu0 %v4454, 32
    %v4457 = vpop.permute.xlu0 %4456
    %v4459 = vadd.f32 %v4449, %v4457
    %v4460 = vtanh.pop %v4459
    %4462 = vrot.lane.b32.xlu0 %v4460, 64
    %v4463 = vpop.permute.xlu0 %4462
    %v4465 = vmul.f32 %v4448, %v4463
    %4467 = vrot.lane.b32.xlu0 %v4465, 32
    %v4468 = vpop.permute.xlu0 %4467
    %v4469 = vsel %vm678, %v4468, 0
    %4471 = vmatprep.subr.mxu0 0.0
    %4472 = vmatpush1.msra.mxu0 %v3163
    %4473 = vmatprep.subr.mxu0 0.0
    %4474 = vmatpush1.msra.mxu0 %v3164
    %4475 = vmatprep.subr.mxu0 0.0
    %4476 = vmatpush1.msra.mxu0 %v3165
    %4477 = vmatprep.subr.mxu0 0.0
    %4478 = vmatpush1.msra.mxu0 %v3166
    %4479 = vmatprep.subr.mxu0 0.0
    %4480 = vmatpush1.msra.mxu0 0.0
    %4481 = vmatprep.subr.mxu0 0.0
    %4482 = vmatpush1.msra.mxu0 0.0
    %4483 = vmatprep.subr.mxu0 0.0
    %4484 = vmatpush1.msra.mxu0 0.0
    %4485 = vmatprep.subr.mxu0 0.0
    %4486 = vmatpush1.msra.mxu0 0.0
    %4487 = vmatprep.subr.mxu0 0.0
    %4488 = vmatpush1.msra.mxu0 0.0
    %4489 = vmatprep.subr.mxu0 0.0
    %4490 = vmatpush1.msra.mxu0 0.0
    %4491 = vmatprep.subr.mxu0 0.0
    %4492 = vmatpush1.msra.mxu0 0.0
    %4493 = vmatprep.subr.mxu0 0.0
    %4494 = vmatpush1.msra.mxu0 0.0
    %4495 = vmatprep.subr.mxu0 0.0
    %4496 = vmatpush1.msra.mxu0 0.0
    %4497 = vmatprep.subr.mxu0 0.0
    %4498 = vmatpush1.msra.mxu0 0.0
    %4499 = vmatprep.subr.mxu0 0.0
    %4500 = vmatpush1.msra.mxu0 0.0
    %4501 = vmatprep.subr.mxu0 0.0
    %4502 = vmatpush1.msra.mxu0 0.0
    %4503 = vmatprep.subr.mxu0 0.0
    %4504 = vmatpush1.msra.mxu0 0.0
    %4505 = vmatprep.subr.mxu0 0.0
    %4506 = vmatpush1.msra.mxu0 0.0
    %4507 = vmatprep.subr.mxu0 0.0
    %4508 = vmatpush1.msra.mxu0 0.0
    %4509 = vmatprep.subr.mxu0 0.0
    %4510 = vmatpush1.msra.mxu0 0.0
    %4511 = vmatprep.subr.mxu0 0.0
    %4512 = vmatpush1.msra.mxu0 0.0
    %4513 = vmatprep.subr.mxu0 0.0
    %4514 = vmatpush1.msra.mxu0 0.0
    %4515 = vmatprep.subr.mxu0 0.0
    %4516 = vmatpush1.msra.mxu0 0.0
    %4517 = vmatprep.subr.mxu0 0.0
    %4518 = vmatpush1.msra.mxu0 0.0
    %4519 = vmatprep.subr.mxu0 0.0
    %4520 = vmatpush1.msra.mxu0 0.0
    %4521 = vmatprep.subr.mxu0 0.0
    %4522 = vmatpush1.msra.mxu0 0.0
    %4523 = vmatprep.subr.mxu0 0.0
    %4524 = vmatpush1.msra.mxu0 0.0
    %4525 = vmatprep.subr.mxu0 0.0
    %4526 = vmatpush1.msra.mxu0 0.0
    %4527 = vmatprep.subr.mxu0 0.0
    %4528 = vmatpush1.msra.mxu0 0.0
    %4529 = vmatprep.subr.mxu0 0.0
    %4530 = vmatpush1.msra.mxu0 0.0
    %4531 = vmatprep.subr.mxu0 0.0
    %4532 = vmatpush1.msra.mxu0 0.0
    %4533 = vmatprep.subr.mxu0 0.0
    %4534 = vmatpush1.msra.mxu0 0.0
    %4535 = vmatprep.mubr.f32.mxu0 0.0
    %4536 = vmatmul.mubr.f32.gmra.mrb[0].mxu0 %v4469
    %v4537 = vpop.f32.mrb[0].mxu0
    %v4538 = vadd.f32 %v3172, %v4537
    %v4539 = vpop.f32.mrb[0].mxu0
    %4540 = vdwg.mxu0
    %s4541 = scalar_lea.vmem %s17, 8
    %4542 = vst [vmem:[%s4541] sm:$0x3] %v4538
    %4543 = vmatprep.subr.mxu0 0.0
    %4544 = vmatpush1.msra.mxu0 %v3057
    %4545 = vmatprep.subr.mxu0 0.0
    %4546 = vmatpush1.msra.mxu0 %v3058
    %4547 = vmatprep.subr.mxu0 0.0
    %4548 = vmatpush1.msra.mxu0 %v3059
    %4549 = vmatprep.subr.mxu0 0.0
    %4550 = vmatpush1.msra.mxu0 %v3060
    %4551 = vmatprep.subr.mxu0 0.0
    %4552 = vmatpush1.msra.mxu0 %v3061
    %4553 = vmatprep.subr.mxu0 0.0
    %4554 = vmatpush1.msra.mxu0 %v3062
    %4555 = vmatprep.subr.mxu0 0.0
    %4556 = vmatpush1.msra.mxu0 %v3063
    %4557 = vmatprep.subr.mxu0 0.0
    %4558 = vmatpush1.msra.mxu0 %v3064
    %4559 = vmatprep.subr.mxu0 0.0
    %4560 = vmatpush1.msra.mxu0 %v3065
    %4561 = vmatprep.subr.mxu0 0.0
    %4562 = vmatpush1.msra.mxu0 %v3066
    %4563 = vmatprep.subr.mxu0 0.0
    %4564 = vmatpush1.msra.mxu0 %v3067
    %4565 = vmatprep.subr.mxu0 0.0
    %4566 = vmatpush1.msra.mxu0 %v3068
    %4567 = vmatprep.subr.mxu0 0.0
    %4568 = vmatpush1.msra.mxu0 %v3069
    %4569 = vmatprep.subr.mxu0 0.0
    %4570 = vmatpush1.msra.mxu0 %v3070
    %4571 = vmatprep.subr.mxu0 0.0
    %4572 = vmatpush1.msra.mxu0 %v3071
    %4573 = vmatprep.subr.mxu0 0.0
    %4574 = vmatpush1.msra.mxu0 %v3072
    %4575 = vmatprep.subr.mxu0 0.0
    %4576 = vmatpush1.msra.mxu0 0.0
    %4577 = vmatprep.subr.mxu0 0.0
    %4578 = vmatpush1.msra.mxu0 0.0
    %4579 = vmatprep.subr.mxu0 0.0
    %4580 = vmatpush1.msra.mxu0 0.0
    %4581 = vmatprep.subr.mxu0 0.0
    %4582 = vmatpush1.msra.mxu0 0.0
    %4583 = vmatprep.subr.mxu0 0.0
    %4584 = vmatpush1.msra.mxu0 0.0
    %4585 = vmatprep.subr.mxu0 0.0
    %4586 = vmatpush1.msra.mxu0 0.0
    %4587 = vmatprep.subr.mxu0 0.0
    %4588 = vmatpush1.msra.mxu0 0.0
    %4589 = vmatprep.subr.mxu0 0.0
    %4590 = vmatpush1.msra.mxu0 0.0
    %4591 = vmatprep.subr.mxu0 0.0
    %4592 = vmatpush1.msra.mxu0 0.0
    %4593 = vmatprep.subr.mxu0 0.0
    %4594 = vmatpush1.msra.mxu0 0.0
    %4595 = vmatprep.subr.mxu0 0.0
    %4596 = vmatpush1.msra.mxu0 0.0
    %4597 = vmatprep.subr.mxu0 0.0
    %4598 = vmatpush1.msra.mxu0 0.0
    %4599 = vmatprep.subr.mxu0 0.0
    %4600 = vmatpush1.msra.mxu0 0.0
    %4601 = vmatprep.subr.mxu0 0.0
    %4602 = vmatpush1.msra.mxu0 0.0
    %4603 = vmatprep.subr.mxu0 0.0
    %4604 = vmatpush1.msra.mxu0 0.0
    %4605 = vmatprep.subr.mxu0 0.0
    %4606 = vmatpush1.msra.mxu0 0.0
    %4607 = vmatprep.mubr.f32.mxu0 0.0
    %4608 = vmatmul.mubr.f32.gmra.mrb[0].mxu0 %v4538
    %v4609 = vpop.f32.mrb[0].mxu0
    %v4610 = vadd.f32 %v3054, %v4609
    %v4611 = vpop.f32.mrb[0].mxu0
    %4612 = vdwg.mxu0
    %v4613 = vxor.u32 %v4610, 2147483648
    %v4614 = vmul.f32 %v4613, 1.442695
    %v4615 = vpow.pop %v4614
    %v4616 = vadd.f32 %v4615, 1.0
    %v4617 = vrcp.pop %v4616
    %v4618 = vmul.f32 1.0, %v4617
    %v4619 = vmul.f32 %v4618, 2.0
    %v4620 = vsub.f32 %v4619, 1.0
    %v4621 = vsel %vm65, %v4620, %v4618
    %v4622 = vmul.f32 %v4621, %v1486
    %4624 = vrot.lane.b32.xlu0 %v4621, 64
    %v4625 = vpop.permute.xlu0 %4624
    %v4627 = vmul.f32 %v4621, %v4625
    %4629 = vrot.lane.b32.xlu0 %v4627, 32
    %v4630 = vpop.permute.xlu0 %4629
    %v4632 = vadd.f32 %v4622, %v4630
    %v4633 = vtanh.pop %v4632
    %4635 = vrot.lane.b32.xlu0 %v4633, 64
    %v4636 = vpop.permute.xlu0 %4635
    %v4638 = vmul.f32 %v4621, %v4636
    %4640 = vrot.lane.b32.xlu0 %v4638, 32
    %v4641 = vpop.permute.xlu0 %4640
    %v4642 = vsel %vm678, %v4641, 0
    %4644 = vmatprep.subr.mxu0 0.0
    %4645 = vmatpush1.msra.mxu0 %v3159
    %4646 = vmatprep.subr.mxu0 0.0
    %4647 = vmatpush1.msra.mxu0 %v3160
    %4648 = vmatprep.subr.mxu0 0.0
    %4649 = vmatpush1.msra.mxu0 %v3161
    %4650 = vmatprep.subr.mxu0 0.0
    %4651 = vmatpush1.msra.mxu0 %v3162
    %4652 = vmatprep.subr.mxu0 0.0
    %4653 = vmatpush1.msra.mxu0 0.0
    %4654 = vmatprep.subr.mxu0 0.0
    %4655 = vmatpush1.msra.mxu0 0.0
    %4656 = vmatprep.subr.mxu0 0.0
    %4657 = vmatpush1.msra.mxu0 0.0
    %4658 = vmatprep.subr.mxu0 0.0
    %4659 = vmatpush1.msra.mxu0 0.0
    %4660 = vmatprep.subr.mxu0 0.0
    %4661 = vmatpush1.msra.mxu0 0.0
    %4662 = vmatprep.subr.mxu0 0.0
    %4663 = vmatpush1.msra.mxu0 0.0
    %4664 = vmatprep.subr.mxu0 0.0
    %4665 = vmatpush1.msra.mxu0 0.0
    %4666 = vmatprep.subr.mxu0 0.0
    %4667 = vmatpush1.msra.mxu0 0.0
    %4668 = vmatprep.subr.mxu0 0.0
    %4669 = vmatpush1.msra.mxu0 0.0
    %4670 = vmatprep.subr.mxu0 0.0
    %4671 = vmatpush1.msra.mxu0 0.0
    %4672 = vmatprep.subr.mxu0 0.0
    %4673 = vmatpush1.msra.mxu0 0.0
    %4674 = vmatprep.subr.mxu0 0.0
    %4675 = vmatpush1.msra.mxu0 0.0
    %4676 = vmatprep.subr.mxu0 0.0
    %4677 = vmatpush1.msra.mxu0 0.0
    %4678 = vmatprep.subr.mxu0 0.0
    %4679 = vmatpush1.msra.mxu0 0.0
    %4680 = vmatprep.subr.mxu0 0.0
    %4681 = vmatpush1.msra.mxu0 0.0
    %4682 = vmatprep.subr.mxu0 0.0
    %4683 = vmatpush1.msra.mxu0 0.0
    %4684 = vmatprep.subr.mxu0 0.0
    %4685 = vmatpush1.msra.mxu0 0.0
    %4686 = vmatprep.subr.mxu0 0.0
    %4687 = vmatpush1.msra.mxu0 0.0
    %4688 = vmatprep.subr.mxu0 0.0
    %4689 = vmatpush1.msra.mxu0 0.0
    %4690 = vmatprep.subr.mxu0 0.0
    %4691 = vmatpush1.msra.mxu0 0.0
    %4692 = vmatprep.subr.mxu0 0.0
    %4693 = vmatpush1.msra.mxu0 0.0
    %4694 = vmatprep.subr.mxu0 0.0
    %4695 = vmatpush1.msra.mxu0 0.0
    %4696 = vmatprep.subr.mxu0 0.0
    %4697 = vmatpush1.msra.mxu0 0.0
    %4698 = vmatprep.subr.mxu0 0.0
    %4699 = vmatpush1.msra.mxu0 0.0
    %4700 = vmatprep.subr.mxu0 0.0
    %4701 = vmatpush1.msra.mxu0 0.0
    %4702 = vmatprep.subr.mxu0 0.0
    %4703 = vmatpush1.msra.mxu0 0.0
    %4704 = vmatprep.subr.mxu0 0.0
    %4705 = vmatpush1.msra.mxu0 0.0
    %4706 = vmatprep.subr.mxu0 0.0
    %4707 = vmatpush1.msra.mxu0 0.0
    %4708 = vmatprep.mubr.f32.mxu0 0.0
    %4709 = vmatmul.mubr.f32.gmra.mrb[0].mxu0 %v4642
    %v4710 = vpop.f32.mrb[0].mxu0
    %v4711 = vadd.f32 %v3156, %v4710
    %v4712 = vpop.f32.mrb[0].mxu0
    %4713 = vdwg.mxu0
    %v4714 = vxor.u32 %v4711, 2147483648
    %v4715 = vmul.f32 %v4714, 1.442695
    %v4716 = vpow.pop %v4715
    %v4717 = vadd.f32 %v4716, 1.0
    %v4718 = vrcp.pop %v4717
    %v4719 = vmul.f32 1.0, %v4718
    %v4720 = vmul.f32 %v4719, 2.0
    %v4721 = vsub.f32 %v4720, 1.0
    %v4722 = vsel %vm65, %v4721, %v4719
    %v4723 = vmul.f32 %v4722, %v2877
    %4725 = vrot.lane.b32.xlu0 %v4722, 64
    %v4726 = vpop.permute.xlu0 %4725
    %v4728 = vmul.f32 %v4722, %v4726
    %4730 = vrot.lane.b32.xlu0 %v4728, 32
    %v4731 = vpop.permute.xlu0 %4730
    %v4733 = vadd.f32 %v4723, %v4731
    %v4734 = vtanh.pop %v4733
    %4736 = vrot.lane.b32.xlu0 %v4734, 64
    %v4737 = vpop.permute.xlu0 %4736
    %v4739 = vmul.f32 %v4722, %v4737
    %4741 = vrot.lane.b32.xlu0 %v4739, 32
    %v4742 = vpop.permute.xlu0 %4741
    %v4743 = vsel %vm678, %v4742, 0
    %4745 = vmatprep.subr.mxu0 0.0
    %4746 = vmatpush1.msra.mxu0 %v3163
    %4747 = vmatprep.subr.mxu0 0.0
    %4748 = vmatpush1.msra.mxu0 %v3164
    %4749 = vmatprep.subr.mxu0 0.0
    %4750 = vmatpush1.msra.mxu0 %v3165
    %4751 = vmatprep.subr.mxu0 0.0
    %4752 = vmatpush1.msra.mxu0 %v3166
    %4753 = vmatprep.subr.mxu0 0.0
    %4754 = vmatpush1.msra.mxu0 0.0
    %4755 = vmatprep.subr.mxu0 0.0
    %4756 = vmatpush1.msra.mxu0 0.0
    %4757 = vmatprep.subr.mxu0 0.0
    %4758 = vmatpush1.msra.mxu0 0.0
    %4759 = vmatprep.subr.mxu0 0.0
    %4760 = vmatpush1.msra.mxu0 0.0
    %4761 = vmatprep.subr.mxu0 0.0
    %4762 = vmatpush1.msra.mxu0 0.0
    %4763 = vmatprep.subr.mxu0 0.0
    %4764 = vmatpush1.msra.mxu0 0.0
    %4765 = vmatprep.subr.mxu0 0.0
    %4766 = vmatpush1.msra.mxu0 0.0
    %4767 = vmatprep.subr.mxu0 0.0
    %4768 = vmatpush1.msra.mxu0 0.0
    %4769 = vmatprep.subr.mxu0 0.0
    %4770 = vmatpush1.msra.mxu0 0.0
    %4771 = vmatprep.subr.mxu0 0.0
    %4772 = vmatpush1.msra.mxu0 0.0
    %4773 = vmatprep.subr.mxu0 0.0
    %4774 = vmatpush1.msra.mxu0 0.0
    %4775 = vmatprep.subr.mxu0 0.0
    %4776 = vmatpush1.msra.mxu0 0.0
    %4777 = vmatprep.subr.mxu0 0.0
    %4778 = vmatpush1.msra.mxu0 0.0
    %4779 = vmatprep.subr.mxu0 0.0
    %4780 = vmatpush1.msra.mxu0 0.0
    %4781 = vmatprep.subr.mxu0 0.0
    %4782 = vmatpush1.msra.mxu0 0.0
    %4783 = vmatprep.subr.mxu0 0.0
    %4784 = vmatpush1.msra.mxu0 0.0
    %4785 = vmatprep.subr.mxu0 0.0
    %4786 = vmatpush1.msra.mxu0 0.0
    %4787 = vmatprep.subr.mxu0 0.0
    %4788 = vmatpush1.msra.mxu0 0.0
    %4789 = vmatprep.subr.mxu0 0.0
    %4790 = vmatpush1.msra.mxu0 0.0
    %4791 = vmatprep.subr.mxu0 0.0
    %4792 = vmatpush1.msra.mxu0 0.0
    %4793 = vmatprep.subr.mxu0 0.0
    %4794 = vmatpush1.msra.mxu0 0.0
    %4795 = vmatprep.subr.mxu0 0.0
    %4796 = vmatpush1.msra.mxu0 0.0
    %4797 = vmatprep.subr.mxu0 0.0
    %4798 = vmatpush1.msra.mxu0 0.0
    %4799 = vmatprep.subr.mxu0 0.0
    %4800 = vmatpush1.msra.mxu0 0.0
    %4801 = vmatprep.subr.mxu0 0.0
    %4802 = vmatpush1.msra.mxu0 0.0
    %4803 = vmatprep.subr.mxu0 0.0
    %4804 = vmatpush1.msra.mxu0 0.0
    %4805 = vmatprep.subr.mxu0 0.0
    %4806 = vmatpush1.msra.mxu0 0.0
    %4807 = vmatprep.subr.mxu0 0.0
    %4808 = vmatpush1.msra.mxu0 0.0
    %4809 = vmatprep.mubr.f32.mxu0 0.0
    %4810 = vmatmul.mubr.f32.gmra.mrb[0].mxu0 %v4743
    %v4811 = vpop.f32.mrb[0].mxu0
    %v4812 = vadd.f32 %v3172, %v4811
    %v4813 = vpop.f32.mrb[0].mxu0
    %4814 = vdwg.mxu0
    %s4815 = scalar_lea.vmem %s17, 10
    %4816 = vst [vmem:[%s4815] sm:$0x3] %v4812
    %4817 = vmatprep.subr.mxu0 0.0
    %4818 = vmatpush1.msra.mxu0 %v3057
    %4819 = vmatprep.subr.mxu0 0.0
    %4820 = vmatpush1.msra.mxu0 %v3058
    %4821 = vmatprep.subr.mxu0 0.0
    %4822 = vmatpush1.msra.mxu0 %v3059
    %4823 = vmatprep.subr.mxu0 0.0
    %4824 = vmatpush1.msra.mxu0 %v3060
    %4825 = vmatprep.subr.mxu0 0.0
    %4826 = vmatpush1.msra.mxu0 %v3061
    %4827 = vmatprep.subr.mxu0 0.0
    %4828 = vmatpush1.msra.mxu0 %v3062
    %4829 = vmatprep.subr.mxu0 0.0
    %4830 = vmatpush1.msra.mxu0 %v3063
    %4831 = vmatprep.subr.mxu0 0.0
    %4832 = vmatpush1.msra.mxu0 %v3064
    %4833 = vmatprep.subr.mxu0 0.0
    %4834 = vmatpush1.msra.mxu0 %v3065
    %4835 = vmatprep.subr.mxu0 0.0
    %4836 = vmatpush1.msra.mxu0 %v3066
    %4837 = vmatprep.subr.mxu0 0.0
    %4838 = vmatpush1.msra.mxu0 %v3067
    %4839 = vmatprep.subr.mxu0 0.0
    %4840 = vmatpush1.msra.mxu0 %v3068
    %4841 = vmatprep.subr.mxu0 0.0
    %4842 = vmatpush1.msra.mxu0 %v3069
    %4843 = vmatprep.subr.mxu0 0.0
    %4844 = vmatpush1.msra.mxu0 %v3070
    %4845 = vmatprep.subr.mxu0 0.0
    %4846 = vmatpush1.msra.mxu0 %v3071
    %4847 = vmatprep.subr.mxu0 0.0
    %4848 = vmatpush1.msra.mxu0 %v3072
    %4849 = vmatprep.subr.mxu0 0.0
    %4850 = vmatpush1.msra.mxu0 0.0
    %4851 = vmatprep.subr.mxu0 0.0
    %4852 = vmatpush1.msra.mxu0 0.0
    %4853 = vmatprep.subr.mxu0 0.0
    %4854 = vmatpush1.msra.mxu0 0.0
    %4855 = vmatprep.subr.mxu0 0.0
    %4856 = vmatpush1.msra.mxu0 0.0
    %4857 = vmatprep.subr.mxu0 0.0
    %4858 = vmatpush1.msra.mxu0 0.0
    %4859 = vmatprep.subr.mxu0 0.0
    %4860 = vmatpush1.msra.mxu0 0.0
    %4861 = vmatprep.subr.mxu0 0.0
    %4862 = vmatpush1.msra.mxu0 0.0
    %4863 = vmatprep.subr.mxu0 0.0
    %4864 = vmatpush1.msra.mxu0 0.0
    %4865 = vmatprep.subr.mxu0 0.0
    %4866 = vmatpush1.msra.mxu0 0.0
    %4867 = vmatprep.subr.mxu0 0.0
    %4868 = vmatpush1.msra.mxu0 0.0
    %4869 = vmatprep.subr.mxu0 0.0
    %4870 = vmatpush1.msra.mxu0 0.0
    %4871 = vmatprep.subr.mxu0 0.0
    %4872 = vmatpush1.msra.mxu0 0.0
    %4873 = vmatprep.subr.mxu0 0.0
    %4874 = vmatpush1.msra.mxu0 0.0
    %4875 = vmatprep.subr.mxu0 0.0
    %4876 = vmatpush1.msra.mxu0 0.0
    %4877 = vmatprep.subr.mxu0 0.0
    %4878 = vmatpush1.msra.mxu0 0.0
    %4879 = vmatprep.subr.mxu0 0.0
    %4880 = vmatpush1.msra.mxu0 0.0
    %4881 = vmatprep.mubr.f32.mxu0 0.0
    %4882 = vmatmul.mubr.f32.gmra.mrb[0].mxu0 %v4812
    %v4883 = vpop.f32.mrb[0].mxu0
    %v4884 = vadd.f32 %v3054, %v4883
    %v4885 = vpop.f32.mrb[0].mxu0
    %4886 = vdwg.mxu0
    %v4887 = vxor.u32 %v4884, 2147483648
    %v4888 = vmul.f32 %v4887, 1.442695
    %v4889 = vpow.pop %v4888
    %v4890 = vadd.f32 %v4889, 1.0
    %v4891 = vrcp.pop %v4890
    %v4892 = vmul.f32 1.0, %v4891
    %v4893 = vmul.f32 %v4892, 2.0
    %v4894 = vsub.f32 %v4893, 1.0
    %v4895 = vsel %vm65, %v4894, %v4892
    %v4896 = vmul.f32 %v4895, %v1486
    %4898 = vrot.lane.b32.xlu0 %v4895, 64
    %v4899 = vpop.permute.xlu0 %4898
    %v4901 = vmul.f32 %v4895, %v4899
    %4903 = vrot.lane.b32.xlu0 %v4901, 32
    %v4904 = vpop.permute.xlu0 %4903
    %v4906 = vadd.f32 %v4896, %v4904
    %v4907 = vtanh.pop %v4906
    %4909 = vrot.lane.b32.xlu0 %v4907, 64
    %v4910 = vpop.permute.xlu0 %4909
    %v4912 = vmul.f32 %v4895, %v4910
    %4914 = vrot.lane.b32.xlu0 %v4912, 32
    %v4915 = vpop.permute.xlu0 %4914
    %v4916 = vsel %vm678, %v4915, 0
    %4918 = vmatprep.subr.mxu0 0.0
    %4919 = vmatpush1.msra.mxu0 %v3159
    %4920 = vmatprep.subr.mxu0 0.0
    %4921 = vmatpush1.msra.mxu0 %v3160
    %4922 = vmatprep.subr.mxu0 0.0
    %4923 = vmatpush1.msra.mxu0 %v3161
    %4924 = vmatprep.subr.mxu0 0.0
    %4925 = vmatpush1.msra.mxu0 %v3162
    %4926 = vmatprep.subr.mxu0 0.0
    %4927 = vmatpush1.msra.mxu0 0.0
    %4928 = vmatprep.subr.mxu0 0.0
    %4929 = vmatpush1.msra.mxu0 0.0
    %4930 = vmatprep.subr.mxu0 0.0
    %4931 = vmatpush1.msra.mxu0 0.0
    %4932 = vmatprep.subr.mxu0 0.0
    %4933 = vmatpush1.msra.mxu0 0.0
    %4934 = vmatprep.subr.mxu0 0.0
    %4935 = vmatpush1.msra.mxu0 0.0
    %4936 = vmatprep.subr.mxu0 0.0
    %4937 = vmatpush1.msra.mxu0 0.0
    %4938 = vmatprep.subr.mxu0 0.0
    %4939 = vmatpush1.msra.mxu0 0.0
    %4940 = vmatprep.subr.mxu0 0.0
    %4941 = vmatpush1.msra.mxu0 0.0
    %4942 = vmatprep.subr.mxu0 0.0
    %4943 = vmatpush1.msra.mxu0 0.0
    %4944 = vmatprep.subr.mxu0 0.0
    %4945 = vmatpush1.msra.mxu0 0.0
    %4946 = vmatprep.subr.mxu0 0.0
    %4947 = vmatpush1.msra.mxu0 0.0
    %4948 = vmatprep.subr.mxu0 0.0
    %4949 = vmatpush1.msra.mxu0 0.0
    %4950 = vmatprep.subr.mxu0 0.0
    %4951 = vmatpush1.msra.mxu0 0.0
    %4952 = vmatprep.subr.mxu0 0.0
    %4953 = vmatpush1.msra.mxu0 0.0
    %4954 = vmatprep.subr.mxu0 0.0
    %4955 = vmatpush1.msra.mxu0 0.0
    %4956 = vmatprep.subr.mxu0 0.0
    %4957 = vmatpush1.msra.mxu0 0.0
    %4958 = vmatprep.subr.mxu0 0.0
    %4959 = vmatpush1.msra.mxu0 0.0
    %4960 = vmatprep.subr.mxu0 0.0
    %4961 = vmatpush1.msra.mxu0 0.0
    %4962 = vmatprep.subr.mxu0 0.0
    %4963 = vmatpush1.msra.mxu0 0.0
    %4964 = vmatprep.subr.mxu0 0.0
    %4965 = vmatpush1.msra.mxu0 0.0
    %4966 = vmatprep.subr.mxu0 0.0
    %4967 = vmatpush1.msra.mxu0 0.0
    %4968 = vmatprep.subr.mxu0 0.0
    %4969 = vmatpush1.msra.mxu0 0.0
    %4970 = vmatprep.subr.mxu0 0.0
    %4971 = vmatpush1.msra.mxu0 0.0
    %4972 = vmatprep.subr.mxu0 0.0
    %4973 = vmatpush1.msra.mxu0 0.0
    %4974 = vmatprep.subr.mxu0 0.0
    %4975 = vmatpush1.msra.mxu0 0.0
    %4976 = vmatprep.subr.mxu0 0.0
    %4977 = vmatpush1.msra.mxu0 0.0
    %4978 = vmatprep.subr.mxu0 0.0
    %4979 = vmatpush1.msra.mxu0 0.0
    %4980 = vmatprep.subr.mxu0 0.0
    %4981 = vmatpush1.msra.mxu0 0.0
    %4982 = vmatprep.mubr.f32.mxu0 0.0
    %4983 = vmatmul.mubr.f32.gmra.mrb[0].mxu0 %v4916
    %v4984 = vpop.f32.mrb[0].mxu0
    %v4985 = vadd.f32 %v3156, %v4984
    %v4986 = vpop.f32.mrb[0].mxu0
    %4987 = vdwg.mxu0
    %v4988 = vxor.u32 %v4985, 2147483648
    %v4989 = vmul.f32 %v4988, 1.442695
    %v4990 = vpow.pop %v4989
    %v4991 = vadd.f32 %v4990, 1.0
    %v4992 = vrcp.pop %v4991
    %v4993 = vmul.f32 1.0, %v4992
    %v4994 = vmul.f32 %v4993, 2.0
    %v4995 = vsub.f32 %v4994, 1.0
    %v4996 = vsel %vm65, %v4995, %v4993
    %v4997 = vmul.f32 %v4996, %v2877
    %4999 = vrot.lane.b32.xlu0 %v4996, 64
    %v5000 = vpop.permute.xlu0 %4999
    %v5002 = vmul.f32 %v4996, %v5000
    %5004 = vrot.lane.b32.xlu0 %v5002, 32
    %v5005 = vpop.permute.xlu0 %5004
    %v5007 = vadd.f32 %v4997, %v5005
    %v5008 = vtanh.pop %v5007
    %5010 = vrot.lane.b32.xlu0 %v5008, 64
    %v5011 = vpop.permute.xlu0 %5010
    %v5013 = vmul.f32 %v4996, %v5011
    %5015 = vrot.lane.b32.xlu0 %v5013, 32
    %v5016 = vpop.permute.xlu0 %5015
    %v5017 = vsel %vm678, %v5016, 0
    %5019 = vmatprep.subr.mxu0 0.0
    %5020 = vmatpush1.msra.mxu0 %v3163
    %5021 = vmatprep.subr.mxu0 0.0
    %5022 = vmatpush1.msra.mxu0 %v3164
    %5023 = vmatprep.subr.mxu0 0.0
    %5024 = vmatpush1.msra.mxu0 %v3165
    %5025 = vmatprep.subr.mxu0 0.0
    %5026 = vmatpush1.msra.mxu0 %v3166
    %5027 = vmatprep.subr.mxu0 0.0
    %5028 = vmatpush1.msra.mxu0 0.0
    %5029 = vmatprep.subr.mxu0 0.0
    %5030 = vmatpush1.msra.mxu0 0.0
    %5031 = vmatprep.subr.mxu0 0.0
    %5032 = vmatpush1.msra.mxu0 0.0
    %5033 = vmatprep.subr.mxu0 0.0
    %5034 = vmatpush1.msra.mxu0 0.0
    %5035 = vmatprep.subr.mxu0 0.0
    %5036 = vmatpush1.msra.mxu0 0.0
    %5037 = vmatprep.subr.mxu0 0.0
    %5038 = vmatpush1.msra.mxu0 0.0
    %5039 = vmatprep.subr.mxu0 0.0
    %5040 = vmatpush1.msra.mxu0 0.0
    %5041 = vmatprep.subr.mxu0 0.0
    %5042 = vmatpush1.msra.mxu0 0.0
    %5043 = vmatprep.subr.mxu0 0.0
    %5044 = vmatpush1.msra.mxu0 0.0
    %5045 = vmatprep.subr.mxu0 0.0
    %5046 = vmatpush1.msra.mxu0 0.0
    %5047 = vmatprep.subr.mxu0 0.0
    %5048 = vmatpush1.msra.mxu0 0.0
    %5049 = vmatprep.subr.mxu0 0.0
    %5050 = vmatpush1.msra.mxu0 0.0
    %5051 = vmatprep.subr.mxu0 0.0
    %5052 = vmatpush1.msra.mxu0 0.0
    %5053 = vmatprep.subr.mxu0 0.0
    %5054 = vmatpush1.msra.mxu0 0.0
    %5055 = vmatprep.subr.mxu0 0.0
    %5056 = vmatpush1.msra.mxu0 0.0
    %5057 = vmatprep.subr.mxu0 0.0
    %5058 = vmatpush1.msra.mxu0 0.0
    %5059 = vmatprep.subr.mxu0 0.0
    %5060 = vmatpush1.msra.mxu0 0.0
    %5061 = vmatprep.subr.mxu0 0.0
    %5062 = vmatpush1.msra.mxu0 0.0
    %5063 = vmatprep.subr.mxu0 0.0
    %5064 = vmatpush1.msra.mxu0 0.0
    %5065 = vmatprep.subr.mxu0 0.0
    %5066 = vmatpush1.msra.mxu0 0.0
    %5067 = vmatprep.subr.mxu0 0.0
    %5068 = vmatpush1.msra.mxu0 0.0
    %5069 = vmatprep.subr.mxu0 0.0
    %5070 = vmatpush1.msra.mxu0 0.0
    %5071 = vmatprep.subr.mxu0 0.0
    %5072 = vmatpush1.msra.mxu0 0.0
    %5073 = vmatprep.subr.mxu0 0.0
    %5074 = vmatpush1.msra.mxu0 0.0
    %5075 = vmatprep.subr.mxu0 0.0
    %5076 = vmatpush1.msra.mxu0 0.0
    %5077 = vmatprep.subr.mxu0 0.0
    %5078 = vmatpush1.msra.mxu0 0.0
    %5079 = vmatprep.subr.mxu0 0.0
    %5080 = vmatpush1.msra.mxu0 0.0
    %5081 = vmatprep.subr.mxu0 0.0
    %5082 = vmatpush1.msra.mxu0 0.0
    %5083 = vmatprep.mubr.f32.mxu0 0.0
    %5084 = vmatmul.mubr.f32.gmra.mrb[0].mxu0 %v5017
    %v5085 = vpop.f32.mrb[0].mxu0
    %v5086 = vadd.f32 %v3172, %v5085
    %v5087 = vpop.f32.mrb[0].mxu0
    %5088 = vdwg.mxu0
    %s5089 = scalar_lea.vmem %s17, 12
    %5090 = vst [vmem:[%s5089] sm:$0x3] %v5086
    %5091 = vmatprep.subr.mxu0 0.0
    %5092 = vmatpush1.msra.mxu0 %v3057
    %5093 = vmatprep.subr.mxu0 0.0
    %5094 = vmatpush1.msra.mxu0 %v3058
    %5095 = vmatprep.subr.mxu0 0.0
    %5096 = vmatpush1.msra.mxu0 %v3059
    %5097 = vmatprep.subr.mxu0 0.0
    %5098 = vmatpush1.msra.mxu0 %v3060
    %5099 = vmatprep.subr.mxu0 0.0
    %5100 = vmatpush1.msra.mxu0 %v3061
    %5101 = vmatprep.subr.mxu0 0.0
    %5102 = vmatpush1.msra.mxu0 %v3062
    %5103 = vmatprep.subr.mxu0 0.0
    %5104 = vmatpush1.msra.mxu0 %v3063
    %5105 = vmatprep.subr.mxu0 0.0
    %5106 = vmatpush1.msra.mxu0 %v3064
    %5107 = vmatprep.subr.mxu0 0.0
    %5108 = vmatpush1.msra.mxu0 %v3065
    %5109 = vmatprep.subr.mxu0 0.0
    %5110 = vmatpush1.msra.mxu0 %v3066
    %5111 = vmatprep.subr.mxu0 0.0
    %5112 = vmatpush1.msra.mxu0 %v3067
    %5113 = vmatprep.subr.mxu0 0.0
    %5114 = vmatpush1.msra.mxu0 %v3068
    %5115 = vmatprep.subr.mxu0 0.0
    %5116 = vmatpush1.msra.mxu0 %v3069
    %5117 = vmatprep.subr.mxu0 0.0
    %5118 = vmatpush1.msra.mxu0 %v3070
    %5119 = vmatprep.subr.mxu0 0.0
    %5120 = vmatpush1.msra.mxu0 %v3071
    %5121 = vmatprep.subr.mxu0 0.0
    %5122 = vmatpush1.msra.mxu0 %v3072
    %5123 = vmatprep.subr.mxu0 0.0
    %5124 = vmatpush1.msra.mxu0 0.0
    %5125 = vmatprep.subr.mxu0 0.0
    %5126 = vmatpush1.msra.mxu0 0.0
    %5127 = vmatprep.subr.mxu0 0.0
    %5128 = vmatpush1.msra.mxu0 0.0
    %5129 = vmatprep.subr.mxu0 0.0
    %5130 = vmatpush1.msra.mxu0 0.0
    %5131 = vmatprep.subr.mxu0 0.0
    %5132 = vmatpush1.msra.mxu0 0.0
    %5133 = vmatprep.subr.mxu0 0.0
    %5134 = vmatpush1.msra.mxu0 0.0
    %5135 = vmatprep.subr.mxu0 0.0
    %5136 = vmatpush1.msra.mxu0 0.0
    %5137 = vmatprep.subr.mxu0 0.0
    %5138 = vmatpush1.msra.mxu0 0.0
    %5139 = vmatprep.subr.mxu0 0.0
    %5140 = vmatpush1.msra.mxu0 0.0
    %5141 = vmatprep.subr.mxu0 0.0
    %5142 = vmatpush1.msra.mxu0 0.0
    %5143 = vmatprep.subr.mxu0 0.0
    %5144 = vmatpush1.msra.mxu0 0.0
    %5145 = vmatprep.subr.mxu0 0.0
    %5146 = vmatpush1.msra.mxu0 0.0
    %5147 = vmatprep.subr.mxu0 0.0
    %5148 = vmatpush1.msra.mxu0 0.0
    %5149 = vmatprep.subr.mxu0 0.0
    %5150 = vmatpush1.msra.mxu0 0.0
    %5151 = vmatprep.subr.mxu0 0.0
    %5152 = vmatpush1.msra.mxu0 0.0
    %5153 = vmatprep.subr.mxu0 0.0
    %5154 = vmatpush1.msra.mxu0 0.0
    %5155 = vmatprep.mubr.f32.mxu0 0.0
    %5156 = vmatmul.mubr.f32.gmra.mrb[0].mxu0 %v5086
    %v5157 = vpop.f32.mrb[0].mxu0
    %v5158 = vadd.f32 %v3054, %v5157
    %v5159 = vpop.f32.mrb[0].mxu0
    %5160 = vdwg.mxu0
    %v5161 = vxor.u32 %v5158, 2147483648
    %v5162 = vmul.f32 %v5161, 1.442695
    %v5163 = vpow.pop %v5162
    %v5164 = vadd.f32 %v5163, 1.0
    %v5165 = vrcp.pop %v5164
    %v5166 = vmul.f32 1.0, %v5165
    %v5167 = vmul.f32 %v5166, 2.0
    %v5168 = vsub.f32 %v5167, 1.0
    %v5169 = vsel %vm65, %v5168, %v5166
    %v5170 = vmul.f32 %v5169, %v1486
    %5172 = vrot.lane.b32.xlu0 %v5169, 64
    %v5173 = vpop.permute.xlu0 %5172
    %v5175 = vmul.f32 %v5169, %v5173
    %5177 = vrot.lane.b32.xlu0 %v5175, 32
    %v5178 = vpop.permute.xlu0 %5177
    %v5180 = vadd.f32 %v5170, %v5178
    %v5181 = vtanh.pop %v5180
    %5183 = vrot.lane.b32.xlu0 %v5181, 64
    %v5184 = vpop.permute.xlu0 %5183
    %v5186 = vmul.f32 %v5169, %v5184
    %5188 = vrot.lane.b32.xlu0 %v5186, 32
    %v5189 = vpop.permute.xlu0 %5188
    %v5190 = vsel %vm678, %v5189, 0
    %5192 = vmatprep.subr.mxu0 0.0
    %5193 = vmatpush1.msra.mxu0 %v3159
    %5194 = vmatprep.subr.mxu0 0.0
    %5195 = vmatpush1.msra.mxu0 %v3160
    %5196 = vmatprep.subr.mxu0 0.0
    %5197 = vmatpush1.msra.mxu0 %v3161
    %5198 = vmatprep.subr.mxu0 0.0
    %5199 = vmatpush1.msra.mxu0 %v3162
    %5200 = vmatprep.subr.mxu0 0.0
    %5201 = vmatpush1.msra.mxu0 0.0
    %5202 = vmatprep.subr.mxu0 0.0
    %5203 = vmatpush1.msra.mxu0 0.0
    %5204 = vmatprep.subr.mxu0 0.0
    %5205 = vmatpush1.msra.mxu0 0.0
    %5206 = vmatprep.subr.mxu0 0.0
    %5207 = vmatpush1.msra.mxu0 0.0
    %5208 = vmatprep.subr.mxu0 0.0
    %5209 = vmatpush1.msra.mxu0 0.0
    %5210 = vmatprep.subr.mxu0 0.0
    %5211 = vmatpush1.msra.mxu0 0.0
    %5212 = vmatprep.subr.mxu0 0.0
    %5213 = vmatpush1.msra.mxu0 0.0
    %5214 = vmatprep.subr.mxu0 0.0
    %5215 = vmatpush1.msra.mxu0 0.0
    %5216 = vmatprep.subr.mxu0 0.0
    %5217 = vmatpush1.msra.mxu0 0.0
    %5218 = vmatprep.subr.mxu0 0.0
    %5219 = vmatpush1.msra.mxu0 0.0
    %5220 = vmatprep.subr.mxu0 0.0
    %5221 = vmatpush1.msra.mxu0 0.0
    %5222 = vmatprep.subr.mxu0 0.0
    %5223 = vmatpush1.msra.mxu0 0.0
    %5224 = vmatprep.subr.mxu0 0.0
    %5225 = vmatpush1.msra.mxu0 0.0
    %5226 = vmatprep.subr.mxu0 0.0
    %5227 = vmatpush1.msra.mxu0 0.0
    %5228 = vmatprep.subr.mxu0 0.0
    %5229 = vmatpush1.msra.mxu0 0.0
    %5230 = vmatprep.subr.mxu0 0.0
    %5231 = vmatpush1.msra.mxu0 0.0
    %5232 = vmatprep.subr.mxu0 0.0
    %5233 = vmatpush1.msra.mxu0 0.0
    %5234 = vmatprep.subr.mxu0 0.0
    %5235 = vmatpush1.msra.mxu0 0.0
    %5236 = vmatprep.subr.mxu0 0.0
    %5237 = vmatpush1.msra.mxu0 0.0
    %5238 = vmatprep.subr.mxu0 0.0
    %5239 = vmatpush1.msra.mxu0 0.0
    %5240 = vmatprep.subr.mxu0 0.0
    %5241 = vmatpush1.msra.mxu0 0.0
    %5242 = vmatprep.subr.mxu0 0.0
    %5243 = vmatpush1.msra.mxu0 0.0
    %5244 = vmatprep.subr.mxu0 0.0
    %5245 = vmatpush1.msra.mxu0 0.0
    %5246 = vmatprep.subr.mxu0 0.0
    %5247 = vmatpush1.msra.mxu0 0.0
    %5248 = vmatprep.subr.mxu0 0.0
    %5249 = vmatpush1.msra.mxu0 0.0
    %5250 = vmatprep.subr.mxu0 0.0
    %5251 = vmatpush1.msra.mxu0 0.0
    %5252 = vmatprep.subr.mxu0 0.0
    %5253 = vmatpush1.msra.mxu0 0.0
    %5254 = vmatprep.subr.mxu0 0.0
    %5255 = vmatpush1.msra.mxu0 0.0
    %5256 = vmatprep.mubr.f32.mxu0 0.0
    %5257 = vmatmul.mubr.f32.gmra.mrb[0].mxu0 %v5190
    %v5258 = vpop.f32.mrb[0].mxu0
    %v5259 = vadd.f32 %v3156, %v5258
    %v5260 = vpop.f32.mrb[0].mxu0
    %5261 = vdwg.mxu0
    %v5262 = vxor.u32 %v5259, 2147483648
    %v5263 = vmul.f32 %v5262, 1.442695
    %v5264 = vpow.pop %v5263
    %v5265 = vadd.f32 %v5264, 1.0
    %v5266 = vrcp.pop %v5265
    %v5267 = vmul.f32 1.0, %v5266
    %v5268 = vmul.f32 %v5267, 2.0
    %v5269 = vsub.f32 %v5268, 1.0
    %v5270 = vsel %vm65, %v5269, %v5267
    %v5271 = vmul.f32 %v5270, %v2877
    %5273 = vrot.lane.b32.xlu0 %v5270, 64
    %v5274 = vpop.permute.xlu0 %5273
    %v5276 = vmul.f32 %v5270, %v5274
    %5278 = vrot.lane.b32.xlu0 %v5276, 32
    %v5279 = vpop.permute.xlu0 %5278
    %v5281 = vadd.f32 %v5271, %v5279
    %v5282 = vtanh.pop %v5281
    %5284 = vrot.lane.b32.xlu0 %v5282, 64
    %v5285 = vpop.permute.xlu0 %5284
    %v5287 = vmul.f32 %v5270, %v5285
    %5289 = vrot.lane.b32.xlu0 %v5287, 32
    %v5290 = vpop.permute.xlu0 %5289
    %v5291 = vsel %vm678, %v5290, 0
    %5293 = vmatprep.subr.mxu0 0.0
    %5294 = vmatpush1.msra.mxu0 %v3163
    %5295 = vmatprep.subr.mxu0 0.0
    %5296 = vmatpush1.msra.mxu0 %v3164
    %5297 = vmatprep.subr.mxu0 0.0
    %5298 = vmatpush1.msra.mxu0 %v3165
    %5299 = vmatprep.subr.mxu0 0.0
    %5300 = vmatpush1.msra.mxu0 %v3166
    %5301 = vmatprep.subr.mxu0 0.0
    %5302 = vmatpush1.msra.mxu0 0.0
    %5303 = vmatprep.subr.mxu0 0.0
    %5304 = vmatpush1.msra.mxu0 0.0
    %5305 = vmatprep.subr.mxu0 0.0
    %5306 = vmatpush1.msra.mxu0 0.0
    %5307 = vmatprep.subr.mxu0 0.0
    %5308 = vmatpush1.msra.mxu0 0.0
    %5309 = vmatprep.subr.mxu0 0.0
    %5310 = vmatpush1.msra.mxu0 0.0
    %5311 = vmatprep.subr.mxu0 0.0
    %5312 = vmatpush1.msra.mxu0 0.0
    %5313 = vmatprep.subr.mxu0 0.0
    %5314 = vmatpush1.msra.mxu0 0.0
    %5315 = vmatprep.subr.mxu0 0.0
    %5316 = vmatpush1.msra.mxu0 0.0
    %5317 = vmatprep.subr.mxu0 0.0
    %5318 = vmatpush1.msra.mxu0 0.0
    %5319 = vmatprep.subr.mxu0 0.0
    %5320 = vmatpush1.msra.mxu0 0.0
    %5321 = vmatprep.subr.mxu0 0.0
    %5322 = vmatpush1.msra.mxu0 0.0
    %5323 = vmatprep.subr.mxu0 0.0
    %5324 = vmatpush1.msra.mxu0 0.0
    %5325 = vmatprep.subr.mxu0 0.0
    %5326 = vmatpush1.msra.mxu0 0.0
    %5327 = vmatprep.subr.mxu0 0.0
    %5328 = vmatpush1.msra.mxu0 0.0
    %5329 = vmatprep.subr.mxu0 0.0
    %5330 = vmatpush1.msra.mxu0 0.0
    %5331 = vmatprep.subr.mxu0 0.0
    %5332 = vmatpush1.msra.mxu0 0.0
    %5333 = vmatprep.subr.mxu0 0.0
    %5334 = vmatpush1.msra.mxu0 0.0
    %5335 = vmatprep.subr.mxu0 0.0
    %5336 = vmatpush1.msra.mxu0 0.0
    %5337 = vmatprep.subr.mxu0 0.0
    %5338 = vmatpush1.msra.mxu0 0.0
    %5339 = vmatprep.subr.mxu0 0.0
    %5340 = vmatpush1.msra.mxu0 0.0
    %5341 = vmatprep.subr.mxu0 0.0
    %5342 = vmatpush1.msra.mxu0 0.0
    %5343 = vmatprep.subr.mxu0 0.0
    %5344 = vmatpush1.msra.mxu0 0.0
    %5345 = vmatprep.subr.mxu0 0.0
    %5346 = vmatpush1.msra.mxu0 0.0
    %5347 = vmatprep.subr.mxu0 0.0
    %5348 = vmatpush1.msra.mxu0 0.0
    %5349 = vmatprep.subr.mxu0 0.0
    %5350 = vmatpush1.msra.mxu0 0.0
    %5351 = vmatprep.subr.mxu0 0.0
    %5352 = vmatpush1.msra.mxu0 0.0
    %5353 = vmatprep.subr.mxu0 0.0
    %5354 = vmatpush1.msra.mxu0 0.0
    %5355 = vmatprep.subr.mxu0 0.0
    %5356 = vmatpush1.msra.mxu0 0.0
    %5357 = vmatprep.mubr.f32.mxu0 0.0
    %5358 = vmatmul.mubr.f32.gmra.mrb[0].mxu0 %v5291
    %v5359 = vpop.f32.mrb[0].mxu0
    %v5360 = vadd.f32 %v3172, %v5359
    %v5361 = vpop.f32.mrb[0].mxu0
    %5362 = vdwg.mxu0
    %s5363 = scalar_lea.vmem %s17, 14
    %5364 = vst [vmem:[%s5363] sm:$0x3] %v5360
    // Predicated region
    $region70: #{forward.1} parent=1 // pred_check
      _
    $region71: #{forward.1} parent=1 // pred_check_branch
      %5366 = sbr.rel (0) target = $region73
    $region72: #{forward.1} parent=1 // pred_region
      _
    $region73: #{forward.1} parent=1 // pred_fallthru
      _
    // Predicated region
    $region74: #{forward.1} parent=1 // pred_check
      _
    $region75: #{forward.1} parent=1 // pred_check_branch
      %5368 = sbr.rel (0) target = $region77
    $region76: #{forward.1} parent=1 // pred_region
      %s5370 = ssub.s32 32, 32
      %5371 = vsyncadd [#allocation3], %s5370
      %s5373 = sshll.u32 [#allocation2], 4
      %s5374 = int_to_ptr.vmem [resolvable:$true] %s5373
      %5376 = dma.vmem_to_hbm [thread:$0]  %s5374, 32, %s18, [#allocation3]
    $region77: #{forward.1} parent=1 // pred_fallthru
      _
    // Predicated region
    $region78: #{forward.1} parent=1 // pred_check
      _
    $region79: #{forward.1} parent=1 // pred_check_branch
      %5378 = sbr.rel (0) target = $region81
    $region80: #{forward.1} parent=1 // pred_region
      %s5380 = ssub.s32 32, 32
      %5381 = vsyncadd [#allocation5], %s5380
      %s5383 = sshll.u32 [#allocation4], 4
      %s5384 = int_to_ptr.vmem [resolvable:$true] %s5383
      %5386 = dma.vmem_to_hbm [thread:$0]  %s5384, 32, %s19, [#allocation5]
    $region81: #{forward.1} parent=1 // pred_fallthru
      _
    // Predicated region
    $region82: #{forward.1} parent=1 // pred_check
      _
    $region83: #{forward.1} parent=1 // pred_check_branch
      %5388 = sbr.rel (0) target = $region85
    $region84: #{forward.1} parent=1 // pred_region
      _
    $region85: #{forward.1} parent=1 // pred_fallthru
      _
    // Predicated region
    $region86: #{forward.1} parent=1 // pred_check
      _
    $region87: #{forward.1} parent=1 // pred_check_branch
      %5390 = sbr.rel (0) target = $region89
    $region88: #{forward.1} parent=1 // pred_region
      %5391 = dma.done [#allocation3], 32
    $region89: #{forward.1} parent=1 // pred_fallthru
      _
    // Predicated region
    $region90: #{forward.1} parent=1 // pred_check
      _
    $region91: #{forward.1} parent=1 // pred_check_branch
      %5393 = sbr.rel (0) target = $region93
    $region92: #{forward.1} parent=1 // pred_region
      %5394 = dma.done [#allocation5], 32
    $region93: #{forward.1} parent=1 // pred_fallthru
      _
    %5395 = vsyncpa [#allocation3], 1
    %5396 = vsyncpa [#allocation5], 1

</llo_original>
